<compile_context>
chip_gen: v6e
topology: v6e:2x2x1
jax: 0.10.0
libtpu: 0.0.40
codegen_flags: <defaults>
</compile_context>

<pallas_src>
from functools import partial

import jax
import jax.numpy as jnp
import numpy as np
from jax.experimental import pallas as pl
from jax.experimental.pallas import tpu as pltpu

# Small shapes consistent with the module: raw_size (pca dim), hidden_size.
NB, B, R, H, M = 4, 8, 64, 32, 2048   # micro-batches, batch, raw, hidden, middle(=2048)
EPS_BN = 1e-3
DROP_P = 0.3
INV_KEEP = 1.0 / (1.0 - DROP_P)


def cvae_kernel(x_ref, sk_ref, im_ref, eps_ref, drop_ref,
                we1_ref, be1_ref, g1_ref, bt1_ref,
                we2_ref, be2_ref, g2_ref, bt2_ref,
                wm_ref, bm_ref, wl_ref, bl_ref,
                wi1z_ref, wi1s_ref, bi1_ref, wi2_ref, bi2_ref,
                ws1_ref, bs1_ref, ws2_ref, bs2_ref,
                loss_ref, *, nb, b):
    f32, bf16 = jnp.float32, jnp.bfloat16

    def dense(act, w_ref, b_ref):
        # bf16 operands into the MXU, f32 accumulation, f32 bias add.
        return (jnp.dot(act.astype(bf16), w_ref[...],
                        preferred_element_type=f32) + b_ref[...])

    def bn_grouped(a, g_ref, bt_ref):
        # BatchNorm1d training mode, biased batch stats, computed PER
        # micro-batch: reduce over the B axis of an (nb, b, feat) view.
        feat = a.shape[-1]
        ag = a.reshape(nb, b, feat)
        mu = jnp.mean(ag, axis=1, keepdims=True)
        var = jnp.mean((ag - mu) ** 2, axis=1, keepdims=True)
        out = (ag - mu) * jax.lax.rsqrt(var + EPS_BN) * g_ref[...] + bt_ref[...]
        return out.reshape(nb * b, feat)

    def per_mb_mean(rows_2d):
        # rows_2d: [nb*b, feat] -> per-micro-batch mean over feat then batch
        # -> [nb, 1]
        per_row = jnp.mean(rows_2d.reshape(nb, b, -1), axis=-1)   # [nb, b]
        return jnp.mean(per_row, axis=1, keepdims=True)           # [nb, 1]

    x = x_ref[...]            # [N, 2R]  host-side concat([sketch, image])
    sketch = sk_ref[...]      # [N, R]
    image = im_ref[...]       # [N, R]

    # ---- encoder: Linear(2R -> M), ReLU, BN, Dropout, Linear(M -> H), ReLU, BN
    h = jnp.maximum(dense(x, we1_ref, be1_ref), 0.0)                 # [N, M]
    keep = drop_ref[...].astype(f32) * INV_KEEP                      # int8 mask -> scaled f32
    h = bn_grouped(h, g1_ref, bt1_ref) * keep
    h2 = jnp.maximum(dense(h, we2_ref, be2_ref), 0.0)                # [N, H]
    enc = bn_grouped(h2, g2_ref, bt2_ref)

    # ---- variational sampler: two separate Linear+Tanh heads ----
    mean = jnp.tanh(dense(enc, wm_ref, bm_ref))                      # [N, H]
    logvar = jnp.tanh(dense(enc, wl_ref, bl_ref))                    # [N, H]
    std = jnp.exp(0.5 * logvar)
    var_e = std * std                                                # == exp(logvar)
    z = mean + eps_ref[...] * std                                    # reparameterize

    kl_term = 1.0 + logvar - mean * mean - var_e                     # [N, H]
    kl_rows = -0.5 * jnp.sum(kl_term.reshape(nb, b, -1), axis=-1)    # [nb, b]
    kl_mb = jnp.mean(kl_rows, axis=1, keepdims=True)                 # [nb, 1]

    # ---- image decoder: Linear(H+R -> M) on cat([z, sketch]) via split weights
    d1 = (jnp.dot(z.astype(bf16), wi1z_ref[...], preferred_element_type=f32)
          + jnp.dot(sketch.astype(bf16), wi1s_ref[...], preferred_element_type=f32)
          + bi1_ref[...])
    d1 = jnp.maximum(d1, 0.0)
    image_recon = jnp.maximum(dense(d1, wi2_ref, bi2_ref), 0.0)      # [N, R]

    # ---- sketch decoder: Linear(R -> M), ReLU, Linear(M -> R), ReLU ----
    s1 = jnp.maximum(dense(image_recon, ws1_ref, bs1_ref), 0.0)
    sketch_recon = jnp.maximum(dense(s1, ws2_ref, bs2_ref), 0.0)

    # ---- losses: torch.mean(MSE(...)) == mean over features then batch ----
    img_mb = per_mb_mean((image_recon - image) ** 2)                 # [nb, 1]
    sk_mb = per_mb_mean((sketch_recon - sketch) ** 2)                # [nb, 1]

    # Packed loss output: one (nb, 3) block -> one output DMA.
    loss_ref[:, 0:1] = kl_mb
    loss_ref[:, 1:2] = img_mb
    loss_ref[:, 2:3] = sk_mb


@jax.jit
def cvae_forward(sketch, image, eps, drop_keep_i8, p):
    """sketch/image: [NB, B, R]; eps: [NB, B, H]; drop_keep_i8: [NB, B, M] int8.

    Runs NB independent CVAE forward passes in ONE kernel invocation: matmuls
    operate on the flattened [NB*B, K] slab, BatchNorm statistics stay
    per-micro-batch via an (NB, B, feat) grouped reduction.
    Returns per-micro-batch losses of shape [NB].
    """
    nb, b, r = sketch.shape
    n = nb * b
    sk = sketch.reshape(n, r)
    im = image.reshape(n, r)
    x = jnp.concatenate([sk, im], axis=-1)                           # [N, 2R]
    eps2 = eps.reshape(n, eps.shape[-1])
    drop2 = drop_keep_i8.reshape(n, drop_keep_i8.shape[-1])

    args = (x, sk, im, eps2, drop2,
            p['we1'], p['be1'], p['g1'], p['bt1'],
            p['we2'], p['be2'], p['g2'], p['bt2'],
            p['wm'], p['bm'], p['wl'], p['bl'],
            p['wi1z'], p['wi1s'], p['bi1'], p['wi2'], p['bi2'],
            p['ws1'], p['bs1'], p['ws2'], p['bs2'])

    # Single invocation, no grid: every operand (weights + activations,
    # ~4 MiB total) is DMA'd into VMEM once. 16 MiB scoped VMEM is the
    # v5e default and leaves ample headroom.
    losses = pl.pallas_call(
        partial(cvae_kernel, nb=nb, b=b),
        out_shape=jax.ShapeDtypeStruct((nb, 3), jnp.float32),
        compiler_params=pltpu.CompilerParams(
            vmem_limit_bytes=16 * 1024 * 1024),
    )(*args)
    return {'kl': losses[:, 0], 'image': losses[:, 1], 'sketch': losses[:, 2]}


# ---------------- pure-JAX reference (same bf16 weight quantization) ----------------
def reference_forward(sketch, image, eps, keep_i8, p):
    f32, bf16 = jnp.float32, jnp.bfloat16

    def dense(a, w, bias):
        return jnp.dot(a.astype(bf16), w, preferred_element_type=f32) + bias

    def bn(a, g, bt):
        mu = jnp.mean(a, axis=0, keepdims=True)
        var = jnp.mean((a - mu) ** 2, axis=0, keepdims=True)
        return (a - mu) * jax.lax.rsqrt(var + EPS_BN) * g + bt

    x = jnp.concatenate([sketch, image], axis=1)
    h = jnp.maximum(dense(x, p['we1'], p['be1']), 0.0)
    h = bn(h, p['g1'], p['bt1']) * (keep_i8.astype(f32) * INV_KEEP)
    enc = bn(jnp.maximum(dense(h, p['we2'], p['be2']), 0.0), p['g2'], p['bt2'])
    mean = jnp.tanh(dense(enc, p['wm'], p['bm']))
    logvar = jnp.tanh(dense(enc, p['wl'], p['bl']))
    z = mean + eps * jnp.exp(0.5 * logvar)
    kl = jnp.mean(-0.5 * jnp.sum(1.0 + logvar - mean ** 2 - jnp.exp(logvar), axis=1))
    d1 = jnp.maximum(
        jnp.dot(z.astype(bf16), p['wi1z'], preferred_element_type=f32)
        + jnp.dot(sketch.astype(bf16), p['wi1s'], preferred_element_type=f32)
        + p['bi1'], 0.0)
    image_recon = jnp.maximum(dense(d1, p['wi2'], p['bi2']), 0.0)
    s1 = jnp.maximum(dense(image_recon, p['ws1'], p['bs1']), 0.0)
    sketch_recon = jnp.maximum(dense(s1, p['ws2'], p['bs2']), 0.0)
    return {'kl': kl,
            'image': jnp.mean(jnp.mean((image_recon - image) ** 2, axis=-1)),
            'sketch': jnp.mean(jnp.mean((sketch_recon - sketch) ** 2, axis=-1))}


def linear_init(key, fan_in, fan_out):
    # PyTorch nn.Linear default: U(-1/sqrt(fan_in), 1/sqrt(fan_in)); stored
    # transposed ([in, out]) and quantized to bf16 for the MXU.
    k1, k2 = jax.random.split(key)
    bound = 1.0 / np.sqrt(fan_in)
    w = jax.random.uniform(k1, (fan_in, fan_out), jnp.float32, -bound, bound)
    b = jax.random.uniform(k2, (1, fan_out), jnp.float32, -bound, bound)
    return w.astype(jnp.bfloat16), b


if __name__ == "__main__":
    key = jax.random.PRNGKey(0)
    keys = jax.random.split(key, 16)

    sketch = jax.random.normal(keys[0], (NB, B, R), jnp.float32)
    image = jax.random.normal(keys[1], (NB, B, R), jnp.float32)
    eps = jax.random.normal(keys[2], (NB, B, H), jnp.float32)        # reparam noise
    keep = jax.random.bernoulli(keys[3], 1.0 - DROP_P, (NB, B, M)).astype(jnp.int8)

    p = {}
    p['we1'], p['be1'] = linear_init(keys[4], 2 * R, M)
    p['g1'], p['bt1'] = jnp.ones((1, M), jnp.float32), jnp.zeros((1, M), jnp.float32)
    p['we2'], p['be2'] = linear_init(keys[5], M, H)
    p['g2'], p['bt2'] = jnp.ones((1, H), jnp.float32), jnp.zeros((1, H), jnp.float32)
    p['wm'], p['bm'] = linear_init(keys[6], H, H)                    # mean head (Linear+Tanh)
    p['wl'], p['bl'] = linear_init(keys[7], H, H)                    # logvar head (Linear+Tanh)
    wi1, p['bi1'] = linear_init(keys[8], H + R, M)
    p['wi1z'], p['wi1s'] = wi1[:H, :], wi1[H:, :]                    # split for cat([z, sketch])
    p['wi2'], p['bi2'] = linear_init(keys[9], M, R)
    p['ws1'], p['bs1'] = linear_init(keys[10], R, M)
    p['ws2'], p['bs2'] = linear_init(keys[11], M, R)

    out = jax.block_until_ready(cvae_forward(sketch, image, eps, keep, p))

    for nb_i in range(NB):
        ref = reference_forward(sketch[nb_i], image[nb_i], eps[nb_i], keep[nb_i], p)
        for name in ('kl', 'image', 'sketch'):
            np.testing.assert_allclose(np.asarray(out[name][nb_i]),
                                       np.asarray(ref[name]),
                                       rtol=2e-2, atol=1e-3)
    print("KERNEL_OK")
</pallas_src>

<mosaic_0001>
module attributes {stable_mosaic.version = 11 : i64} {
  func.func @cvae_kernel(%arg0: memref<32x128xf32, #tpu.memory_space<vmem>>, %arg1: memref<32x64xf32, #tpu.memory_space<vmem>>, %arg2: memref<32x64xf32, #tpu.memory_space<vmem>>, %arg3: memref<32x32xf32, #tpu.memory_space<vmem>>, %arg4: memref<32x2048xi8, #tpu.memory_space<vmem>>, %arg5: memref<128x2048xbf16, #tpu.memory_space<vmem>>, %arg6: memref<1x2048xf32, #tpu.memory_space<vmem>>, %arg7: memref<1x2048xf32, #tpu.memory_space<vmem>>, %arg8: memref<1x2048xf32, #tpu.memory_space<vmem>>, %arg9: memref<2048x32xbf16, #tpu.memory_space<vmem>>, %arg10: memref<1x32xf32, #tpu.memory_space<vmem>>, %arg11: memref<1x32xf32, #tpu.memory_space<vmem>>, %arg12: memref<1x32xf32, #tpu.memory_space<vmem>>, %arg13: memref<32x32xbf16, #tpu.memory_space<vmem>>, %arg14: memref<1x32xf32, #tpu.memory_space<vmem>>, %arg15: memref<32x32xbf16, #tpu.memory_space<vmem>>, %arg16: memref<1x32xf32, #tpu.memory_space<vmem>>, %arg17: memref<32x2048xbf16, #tpu.memory_space<vmem>>, %arg18: memref<64x2048xbf16, #tpu.memory_space<vmem>>, %arg19: memref<1x2048xf32, #tpu.memory_space<vmem>>, %arg20: memref<2048x64xbf16, #tpu.memory_space<vmem>>, %arg21: memref<1x64xf32, #tpu.memory_space<vmem>>, %arg22: memref<64x2048xbf16, #tpu.memory_space<vmem>>, %arg23: memref<1x2048xf32, #tpu.memory_space<vmem>>, %arg24: memref<2048x64xbf16, #tpu.memory_space<vmem>>, %arg25: memref<1x64xf32, #tpu.memory_space<vmem>>, %arg26: memref<4x3xf32, #tpu.memory_space<vmem>>) attributes {dimension_semantics = [], scalar_prefetch = 0 : i64, scratch_operands = 0 : i64, tpu.core_type = #tpu.core_type<tc>} {
    %c0 = arith.constant 0 : index
    %c0_0 = arith.constant 0 : index
    %0 = vector.load %arg0[%c0, %c0_0] : memref<32x128xf32, #tpu.memory_space<vmem>>, vector<32x128xf32>
    %c0_1 = arith.constant 0 : index
    %c0_2 = arith.constant 0 : index
    %1 = vector.load %arg1[%c0_1, %c0_2] : memref<32x64xf32, #tpu.memory_space<vmem>>, vector<32x64xf32>
    %c0_3 = arith.constant 0 : index
    %c0_4 = arith.constant 0 : index
    %2 = vector.load %arg2[%c0_3, %c0_4] : memref<32x64xf32, #tpu.memory_space<vmem>>, vector<32x64xf32>
    %3 = arith.truncf %0 : vector<32x128xf32> to vector<32x128xbf16>
    %c0_5 = arith.constant 0 : index
    %c0_6 = arith.constant 0 : index
    %4 = vector.load %arg5[%c0_5, %c0_6] : memref<128x2048xbf16, #tpu.memory_space<vmem>>, vector<128x2048xbf16>
    %cst = arith.constant dense<0.000000e+00> : vector<32x2048xf32>
    %5 = tpu.matmul %3, %4, %cst {dimension_numbers = #tpu.dot_dimension_numbers<[1], [0], [0], [1], [0, 0, 1, 1], [], []>} : vector<32x128xbf16>, vector<128x2048xbf16>, vector<32x2048xf32> -> vector<32x2048xf32>
    %c0_7 = arith.constant 0 : index
    %c0_8 = arith.constant 0 : index
    %6 = vector.load %arg6[%c0_7, %c0_8] : memref<1x2048xf32, #tpu.memory_space<vmem>>, vector<1x2048xf32>
    %7 = vector.broadcast %6 : vector<1x2048xf32> to vector<32x2048xf32>
    %8 = arith.addf %5, %7 : vector<32x2048xf32>
    %cst_9 = arith.constant 0.000000e+00 : f32
    %9 = vector.broadcast %cst_9 : f32 to vector<32x2048xf32>
    %10 = arith.maximumf %8, %9 : vector<32x2048xf32>
    %c0_10 = arith.constant 0 : index
    %c0_11 = arith.constant 0 : index
    %11 = vector.load %arg4[%c0_10, %c0_11] : memref<32x2048xi8, #tpu.memory_space<vmem>>, vector<32x2048xi8>
    %12 = arith.sitofp %11 : vector<32x2048xi8> to vector<32x2048xf32>
    %cst_12 = arith.constant 1.42857146 : f32
    %13 = vector.broadcast %cst_12 : f32 to vector<32x2048xf32>
    %14 = arith.mulf %12, %13 : vector<32x2048xf32>
    %15 = vector.shape_cast %10 : vector<32x2048xf32> to vector<4x8x2048xf32>
    %cst_13 = arith.constant dense<0.000000e+00> : vector<4x2048xf32>
    %16 = vector.multi_reduction <add>, %15, %cst_13 [1] : vector<4x8x2048xf32> to vector<4x2048xf32>
    %17 = vector.shape_cast %16 : vector<4x2048xf32> to vector<4x1x2048xf32>
    %cst_14 = arith.constant 8.000000e+00 : f32
    %18 = vector.broadcast %cst_14 : f32 to vector<4x1x2048xf32>
    %19 = arith.divf %17, %18 : vector<4x1x2048xf32>
    %20 = vector.broadcast %19 : vector<4x1x2048xf32> to vector<4x8x2048xf32>
    %21 = arith.subf %15, %20 : vector<4x8x2048xf32>
    %22 = arith.mulf %21, %21 : vector<4x8x2048xf32>
    %cst_15 = arith.constant dense<0.000000e+00> : vector<4x2048xf32>
    %23 = vector.multi_reduction <add>, %22, %cst_15 [1] : vector<4x8x2048xf32> to vector<4x2048xf32>
    %24 = vector.shape_cast %23 : vector<4x2048xf32> to vector<4x1x2048xf32>
    %cst_16 = arith.constant 8.000000e+00 : f32
    %25 = vector.broadcast %cst_16 : f32 to vector<4x1x2048xf32>
    %26 = arith.divf %24, %25 : vector<4x1x2048xf32>
    %27 = vector.broadcast %19 : vector<4x1x2048xf32> to vector<4x8x2048xf32>
    %28 = arith.subf %15, %27 : vector<4x8x2048xf32>
    %cst_17 = arith.constant 1.000000e-03 : f32
    %29 = vector.broadcast %cst_17 : f32 to vector<4x1x2048xf32>
    %30 = arith.addf %26, %29 : vector<4x1x2048xf32>
    %31 = math.rsqrt %30 : vector<4x1x2048xf32>
    %32 = vector.broadcast %31 : vector<4x1x2048xf32> to vector<4x8x2048xf32>
    %33 = arith.mulf %28, %32 : vector<4x8x2048xf32>
    %c0_18 = arith.constant 0 : index
    %c0_19 = arith.constant 0 : index
    %34 = vector.load %arg7[%c0_18, %c0_19] : memref<1x2048xf32, #tpu.memory_space<vmem>>, vector<1x2048xf32>
    %35 = vector.shape_cast %34 : vector<1x2048xf32> to vector<1x1x2048xf32>
    %36 = vector.broadcast %35 : vector<1x1x2048xf32> to vector<4x8x2048xf32>
    %37 = arith.mulf %33, %36 : vector<4x8x2048xf32>
    %c0_20 = arith.constant 0 : index
    %c0_21 = arith.constant 0 : index
    %38 = vector.load %arg8[%c0_20, %c0_21] : memref<1x2048xf32, #tpu.memory_space<vmem>>, vector<1x2048xf32>
    %39 = vector.shape_cast %38 : vector<1x2048xf32> to vector<1x1x2048xf32>
    %40 = vector.broadcast %39 : vector<1x1x2048xf32> to vector<4x8x2048xf32>
    %41 = arith.addf %37, %40 : vector<4x8x2048xf32>
    %42 = vector.shape_cast %41 : vector<4x8x2048xf32> to vector<32x2048xf32>
    %43 = arith.mulf %42, %14 : vector<32x2048xf32>
    %44 = arith.truncf %43 : vector<32x2048xf32> to vector<32x2048xbf16>
    %c0_22 = arith.constant 0 : index
    %c0_23 = arith.constant 0 : index
    %45 = vector.load %arg9[%c0_22, %c0_23] : memref<2048x32xbf16, #tpu.memory_space<vmem>>, vector<2048x32xbf16>
    %cst_24 = arith.constant dense<0.000000e+00> : vector<32x32xf32>
    %46 = tpu.matmul %44, %45, %cst_24 {dimension_numbers = #tpu.dot_dimension_numbers<[1], [0], [0], [1], [0, 0, 1, 1], [], []>} : vector<32x2048xbf16>, vector<2048x32xbf16>, vector<32x32xf32> -> vector<32x32xf32>
    %c0_25 = arith.constant 0 : index
    %c0_26 = arith.constant 0 : index
    %47 = vector.load %arg10[%c0_25, %c0_26] : memref<1x32xf32, #tpu.memory_space<vmem>>, vector<1x32xf32>
    %48 = vector.broadcast %47 : vector<1x32xf32> to vector<32x32xf32>
    %49 = arith.addf %46, %48 : vector<32x32xf32>
    %cst_27 = arith.constant 0.000000e+00 : f32
    %50 = vector.broadcast %cst_27 : f32 to vector<32x32xf32>
    %51 = arith.maximumf %49, %50 : vector<32x32xf32>
    %52 = vector.shape_cast %51 : vector<32x32xf32> to vector<4x8x32xf32>
    %cst_28 = arith.constant dense<0.000000e+00> : vector<4x32xf32>
    %53 = vector.multi_reduction <add>, %52, %cst_28 [1] : vector<4x8x32xf32> to vector<4x32xf32>
    %54 = vector.shape_cast %53 : vector<4x32xf32> to vector<4x1x32xf32>
    %cst_29 = arith.constant 8.000000e+00 : f32
    %55 = vector.broadcast %cst_29 : f32 to vector<4x1x32xf32>
    %56 = arith.divf %54, %55 : vector<4x1x32xf32>
    %57 = vector.broadcast %56 : vector<4x1x32xf32> to vector<4x8x32xf32>
    %58 = arith.subf %52, %57 : vector<4x8x32xf32>
    %59 = arith.mulf %58, %58 : vector<4x8x32xf32>
    %cst_30 = arith.constant dense<0.000000e+00> : vector<4x32xf32>
    %60 = vector.multi_reduction <add>, %59, %cst_30 [1] : vector<4x8x32xf32> to vector<4x32xf32>
    %61 = vector.shape_cast %60 : vector<4x32xf32> to vector<4x1x32xf32>
    %cst_31 = arith.constant 8.000000e+00 : f32
    %62 = vector.broadcast %cst_31 : f32 to vector<4x1x32xf32>
    %63 = arith.divf %61, %62 : vector<4x1x32xf32>
    %64 = vector.broadcast %56 : vector<4x1x32xf32> to vector<4x8x32xf32>
    %65 = arith.subf %52, %64 : vector<4x8x32xf32>
    %cst_32 = arith.constant 1.000000e-03 : f32
    %66 = vector.broadcast %cst_32 : f32 to vector<4x1x32xf32>
    %67 = arith.addf %63, %66 : vector<4x1x32xf32>
    %68 = math.rsqrt %67 : vector<4x1x32xf32>
    %69 = vector.broadcast %68 : vector<4x1x32xf32> to vector<4x8x32xf32>
    %70 = arith.mulf %65, %69 : vector<4x8x32xf32>
    %c0_33 = arith.constant 0 : index
    %c0_34 = arith.constant 0 : index
    %71 = vector.load %arg11[%c0_33, %c0_34] : memref<1x32xf32, #tpu.memory_space<vmem>>, vector<1x32xf32>
    %72 = vector.shape_cast %71 : vector<1x32xf32> to vector<1x1x32xf32>
    %73 = vector.broadcast %72 : vector<1x1x32xf32> to vector<4x8x32xf32>
    %74 = arith.mulf %70, %73 : vector<4x8x32xf32>
    %c0_35 = arith.constant 0 : index
    %c0_36 = arith.constant 0 : index
    %75 = vector.load %arg12[%c0_35, %c0_36] : memref<1x32xf32, #tpu.memory_space<vmem>>, vector<1x32xf32>
    %76 = vector.shape_cast %75 : vector<1x32xf32> to vector<1x1x32xf32>
    %77 = vector.broadcast %76 : vector<1x1x32xf32> to vector<4x8x32xf32>
    %78 = arith.addf %74, %77 : vector<4x8x32xf32>
    %79 = vector.shape_cast %78 : vector<4x8x32xf32> to vector<32x32xf32>
    %80 = arith.truncf %79 : vector<32x32xf32> to vector<32x32xbf16>
    %c0_37 = arith.constant 0 : index
    %c0_38 = arith.constant 0 : index
    %81 = vector.load %arg13[%c0_37, %c0_38] : memref<32x32xbf16, #tpu.memory_space<vmem>>, vector<32x32xbf16>
    %cst_39 = arith.constant dense<0.000000e+00> : vector<32x32xf32>
    %82 = tpu.matmul %80, %81, %cst_39 {dimension_numbers = #tpu.dot_dimension_numbers<[1], [0], [0], [1], [0, 0, 1, 1], [], []>} : vector<32x32xbf16>, vector<32x32xbf16>, vector<32x32xf32> -> vector<32x32xf32>
    %c0_40 = arith.constant 0 : index
    %c0_41 = arith.constant 0 : index
    %83 = vector.load %arg14[%c0_40, %c0_41] : memref<1x32xf32, #tpu.memory_space<vmem>>, vector<1x32xf32>
    %84 = vector.broadcast %83 : vector<1x32xf32> to vector<32x32xf32>
    %85 = arith.addf %82, %84 : vector<32x32xf32>
    %86 = math.tanh %85 : vector<32x32xf32>
    %87 = arith.truncf %79 : vector<32x32xf32> to vector<32x32xbf16>
    %c0_42 = arith.constant 0 : index
    %c0_43 = arith.constant 0 : index
    %88 = vector.load %arg15[%c0_42, %c0_43] : memref<32x32xbf16, #tpu.memory_space<vmem>>, vector<32x32xbf16>
    %cst_44 = arith.constant dense<0.000000e+00> : vector<32x32xf32>
    %89 = tpu.matmul %87, %88, %cst_44 {dimension_numbers = #tpu.dot_dimension_numbers<[1], [0], [0], [1], [0, 0, 1, 1], [], []>} : vector<32x32xbf16>, vector<32x32xbf16>, vector<32x32xf32> -> vector<32x32xf32>
    %c0_45 = arith.constant 0 : index
    %c0_46 = arith.constant 0 : index
    %90 = vector.load %arg16[%c0_45, %c0_46] : memref<1x32xf32, #tpu.memory_space<vmem>>, vector<1x32xf32>
    %91 = vector.broadcast %90 : vector<1x32xf32> to vector<32x32xf32>
    %92 = arith.addf %89, %91 : vector<32x32xf32>
    %93 = math.tanh %92 : vector<32x32xf32>
    %cst_47 = arith.constant 5.000000e-01 : f32
    %94 = vector.broadcast %cst_47 : f32 to vector<32x32xf32>
    %95 = arith.mulf %94, %93 : vector<32x32xf32>
    %96 = math.exp %95 : vector<32x32xf32>
    %97 = arith.mulf %96, %96 : vector<32x32xf32>
    %c0_48 = arith.constant 0 : index
    %c0_49 = arith.constant 0 : index
    %98 = vector.load %arg3[%c0_48, %c0_49] : memref<32x32xf32, #tpu.memory_space<vmem>>, vector<32x32xf32>
    %99 = arith.mulf %98, %96 : vector<32x32xf32>
    %100 = arith.addf %86, %99 : vector<32x32xf32>
    %cst_50 = arith.constant 1.000000e+00 : f32
    %101 = vector.broadcast %cst_50 : f32 to vector<32x32xf32>
    %102 = arith.addf %101, %93 : vector<32x32xf32>
    %103 = arith.mulf %86, %86 : vector<32x32xf32>
    %104 = arith.subf %102, %103 : vector<32x32xf32>
    %105 = arith.subf %104, %97 : vector<32x32xf32>
    %106 = vector.shape_cast %105 : vector<32x32xf32> to vector<4x8x32xf32>
    %cst_51 = arith.constant dense<0.000000e+00> : vector<4x8xf32>
    %107 = vector.multi_reduction <add>, %106, %cst_51 [2] : vector<4x8x32xf32> to vector<4x8xf32>
    %cst_52 = arith.constant -5.000000e-01 : f32
    %108 = vector.broadcast %cst_52 : f32 to vector<4x8xf32>
    %109 = arith.mulf %108, %107 : vector<4x8xf32>
    %cst_53 = arith.constant dense<0.000000e+00> : vector<4xf32>
    %110 = vector.multi_reduction <add>, %109, %cst_53 [1] : vector<4x8xf32> to vector<4xf32>
    %111 = vector.shape_cast %110 : vector<4xf32> to vector<4x1xf32>
    %cst_54 = arith.constant 8.000000e+00 : f32
    %112 = vector.broadcast %cst_54 : f32 to vector<4x1xf32>
    %113 = arith.divf %111, %112 : vector<4x1xf32>
    %114 = arith.truncf %100 : vector<32x32xf32> to vector<32x32xbf16>
    %c0_55 = arith.constant 0 : index
    %c0_56 = arith.constant 0 : index
    %115 = vector.load %arg17[%c0_55, %c0_56] : memref<32x2048xbf16, #tpu.memory_space<vmem>>, vector<32x2048xbf16>
    %cst_57 = arith.constant dense<0.000000e+00> : vector<32x2048xf32>
    %116 = tpu.matmul %114, %115, %cst_57 {dimension_numbers = #tpu.dot_dimension_numbers<[1], [0], [0], [1], [0, 0, 1, 1], [], []>} : vector<32x32xbf16>, vector<32x2048xbf16>, vector<32x2048xf32> -> vector<32x2048xf32>
    %117 = arith.truncf %1 : vector<32x64xf32> to vector<32x64xbf16>
    %c0_58 = arith.constant 0 : index
    %c0_59 = arith.constant 0 : index
    %118 = vector.load %arg18[%c0_58, %c0_59] : memref<64x2048xbf16, #tpu.memory_space<vmem>>, vector<64x2048xbf16>
    %cst_60 = arith.constant dense<0.000000e+00> : vector<32x2048xf32>
    %119 = tpu.matmul %117, %118, %cst_60 {dimension_numbers = #tpu.dot_dimension_numbers<[1], [0], [0], [1], [0, 0, 1, 1], [], []>} : vector<32x64xbf16>, vector<64x2048xbf16>, vector<32x2048xf32> -> vector<32x2048xf32>
    %120 = arith.addf %116, %119 : vector<32x2048xf32>
    %c0_61 = arith.constant 0 : index
    %c0_62 = arith.constant 0 : index
    %121 = vector.load %arg19[%c0_61, %c0_62] : memref<1x2048xf32, #tpu.memory_space<vmem>>, vector<1x2048xf32>
    %122 = vector.broadcast %121 : vector<1x2048xf32> to vector<32x2048xf32>
    %123 = arith.addf %120, %122 : vector<32x2048xf32>
    %cst_63 = arith.constant 0.000000e+00 : f32
    %124 = vector.broadcast %cst_63 : f32 to vector<32x2048xf32>
    %125 = arith.maximumf %123, %124 : vector<32x2048xf32>
    %126 = arith.truncf %125 : vector<32x2048xf32> to vector<32x2048xbf16>
    %c0_64 = arith.constant 0 : index
    %c0_65 = arith.constant 0 : index
    %127 = vector.load %arg20[%c0_64, %c0_65] : memref<2048x64xbf16, #tpu.memory_space<vmem>>, vector<2048x64xbf16>
    %cst_66 = arith.constant dense<0.000000e+00> : vector<32x64xf32>
    %128 = tpu.matmul %126, %127, %cst_66 {dimension_numbers = #tpu.dot_dimension_numbers<[1], [0], [0], [1], [0, 0, 1, 1], [], []>} : vector<32x2048xbf16>, vector<2048x64xbf16>, vector<32x64xf32> -> vector<32x64xf32>
    %c0_67 = arith.constant 0 : index
    %c0_68 = arith.constant 0 : index
    %129 = vector.load %arg21[%c0_67, %c0_68] : memref<1x64xf32, #tpu.memory_space<vmem>>, vector<1x64xf32>
    %130 = vector.broadcast %129 : vector<1x64xf32> to vector<32x64xf32>
    %131 = arith.addf %128, %130 : vector<32x64xf32>
    %cst_69 = arith.constant 0.000000e+00 : f32
    %132 = vector.broadcast %cst_69 : f32 to vector<32x64xf32>
    %133 = arith.maximumf %131, %132 : vector<32x64xf32>
    %134 = arith.truncf %133 : vector<32x64xf32> to vector<32x64xbf16>
    %c0_70 = arith.constant 0 : index
    %c0_71 = arith.constant 0 : index
    %135 = vector.load %arg22[%c0_70, %c0_71] : memref<64x2048xbf16, #tpu.memory_space<vmem>>, vector<64x2048xbf16>
    %cst_72 = arith.constant dense<0.000000e+00> : vector<32x2048xf32>
    %136 = tpu.matmul %134, %135, %cst_72 {dimension_numbers = #tpu.dot_dimension_numbers<[1], [0], [0], [1], [0, 0, 1, 1], [], []>} : vector<32x64xbf16>, vector<64x2048xbf16>, vector<32x2048xf32> -> vector<32x2048xf32>
    %c0_73 = arith.constant 0 : index
    %c0_74 = arith.constant 0 : index
    %137 = vector.load %arg23[%c0_73, %c0_74] : memref<1x2048xf32, #tpu.memory_space<vmem>>, vector<1x2048xf32>
    %138 = vector.broadcast %137 : vector<1x2048xf32> to vector<32x2048xf32>
    %139 = arith.addf %136, %138 : vector<32x2048xf32>
    %cst_75 = arith.constant 0.000000e+00 : f32
    %140 = vector.broadcast %cst_75 : f32 to vector<32x2048xf32>
    %141 = arith.maximumf %139, %140 : vector<32x2048xf32>
    %142 = arith.truncf %141 : vector<32x2048xf32> to vector<32x2048xbf16>
    %c0_76 = arith.constant 0 : index
    %c0_77 = arith.constant 0 : index
    %143 = vector.load %arg24[%c0_76, %c0_77] : memref<2048x64xbf16, #tpu.memory_space<vmem>>, vector<2048x64xbf16>
    %cst_78 = arith.constant dense<0.000000e+00> : vector<32x64xf32>
    %144 = tpu.matmul %142, %143, %cst_78 {dimension_numbers = #tpu.dot_dimension_numbers<[1], [0], [0], [1], [0, 0, 1, 1], [], []>} : vector<32x2048xbf16>, vector<2048x64xbf16>, vector<32x64xf32> -> vector<32x64xf32>
    %c0_79 = arith.constant 0 : index
    %c0_80 = arith.constant 0 : index
    %145 = vector.load %arg25[%c0_79, %c0_80] : memref<1x64xf32, #tpu.memory_space<vmem>>, vector<1x64xf32>
    %146 = vector.broadcast %145 : vector<1x64xf32> to vector<32x64xf32>
    %147 = arith.addf %144, %146 : vector<32x64xf32>
    %cst_81 = arith.constant 0.000000e+00 : f32
    %148 = vector.broadcast %cst_81 : f32 to vector<32x64xf32>
    %149 = arith.maximumf %147, %148 : vector<32x64xf32>
    %150 = arith.subf %133, %2 : vector<32x64xf32>
    %151 = arith.mulf %150, %150 : vector<32x64xf32>
    %152 = vector.shape_cast %151 : vector<32x64xf32> to vector<4x8x64xf32>
    %cst_82 = arith.constant dense<0.000000e+00> : vector<4x8xf32>
    %153 = vector.multi_reduction <add>, %152, %cst_82 [2] : vector<4x8x64xf32> to vector<4x8xf32>
    %cst_83 = arith.constant 6.400000e+01 : f32
    %154 = vector.broadcast %cst_83 : f32 to vector<4x8xf32>
    %155 = arith.divf %153, %154 : vector<4x8xf32>
    %cst_84 = arith.constant dense<0.000000e+00> : vector<4xf32>
    %156 = vector.multi_reduction <add>, %155, %cst_84 [1] : vector<4x8xf32> to vector<4xf32>
    %157 = vector.shape_cast %156 : vector<4xf32> to vector<4x1xf32>
    %cst_85 = arith.constant 8.000000e+00 : f32
    %158 = vector.broadcast %cst_85 : f32 to vector<4x1xf32>
    %159 = arith.divf %157, %158 : vector<4x1xf32>
    %160 = arith.subf %149, %1 : vector<32x64xf32>
    %161 = arith.mulf %160, %160 : vector<32x64xf32>
    %162 = vector.shape_cast %161 : vector<32x64xf32> to vector<4x8x64xf32>
    %cst_86 = arith.constant dense<0.000000e+00> : vector<4x8xf32>
    %163 = vector.multi_reduction <add>, %162, %cst_86 [2] : vector<4x8x64xf32> to vector<4x8xf32>
    %cst_87 = arith.constant 6.400000e+01 : f32
    %164 = vector.broadcast %cst_87 : f32 to vector<4x8xf32>
    %165 = arith.divf %163, %164 : vector<4x8xf32>
    %cst_88 = arith.constant dense<0.000000e+00> : vector<4xf32>
    %166 = vector.multi_reduction <add>, %165, %cst_88 [1] : vector<4x8xf32> to vector<4xf32>
    %167 = vector.shape_cast %166 : vector<4xf32> to vector<4x1xf32>
    %cst_89 = arith.constant 8.000000e+00 : f32
    %168 = vector.broadcast %cst_89 : f32 to vector<4x1xf32>
    %169 = arith.divf %167, %168 : vector<4x1xf32>
    %c0_90 = arith.constant 0 : index
    %c0_91 = arith.constant 0 : index
    %170 = vector.load %arg26[%c0_90, %c0_91] : memref<4x3xf32, #tpu.memory_space<vmem>>, vector<4x1xf32>
    tpu.vector_store %arg26[%c0_90, %c0_91], %113 {strides = array<i32>} : memref<4x3xf32, #tpu.memory_space<vmem>>, vector<4x1xf32>,
    %c0_92 = arith.constant 0 : index
    %c1 = arith.constant 1 : index
    %171 = vector.load %arg26[%c0_92, %c1] : memref<4x3xf32, #tpu.memory_space<vmem>>, vector<4x1xf32>
    tpu.vector_store %arg26[%c0_92, %c1], %159 {strides = array<i32>} : memref<4x3xf32, #tpu.memory_space<vmem>>, vector<4x1xf32>,
    %c0_93 = arith.constant 0 : index
    %c2 = arith.constant 2 : index
    %172 = vector.load %arg26[%c0_93, %c2] : memref<4x3xf32, #tpu.memory_space<vmem>>, vector<4x1xf32>
    tpu.vector_store %arg26[%c0_93, %c2], %169 {strides = array<i32>} : memref<4x3xf32, #tpu.memory_space<vmem>>, vector<4x1xf32>,
    return
  }
}

</mosaic_0001>

<llo_original>
// kernel: cvae_forward.1
$region0: #{cvae_forward.1}
  #allocation0 [shape = 'u32[]', space=smem, size = 0x4, offset = 0x4, fixed_abs, tag = 'smem constant byte address 0x4 - core index']
  #allocation1 [shape = 'u32[144,128]{1,0:T(1,128)}', space=vmem, size = 0x12000, scoped, tag = 'internal scratch']
  %s0 = inlined_call_operand.vmem [shape: f32[32,128], index: 0, kind: input, shape index: {}]
  %s1 = inlined_call_operand.vmem [shape: f32[32,64], index: 1, kind: input, shape index: {}]
  %s2 = inlined_call_operand.vmem [shape: f32[32,64], index: 2, kind: input, shape index: {}]
  %s3 = inlined_call_operand.vmem [shape: f32[32,32], index: 3, kind: input, shape index: {}]
  %s4 = inlined_call_operand.vmem [shape: s8[32,2048], index: 4, kind: input, shape index: {}]
  %s5 = inlined_call_operand.vmem [shape: bf16[128,2048], index: 5, kind: input, shape index: {}]
  %s6 = inlined_call_operand.vmem [shape: f32[1,2048], index: 6, kind: input, shape index: {}]
  %s7 = inlined_call_operand.vmem [shape: f32[1,2048], index: 7, kind: input, shape index: {}]
  %s8 = inlined_call_operand.vmem [shape: f32[1,2048], index: 8, kind: input, shape index: {}]
  %s9 = inlined_call_operand.vmem [shape: bf16[2048,32], index: 9, kind: input, shape index: {}]
  %s10 = inlined_call_operand.vmem [shape: f32[1,32], index: 10, kind: input, shape index: {}]
  %s11 = inlined_call_operand.vmem [shape: f32[1,32], index: 11, kind: input, shape index: {}]
  %s12 = inlined_call_operand.vmem [shape: f32[1,32], index: 12, kind: input, shape index: {}]
  %s13 = inlined_call_operand.vmem [shape: bf16[32,32], index: 13, kind: input, shape index: {}]
  %s14 = inlined_call_operand.vmem [shape: f32[1,32], index: 14, kind: input, shape index: {}]
  %s15 = inlined_call_operand.vmem [shape: bf16[32,32], index: 15, kind: input, shape index: {}]
  %s16 = inlined_call_operand.vmem [shape: f32[1,32], index: 16, kind: input, shape index: {}]
  %s17 = inlined_call_operand.vmem [shape: bf16[32,2048], index: 17, kind: input, shape index: {}]
  %s18 = inlined_call_operand.vmem [shape: bf16[64,2048], index: 18, kind: input, shape index: {}]
  %s19 = inlined_call_operand.vmem [shape: f32[1,2048], index: 19, kind: input, shape index: {}]
  %s20 = inlined_call_operand.vmem [shape: bf16[2048,64], index: 20, kind: input, shape index: {}]
  %s21 = inlined_call_operand.vmem [shape: f32[1,64], index: 21, kind: input, shape index: {}]
  %s22 = inlined_call_operand.vmem [shape: bf16[64,2048], index: 22, kind: input, shape index: {}]
  %s23 = inlined_call_operand.vmem [shape: f32[1,2048], index: 23, kind: input, shape index: {}]
  %s24 = inlined_call_operand.vmem [shape: bf16[2048,64], index: 24, kind: input, shape index: {}]
  %s25 = inlined_call_operand.vmem [shape: f32[1,64], index: 25, kind: input, shape index: {}]
  %s26 = inlined_call_operand.vmem [shape: f32[4,3], index: 26, kind: output, shape index: {}]
  %s27 = sld [smem:[#allocation0]]
  $region114: #{cvae_forward.1} parent=0
    _
  %s29 = ssub.s32 1, %s27
  %s30 = scalar_select 0, %s29, %s27
  // Predicated region
  $region2: #{cvae_forward.1} parent=0 // pred_check
    _
  $region3: #{cvae_forward.1} parent=0 // pred_check_branch
    %32 = sbr.rel (0) target = $region5
  $region4: #{cvae_forward.1} parent=0 // pred_region
    _
  $region5: #{cvae_forward.1} parent=0 // pred_fallthru
    _
  // Predicated region
  $region6: #{cvae_forward.1} parent=0 // pred_check
    _
  $region7: #{cvae_forward.1} parent=0 // pred_check_branch
    %34 = sbr.rel (0) target = $region9
  $region8: #{cvae_forward.1} parent=0 // pred_region
    _
  $region9: #{cvae_forward.1} parent=0 // pred_fallthru
    _
  // Predicated region
  $region10: #{cvae_forward.1} parent=0 // pred_check
    _
  $region11: #{cvae_forward.1} parent=0 // pred_check_branch
    %36 = sbr.rel (0) target = $region13
  $region12: #{cvae_forward.1} parent=0 // pred_region
    _
  $region13: #{cvae_forward.1} parent=0 // pred_fallthru
    _
  // Predicated region
  $region14: #{cvae_forward.1} parent=0 // pred_check
    _
  $region15: #{cvae_forward.1} parent=0 // pred_check_branch
    %38 = sbr.rel (0) target = $region17
  $region16: #{cvae_forward.1} parent=0 // pred_region
    _
  $region17: #{cvae_forward.1} parent=0 // pred_fallthru
    _
  // Predicated region
  $region18: #{cvae_forward.1} parent=0 // pred_check
    _
  $region19: #{cvae_forward.1} parent=0 // pred_check_branch
    %40 = sbr.rel (0) target = $region21
  $region20: #{cvae_forward.1} parent=0 // pred_region
    _
  $region21: #{cvae_forward.1} parent=0 // pred_fallthru
    _
  // Predicated region
  $region22: #{cvae_forward.1} parent=0 // pred_check
    _
  $region23: #{cvae_forward.1} parent=0 // pred_check_branch
    %42 = sbr.rel (0) target = $region25
  $region24: #{cvae_forward.1} parent=0 // pred_region
    _
  $region25: #{cvae_forward.1} parent=0 // pred_fallthru
    _
  // Predicated region
  $region26: #{cvae_forward.1} parent=0 // pred_check
    _
  $region27: #{cvae_forward.1} parent=0 // pred_check_branch
    %44 = sbr.rel (0) target = $region29
  $region28: #{cvae_forward.1} parent=0 // pred_region
    _
  $region29: #{cvae_forward.1} parent=0 // pred_fallthru
    _
  // Predicated region
  $region30: #{cvae_forward.1} parent=0 // pred_check
    _
  $region31: #{cvae_forward.1} parent=0 // pred_check_branch
    %46 = sbr.rel (0) target = $region33
  $region32: #{cvae_forward.1} parent=0 // pred_region
    _
  $region33: #{cvae_forward.1} parent=0 // pred_fallthru
    _
  // Predicated region
  $region34: #{cvae_forward.1} parent=0 // pred_check
    _
  $region35: #{cvae_forward.1} parent=0 // pred_check_branch
    %48 = sbr.rel (0) target = $region37
  $region36: #{cvae_forward.1} parent=0 // pred_region
    _
  $region37: #{cvae_forward.1} parent=0 // pred_fallthru
    _
  // Predicated region
  $region38: #{cvae_forward.1} parent=0 // pred_check
    _
  $region39: #{cvae_forward.1} parent=0 // pred_check_branch
    %50 = sbr.rel (0) target = $region41
  $region40: #{cvae_forward.1} parent=0 // pred_region
    _
  $region41: #{cvae_forward.1} parent=0 // pred_fallthru
    _
  // Predicated region
  $region42: #{cvae_forward.1} parent=0 // pred_check
    _
  $region43: #{cvae_forward.1} parent=0 // pred_check_branch
    %52 = sbr.rel (0) target = $region45
  $region44: #{cvae_forward.1} parent=0 // pred_region
    _
  $region45: #{cvae_forward.1} parent=0 // pred_fallthru
    _
  // Predicated region
  $region46: #{cvae_forward.1} parent=0 // pred_check
    _
  $region47: #{cvae_forward.1} parent=0 // pred_check_branch
    %54 = sbr.rel (0) target = $region49
  $region48: #{cvae_forward.1} parent=0 // pred_region
    _
  $region49: #{cvae_forward.1} parent=0 // pred_fallthru
    _
  // Predicated region
  $region50: #{cvae_forward.1} parent=0 // pred_check
    _
  $region51: #{cvae_forward.1} parent=0 // pred_check_branch
    %56 = sbr.rel (0) target = $region53
  $region52: #{cvae_forward.1} parent=0 // pred_region
    _
  $region53: #{cvae_forward.1} parent=0 // pred_fallthru
    _
  // Predicated region
  $region54: #{cvae_forward.1} parent=0 // pred_check
    _
  $region55: #{cvae_forward.1} parent=0 // pred_check_branch
    %58 = sbr.rel (0) target = $region57
  $region56: #{cvae_forward.1} parent=0 // pred_region
    _
  $region57: #{cvae_forward.1} parent=0 // pred_fallthru
    _
  // Predicated region
  $region58: #{cvae_forward.1} parent=0 // pred_check
    _
  $region59: #{cvae_forward.1} parent=0 // pred_check_branch
    %60 = sbr.rel (0) target = $region61
  $region60: #{cvae_forward.1} parent=0 // pred_region
    _
  $region61: #{cvae_forward.1} parent=0 // pred_fallthru
    _
  // Predicated region
  $region62: #{cvae_forward.1} parent=0 // pred_check
    _
  $region63: #{cvae_forward.1} parent=0 // pred_check_branch
    %62 = sbr.rel (0) target = $region65
  $region64: #{cvae_forward.1} parent=0 // pred_region
    _
  $region65: #{cvae_forward.1} parent=0 // pred_fallthru
    _
  // Predicated region
  $region66: #{cvae_forward.1} parent=0 // pred_check
    _
  $region67: #{cvae_forward.1} parent=0 // pred_check_branch
    %64 = sbr.rel (0) target = $region69
  $region68: #{cvae_forward.1} parent=0 // pred_region
    _
  $region69: #{cvae_forward.1} parent=0 // pred_fallthru
    _
  // Predicated region
  $region70: #{cvae_forward.1} parent=0 // pred_check
    _
  $region71: #{cvae_forward.1} parent=0 // pred_check_branch
    %66 = sbr.rel (0) target = $region73
  $region72: #{cvae_forward.1} parent=0 // pred_region
    _
  $region73: #{cvae_forward.1} parent=0 // pred_fallthru
    _
  // Predicated region
  $region74: #{cvae_forward.1} parent=0 // pred_check
    _
  $region75: #{cvae_forward.1} parent=0 // pred_check_branch
    %68 = sbr.rel (0) target = $region77
  $region76: #{cvae_forward.1} parent=0 // pred_region
    _
  $region77: #{cvae_forward.1} parent=0 // pred_fallthru
    _
  // Predicated region
  $region78: #{cvae_forward.1} parent=0 // pred_check
    _
  $region79: #{cvae_forward.1} parent=0 // pred_check_branch
    %70 = sbr.rel (0) target = $region81
  $region80: #{cvae_forward.1} parent=0 // pred_region
    _
  $region81: #{cvae_forward.1} parent=0 // pred_fallthru
    _
  // Predicated region
  $region82: #{cvae_forward.1} parent=0 // pred_check
    _
  $region83: #{cvae_forward.1} parent=0 // pred_check_branch
    %72 = sbr.rel (0) target = $region85
  $region84: #{cvae_forward.1} parent=0 // pred_region
    _
  $region85: #{cvae_forward.1} parent=0 // pred_fallthru
    _
  // Predicated region
  $region86: #{cvae_forward.1} parent=0 // pred_check
    _
  $region87: #{cvae_forward.1} parent=0 // pred_check_branch
    %74 = sbr.rel (0) target = $region89
  $region88: #{cvae_forward.1} parent=0 // pred_region
    _
  $region89: #{cvae_forward.1} parent=0 // pred_fallthru
    _
  // Predicated region
  $region90: #{cvae_forward.1} parent=0 // pred_check
    _
  $region91: #{cvae_forward.1} parent=0 // pred_check_branch
    %76 = sbr.rel (0) target = $region93
  $region92: #{cvae_forward.1} parent=0 // pred_region
    _
  $region93: #{cvae_forward.1} parent=0 // pred_fallthru
    _
  // Predicated region
  $region94: #{cvae_forward.1} parent=0 // pred_check
    _
  $region95: #{cvae_forward.1} parent=0 // pred_check_branch
    %78 = sbr.rel (0) target = $region97
  $region96: #{cvae_forward.1} parent=0 // pred_region
    _
  $region97: #{cvae_forward.1} parent=0 // pred_fallthru
    _
  // Predicated region
  $region98: #{cvae_forward.1} parent=0 // pred_check
    _
  $region99: #{cvae_forward.1} parent=0 // pred_check_branch
    %80 = sbr.rel (0) target = $region101
  $region100: #{cvae_forward.1} parent=0 // pred_region
    _
  $region101: #{cvae_forward.1} parent=0 // pred_fallthru
    _
  // Predicated region
  $region102: #{cvae_forward.1} parent=0 // pred_check
    _
  $region103: #{cvae_forward.1} parent=0 // pred_check_branch
    %82 = sbr.rel (0) target = $region105
  $region104: #{cvae_forward.1} parent=0 // pred_region
    _
  $region105: #{cvae_forward.1} parent=0 // pred_fallthru
    _
  %v84 = vld [vmem:[%s0] sm:$0xff]
  %v85 = vld [vmem:[%s0 + $0x8] sm:$0xff]
  %v86 = vld [vmem:[%s0 + $0x10] sm:$0xff]
  %v87 = vld [vmem:[%s0 + $0x18] sm:$0xff]
  %v88 = vld [vmem:[%s1] sm:$0xff]
  %v89 = vld [vmem:[%s1 + $0x8] sm:$0xff]
  %v90 = vld [vmem:[%s1 + $0x10] sm:$0xff]
  %v91 = vld [vmem:[%s1 + $0x18] sm:$0xff]
  %v92 = vld [vmem:[%s2] sm:$0xff]
  %v93 = vld [vmem:[%s2 + $0x8] sm:$0xff]
  %v94 = vld [vmem:[%s2 + $0x10] sm:$0xff]
  %v95 = vld [vmem:[%s2 + $0x18] sm:$0xff]
  %v96 = vpack.c.bf16 %v85, %v84
  %v97 = vpack.c.bf16 %v87, %v86
  %v98 = vld [vmem:[%s5] sm:$0xff]
  %v99 = vld [vmem:[%s5 + $0x8] sm:$0xff]
  %v100 = vld [vmem:[%s5 + $0x10] sm:$0xff]
  %v101 = vld [vmem:[%s5 + $0x18] sm:$0xff]
  %v102 = vld [vmem:[%s5 + $0x20] sm:$0xff]
  %v103 = vld [vmem:[%s5 + $0x28] sm:$0xff]
  %v104 = vld [vmem:[%s5 + $0x30] sm:$0xff]
  %v105 = vld [vmem:[%s5 + $0x38] sm:$0xff]
  %v106 = vld [vmem:[%s5 + $0x40] sm:$0xff]
  %v107 = vld [vmem:[%s5 + $0x48] sm:$0xff]
  %v108 = vld [vmem:[%s5 + $0x50] sm:$0xff]
  %v109 = vld [vmem:[%s5 + $0x58] sm:$0xff]
  %v110 = vld [vmem:[%s5 + $0x60] sm:$0xff]
  %v111 = vld [vmem:[%s5 + $0x68] sm:$0xff]
  %v112 = vld [vmem:[%s5 + $0x70] sm:$0xff]
  %v113 = vld [vmem:[%s5 + $0x78] sm:$0xff]
  %v114 = vld [vmem:[%s5 + $0x80] sm:$0xff]
  %v115 = vld [vmem:[%s5 + $0x88] sm:$0xff]
  %v116 = vld [vmem:[%s5 + $0x90] sm:$0xff]
  %v117 = vld [vmem:[%s5 + $0x98] sm:$0xff]
  %v118 = vld [vmem:[%s5 + $0xa0] sm:$0xff]
  %v119 = vld [vmem:[%s5 + $0xa8] sm:$0xff]
  %v120 = vld [vmem:[%s5 + $0xb0] sm:$0xff]
  %v121 = vld [vmem:[%s5 + $0xb8] sm:$0xff]
  %v122 = vld [vmem:[%s5 + $0xc0] sm:$0xff]
  %v123 = vld [vmem:[%s5 + $0xc8] sm:$0xff]
  %v124 = vld [vmem:[%s5 + $0xd0] sm:$0xff]
  %v125 = vld [vmem:[%s5 + $0xd8] sm:$0xff]
  %v126 = vld [vmem:[%s5 + $0xe0] sm:$0xff]
  %v127 = vld [vmem:[%s5 + $0xe8] sm:$0xff]
  %v128 = vld [vmem:[%s5 + $0xf0] sm:$0xff]
  %v129 = vld [vmem:[%s5 + $0xf8] sm:$0xff]
  %v130 = vld [vmem:[%s5 + $0x100] sm:$0xff]
  %v131 = vld [vmem:[%s5 + $0x108] sm:$0xff]
  %v132 = vld [vmem:[%s5 + $0x110] sm:$0xff]
  %v133 = vld [vmem:[%s5 + $0x118] sm:$0xff]
  %v134 = vld [vmem:[%s5 + $0x120] sm:$0xff]
  %v135 = vld [vmem:[%s5 + $0x128] sm:$0xff]
  %v136 = vld [vmem:[%s5 + $0x130] sm:$0xff]
  %v137 = vld [vmem:[%s5 + $0x138] sm:$0xff]
  %v138 = vld [vmem:[%s5 + $0x140] sm:$0xff]
  %v139 = vld [vmem:[%s5 + $0x148] sm:$0xff]
  %v140 = vld [vmem:[%s5 + $0x150] sm:$0xff]
  %v141 = vld [vmem:[%s5 + $0x158] sm:$0xff]
  %v142 = vld [vmem:[%s5 + $0x160] sm:$0xff]
  %v143 = vld [vmem:[%s5 + $0x168] sm:$0xff]
  %v144 = vld [vmem:[%s5 + $0x170] sm:$0xff]
  %v145 = vld [vmem:[%s5 + $0x178] sm:$0xff]
  %v146 = vld [vmem:[%s5 + $0x180] sm:$0xff]
  %v147 = vld [vmem:[%s5 + $0x188] sm:$0xff]
  %v148 = vld [vmem:[%s5 + $0x190] sm:$0xff]
  %v149 = vld [vmem:[%s5 + $0x198] sm:$0xff]
  %v150 = vld [vmem:[%s5 + $0x1a0] sm:$0xff]
  %v151 = vld [vmem:[%s5 + $0x1a8] sm:$0xff]
  %v152 = vld [vmem:[%s5 + $0x1b0] sm:$0xff]
  %v153 = vld [vmem:[%s5 + $0x1b8] sm:$0xff]
  %v154 = vld [vmem:[%s5 + $0x1c0] sm:$0xff]
  %v155 = vld [vmem:[%s5 + $0x1c8] sm:$0xff]
  %v156 = vld [vmem:[%s5 + $0x1d0] sm:$0xff]
  %v157 = vld [vmem:[%s5 + $0x1d8] sm:$0xff]
  %v158 = vld [vmem:[%s5 + $0x1e0] sm:$0xff]
  %v159 = vld [vmem:[%s5 + $0x1e8] sm:$0xff]
  %v160 = vld [vmem:[%s5 + $0x1f0] sm:$0xff]
  %v161 = vld [vmem:[%s5 + $0x1f8] sm:$0xff]
  %v162 = vld [vmem:[%s5 + $0x200] sm:$0xff]
  %v163 = vld [vmem:[%s5 + $0x208] sm:$0xff]
  %v164 = vld [vmem:[%s5 + $0x210] sm:$0xff]
  %v165 = vld [vmem:[%s5 + $0x218] sm:$0xff]
  %v166 = vld [vmem:[%s5 + $0x220] sm:$0xff]
  %v167 = vld [vmem:[%s5 + $0x228] sm:$0xff]
  %v168 = vld [vmem:[%s5 + $0x230] sm:$0xff]
  %v169 = vld [vmem:[%s5 + $0x238] sm:$0xff]
  %v170 = vld [vmem:[%s5 + $0x240] sm:$0xff]
  %v171 = vld [vmem:[%s5 + $0x248] sm:$0xff]
  %v172 = vld [vmem:[%s5 + $0x250] sm:$0xff]
  %v173 = vld [vmem:[%s5 + $0x258] sm:$0xff]
  %v174 = vld [vmem:[%s5 + $0x260] sm:$0xff]
  %v175 = vld [vmem:[%s5 + $0x268] sm:$0xff]
  %v176 = vld [vmem:[%s5 + $0x270] sm:$0xff]
  %v177 = vld [vmem:[%s5 + $0x278] sm:$0xff]
  %v178 = vld [vmem:[%s5 + $0x280] sm:$0xff]
  %v179 = vld [vmem:[%s5 + $0x288] sm:$0xff]
  %v180 = vld [vmem:[%s5 + $0x290] sm:$0xff]
  %v181 = vld [vmem:[%s5 + $0x298] sm:$0xff]
  %v182 = vld [vmem:[%s5 + $0x2a0] sm:$0xff]
  %v183 = vld [vmem:[%s5 + $0x2a8] sm:$0xff]
  %v184 = vld [vmem:[%s5 + $0x2b0] sm:$0xff]
  %v185 = vld [vmem:[%s5 + $0x2b8] sm:$0xff]
  %v186 = vld [vmem:[%s5 + $0x2c0] sm:$0xff]
  %v187 = vld [vmem:[%s5 + $0x2c8] sm:$0xff]
  %v188 = vld [vmem:[%s5 + $0x2d0] sm:$0xff]
  %v189 = vld [vmem:[%s5 + $0x2d8] sm:$0xff]
  %v190 = vld [vmem:[%s5 + $0x2e0] sm:$0xff]
  %v191 = vld [vmem:[%s5 + $0x2e8] sm:$0xff]
  %v192 = vld [vmem:[%s5 + $0x2f0] sm:$0xff]
  %v193 = vld [vmem:[%s5 + $0x2f8] sm:$0xff]
  %v194 = vld [vmem:[%s5 + $0x300] sm:$0xff]
  %v195 = vld [vmem:[%s5 + $0x308] sm:$0xff]
  %v196 = vld [vmem:[%s5 + $0x310] sm:$0xff]
  %v197 = vld [vmem:[%s5 + $0x318] sm:$0xff]
  %v198 = vld [vmem:[%s5 + $0x320] sm:$0xff]
  %v199 = vld [vmem:[%s5 + $0x328] sm:$0xff]
  %v200 = vld [vmem:[%s5 + $0x330] sm:$0xff]
  %v201 = vld [vmem:[%s5 + $0x338] sm:$0xff]
  %v202 = vld [vmem:[%s5 + $0x340] sm:$0xff]
  %v203 = vld [vmem:[%s5 + $0x348] sm:$0xff]
  %v204 = vld [vmem:[%s5 + $0x350] sm:$0xff]
  %v205 = vld [vmem:[%s5 + $0x358] sm:$0xff]
  %v206 = vld [vmem:[%s5 + $0x360] sm:$0xff]
  %v207 = vld [vmem:[%s5 + $0x368] sm:$0xff]
  %v208 = vld [vmem:[%s5 + $0x370] sm:$0xff]
  %v209 = vld [vmem:[%s5 + $0x378] sm:$0xff]
  %v210 = vld [vmem:[%s5 + $0x380] sm:$0xff]
  %v211 = vld [vmem:[%s5 + $0x388] sm:$0xff]
  %v212 = vld [vmem:[%s5 + $0x390] sm:$0xff]
  %v213 = vld [vmem:[%s5 + $0x398] sm:$0xff]
  %v214 = vld [vmem:[%s5 + $0x3a0] sm:$0xff]
  %v215 = vld [vmem:[%s5 + $0x3a8] sm:$0xff]
  %v216 = vld [vmem:[%s5 + $0x3b0] sm:$0xff]
  %v217 = vld [vmem:[%s5 + $0x3b8] sm:$0xff]
  %v218 = vld [vmem:[%s5 + $0x3c0] sm:$0xff]
  %v219 = vld [vmem:[%s5 + $0x3c8] sm:$0xff]
  %v220 = vld [vmem:[%s5 + $0x3d0] sm:$0xff]
  %v221 = vld [vmem:[%s5 + $0x3d8] sm:$0xff]
  %v222 = vld [vmem:[%s5 + $0x3e0] sm:$0xff]
  %v223 = vld [vmem:[%s5 + $0x3e8] sm:$0xff]
  %v224 = vld [vmem:[%s5 + $0x3f0] sm:$0xff]
  %v225 = vld [vmem:[%s5 + $0x3f8] sm:$0xff]
  %v226 = vld [vmem:[%s6] sm:$0xff]
  %v227 = vld [vmem:[%s6 + $0x8] sm:$0xff]
  %v230 = vlaneseq
  %v231 = vshrl.u32 %v230, 7
  %v232 = vsub.s32 0, %v231
  %v233 = vrot.slane %v226, %v232
  %v234 = vlaneseq
  %v235 = vshrl.u32 %v234, 7
  %v236 = vsub.s32 1, %v235
  %v237 = vrot.slane %v226, %v236
  %v238 = vlaneseq
  %v239 = vshrl.u32 %v238, 7
  %v240 = vsub.s32 2, %v239
  %v241 = vrot.slane %v226, %v240
  %v242 = vlaneseq
  %v243 = vshrl.u32 %v242, 7
  %v244 = vsub.s32 3, %v243
  %v245 = vrot.slane %v226, %v244
  %v246 = vlaneseq
  %v247 = vshrl.u32 %v246, 7
  %v248 = vsub.s32 4, %v247
  %v249 = vrot.slane %v226, %v248
  %v250 = vlaneseq
  %v251 = vshrl.u32 %v250, 7
  %v252 = vsub.s32 5, %v251
  %v253 = vrot.slane %v226, %v252
  %v254 = vlaneseq
  %v255 = vshrl.u32 %v254, 7
  %v256 = vsub.s32 6, %v255
  %v257 = vrot.slane %v226, %v256
  %v258 = vlaneseq
  %v259 = vshrl.u32 %v258, 7
  %v260 = vsub.s32 7, %v259
  %v261 = vrot.slane %v226, %v260
  %v262 = vlaneseq
  %v263 = vshrl.u32 %v262, 7
  %v264 = vsub.s32 0, %v263
  %v265 = vrot.slane %v227, %v264
  %v266 = vlaneseq
  %v267 = vshrl.u32 %v266, 7
  %v268 = vsub.s32 1, %v267
  %v269 = vrot.slane %v227, %v268
  %v270 = vlaneseq
  %v271 = vshrl.u32 %v270, 7
  %v272 = vsub.s32 2, %v271
  %v273 = vrot.slane %v227, %v272
  %v274 = vlaneseq
  %v275 = vshrl.u32 %v274, 7
  %v276 = vsub.s32 3, %v275
  %v277 = vrot.slane %v227, %v276
  %v278 = vlaneseq
  %v279 = vshrl.u32 %v278, 7
  %v280 = vsub.s32 4, %v279
  %v281 = vrot.slane %v227, %v280
  %v282 = vlaneseq
  %v283 = vshrl.u32 %v282, 7
  %v284 = vsub.s32 5, %v283
  %v285 = vrot.slane %v227, %v284
  %v286 = vlaneseq
  %v287 = vshrl.u32 %v286, 7
  %v288 = vsub.s32 6, %v287
  %v289 = vrot.slane %v227, %v288
  %v290 = vlaneseq
  %v291 = vshrl.u32 %v290, 7
  %v292 = vsub.s32 7, %v291
  %v293 = vrot.slane %v227, %v292
  %v438 = vunpack.c.l.b16 %v98
  %v439 = vunpack.c.h.b16 %v98
  %v440 = vunpack.c.l.b16 %v99
  %v441 = vunpack.c.h.b16 %v99
  %v442 = vunpack.c.l.b16 %v100
  %v443 = vunpack.c.h.b16 %v100
  %v444 = vunpack.c.l.b16 %v101
  %v445 = vunpack.c.h.b16 %v101
  %v446 = vunpack.c.l.b16 %v102
  %v447 = vunpack.c.h.b16 %v102
  %v448 = vunpack.c.l.b16 %v103
  %v449 = vunpack.c.h.b16 %v103
  %v450 = vunpack.c.l.b16 %v104
  %v451 = vunpack.c.h.b16 %v104
  %v452 = vunpack.c.l.b16 %v105
  %v453 = vunpack.c.h.b16 %v105
  %v454 = vunpack.c.l.b16 %v106
  %v455 = vunpack.c.h.b16 %v106
  %v456 = vunpack.c.l.b16 %v107
  %v457 = vunpack.c.h.b16 %v107
  %v458 = vunpack.c.l.b16 %v108
  %v459 = vunpack.c.h.b16 %v108
  %v460 = vunpack.c.l.b16 %v109
  %v461 = vunpack.c.h.b16 %v109
  %v462 = vunpack.c.l.b16 %v110
  %v463 = vunpack.c.h.b16 %v110
  %v464 = vunpack.c.l.b16 %v111
  %v465 = vunpack.c.h.b16 %v111
  %v466 = vunpack.c.l.b16 %v112
  %v467 = vunpack.c.h.b16 %v112
  %v468 = vunpack.c.l.b16 %v113
  %v469 = vunpack.c.h.b16 %v113
  %v470 = vunpack.c.l.b16 %v114
  %v471 = vunpack.c.h.b16 %v114
  %v472 = vunpack.c.l.b16 %v115
  %v473 = vunpack.c.h.b16 %v115
  %v474 = vunpack.c.l.b16 %v116
  %v475 = vunpack.c.h.b16 %v116
  %v476 = vunpack.c.l.b16 %v117
  %v477 = vunpack.c.h.b16 %v117
  %v478 = vunpack.c.l.b16 %v118
  %v479 = vunpack.c.h.b16 %v118
  %v480 = vunpack.c.l.b16 %v119
  %v481 = vunpack.c.h.b16 %v119
  %v482 = vunpack.c.l.b16 %v120
  %v483 = vunpack.c.h.b16 %v120
  %v484 = vunpack.c.l.b16 %v121
  %v485 = vunpack.c.h.b16 %v121
  %v486 = vunpack.c.l.b16 %v122
  %v487 = vunpack.c.h.b16 %v122
  %v488 = vunpack.c.l.b16 %v123
  %v489 = vunpack.c.h.b16 %v123
  %v490 = vunpack.c.l.b16 %v124
  %v491 = vunpack.c.h.b16 %v124
  %v492 = vunpack.c.l.b16 %v125
  %v493 = vunpack.c.h.b16 %v125
  %v494 = vunpack.c.l.b16 %v126
  %v495 = vunpack.c.h.b16 %v126
  %v496 = vunpack.c.l.b16 %v127
  %v497 = vunpack.c.h.b16 %v127
  %v498 = vunpack.c.l.b16 %v128
  %v499 = vunpack.c.h.b16 %v128
  %v500 = vunpack.c.l.b16 %v129
  %v501 = vunpack.c.h.b16 %v129
  %v502 = vunpack.c.l.b16 %v130
  %v503 = vunpack.c.h.b16 %v130
  %v504 = vunpack.c.l.b16 %v131
  %v505 = vunpack.c.h.b16 %v131
  %v506 = vunpack.c.l.b16 %v132
  %v507 = vunpack.c.h.b16 %v132
  %v508 = vunpack.c.l.b16 %v133
  %v509 = vunpack.c.h.b16 %v133
  %v510 = vunpack.c.l.b16 %v134
  %v511 = vunpack.c.h.b16 %v134
  %v512 = vunpack.c.l.b16 %v135
  %v513 = vunpack.c.h.b16 %v135
  %v514 = vunpack.c.l.b16 %v136
  %v515 = vunpack.c.h.b16 %v136
  %v516 = vunpack.c.l.b16 %v137
  %v517 = vunpack.c.h.b16 %v137
  %v518 = vunpack.c.l.b16 %v138
  %v519 = vunpack.c.h.b16 %v138
  %v520 = vunpack.c.l.b16 %v139
  %v521 = vunpack.c.h.b16 %v139
  %v522 = vunpack.c.l.b16 %v140
  %v523 = vunpack.c.h.b16 %v140
  %v524 = vunpack.c.l.b16 %v141
  %v525 = vunpack.c.h.b16 %v141
  %v526 = vunpack.c.l.b16 %v142
  %v527 = vunpack.c.h.b16 %v142
  %v528 = vunpack.c.l.b16 %v143
  %v529 = vunpack.c.h.b16 %v143
  %v530 = vunpack.c.l.b16 %v144
  %v531 = vunpack.c.h.b16 %v144
  %v532 = vunpack.c.l.b16 %v145
  %v533 = vunpack.c.h.b16 %v145
  %v534 = vunpack.c.l.b16 %v146
  %v535 = vunpack.c.h.b16 %v146
  %v536 = vunpack.c.l.b16 %v147
  %v537 = vunpack.c.h.b16 %v147
  %v538 = vunpack.c.l.b16 %v148
  %v539 = vunpack.c.h.b16 %v148
  %v540 = vunpack.c.l.b16 %v149
  %v541 = vunpack.c.h.b16 %v149
  %v542 = vunpack.c.l.b16 %v150
  %v543 = vunpack.c.h.b16 %v150
  %v544 = vunpack.c.l.b16 %v151
  %v545 = vunpack.c.h.b16 %v151
  %v546 = vunpack.c.l.b16 %v152
  %v547 = vunpack.c.h.b16 %v152
  %v548 = vunpack.c.l.b16 %v153
  %v549 = vunpack.c.h.b16 %v153
  %v550 = vunpack.c.l.b16 %v154
  %v551 = vunpack.c.h.b16 %v154
  %v552 = vunpack.c.l.b16 %v155
  %v553 = vunpack.c.h.b16 %v155
  %v554 = vunpack.c.l.b16 %v156
  %v555 = vunpack.c.h.b16 %v156
  %v556 = vunpack.c.l.b16 %v157
  %v557 = vunpack.c.h.b16 %v157
  %v558 = vunpack.c.l.b16 %v158
  %v559 = vunpack.c.h.b16 %v158
  %v560 = vunpack.c.l.b16 %v159
  %v561 = vunpack.c.h.b16 %v159
  %v562 = vunpack.c.l.b16 %v160
  %v563 = vunpack.c.h.b16 %v160
  %v564 = vunpack.c.l.b16 %v161
  %v565 = vunpack.c.h.b16 %v161
  %v566 = vunpack.c.l.b16 %v162
  %v567 = vunpack.c.h.b16 %v162
  %v568 = vunpack.c.l.b16 %v163
  %v569 = vunpack.c.h.b16 %v163
  %v570 = vunpack.c.l.b16 %v164
  %v571 = vunpack.c.h.b16 %v164
  %v572 = vunpack.c.l.b16 %v165
  %v573 = vunpack.c.h.b16 %v165
  %v574 = vunpack.c.l.b16 %v166
  %v575 = vunpack.c.h.b16 %v166
  %v576 = vunpack.c.l.b16 %v167
  %v577 = vunpack.c.h.b16 %v167
  %v578 = vunpack.c.l.b16 %v168
  %v579 = vunpack.c.h.b16 %v168
  %v580 = vunpack.c.l.b16 %v169
  %v581 = vunpack.c.h.b16 %v169
  %v582 = vunpack.c.l.b16 %v170
  %v583 = vunpack.c.h.b16 %v170
  %v584 = vunpack.c.l.b16 %v171
  %v585 = vunpack.c.h.b16 %v171
  %v586 = vunpack.c.l.b16 %v172
  %v587 = vunpack.c.h.b16 %v172
  %v588 = vunpack.c.l.b16 %v173
  %v589 = vunpack.c.h.b16 %v173
  %v590 = vunpack.c.l.b16 %v174
  %v591 = vunpack.c.h.b16 %v174
  %v592 = vunpack.c.l.b16 %v175
  %v593 = vunpack.c.h.b16 %v175
  %v594 = vunpack.c.l.b16 %v176
  %v595 = vunpack.c.h.b16 %v176
  %v596 = vunpack.c.l.b16 %v177
  %v597 = vunpack.c.h.b16 %v177
  %v598 = vunpack.c.l.b16 %v178
  %v599 = vunpack.c.h.b16 %v178
  %v600 = vunpack.c.l.b16 %v179
  %v601 = vunpack.c.h.b16 %v179
  %v602 = vunpack.c.l.b16 %v180
  %v603 = vunpack.c.h.b16 %v180
  %v604 = vunpack.c.l.b16 %v181
  %v605 = vunpack.c.h.b16 %v181
  %v606 = vunpack.c.l.b16 %v182
  %v607 = vunpack.c.h.b16 %v182
  %v608 = vunpack.c.l.b16 %v183
  %v609 = vunpack.c.h.b16 %v183
  %v610 = vunpack.c.l.b16 %v184
  %v611 = vunpack.c.h.b16 %v184
  %v612 = vunpack.c.l.b16 %v185
  %v613 = vunpack.c.h.b16 %v185
  %v614 = vunpack.c.l.b16 %v186
  %v615 = vunpack.c.h.b16 %v186
  %v616 = vunpack.c.l.b16 %v187
  %v617 = vunpack.c.h.b16 %v187
  %v618 = vunpack.c.l.b16 %v188
  %v619 = vunpack.c.h.b16 %v188
  %v620 = vunpack.c.l.b16 %v189
  %v621 = vunpack.c.h.b16 %v189
  %v622 = vunpack.c.l.b16 %v190
  %v623 = vunpack.c.h.b16 %v190
  %v624 = vunpack.c.l.b16 %v191
  %v625 = vunpack.c.h.b16 %v191
  %v626 = vunpack.c.l.b16 %v192
  %v627 = vunpack.c.h.b16 %v192
  %v628 = vunpack.c.l.b16 %v193
  %v629 = vunpack.c.h.b16 %v193
  %v630 = vunpack.c.l.b16 %v194
  %v631 = vunpack.c.h.b16 %v194
  %v632 = vunpack.c.l.b16 %v195
  %v633 = vunpack.c.h.b16 %v195
  %v634 = vunpack.c.l.b16 %v196
  %v635 = vunpack.c.h.b16 %v196
  %v636 = vunpack.c.l.b16 %v197
  %v637 = vunpack.c.h.b16 %v197
  %v638 = vunpack.c.l.b16 %v198
  %v639 = vunpack.c.h.b16 %v198
  %v640 = vunpack.c.l.b16 %v199
  %v641 = vunpack.c.h.b16 %v199
  %v642 = vunpack.c.l.b16 %v200
  %v643 = vunpack.c.h.b16 %v200
  %v644 = vunpack.c.l.b16 %v201
  %v645 = vunpack.c.h.b16 %v201
  %v646 = vunpack.c.l.b16 %v202
  %v647 = vunpack.c.h.b16 %v202
  %v648 = vunpack.c.l.b16 %v203
  %v649 = vunpack.c.h.b16 %v203
  %v650 = vunpack.c.l.b16 %v204
  %v651 = vunpack.c.h.b16 %v204
  %v652 = vunpack.c.l.b16 %v205
  %v653 = vunpack.c.h.b16 %v205
  %v654 = vunpack.c.l.b16 %v206
  %v655 = vunpack.c.h.b16 %v206
  %v656 = vunpack.c.l.b16 %v207
  %v657 = vunpack.c.h.b16 %v207
  %v658 = vunpack.c.l.b16 %v208
  %v659 = vunpack.c.h.b16 %v208
  %v660 = vunpack.c.l.b16 %v209
  %v661 = vunpack.c.h.b16 %v209
  %v662 = vunpack.c.l.b16 %v210
  %v663 = vunpack.c.h.b16 %v210
  %v664 = vunpack.c.l.b16 %v211
  %v665 = vunpack.c.h.b16 %v211
  %v666 = vunpack.c.l.b16 %v212
  %v667 = vunpack.c.h.b16 %v212
  %v668 = vunpack.c.l.b16 %v213
  %v669 = vunpack.c.h.b16 %v213
  %v670 = vunpack.c.l.b16 %v214
  %v671 = vunpack.c.h.b16 %v214
  %v672 = vunpack.c.l.b16 %v215
  %v673 = vunpack.c.h.b16 %v215
  %v674 = vunpack.c.l.b16 %v216
  %v675 = vunpack.c.h.b16 %v216
  %v676 = vunpack.c.l.b16 %v217
  %v677 = vunpack.c.h.b16 %v217
  %v678 = vunpack.c.l.b16 %v218
  %v679 = vunpack.c.h.b16 %v218
  %v680 = vunpack.c.l.b16 %v219
  %v681 = vunpack.c.h.b16 %v219
  %v682 = vunpack.c.l.b16 %v220
  %v683 = vunpack.c.h.b16 %v220
  %v684 = vunpack.c.l.b16 %v221
  %v685 = vunpack.c.h.b16 %v221
  %v686 = vunpack.c.l.b16 %v222
  %v687 = vunpack.c.h.b16 %v222
  %v688 = vunpack.c.l.b16 %v223
  %v689 = vunpack.c.h.b16 %v223
  %v690 = vunpack.c.l.b16 %v224
  %v691 = vunpack.c.h.b16 %v224
  %v692 = vunpack.c.l.b16 %v225
  %v693 = vunpack.c.h.b16 %v225
  %v694 = vpack.c.b16 %v454, %v438
  %v695 = vpack.c.b16 %v455, %v439
  %v696 = vpack.c.b16 %v456, %v440
  %v697 = vpack.c.b16 %v457, %v441
  %v698 = vpack.c.b16 %v458, %v442
  %v699 = vpack.c.b16 %v459, %v443
  %v700 = vpack.c.b16 %v460, %v444
  %v701 = vpack.c.b16 %v461, %v445
  %v702 = vpack.c.b16 %v462, %v446
  %v703 = vpack.c.b16 %v463, %v447
  %v704 = vpack.c.b16 %v464, %v448
  %v705 = vpack.c.b16 %v465, %v449
  %v706 = vpack.c.b16 %v466, %v450
  %v707 = vpack.c.b16 %v467, %v451
  %v708 = vpack.c.b16 %v468, %v452
  %v709 = vpack.c.b16 %v469, %v453
  %v710 = vpack.c.b16 %v486, %v470
  %v711 = vpack.c.b16 %v487, %v471
  %v712 = vpack.c.b16 %v488, %v472
  %v713 = vpack.c.b16 %v489, %v473
  %v714 = vpack.c.b16 %v490, %v474
  %v715 = vpack.c.b16 %v491, %v475
  %v716 = vpack.c.b16 %v492, %v476
  %v717 = vpack.c.b16 %v493, %v477
  %v718 = vpack.c.b16 %v494, %v478
  %v719 = vpack.c.b16 %v495, %v479
  %v720 = vpack.c.b16 %v496, %v480
  %v721 = vpack.c.b16 %v497, %v481
  %v722 = vpack.c.b16 %v498, %v482
  %v723 = vpack.c.b16 %v499, %v483
  %v724 = vpack.c.b16 %v500, %v484
  %v725 = vpack.c.b16 %v501, %v485
  %v726 = vpack.c.b16 %v518, %v502
  %v727 = vpack.c.b16 %v519, %v503
  %v728 = vpack.c.b16 %v520, %v504
  %v729 = vpack.c.b16 %v521, %v505
  %v730 = vpack.c.b16 %v522, %v506
  %v731 = vpack.c.b16 %v523, %v507
  %v732 = vpack.c.b16 %v524, %v508
  %v733 = vpack.c.b16 %v525, %v509
  %v734 = vpack.c.b16 %v526, %v510
  %v735 = vpack.c.b16 %v527, %v511
  %v736 = vpack.c.b16 %v528, %v512
  %v737 = vpack.c.b16 %v529, %v513
  %v738 = vpack.c.b16 %v530, %v514
  %v739 = vpack.c.b16 %v531, %v515
  %v740 = vpack.c.b16 %v532, %v516
  %v741 = vpack.c.b16 %v533, %v517
  %v742 = vpack.c.b16 %v550, %v534
  %v743 = vpack.c.b16 %v551, %v535
  %v744 = vpack.c.b16 %v552, %v536
  %v745 = vpack.c.b16 %v553, %v537
  %v746 = vpack.c.b16 %v554, %v538
  %v747 = vpack.c.b16 %v555, %v539
  %v748 = vpack.c.b16 %v556, %v540
  %v749 = vpack.c.b16 %v557, %v541
  %v750 = vpack.c.b16 %v558, %v542
  %v751 = vpack.c.b16 %v559, %v543
  %v752 = vpack.c.b16 %v560, %v544
  %v753 = vpack.c.b16 %v561, %v545
  %v754 = vpack.c.b16 %v562, %v546
  %v755 = vpack.c.b16 %v563, %v547
  %v756 = vpack.c.b16 %v564, %v548
  %v757 = vpack.c.b16 %v565, %v549
  %v758 = vpack.c.b16 %v582, %v566
  %v759 = vpack.c.b16 %v583, %v567
  %v760 = vpack.c.b16 %v584, %v568
  %v761 = vpack.c.b16 %v585, %v569
  %v762 = vpack.c.b16 %v586, %v570
  %v763 = vpack.c.b16 %v587, %v571
  %v764 = vpack.c.b16 %v588, %v572
  %v765 = vpack.c.b16 %v589, %v573
  %v766 = vpack.c.b16 %v590, %v574
  %v767 = vpack.c.b16 %v591, %v575
  %v768 = vpack.c.b16 %v592, %v576
  %v769 = vpack.c.b16 %v593, %v577
  %v770 = vpack.c.b16 %v594, %v578
  %v771 = vpack.c.b16 %v595, %v579
  %v772 = vpack.c.b16 %v596, %v580
  %v773 = vpack.c.b16 %v597, %v581
  %v774 = vpack.c.b16 %v614, %v598
  %v775 = vpack.c.b16 %v615, %v599
  %v776 = vpack.c.b16 %v616, %v600
  %v777 = vpack.c.b16 %v617, %v601
  %v778 = vpack.c.b16 %v618, %v602
  %v779 = vpack.c.b16 %v619, %v603
  %v780 = vpack.c.b16 %v620, %v604
  %v781 = vpack.c.b16 %v621, %v605
  %v782 = vpack.c.b16 %v622, %v606
  %v783 = vpack.c.b16 %v623, %v607
  %v784 = vpack.c.b16 %v624, %v608
  %v785 = vpack.c.b16 %v625, %v609
  %v786 = vpack.c.b16 %v626, %v610
  %v787 = vpack.c.b16 %v627, %v611
  %v788 = vpack.c.b16 %v628, %v612
  %v789 = vpack.c.b16 %v629, %v613
  %v790 = vpack.c.b16 %v646, %v630
  %v791 = vpack.c.b16 %v647, %v631
  %v792 = vpack.c.b16 %v648, %v632
  %v793 = vpack.c.b16 %v649, %v633
  %v794 = vpack.c.b16 %v650, %v634
  %v795 = vpack.c.b16 %v651, %v635
  %v796 = vpack.c.b16 %v652, %v636
  %v797 = vpack.c.b16 %v653, %v637
  %v798 = vpack.c.b16 %v654, %v638
  %v799 = vpack.c.b16 %v655, %v639
  %v800 = vpack.c.b16 %v656, %v640
  %v801 = vpack.c.b16 %v657, %v641
  %v802 = vpack.c.b16 %v658, %v642
  %v803 = vpack.c.b16 %v659, %v643
  %v804 = vpack.c.b16 %v660, %v644
  %v805 = vpack.c.b16 %v661, %v645
  %v806 = vpack.c.b16 %v678, %v662
  %v807 = vpack.c.b16 %v679, %v663
  %v808 = vpack.c.b16 %v680, %v664
  %v809 = vpack.c.b16 %v681, %v665
  %v810 = vpack.c.b16 %v682, %v666
  %v811 = vpack.c.b16 %v683, %v667
  %v812 = vpack.c.b16 %v684, %v668
  %v813 = vpack.c.b16 %v685, %v669
  %v814 = vpack.c.b16 %v686, %v670
  %v815 = vpack.c.b16 %v687, %v671
  %v816 = vpack.c.b16 %v688, %v672
  %v817 = vpack.c.b16 %v689, %v673
  %v818 = vpack.c.b16 %v690, %v674
  %v819 = vpack.c.b16 %v691, %v675
  %v820 = vpack.c.b16 %v692, %v676
  %v821 = vpack.c.b16 %v693, %v677
  %950 = vmatprep.subr.bf16.mxu0 %v807
  %951 = vmatpush1.bf16.msra.mxu0 %v806
  %952 = vmatprep.subr.bf16.mxu0 %v791
  %953 = vmatpush1.bf16.msra.mxu0 %v790
  %954 = vmatprep.subr.bf16.mxu0 %v775
  %955 = vmatpush1.bf16.msra.mxu0 %v774
  %956 = vmatprep.subr.bf16.mxu0 %v759
  %957 = vmatpush1.bf16.msra.mxu0 %v758
  %958 = vmatprep.subr.bf16.mxu0 %v743
  %959 = vmatpush1.bf16.msra.mxu0 %v742
  %960 = vmatprep.subr.bf16.mxu0 %v727
  %961 = vmatpush1.bf16.msra.mxu0 %v726
  %962 = vmatprep.subr.bf16.mxu0 %v711
  %963 = vmatpush1.bf16.msra.mxu0 %v710
  %964 = vmatprep.subr.bf16.mxu0 %v695
  %965 = vmatpush1.bf16.msra.mxu0 %v694
  %966 = vmatprep.subr.bf16.mxu0 0
  %967 = vmatpush2.bf16.msra.mxu0 0
  %968 = vmatprep.subr.bf16.mxu0 0
  %969 = vmatpush2.bf16.msra.mxu0 0
  %970 = vmatprep.subr.bf16.mxu0 0
  %971 = vmatpush2.bf16.msra.mxu0 0
  %972 = vmatprep.subr.bf16.mxu0 0
  %973 = vmatpush2.bf16.msra.mxu0 0
  %974 = vmatprep.subr.bf16.mxu0 0
  %975 = vmatpush2.bf16.msra.mxu0 0
  %976 = vmatprep.subr.bf16.mxu0 0
  %977 = vmatpush2.bf16.msra.mxu0 0
  %978 = vmatprep.subr.bf16.mxu0 0
  %979 = vmatpush2.bf16.msra.mxu0 0
  %980 = vmatprep.subr.bf16.mxu0 0
  %981 = vmatpush2.bf16.msra.mxu0 0
  %982 = vmatprep.mubr.bf16.mxu0 0
  %983 = vmatmul.mubr.bf16.gmra.mxu0 %v96
  %v984 = vpop.f32.mrf.mxu0
  %v985 = vadd.f32 %v233, %v984
  %v986 = vpop.f32.mrf.mxu0
  %v987 = vadd.f32 %v237, %v986
  %v988 = vpop.f32.mrf.mxu0
  %v989 = vadd.f32 %v233, %v988
  %v990 = vpop.f32.mrf.mxu0
  %v991 = vadd.f32 %v237, %v990
  %992 = vmatprep.mubr.bf16.mxu0 0
  %993 = vmatmul.mubr.bf16.gmra.mxu0 %v97
  %v994 = vpop.f32.mrf.mxu0
  %v995 = vadd.f32 %v233, %v994
  %v996 = vpop.f32.mrf.mxu0
  %v997 = vadd.f32 %v237, %v996
  %v998 = vpop.f32.mrf.mxu0
  %v999 = vadd.f32 %v233, %v998
  %v1000 = vpop.f32.mrf.mxu0
  %v1001 = vadd.f32 %v237, %v1000
  %1002 = vdwg.mxu0
  %1003 = vmatprep.subr.bf16.mxu0 %v809
  %1004 = vmatpush1.bf16.msra.mxu0 %v808
  %1005 = vmatprep.subr.bf16.mxu0 %v793
  %1006 = vmatpush1.bf16.msra.mxu0 %v792
  %1007 = vmatprep.subr.bf16.mxu0 %v777
  %1008 = vmatpush1.bf16.msra.mxu0 %v776
  %1009 = vmatprep.subr.bf16.mxu0 %v761
  %1010 = vmatpush1.bf16.msra.mxu0 %v760
  %1011 = vmatprep.subr.bf16.mxu0 %v745
  %1012 = vmatpush1.bf16.msra.mxu0 %v744
  %1013 = vmatprep.subr.bf16.mxu0 %v729
  %1014 = vmatpush1.bf16.msra.mxu0 %v728
  %1015 = vmatprep.subr.bf16.mxu0 %v713
  %1016 = vmatpush1.bf16.msra.mxu0 %v712
  %1017 = vmatprep.subr.bf16.mxu0 %v697
  %1018 = vmatpush1.bf16.msra.mxu0 %v696
  %1019 = vmatprep.subr.bf16.mxu0 0
  %1020 = vmatpush2.bf16.msra.mxu0 0
  %1021 = vmatprep.subr.bf16.mxu0 0
  %1022 = vmatpush2.bf16.msra.mxu0 0
  %1023 = vmatprep.subr.bf16.mxu0 0
  %1024 = vmatpush2.bf16.msra.mxu0 0
  %1025 = vmatprep.subr.bf16.mxu0 0
  %1026 = vmatpush2.bf16.msra.mxu0 0
  %1027 = vmatprep.subr.bf16.mxu0 0
  %1028 = vmatpush2.bf16.msra.mxu0 0
  %1029 = vmatprep.subr.bf16.mxu0 0
  %1030 = vmatpush2.bf16.msra.mxu0 0
  %1031 = vmatprep.subr.bf16.mxu0 0
  %1032 = vmatpush2.bf16.msra.mxu0 0
  %1033 = vmatprep.subr.bf16.mxu0 0
  %1034 = vmatpush2.bf16.msra.mxu0 0
  %1035 = vmatprep.mubr.bf16.mxu0 0
  %1036 = vmatmul.mubr.bf16.gmra.mxu0 %v96
  %v1037 = vpop.f32.mrf.mxu0
  %v1038 = vadd.f32 %v241, %v1037
  %v1039 = vpop.f32.mrf.mxu0
  %v1040 = vadd.f32 %v245, %v1039
  %v1041 = vpop.f32.mrf.mxu0
  %v1042 = vadd.f32 %v241, %v1041
  %v1043 = vpop.f32.mrf.mxu0
  %v1044 = vadd.f32 %v245, %v1043
  %1045 = vmatprep.mubr.bf16.mxu0 0
  %1046 = vmatmul.mubr.bf16.gmra.mxu0 %v97
  %v1047 = vpop.f32.mrf.mxu0
  %v1048 = vadd.f32 %v241, %v1047
  %v1049 = vpop.f32.mrf.mxu0
  %v1050 = vadd.f32 %v245, %v1049
  %v1051 = vpop.f32.mrf.mxu0
  %v1052 = vadd.f32 %v241, %v1051
  %v1053 = vpop.f32.mrf.mxu0
  %v1054 = vadd.f32 %v245, %v1053
  %1055 = vdwg.mxu0
  %1056 = vmatprep.subr.bf16.mxu0 %v811
  %1057 = vmatpush1.bf16.msra.mxu0 %v810
  %1058 = vmatprep.subr.bf16.mxu0 %v795
  %1059 = vmatpush1.bf16.msra.mxu0 %v794
  %1060 = vmatprep.subr.bf16.mxu0 %v779
  %1061 = vmatpush1.bf16.msra.mxu0 %v778
  %1062 = vmatprep.subr.bf16.mxu0 %v763
  %1063 = vmatpush1.bf16.msra.mxu0 %v762
  %1064 = vmatprep.subr.bf16.mxu0 %v747
  %1065 = vmatpush1.bf16.msra.mxu0 %v746
  %1066 = vmatprep.subr.bf16.mxu0 %v731
  %1067 = vmatpush1.bf16.msra.mxu0 %v730
  %1068 = vmatprep.subr.bf16.mxu0 %v715
  %1069 = vmatpush1.bf16.msra.mxu0 %v714
  %1070 = vmatprep.subr.bf16.mxu0 %v699
  %1071 = vmatpush1.bf16.msra.mxu0 %v698
  %1072 = vmatprep.subr.bf16.mxu0 0
  %1073 = vmatpush2.bf16.msra.mxu0 0
  %1074 = vmatprep.subr.bf16.mxu0 0
  %1075 = vmatpush2.bf16.msra.mxu0 0
  %1076 = vmatprep.subr.bf16.mxu0 0
  %1077 = vmatpush2.bf16.msra.mxu0 0
  %1078 = vmatprep.subr.bf16.mxu0 0
  %1079 = vmatpush2.bf16.msra.mxu0 0
  %1080 = vmatprep.subr.bf16.mxu0 0
  %1081 = vmatpush2.bf16.msra.mxu0 0
  %1082 = vmatprep.subr.bf16.mxu0 0
  %1083 = vmatpush2.bf16.msra.mxu0 0
  %1084 = vmatprep.subr.bf16.mxu0 0
  %1085 = vmatpush2.bf16.msra.mxu0 0
  %1086 = vmatprep.subr.bf16.mxu0 0
  %1087 = vmatpush2.bf16.msra.mxu0 0
  %1088 = vmatprep.mubr.bf16.mxu0 0
  %1089 = vmatmul.mubr.bf16.gmra.mxu0 %v96
  %v1090 = vpop.f32.mrf.mxu0
  %v1091 = vadd.f32 %v249, %v1090
  %v1092 = vpop.f32.mrf.mxu0
  %v1093 = vadd.f32 %v253, %v1092
  %v1094 = vpop.f32.mrf.mxu0
  %v1095 = vadd.f32 %v249, %v1094
  %v1096 = vpop.f32.mrf.mxu0
  %v1097 = vadd.f32 %v253, %v1096
  %1098 = vmatprep.mubr.bf16.mxu0 0
  %1099 = vmatmul.mubr.bf16.gmra.mxu0 %v97
  %v1100 = vpop.f32.mrf.mxu0
  %v1101 = vadd.f32 %v249, %v1100
  %v1102 = vpop.f32.mrf.mxu0
  %v1103 = vadd.f32 %v253, %v1102
  %v1104 = vpop.f32.mrf.mxu0
  %v1105 = vadd.f32 %v249, %v1104
  %v1106 = vpop.f32.mrf.mxu0
  %v1107 = vadd.f32 %v253, %v1106
  %1108 = vdwg.mxu0
  %1109 = vmatprep.subr.bf16.mxu0 %v813
  %1110 = vmatpush1.bf16.msra.mxu0 %v812
  %1111 = vmatprep.subr.bf16.mxu0 %v797
  %1112 = vmatpush1.bf16.msra.mxu0 %v796
  %1113 = vmatprep.subr.bf16.mxu0 %v781
  %1114 = vmatpush1.bf16.msra.mxu0 %v780
  %1115 = vmatprep.subr.bf16.mxu0 %v765
  %1116 = vmatpush1.bf16.msra.mxu0 %v764
  %1117 = vmatprep.subr.bf16.mxu0 %v749
  %1118 = vmatpush1.bf16.msra.mxu0 %v748
  %1119 = vmatprep.subr.bf16.mxu0 %v733
  %1120 = vmatpush1.bf16.msra.mxu0 %v732
  %1121 = vmatprep.subr.bf16.mxu0 %v717
  %1122 = vmatpush1.bf16.msra.mxu0 %v716
  %1123 = vmatprep.subr.bf16.mxu0 %v701
  %1124 = vmatpush1.bf16.msra.mxu0 %v700
  %1125 = vmatprep.subr.bf16.mxu0 0
  %1126 = vmatpush2.bf16.msra.mxu0 0
  %1127 = vmatprep.subr.bf16.mxu0 0
  %1128 = vmatpush2.bf16.msra.mxu0 0
  %1129 = vmatprep.subr.bf16.mxu0 0
  %1130 = vmatpush2.bf16.msra.mxu0 0
  %1131 = vmatprep.subr.bf16.mxu0 0
  %1132 = vmatpush2.bf16.msra.mxu0 0
  %1133 = vmatprep.subr.bf16.mxu0 0
  %1134 = vmatpush2.bf16.msra.mxu0 0
  %1135 = vmatprep.subr.bf16.mxu0 0
  %1136 = vmatpush2.bf16.msra.mxu0 0
  %1137 = vmatprep.subr.bf16.mxu0 0
  %1138 = vmatpush2.bf16.msra.mxu0 0
  %1139 = vmatprep.subr.bf16.mxu0 0
  %1140 = vmatpush2.bf16.msra.mxu0 0
  %1141 = vmatprep.mubr.bf16.mxu0 0
  %1142 = vmatmul.mubr.bf16.gmra.mxu0 %v96
  %v1143 = vpop.f32.mrf.mxu0
  %v1144 = vadd.f32 %v257, %v1143
  %v1145 = vpop.f32.mrf.mxu0
  %v1146 = vadd.f32 %v261, %v1145
  %v1147 = vpop.f32.mrf.mxu0
  %v1148 = vadd.f32 %v257, %v1147
  %v1149 = vpop.f32.mrf.mxu0
  %v1150 = vadd.f32 %v261, %v1149
  %1151 = vmatprep.mubr.bf16.mxu0 0
  %1152 = vmatmul.mubr.bf16.gmra.mxu0 %v97
  %v1153 = vpop.f32.mrf.mxu0
  %v1154 = vadd.f32 %v257, %v1153
  %v1155 = vpop.f32.mrf.mxu0
  %v1156 = vadd.f32 %v261, %v1155
  %v1157 = vpop.f32.mrf.mxu0
  %v1158 = vadd.f32 %v257, %v1157
  %v1159 = vpop.f32.mrf.mxu0
  %v1160 = vadd.f32 %v261, %v1159
  %1161 = vdwg.mxu0
  %1162 = vmatprep.subr.bf16.mxu0 %v815
  %1163 = vmatpush1.bf16.msra.mxu0 %v814
  %1164 = vmatprep.subr.bf16.mxu0 %v799
  %1165 = vmatpush1.bf16.msra.mxu0 %v798
  %1166 = vmatprep.subr.bf16.mxu0 %v783
  %1167 = vmatpush1.bf16.msra.mxu0 %v782
  %1168 = vmatprep.subr.bf16.mxu0 %v767
  %1169 = vmatpush1.bf16.msra.mxu0 %v766
  %1170 = vmatprep.subr.bf16.mxu0 %v751
  %1171 = vmatpush1.bf16.msra.mxu0 %v750
  %1172 = vmatprep.subr.bf16.mxu0 %v735
  %1173 = vmatpush1.bf16.msra.mxu0 %v734
  %1174 = vmatprep.subr.bf16.mxu0 %v719
  %1175 = vmatpush1.bf16.msra.mxu0 %v718
  %1176 = vmatprep.subr.bf16.mxu0 %v703
  %1177 = vmatpush1.bf16.msra.mxu0 %v702
  %1178 = vmatprep.subr.bf16.mxu0 0
  %1179 = vmatpush2.bf16.msra.mxu0 0
  %1180 = vmatprep.subr.bf16.mxu0 0
  %1181 = vmatpush2.bf16.msra.mxu0 0
  %1182 = vmatprep.subr.bf16.mxu0 0
  %1183 = vmatpush2.bf16.msra.mxu0 0
  %1184 = vmatprep.subr.bf16.mxu0 0
  %1185 = vmatpush2.bf16.msra.mxu0 0
  %1186 = vmatprep.subr.bf16.mxu0 0
  %1187 = vmatpush2.bf16.msra.mxu0 0
  %1188 = vmatprep.subr.bf16.mxu0 0
  %1189 = vmatpush2.bf16.msra.mxu0 0
  %1190 = vmatprep.subr.bf16.mxu0 0
  %1191 = vmatpush2.bf16.msra.mxu0 0
  %1192 = vmatprep.subr.bf16.mxu0 0
  %1193 = vmatpush2.bf16.msra.mxu0 0
  %1194 = vmatprep.mubr.bf16.mxu0 0
  %1195 = vmatmul.mubr.bf16.gmra.mxu0 %v96
  %v1196 = vpop.f32.mrf.mxu0
  %v1197 = vadd.f32 %v265, %v1196
  %v1198 = vpop.f32.mrf.mxu0
  %v1199 = vadd.f32 %v269, %v1198
  %v1200 = vpop.f32.mrf.mxu0
  %v1201 = vadd.f32 %v265, %v1200
  %v1202 = vpop.f32.mrf.mxu0
  %v1203 = vadd.f32 %v269, %v1202
  %1204 = vmatprep.mubr.bf16.mxu0 0
  %1205 = vmatmul.mubr.bf16.gmra.mxu0 %v97
  %v1206 = vpop.f32.mrf.mxu0
  %v1207 = vadd.f32 %v265, %v1206
  %v1208 = vpop.f32.mrf.mxu0
  %v1209 = vadd.f32 %v269, %v1208
  %v1210 = vpop.f32.mrf.mxu0
  %v1211 = vadd.f32 %v265, %v1210
  %v1212 = vpop.f32.mrf.mxu0
  %v1213 = vadd.f32 %v269, %v1212
  %1214 = vdwg.mxu0
  %1215 = vmatprep.subr.bf16.mxu0 %v817
  %1216 = vmatpush1.bf16.msra.mxu0 %v816
  %1217 = vmatprep.subr.bf16.mxu0 %v801
  %1218 = vmatpush1.bf16.msra.mxu0 %v800
  %1219 = vmatprep.subr.bf16.mxu0 %v785
  %1220 = vmatpush1.bf16.msra.mxu0 %v784
  %1221 = vmatprep.subr.bf16.mxu0 %v769
  %1222 = vmatpush1.bf16.msra.mxu0 %v768
  %1223 = vmatprep.subr.bf16.mxu0 %v753
  %1224 = vmatpush1.bf16.msra.mxu0 %v752
  %1225 = vmatprep.subr.bf16.mxu0 %v737
  %1226 = vmatpush1.bf16.msra.mxu0 %v736
  %1227 = vmatprep.subr.bf16.mxu0 %v721
  %1228 = vmatpush1.bf16.msra.mxu0 %v720
  %1229 = vmatprep.subr.bf16.mxu0 %v705
  %1230 = vmatpush1.bf16.msra.mxu0 %v704
  %1231 = vmatprep.subr.bf16.mxu0 0
  %1232 = vmatpush2.bf16.msra.mxu0 0
  %1233 = vmatprep.subr.bf16.mxu0 0
  %1234 = vmatpush2.bf16.msra.mxu0 0
  %1235 = vmatprep.subr.bf16.mxu0 0
  %1236 = vmatpush2.bf16.msra.mxu0 0
  %1237 = vmatprep.subr.bf16.mxu0 0
  %1238 = vmatpush2.bf16.msra.mxu0 0
  %1239 = vmatprep.subr.bf16.mxu0 0
  %1240 = vmatpush2.bf16.msra.mxu0 0
  %1241 = vmatprep.subr.bf16.mxu0 0
  %1242 = vmatpush2.bf16.msra.mxu0 0
  %1243 = vmatprep.subr.bf16.mxu0 0
  %1244 = vmatpush2.bf16.msra.mxu0 0
  %1245 = vmatprep.subr.bf16.mxu0 0
  %1246 = vmatpush2.bf16.msra.mxu0 0
  %1247 = vmatprep.mubr.bf16.mxu0 0
  %1248 = vmatmul.mubr.bf16.gmra.mxu0 %v96
  %v1249 = vpop.f32.mrf.mxu0
  %v1250 = vadd.f32 %v273, %v1249
  %v1251 = vpop.f32.mrf.mxu0
  %v1252 = vadd.f32 %v277, %v1251
  %v1253 = vpop.f32.mrf.mxu0
  %v1254 = vadd.f32 %v273, %v1253
  %v1255 = vpop.f32.mrf.mxu0
  %v1256 = vadd.f32 %v277, %v1255
  %1257 = vmatprep.mubr.bf16.mxu0 0
  %1258 = vmatmul.mubr.bf16.gmra.mxu0 %v97
  %v1259 = vpop.f32.mrf.mxu0
  %v1260 = vadd.f32 %v273, %v1259
  %v1261 = vpop.f32.mrf.mxu0
  %v1262 = vadd.f32 %v277, %v1261
  %v1263 = vpop.f32.mrf.mxu0
  %v1264 = vadd.f32 %v273, %v1263
  %v1265 = vpop.f32.mrf.mxu0
  %v1266 = vadd.f32 %v277, %v1265
  %1267 = vdwg.mxu0
  %1268 = vmatprep.subr.bf16.mxu0 %v819
  %1269 = vmatpush1.bf16.msra.mxu0 %v818
  %1270 = vmatprep.subr.bf16.mxu0 %v803
  %1271 = vmatpush1.bf16.msra.mxu0 %v802
  %1272 = vmatprep.subr.bf16.mxu0 %v787
  %1273 = vmatpush1.bf16.msra.mxu0 %v786
  %1274 = vmatprep.subr.bf16.mxu0 %v771
  %1275 = vmatpush1.bf16.msra.mxu0 %v770
  %1276 = vmatprep.subr.bf16.mxu0 %v755
  %1277 = vmatpush1.bf16.msra.mxu0 %v754
  %1278 = vmatprep.subr.bf16.mxu0 %v739
  %1279 = vmatpush1.bf16.msra.mxu0 %v738
  %1280 = vmatprep.subr.bf16.mxu0 %v723
  %1281 = vmatpush1.bf16.msra.mxu0 %v722
  %1282 = vmatprep.subr.bf16.mxu0 %v707
  %1283 = vmatpush1.bf16.msra.mxu0 %v706
  %1284 = vmatprep.subr.bf16.mxu0 0
  %1285 = vmatpush2.bf16.msra.mxu0 0
  %1286 = vmatprep.subr.bf16.mxu0 0
  %1287 = vmatpush2.bf16.msra.mxu0 0
  %1288 = vmatprep.subr.bf16.mxu0 0
  %1289 = vmatpush2.bf16.msra.mxu0 0
  %1290 = vmatprep.subr.bf16.mxu0 0
  %1291 = vmatpush2.bf16.msra.mxu0 0
  %1292 = vmatprep.subr.bf16.mxu0 0
  %1293 = vmatpush2.bf16.msra.mxu0 0
  %1294 = vmatprep.subr.bf16.mxu0 0
  %1295 = vmatpush2.bf16.msra.mxu0 0
  %1296 = vmatprep.subr.bf16.mxu0 0
  %1297 = vmatpush2.bf16.msra.mxu0 0
  %1298 = vmatprep.subr.bf16.mxu0 0
  %1299 = vmatpush2.bf16.msra.mxu0 0
  %1300 = vmatprep.mubr.bf16.mxu0 0
  %1301 = vmatmul.mubr.bf16.gmra.mxu0 %v96
  %v1302 = vpop.f32.mrf.mxu0
  %v1303 = vadd.f32 %v281, %v1302
  %v1304 = vpop.f32.mrf.mxu0
  %v1305 = vadd.f32 %v285, %v1304
  %v1306 = vpop.f32.mrf.mxu0
  %v1307 = vadd.f32 %v281, %v1306
  %v1308 = vpop.f32.mrf.mxu0
  %v1309 = vadd.f32 %v285, %v1308
  %1310 = vmatprep.mubr.bf16.mxu0 0
  %1311 = vmatmul.mubr.bf16.gmra.mxu0 %v97
  %v1312 = vpop.f32.mrf.mxu0
  %v1313 = vadd.f32 %v281, %v1312
  %v1314 = vpop.f32.mrf.mxu0
  %v1315 = vadd.f32 %v285, %v1314
  %v1316 = vpop.f32.mrf.mxu0
  %v1317 = vadd.f32 %v281, %v1316
  %v1318 = vpop.f32.mrf.mxu0
  %v1319 = vadd.f32 %v285, %v1318
  %1320 = vdwg.mxu0
  %1321 = vmatprep.subr.bf16.mxu0 %v821
  %1322 = vmatpush1.bf16.msra.mxu0 %v820
  %1323 = vmatprep.subr.bf16.mxu0 %v805
  %1324 = vmatpush1.bf16.msra.mxu0 %v804
  %1325 = vmatprep.subr.bf16.mxu0 %v789
  %1326 = vmatpush1.bf16.msra.mxu0 %v788
  %1327 = vmatprep.subr.bf16.mxu0 %v773
  %1328 = vmatpush1.bf16.msra.mxu0 %v772
  %1329 = vmatprep.subr.bf16.mxu0 %v757
  %1330 = vmatpush1.bf16.msra.mxu0 %v756
  %1331 = vmatprep.subr.bf16.mxu0 %v741
  %1332 = vmatpush1.bf16.msra.mxu0 %v740
  %1333 = vmatprep.subr.bf16.mxu0 %v725
  %1334 = vmatpush1.bf16.msra.mxu0 %v724
  %1335 = vmatprep.subr.bf16.mxu0 %v709
  %1336 = vmatpush1.bf16.msra.mxu0 %v708
  %1337 = vmatprep.subr.bf16.mxu0 0
  %1338 = vmatpush2.bf16.msra.mxu0 0
  %1339 = vmatprep.subr.bf16.mxu0 0
  %1340 = vmatpush2.bf16.msra.mxu0 0
  %1341 = vmatprep.subr.bf16.mxu0 0
  %1342 = vmatpush2.bf16.msra.mxu0 0
  %1343 = vmatprep.subr.bf16.mxu0 0
  %1344 = vmatpush2.bf16.msra.mxu0 0
  %1345 = vmatprep.subr.bf16.mxu0 0
  %1346 = vmatpush2.bf16.msra.mxu0 0
  %1347 = vmatprep.subr.bf16.mxu0 0
  %1348 = vmatpush2.bf16.msra.mxu0 0
  %1349 = vmatprep.subr.bf16.mxu0 0
  %1350 = vmatpush2.bf16.msra.mxu0 0
  %1351 = vmatprep.subr.bf16.mxu0 0
  %1352 = vmatpush2.bf16.msra.mxu0 0
  %1353 = vmatprep.mubr.bf16.mxu0 0
  %1354 = vmatmul.mubr.bf16.gmra.mxu0 %v96
  %v1355 = vpop.f32.mrf.mxu0
  %v1356 = vadd.f32 %v289, %v1355
  %v1357 = vpop.f32.mrf.mxu0
  %v1358 = vadd.f32 %v293, %v1357
  %v1359 = vpop.f32.mrf.mxu0
  %v1360 = vadd.f32 %v289, %v1359
  %v1361 = vpop.f32.mrf.mxu0
  %v1362 = vadd.f32 %v293, %v1361
  %1363 = vmatprep.mubr.bf16.mxu0 0
  %1364 = vmatmul.mubr.bf16.gmra.mxu0 %v97
  %v1365 = vpop.f32.mrf.mxu0
  %v1366 = vadd.f32 %v289, %v1365
  %v1367 = vpop.f32.mrf.mxu0
  %v1368 = vadd.f32 %v293, %v1367
  %v1369 = vpop.f32.mrf.mxu0
  %v1370 = vadd.f32 %v289, %v1369
  %v1371 = vpop.f32.mrf.mxu0
  %v1372 = vadd.f32 %v293, %v1371
  %1373 = vdwg.mxu0
  %v1374 = vmax.f32 %v985, 0.0
  %v1375 = vmax.f32 %v987, 0.0
  %v1376 = vmax.f32 %v1038, 0.0
  %v1377 = vmax.f32 %v1040, 0.0
  %v1378 = vmax.f32 %v1091, 0.0
  %v1379 = vmax.f32 %v1093, 0.0
  %v1380 = vmax.f32 %v1144, 0.0
  %v1381 = vmax.f32 %v1146, 0.0
  %v1382 = vmax.f32 %v1197, 0.0
  %v1383 = vmax.f32 %v1199, 0.0
  %v1384 = vmax.f32 %v1250, 0.0
  %v1385 = vmax.f32 %v1252, 0.0
  %v1386 = vmax.f32 %v1303, 0.0
  %v1387 = vmax.f32 %v1305, 0.0
  %v1388 = vmax.f32 %v1356, 0.0
  %v1389 = vmax.f32 %v1358, 0.0
  %v1390 = vmax.f32 %v989, 0.0
  %v1391 = vmax.f32 %v991, 0.0
  %v1392 = vmax.f32 %v1042, 0.0
  %v1393 = vmax.f32 %v1044, 0.0
  %v1394 = vmax.f32 %v1095, 0.0
  %v1395 = vmax.f32 %v1097, 0.0
  %v1396 = vmax.f32 %v1148, 0.0
  %v1397 = vmax.f32 %v1150, 0.0
  %v1398 = vmax.f32 %v1201, 0.0
  %v1399 = vmax.f32 %v1203, 0.0
  %v1400 = vmax.f32 %v1254, 0.0
  %v1401 = vmax.f32 %v1256, 0.0
  %v1402 = vmax.f32 %v1307, 0.0
  %v1403 = vmax.f32 %v1309, 0.0
  %v1404 = vmax.f32 %v1360, 0.0
  %v1405 = vmax.f32 %v1362, 0.0
  %v1406 = vmax.f32 %v995, 0.0
  %v1407 = vmax.f32 %v997, 0.0
  %v1408 = vmax.f32 %v1048, 0.0
  %v1409 = vmax.f32 %v1050, 0.0
  %v1410 = vmax.f32 %v1101, 0.0
  %v1411 = vmax.f32 %v1103, 0.0
  %v1412 = vmax.f32 %v1154, 0.0
  %v1413 = vmax.f32 %v1156, 0.0
  %v1414 = vmax.f32 %v1207, 0.0
  %v1415 = vmax.f32 %v1209, 0.0
  %v1416 = vmax.f32 %v1260, 0.0
  %v1417 = vmax.f32 %v1262, 0.0
  %v1418 = vmax.f32 %v1313, 0.0
  %v1419 = vmax.f32 %v1315, 0.0
  %v1420 = vmax.f32 %v1366, 0.0
  %v1421 = vmax.f32 %v1368, 0.0
  %v1422 = vmax.f32 %v999, 0.0
  %v1423 = vmax.f32 %v1001, 0.0
  %v1424 = vmax.f32 %v1052, 0.0
  %v1425 = vmax.f32 %v1054, 0.0
  %v1426 = vmax.f32 %v1105, 0.0
  %v1427 = vmax.f32 %v1107, 0.0
  %v1428 = vmax.f32 %v1158, 0.0
  %v1429 = vmax.f32 %v1160, 0.0
  %v1430 = vmax.f32 %v1211, 0.0
  %v1431 = vmax.f32 %v1213, 0.0
  %v1432 = vmax.f32 %v1264, 0.0
  %v1433 = vmax.f32 %v1266, 0.0
  %v1434 = vmax.f32 %v1317, 0.0
  %v1435 = vmax.f32 %v1319, 0.0
  %v1436 = vmax.f32 %v1370, 0.0
  %v1437 = vmax.f32 %v1372, 0.0
  %v1438 = vld [vmem:[%s4] sm:$0xff]
  %v1439 = vld [vmem:[%s4 + $0x8] sm:$0xff]
  %v1440 = vld [vmem:[%s4 + $0x10] sm:$0xff]
  %v1441 = vld [vmem:[%s4 + $0x18] sm:$0xff]
  %v1442 = vld [vmem:[%s4 + $0x20] sm:$0xff]
  %v1443 = vld [vmem:[%s4 + $0x28] sm:$0xff]
  %v1444 = vld [vmem:[%s4 + $0x30] sm:$0xff]
  %v1445 = vld [vmem:[%s4 + $0x38] sm:$0xff]
  %v1446 = vld [vmem:[%s4 + $0x40] sm:$0xff]
  %v1447 = vld [vmem:[%s4 + $0x48] sm:$0xff]
  %v1448 = vld [vmem:[%s4 + $0x50] sm:$0xff]
  %v1449 = vld [vmem:[%s4 + $0x58] sm:$0xff]
  %v1450 = vld [vmem:[%s4 + $0x60] sm:$0xff]
  %v1451 = vld [vmem:[%s4 + $0x68] sm:$0xff]
  %v1452 = vld [vmem:[%s4 + $0x70] sm:$0xff]
  %v1453 = vld [vmem:[%s4 + $0x78] sm:$0xff]
  %v1454 = vunpack.c.0.s8 %v1438
  %v1455 = vunpack.c.1.s8 %v1438
  %v1456 = vunpack.c.2.s8 %v1438
  %v1457 = vunpack.c.3.s8 %v1438
  %v1458 = vunpack.c.0.s8 %v1439
  %v1459 = vunpack.c.1.s8 %v1439
  %v1460 = vunpack.c.2.s8 %v1439
  %v1461 = vunpack.c.3.s8 %v1439
  %v1462 = vunpack.c.0.s8 %v1440
  %v1463 = vunpack.c.1.s8 %v1440
  %v1464 = vunpack.c.2.s8 %v1440
  %v1465 = vunpack.c.3.s8 %v1440
  %v1466 = vunpack.c.0.s8 %v1441
  %v1467 = vunpack.c.1.s8 %v1441
  %v1468 = vunpack.c.2.s8 %v1441
  %v1469 = vunpack.c.3.s8 %v1441
  %v1470 = vunpack.c.0.s8 %v1442
  %v1471 = vunpack.c.1.s8 %v1442
  %v1472 = vunpack.c.2.s8 %v1442
  %v1473 = vunpack.c.3.s8 %v1442
  %v1474 = vunpack.c.0.s8 %v1443
  %v1475 = vunpack.c.1.s8 %v1443
  %v1476 = vunpack.c.2.s8 %v1443
  %v1477 = vunpack.c.3.s8 %v1443
  %v1478 = vunpack.c.0.s8 %v1444
  %v1479 = vunpack.c.1.s8 %v1444
  %v1480 = vunpack.c.2.s8 %v1444
  %v1481 = vunpack.c.3.s8 %v1444
  %v1482 = vunpack.c.0.s8 %v1445
  %v1483 = vunpack.c.1.s8 %v1445
  %v1484 = vunpack.c.2.s8 %v1445
  %v1485 = vunpack.c.3.s8 %v1445
  %v1486 = vunpack.c.0.s8 %v1446
  %v1487 = vunpack.c.1.s8 %v1446
  %v1488 = vunpack.c.2.s8 %v1446
  %v1489 = vunpack.c.3.s8 %v1446
  %v1490 = vunpack.c.0.s8 %v1447
  %v1491 = vunpack.c.1.s8 %v1447
  %v1492 = vunpack.c.2.s8 %v1447
  %v1493 = vunpack.c.3.s8 %v1447
  %v1494 = vunpack.c.0.s8 %v1448
  %v1495 = vunpack.c.1.s8 %v1448
  %v1496 = vunpack.c.2.s8 %v1448
  %v1497 = vunpack.c.3.s8 %v1448
  %v1498 = vunpack.c.0.s8 %v1449
  %v1499 = vunpack.c.1.s8 %v1449
  %v1500 = vunpack.c.2.s8 %v1449
  %v1501 = vunpack.c.3.s8 %v1449
  %v1502 = vunpack.c.0.s8 %v1450
  %v1503 = vunpack.c.1.s8 %v1450
  %v1504 = vunpack.c.2.s8 %v1450
  %v1505 = vunpack.c.3.s8 %v1450
  %v1506 = vunpack.c.0.s8 %v1451
  %v1507 = vunpack.c.1.s8 %v1451
  %v1508 = vunpack.c.2.s8 %v1451
  %v1509 = vunpack.c.3.s8 %v1451
  %v1510 = vunpack.c.0.s8 %v1452
  %v1511 = vunpack.c.1.s8 %v1452
  %v1512 = vunpack.c.2.s8 %v1452
  %v1513 = vunpack.c.3.s8 %v1452
  %v1514 = vunpack.c.0.s8 %v1453
  %v1515 = vunpack.c.1.s8 %v1453
  %v1516 = vunpack.c.2.s8 %v1453
  %v1517 = vunpack.c.3.s8 %v1453
  %v1518 = vcvt.s32.f32 %v1454
  %v1519 = vcvt.s32.f32 %v1455
  %v1520 = vcvt.s32.f32 %v1456
  %v1521 = vcvt.s32.f32 %v1457
  %v1522 = vcvt.s32.f32 %v1458
  %v1523 = vcvt.s32.f32 %v1459
  %v1524 = vcvt.s32.f32 %v1460
  %v1525 = vcvt.s32.f32 %v1461
  %v1526 = vcvt.s32.f32 %v1462
  %v1527 = vcvt.s32.f32 %v1463
  %v1528 = vcvt.s32.f32 %v1464
  %v1529 = vcvt.s32.f32 %v1465
  %v1530 = vcvt.s32.f32 %v1466
  %v1531 = vcvt.s32.f32 %v1467
  %v1532 = vcvt.s32.f32 %v1468
  %v1533 = vcvt.s32.f32 %v1469
  %v1534 = vcvt.s32.f32 %v1470
  %v1535 = vcvt.s32.f32 %v1471
  %v1536 = vcvt.s32.f32 %v1472
  %v1537 = vcvt.s32.f32 %v1473
  %v1538 = vcvt.s32.f32 %v1474
  %v1539 = vcvt.s32.f32 %v1475
  %v1540 = vcvt.s32.f32 %v1476
  %v1541 = vcvt.s32.f32 %v1477
  %v1542 = vcvt.s32.f32 %v1478
  %v1543 = vcvt.s32.f32 %v1479
  %v1544 = vcvt.s32.f32 %v1480
  %v1545 = vcvt.s32.f32 %v1481
  %v1546 = vcvt.s32.f32 %v1482
  %v1547 = vcvt.s32.f32 %v1483
  %v1548 = vcvt.s32.f32 %v1484
  %v1549 = vcvt.s32.f32 %v1485
  %v1550 = vcvt.s32.f32 %v1486
  %v1551 = vcvt.s32.f32 %v1487
  %v1552 = vcvt.s32.f32 %v1488
  %v1553 = vcvt.s32.f32 %v1489
  %v1554 = vcvt.s32.f32 %v1490
  %v1555 = vcvt.s32.f32 %v1491
  %v1556 = vcvt.s32.f32 %v1492
  %v1557 = vcvt.s32.f32 %v1493
  %v1558 = vcvt.s32.f32 %v1494
  %v1559 = vcvt.s32.f32 %v1495
  %v1560 = vcvt.s32.f32 %v1496
  %v1561 = vcvt.s32.f32 %v1497
  %v1562 = vcvt.s32.f32 %v1498
  %v1563 = vcvt.s32.f32 %v1499
  %v1564 = vcvt.s32.f32 %v1500
  %v1565 = vcvt.s32.f32 %v1501
  %v1566 = vcvt.s32.f32 %v1502
  %v1567 = vcvt.s32.f32 %v1503
  %v1568 = vcvt.s32.f32 %v1504
  %v1569 = vcvt.s32.f32 %v1505
  %v1570 = vcvt.s32.f32 %v1506
  %v1571 = vcvt.s32.f32 %v1507
  %v1572 = vcvt.s32.f32 %v1508
  %v1573 = vcvt.s32.f32 %v1509
  %v1574 = vcvt.s32.f32 %v1510
  %v1575 = vcvt.s32.f32 %v1511
  %v1576 = vcvt.s32.f32 %v1512
  %v1577 = vcvt.s32.f32 %v1513
  %v1578 = vcvt.s32.f32 %v1514
  %v1579 = vcvt.s32.f32 %v1515
  %v1580 = vcvt.s32.f32 %v1516
  %v1581 = vcvt.s32.f32 %v1517
  %v1582 = vmul.f32 %v1518, 1.4285715
  %v1583 = vmul.f32 %v1519, 1.4285715
  %v1584 = vmul.f32 %v1520, 1.4285715
  %v1585 = vmul.f32 %v1521, 1.4285715
  %v1586 = vmul.f32 %v1522, 1.4285715
  %v1587 = vmul.f32 %v1523, 1.4285715
  %v1588 = vmul.f32 %v1524, 1.4285715
  %v1589 = vmul.f32 %v1525, 1.4285715
  %v1590 = vmul.f32 %v1526, 1.4285715
  %v1591 = vmul.f32 %v1527, 1.4285715
  %v1592 = vmul.f32 %v1528, 1.4285715
  %v1593 = vmul.f32 %v1529, 1.4285715
  %v1594 = vmul.f32 %v1530, 1.4285715
  %v1595 = vmul.f32 %v1531, 1.4285715
  %v1596 = vmul.f32 %v1532, 1.4285715
  %v1597 = vmul.f32 %v1533, 1.4285715
  %v1598 = vmul.f32 %v1534, 1.4285715
  %v1599 = vmul.f32 %v1535, 1.4285715
  %v1600 = vmul.f32 %v1536, 1.4285715
  %v1601 = vmul.f32 %v1537, 1.4285715
  %v1602 = vmul.f32 %v1538, 1.4285715
  %v1603 = vmul.f32 %v1539, 1.4285715
  %v1604 = vmul.f32 %v1540, 1.4285715
  %v1605 = vmul.f32 %v1541, 1.4285715
  %v1606 = vmul.f32 %v1542, 1.4285715
  %v1607 = vmul.f32 %v1543, 1.4285715
  %v1608 = vmul.f32 %v1544, 1.4285715
  %v1609 = vmul.f32 %v1545, 1.4285715
  %v1610 = vmul.f32 %v1546, 1.4285715
  %v1611 = vmul.f32 %v1547, 1.4285715
  %v1612 = vmul.f32 %v1548, 1.4285715
  %v1613 = vmul.f32 %v1549, 1.4285715
  %v1614 = vmul.f32 %v1550, 1.4285715
  %v1615 = vmul.f32 %v1551, 1.4285715
  %v1616 = vmul.f32 %v1552, 1.4285715
  %v1617 = vmul.f32 %v1553, 1.4285715
  %v1618 = vmul.f32 %v1554, 1.4285715
  %v1619 = vmul.f32 %v1555, 1.4285715
  %v1620 = vmul.f32 %v1556, 1.4285715
  %v1621 = vmul.f32 %v1557, 1.4285715
  %v1622 = vmul.f32 %v1558, 1.4285715
  %v1623 = vmul.f32 %v1559, 1.4285715
  %v1624 = vmul.f32 %v1560, 1.4285715
  %v1625 = vmul.f32 %v1561, 1.4285715
  %v1626 = vmul.f32 %v1562, 1.4285715
  %v1627 = vmul.f32 %v1563, 1.4285715
  %v1628 = vmul.f32 %v1564, 1.4285715
  %v1629 = vmul.f32 %v1565, 1.4285715
  %v1630 = vmul.f32 %v1566, 1.4285715
  %v1631 = vmul.f32 %v1567, 1.4285715
  %v1632 = vmul.f32 %v1568, 1.4285715
  %v1633 = vmul.f32 %v1569, 1.4285715
  %v1634 = vmul.f32 %v1570, 1.4285715
  %v1635 = vmul.f32 %v1571, 1.4285715
  %v1636 = vmul.f32 %v1572, 1.4285715
  %v1637 = vmul.f32 %v1573, 1.4285715
  %v1638 = vmul.f32 %v1574, 1.4285715
  %v1639 = vmul.f32 %v1575, 1.4285715
  %v1640 = vmul.f32 %v1576, 1.4285715
  %v1641 = vmul.f32 %v1577, 1.4285715
  %v1642 = vmul.f32 %v1578, 1.4285715
  %v1643 = vmul.f32 %v1579, 1.4285715
  %v1644 = vmul.f32 %v1580, 1.4285715
  %v1645 = vmul.f32 %v1581, 1.4285715
  %v1646 = vrot.slane %v1374, 4
  %v1647 = vadd.f32 %v1374, %v1646
  %v1648 = vrot.slane %v1647, 2
  %v1649 = vadd.f32 %v1647, %v1648
  %v1650 = vrot.slane %v1649, 1
  %v1651 = vadd.f32 %v1649, %v1650
  %v1652 = vrot.slane %v1375, 4
  %v1653 = vadd.f32 %v1375, %v1652
  %v1654 = vrot.slane %v1653, 2
  %v1655 = vadd.f32 %v1653, %v1654
  %v1656 = vrot.slane %v1655, 1
  %v1657 = vadd.f32 %v1655, %v1656
  %v1658 = vrot.slane %v1376, 4
  %v1659 = vadd.f32 %v1376, %v1658
  %v1660 = vrot.slane %v1659, 2
  %v1661 = vadd.f32 %v1659, %v1660
  %v1662 = vrot.slane %v1661, 1
  %v1663 = vadd.f32 %v1661, %v1662
  %v1664 = vrot.slane %v1377, 4
  %v1665 = vadd.f32 %v1377, %v1664
  %v1666 = vrot.slane %v1665, 2
  %v1667 = vadd.f32 %v1665, %v1666
  %v1668 = vrot.slane %v1667, 1
  %v1669 = vadd.f32 %v1667, %v1668
  %v1670 = vrot.slane %v1378, 4
  %v1671 = vadd.f32 %v1378, %v1670
  %v1672 = vrot.slane %v1671, 2
  %v1673 = vadd.f32 %v1671, %v1672
  %v1674 = vrot.slane %v1673, 1
  %v1675 = vadd.f32 %v1673, %v1674
  %v1676 = vrot.slane %v1379, 4
  %v1677 = vadd.f32 %v1379, %v1676
  %v1678 = vrot.slane %v1677, 2
  %v1679 = vadd.f32 %v1677, %v1678
  %v1680 = vrot.slane %v1679, 1
  %v1681 = vadd.f32 %v1679, %v1680
  %v1682 = vrot.slane %v1380, 4
  %v1683 = vadd.f32 %v1380, %v1682
  %v1684 = vrot.slane %v1683, 2
  %v1685 = vadd.f32 %v1683, %v1684
  %v1686 = vrot.slane %v1685, 1
  %v1687 = vadd.f32 %v1685, %v1686
  %v1688 = vrot.slane %v1381, 4
  %v1689 = vadd.f32 %v1381, %v1688
  %v1690 = vrot.slane %v1689, 2
  %v1691 = vadd.f32 %v1689, %v1690
  %v1692 = vrot.slane %v1691, 1
  %v1693 = vadd.f32 %v1691, %v1692
  %v1694 = vrot.slane %v1382, 4
  %v1695 = vadd.f32 %v1382, %v1694
  %v1696 = vrot.slane %v1695, 2
  %v1697 = vadd.f32 %v1695, %v1696
  %v1698 = vrot.slane %v1697, 1
  %v1699 = vadd.f32 %v1697, %v1698
  %v1700 = vrot.slane %v1383, 4
  %v1701 = vadd.f32 %v1383, %v1700
  %v1702 = vrot.slane %v1701, 2
  %v1703 = vadd.f32 %v1701, %v1702
  %v1704 = vrot.slane %v1703, 1
  %v1705 = vadd.f32 %v1703, %v1704
  %v1706 = vrot.slane %v1384, 4
  %v1707 = vadd.f32 %v1384, %v1706
  %v1708 = vrot.slane %v1707, 2
  %v1709 = vadd.f32 %v1707, %v1708
  %v1710 = vrot.slane %v1709, 1
  %v1711 = vadd.f32 %v1709, %v1710
  %v1712 = vrot.slane %v1385, 4
  %v1713 = vadd.f32 %v1385, %v1712
  %v1714 = vrot.slane %v1713, 2
  %v1715 = vadd.f32 %v1713, %v1714
  %v1716 = vrot.slane %v1715, 1
  %v1717 = vadd.f32 %v1715, %v1716
  %v1718 = vrot.slane %v1386, 4
  %v1719 = vadd.f32 %v1386, %v1718
  %v1720 = vrot.slane %v1719, 2
  %v1721 = vadd.f32 %v1719, %v1720
  %v1722 = vrot.slane %v1721, 1
  %v1723 = vadd.f32 %v1721, %v1722
  %v1724 = vrot.slane %v1387, 4
  %v1725 = vadd.f32 %v1387, %v1724
  %v1726 = vrot.slane %v1725, 2
  %v1727 = vadd.f32 %v1725, %v1726
  %v1728 = vrot.slane %v1727, 1
  %v1729 = vadd.f32 %v1727, %v1728
  %v1730 = vrot.slane %v1388, 4
  %v1731 = vadd.f32 %v1388, %v1730
  %v1732 = vrot.slane %v1731, 2
  %v1733 = vadd.f32 %v1731, %v1732
  %v1734 = vrot.slane %v1733, 1
  %v1735 = vadd.f32 %v1733, %v1734
  %v1736 = vrot.slane %v1389, 4
  %v1737 = vadd.f32 %v1389, %v1736
  %v1738 = vrot.slane %v1737, 2
  %v1739 = vadd.f32 %v1737, %v1738
  %v1740 = vrot.slane %v1739, 1
  %v1741 = vadd.f32 %v1739, %v1740
  %v1742 = vrot.slane %v1390, 4
  %v1743 = vadd.f32 %v1390, %v1742
  %v1744 = vrot.slane %v1743, 2
  %v1745 = vadd.f32 %v1743, %v1744
  %v1746 = vrot.slane %v1745, 1
  %v1747 = vadd.f32 %v1745, %v1746
  %v1748 = vrot.slane %v1391, 4
  %v1749 = vadd.f32 %v1391, %v1748
  %v1750 = vrot.slane %v1749, 2
  %v1751 = vadd.f32 %v1749, %v1750
  %v1752 = vrot.slane %v1751, 1
  %v1753 = vadd.f32 %v1751, %v1752
  %v1754 = vrot.slane %v1392, 4
  %v1755 = vadd.f32 %v1392, %v1754
  %v1756 = vrot.slane %v1755, 2
  %v1757 = vadd.f32 %v1755, %v1756
  %v1758 = vrot.slane %v1757, 1
  %v1759 = vadd.f32 %v1757, %v1758
  %v1760 = vrot.slane %v1393, 4
  %v1761 = vadd.f32 %v1393, %v1760
  %v1762 = vrot.slane %v1761, 2
  %v1763 = vadd.f32 %v1761, %v1762
  %v1764 = vrot.slane %v1763, 1
  %v1765 = vadd.f32 %v1763, %v1764
  %v1766 = vrot.slane %v1394, 4
  %v1767 = vadd.f32 %v1394, %v1766
  %v1768 = vrot.slane %v1767, 2
  %v1769 = vadd.f32 %v1767, %v1768
  %v1770 = vrot.slane %v1769, 1
  %v1771 = vadd.f32 %v1769, %v1770
  %v1772 = vrot.slane %v1395, 4
  %v1773 = vadd.f32 %v1395, %v1772
  %v1774 = vrot.slane %v1773, 2
  %v1775 = vadd.f32 %v1773, %v1774
  %v1776 = vrot.slane %v1775, 1
  %v1777 = vadd.f32 %v1775, %v1776
  %v1778 = vrot.slane %v1396, 4
  %v1779 = vadd.f32 %v1396, %v1778
  %v1780 = vrot.slane %v1779, 2
  %v1781 = vadd.f32 %v1779, %v1780
  %v1782 = vrot.slane %v1781, 1
  %v1783 = vadd.f32 %v1781, %v1782
  %v1784 = vrot.slane %v1397, 4
  %v1785 = vadd.f32 %v1397, %v1784
  %v1786 = vrot.slane %v1785, 2
  %v1787 = vadd.f32 %v1785, %v1786
  %v1788 = vrot.slane %v1787, 1
  %v1789 = vadd.f32 %v1787, %v1788
  %v1790 = vrot.slane %v1398, 4
  %v1791 = vadd.f32 %v1398, %v1790
  %v1792 = vrot.slane %v1791, 2
  %v1793 = vadd.f32 %v1791, %v1792
  %v1794 = vrot.slane %v1793, 1
  %v1795 = vadd.f32 %v1793, %v1794
  %v1796 = vrot.slane %v1399, 4
  %v1797 = vadd.f32 %v1399, %v1796
  %v1798 = vrot.slane %v1797, 2
  %v1799 = vadd.f32 %v1797, %v1798
  %v1800 = vrot.slane %v1799, 1
  %v1801 = vadd.f32 %v1799, %v1800
  %v1802 = vrot.slane %v1400, 4
  %v1803 = vadd.f32 %v1400, %v1802
  %v1804 = vrot.slane %v1803, 2
  %v1805 = vadd.f32 %v1803, %v1804
  %v1806 = vrot.slane %v1805, 1
  %v1807 = vadd.f32 %v1805, %v1806
  %v1808 = vrot.slane %v1401, 4
  %v1809 = vadd.f32 %v1401, %v1808
  %v1810 = vrot.slane %v1809, 2
  %v1811 = vadd.f32 %v1809, %v1810
  %v1812 = vrot.slane %v1811, 1
  %v1813 = vadd.f32 %v1811, %v1812
  %v1814 = vrot.slane %v1402, 4
  %v1815 = vadd.f32 %v1402, %v1814
  %v1816 = vrot.slane %v1815, 2
  %v1817 = vadd.f32 %v1815, %v1816
  %v1818 = vrot.slane %v1817, 1
  %v1819 = vadd.f32 %v1817, %v1818
  %v1820 = vrot.slane %v1403, 4
  %v1821 = vadd.f32 %v1403, %v1820
  %v1822 = vrot.slane %v1821, 2
  %v1823 = vadd.f32 %v1821, %v1822
  %v1824 = vrot.slane %v1823, 1
  %v1825 = vadd.f32 %v1823, %v1824
  %v1826 = vrot.slane %v1404, 4
  %v1827 = vadd.f32 %v1404, %v1826
  %v1828 = vrot.slane %v1827, 2
  %v1829 = vadd.f32 %v1827, %v1828
  %v1830 = vrot.slane %v1829, 1
  %v1831 = vadd.f32 %v1829, %v1830
  %v1832 = vrot.slane %v1405, 4
  %v1833 = vadd.f32 %v1405, %v1832
  %v1834 = vrot.slane %v1833, 2
  %v1835 = vadd.f32 %v1833, %v1834
  %v1836 = vrot.slane %v1835, 1
  %v1837 = vadd.f32 %v1835, %v1836
  %v1838 = vrot.slane %v1406, 4
  %v1839 = vadd.f32 %v1406, %v1838
  %v1840 = vrot.slane %v1839, 2
  %v1841 = vadd.f32 %v1839, %v1840
  %v1842 = vrot.slane %v1841, 1
  %v1843 = vadd.f32 %v1841, %v1842
  %v1844 = vrot.slane %v1407, 4
  %v1845 = vadd.f32 %v1407, %v1844
  %v1846 = vrot.slane %v1845, 2
  %v1847 = vadd.f32 %v1845, %v1846
  %v1848 = vrot.slane %v1847, 1
  %v1849 = vadd.f32 %v1847, %v1848
  %v1850 = vrot.slane %v1408, 4
  %v1851 = vadd.f32 %v1408, %v1850
  %v1852 = vrot.slane %v1851, 2
  %v1853 = vadd.f32 %v1851, %v1852
  %v1854 = vrot.slane %v1853, 1
  %v1855 = vadd.f32 %v1853, %v1854
  %v1856 = vrot.slane %v1409, 4
  %v1857 = vadd.f32 %v1409, %v1856
  %v1858 = vrot.slane %v1857, 2
  %v1859 = vadd.f32 %v1857, %v1858
  %v1860 = vrot.slane %v1859, 1
  %v1861 = vadd.f32 %v1859, %v1860
  %v1862 = vrot.slane %v1410, 4
  %v1863 = vadd.f32 %v1410, %v1862
  %v1864 = vrot.slane %v1863, 2
  %v1865 = vadd.f32 %v1863, %v1864
  %v1866 = vrot.slane %v1865, 1
  %v1867 = vadd.f32 %v1865, %v1866
  %v1868 = vrot.slane %v1411, 4
  %v1869 = vadd.f32 %v1411, %v1868
  %v1870 = vrot.slane %v1869, 2
  %v1871 = vadd.f32 %v1869, %v1870
  %v1872 = vrot.slane %v1871, 1
  %v1873 = vadd.f32 %v1871, %v1872
  %v1874 = vrot.slane %v1412, 4
  %v1875 = vadd.f32 %v1412, %v1874
  %v1876 = vrot.slane %v1875, 2
  %v1877 = vadd.f32 %v1875, %v1876
  %v1878 = vrot.slane %v1877, 1
  %v1879 = vadd.f32 %v1877, %v1878
  %v1880 = vrot.slane %v1413, 4
  %v1881 = vadd.f32 %v1413, %v1880
  %v1882 = vrot.slane %v1881, 2
  %v1883 = vadd.f32 %v1881, %v1882
  %v1884 = vrot.slane %v1883, 1
  %v1885 = vadd.f32 %v1883, %v1884
  %v1886 = vrot.slane %v1414, 4
  %v1887 = vadd.f32 %v1414, %v1886
  %v1888 = vrot.slane %v1887, 2
  %v1889 = vadd.f32 %v1887, %v1888
  %v1890 = vrot.slane %v1889, 1
  %v1891 = vadd.f32 %v1889, %v1890
  %v1892 = vrot.slane %v1415, 4
  %v1893 = vadd.f32 %v1415, %v1892
  %v1894 = vrot.slane %v1893, 2
  %v1895 = vadd.f32 %v1893, %v1894
  %v1896 = vrot.slane %v1895, 1
  %v1897 = vadd.f32 %v1895, %v1896
  %v1898 = vrot.slane %v1416, 4
  %v1899 = vadd.f32 %v1416, %v1898
  %v1900 = vrot.slane %v1899, 2
  %v1901 = vadd.f32 %v1899, %v1900
  %v1902 = vrot.slane %v1901, 1
  %v1903 = vadd.f32 %v1901, %v1902
  %v1904 = vrot.slane %v1417, 4
  %v1905 = vadd.f32 %v1417, %v1904
  %v1906 = vrot.slane %v1905, 2
  %v1907 = vadd.f32 %v1905, %v1906
  %v1908 = vrot.slane %v1907, 1
  %v1909 = vadd.f32 %v1907, %v1908
  %v1910 = vrot.slane %v1418, 4
  %v1911 = vadd.f32 %v1418, %v1910
  %v1912 = vrot.slane %v1911, 2
  %v1913 = vadd.f32 %v1911, %v1912
  %v1914 = vrot.slane %v1913, 1
  %v1915 = vadd.f32 %v1913, %v1914
  %v1916 = vrot.slane %v1419, 4
  %v1917 = vadd.f32 %v1419, %v1916
  %v1918 = vrot.slane %v1917, 2
  %v1919 = vadd.f32 %v1917, %v1918
  %v1920 = vrot.slane %v1919, 1
  %v1921 = vadd.f32 %v1919, %v1920
  %v1922 = vrot.slane %v1420, 4
  %v1923 = vadd.f32 %v1420, %v1922
  %v1924 = vrot.slane %v1923, 2
  %v1925 = vadd.f32 %v1923, %v1924
  %v1926 = vrot.slane %v1925, 1
  %v1927 = vadd.f32 %v1925, %v1926
  %v1928 = vrot.slane %v1421, 4
  %v1929 = vadd.f32 %v1421, %v1928
  %v1930 = vrot.slane %v1929, 2
  %v1931 = vadd.f32 %v1929, %v1930
  %v1932 = vrot.slane %v1931, 1
  %v1933 = vadd.f32 %v1931, %v1932
  %v1934 = vrot.slane %v1422, 4
  %v1935 = vadd.f32 %v1422, %v1934
  %v1936 = vrot.slane %v1935, 2
  %v1937 = vadd.f32 %v1935, %v1936
  %v1938 = vrot.slane %v1937, 1
  %v1939 = vadd.f32 %v1937, %v1938
  %v1940 = vrot.slane %v1423, 4
  %v1941 = vadd.f32 %v1423, %v1940
  %v1942 = vrot.slane %v1941, 2
  %v1943 = vadd.f32 %v1941, %v1942
  %v1944 = vrot.slane %v1943, 1
  %v1945 = vadd.f32 %v1943, %v1944
  %v1946 = vrot.slane %v1424, 4
  %v1947 = vadd.f32 %v1424, %v1946
  %v1948 = vrot.slane %v1947, 2
  %v1949 = vadd.f32 %v1947, %v1948
  %v1950 = vrot.slane %v1949, 1
  %v1951 = vadd.f32 %v1949, %v1950
  %v1952 = vrot.slane %v1425, 4
  %v1953 = vadd.f32 %v1425, %v1952
  %v1954 = vrot.slane %v1953, 2
  %v1955 = vadd.f32 %v1953, %v1954
  %v1956 = vrot.slane %v1955, 1
  %v1957 = vadd.f32 %v1955, %v1956
  %v1958 = vrot.slane %v1426, 4
  %v1959 = vadd.f32 %v1426, %v1958
  %v1960 = vrot.slane %v1959, 2
  %v1961 = vadd.f32 %v1959, %v1960
  %v1962 = vrot.slane %v1961, 1
  %v1963 = vadd.f32 %v1961, %v1962
  %v1964 = vrot.slane %v1427, 4
  %v1965 = vadd.f32 %v1427, %v1964
  %v1966 = vrot.slane %v1965, 2
  %v1967 = vadd.f32 %v1965, %v1966
  %v1968 = vrot.slane %v1967, 1
  %v1969 = vadd.f32 %v1967, %v1968
  %v1970 = vrot.slane %v1428, 4
  %v1971 = vadd.f32 %v1428, %v1970
  %v1972 = vrot.slane %v1971, 2
  %v1973 = vadd.f32 %v1971, %v1972
  %v1974 = vrot.slane %v1973, 1
  %v1975 = vadd.f32 %v1973, %v1974
  %v1976 = vrot.slane %v1429, 4
  %v1977 = vadd.f32 %v1429, %v1976
  %v1978 = vrot.slane %v1977, 2
  %v1979 = vadd.f32 %v1977, %v1978
  %v1980 = vrot.slane %v1979, 1
  %v1981 = vadd.f32 %v1979, %v1980
  %v1982 = vrot.slane %v1430, 4
  %v1983 = vadd.f32 %v1430, %v1982
  %v1984 = vrot.slane %v1983, 2
  %v1985 = vadd.f32 %v1983, %v1984
  %v1986 = vrot.slane %v1985, 1
  %v1987 = vadd.f32 %v1985, %v1986
  %v1988 = vrot.slane %v1431, 4
  %v1989 = vadd.f32 %v1431, %v1988
  %v1990 = vrot.slane %v1989, 2
  %v1991 = vadd.f32 %v1989, %v1990
  %v1992 = vrot.slane %v1991, 1
  %v1993 = vadd.f32 %v1991, %v1992
  %v1994 = vrot.slane %v1432, 4
  %v1995 = vadd.f32 %v1432, %v1994
  %v1996 = vrot.slane %v1995, 2
  %v1997 = vadd.f32 %v1995, %v1996
  %v1998 = vrot.slane %v1997, 1
  %v1999 = vadd.f32 %v1997, %v1998
  %v2000 = vrot.slane %v1433, 4
  %v2001 = vadd.f32 %v1433, %v2000
  %v2002 = vrot.slane %v2001, 2
  %v2003 = vadd.f32 %v2001, %v2002
  %v2004 = vrot.slane %v2003, 1
  %v2005 = vadd.f32 %v2003, %v2004
  %v2006 = vrot.slane %v1434, 4
  %v2007 = vadd.f32 %v1434, %v2006
  %v2008 = vrot.slane %v2007, 2
  %v2009 = vadd.f32 %v2007, %v2008
  %v2010 = vrot.slane %v2009, 1
  %v2011 = vadd.f32 %v2009, %v2010
  %v2012 = vrot.slane %v1435, 4
  %v2013 = vadd.f32 %v1435, %v2012
  %v2014 = vrot.slane %v2013, 2
  %v2015 = vadd.f32 %v2013, %v2014
  %v2016 = vrot.slane %v2015, 1
  %v2017 = vadd.f32 %v2015, %v2016
  %v2018 = vrot.slane %v1436, 4
  %v2019 = vadd.f32 %v1436, %v2018
  %v2020 = vrot.slane %v2019, 2
  %v2021 = vadd.f32 %v2019, %v2020
  %v2022 = vrot.slane %v2021, 1
  %v2023 = vadd.f32 %v2021, %v2022
  %v2024 = vrot.slane %v1437, 4
  %v2025 = vadd.f32 %v1437, %v2024
  %v2026 = vrot.slane %v2025, 2
  %v2027 = vadd.f32 %v2025, %v2026
  %v2028 = vrot.slane %v2027, 1
  %v2029 = vadd.f32 %v2027, %v2028
  %v2030 = vrcp.pop 8.0
  %v2031 = vmul.f32 %v1651, %v2030
  %v2032 = vmul.f32 %v1657, %v2030
  %v2033 = vmul.f32 %v1663, %v2030
  %v2034 = vmul.f32 %v1669, %v2030
  %v2035 = vmul.f32 %v1675, %v2030
  %v2036 = vmul.f32 %v1681, %v2030
  %v2037 = vmul.f32 %v1687, %v2030
  %v2038 = vmul.f32 %v1693, %v2030
  %v2039 = vmul.f32 %v1699, %v2030
  %v2040 = vmul.f32 %v1705, %v2030
  %v2041 = vmul.f32 %v1711, %v2030
  %v2042 = vmul.f32 %v1717, %v2030
  %v2043 = vmul.f32 %v1723, %v2030
  %v2044 = vmul.f32 %v1729, %v2030
  %v2045 = vmul.f32 %v1735, %v2030
  %v2046 = vmul.f32 %v1741, %v2030
  %v2047 = vmul.f32 %v1747, %v2030
  %v2048 = vmul.f32 %v1753, %v2030
  %v2049 = vmul.f32 %v1759, %v2030
  %v2050 = vmul.f32 %v1765, %v2030
  %v2051 = vmul.f32 %v1771, %v2030
  %v2052 = vmul.f32 %v1777, %v2030
  %v2053 = vmul.f32 %v1783, %v2030
  %v2054 = vmul.f32 %v1789, %v2030
  %v2055 = vmul.f32 %v1795, %v2030
  %v2056 = vmul.f32 %v1801, %v2030
  %v2057 = vmul.f32 %v1807, %v2030
  %v2058 = vmul.f32 %v1813, %v2030
  %v2059 = vmul.f32 %v1819, %v2030
  %v2060 = vmul.f32 %v1825, %v2030
  %v2061 = vmul.f32 %v1831, %v2030
  %v2062 = vmul.f32 %v1837, %v2030
  %v2063 = vmul.f32 %v1843, %v2030
  %v2064 = vmul.f32 %v1849, %v2030
  %v2065 = vmul.f32 %v1855, %v2030
  %v2066 = vmul.f32 %v1861, %v2030
  %v2067 = vmul.f32 %v1867, %v2030
  %v2068 = vmul.f32 %v1873, %v2030
  %v2069 = vmul.f32 %v1879, %v2030
  %v2070 = vmul.f32 %v1885, %v2030
  %v2071 = vmul.f32 %v1891, %v2030
  %v2072 = vmul.f32 %v1897, %v2030
  %v2073 = vmul.f32 %v1903, %v2030
  %v2074 = vmul.f32 %v1909, %v2030
  %v2075 = vmul.f32 %v1915, %v2030
  %v2076 = vmul.f32 %v1921, %v2030
  %v2077 = vmul.f32 %v1927, %v2030
  %v2078 = vmul.f32 %v1933, %v2030
  %v2079 = vmul.f32 %v1939, %v2030
  %v2080 = vmul.f32 %v1945, %v2030
  %v2081 = vmul.f32 %v1951, %v2030
  %v2082 = vmul.f32 %v1957, %v2030
  %v2083 = vmul.f32 %v1963, %v2030
  %v2084 = vmul.f32 %v1969, %v2030
  %v2085 = vmul.f32 %v1975, %v2030
  %v2086 = vmul.f32 %v1981, %v2030
  %v2087 = vmul.f32 %v1987, %v2030
  %v2088 = vmul.f32 %v1993, %v2030
  %v2089 = vmul.f32 %v1999, %v2030
  %v2090 = vmul.f32 %v2005, %v2030
  %v2091 = vmul.f32 %v2011, %v2030
  %v2092 = vmul.f32 %v2017, %v2030
  %v2093 = vmul.f32 %v2023, %v2030
  %v2094 = vmul.f32 %v2029, %v2030
  %v2095 = vsub.f32 %v1374, %v2031
  %v2096 = vsub.f32 %v1375, %v2032
  %v2097 = vsub.f32 %v1376, %v2033
  %v2098 = vsub.f32 %v1377, %v2034
  %v2099 = vsub.f32 %v1378, %v2035
  %v2100 = vsub.f32 %v1379, %v2036
  %v2101 = vsub.f32 %v1380, %v2037
  %v2102 = vsub.f32 %v1381, %v2038
  %v2103 = vsub.f32 %v1382, %v2039
  %v2104 = vsub.f32 %v1383, %v2040
  %v2105 = vsub.f32 %v1384, %v2041
  %v2106 = vsub.f32 %v1385, %v2042
  %v2107 = vsub.f32 %v1386, %v2043
  %v2108 = vsub.f32 %v1387, %v2044
  %v2109 = vsub.f32 %v1388, %v2045
  %v2110 = vsub.f32 %v1389, %v2046
  %v2111 = vsub.f32 %v1390, %v2047
  %v2112 = vsub.f32 %v1391, %v2048
  %v2113 = vsub.f32 %v1392, %v2049
  %v2114 = vsub.f32 %v1393, %v2050
  %v2115 = vsub.f32 %v1394, %v2051
  %v2116 = vsub.f32 %v1395, %v2052
  %v2117 = vsub.f32 %v1396, %v2053
  %v2118 = vsub.f32 %v1397, %v2054
  %v2119 = vsub.f32 %v1398, %v2055
  %v2120 = vsub.f32 %v1399, %v2056
  %v2121 = vsub.f32 %v1400, %v2057
  %v2122 = vsub.f32 %v1401, %v2058
  %v2123 = vsub.f32 %v1402, %v2059
  %v2124 = vsub.f32 %v1403, %v2060
  %v2125 = vsub.f32 %v1404, %v2061
  %v2126 = vsub.f32 %v1405, %v2062
  %v2127 = vsub.f32 %v1406, %v2063
  %v2128 = vsub.f32 %v1407, %v2064
  %v2129 = vsub.f32 %v1408, %v2065
  %v2130 = vsub.f32 %v1409, %v2066
  %v2131 = vsub.f32 %v1410, %v2067
  %v2132 = vsub.f32 %v1411, %v2068
  %v2133 = vsub.f32 %v1412, %v2069
  %v2134 = vsub.f32 %v1413, %v2070
  %v2135 = vsub.f32 %v1414, %v2071
  %v2136 = vsub.f32 %v1415, %v2072
  %v2137 = vsub.f32 %v1416, %v2073
  %v2138 = vsub.f32 %v1417, %v2074
  %v2139 = vsub.f32 %v1418, %v2075
  %v2140 = vsub.f32 %v1419, %v2076
  %v2141 = vsub.f32 %v1420, %v2077
  %v2142 = vsub.f32 %v1421, %v2078
  %v2143 = vsub.f32 %v1422, %v2079
  %v2144 = vsub.f32 %v1423, %v2080
  %v2145 = vsub.f32 %v1424, %v2081
  %v2146 = vsub.f32 %v1425, %v2082
  %v2147 = vsub.f32 %v1426, %v2083
  %v2148 = vsub.f32 %v1427, %v2084
  %v2149 = vsub.f32 %v1428, %v2085
  %v2150 = vsub.f32 %v1429, %v2086
  %v2151 = vsub.f32 %v1430, %v2087
  %v2152 = vsub.f32 %v1431, %v2088
  %v2153 = vsub.f32 %v1432, %v2089
  %v2154 = vsub.f32 %v1433, %v2090
  %v2155 = vsub.f32 %v1434, %v2091
  %v2156 = vsub.f32 %v1435, %v2092
  %v2157 = vsub.f32 %v1436, %v2093
  %v2158 = vsub.f32 %v1437, %v2094
  %v2159 = vmul.f32 %v2095, %v2095
  %v2160 = vmul.f32 %v2096, %v2096
  %v2161 = vmul.f32 %v2097, %v2097
  %v2162 = vmul.f32 %v2098, %v2098
  %v2163 = vmul.f32 %v2099, %v2099
  %v2164 = vmul.f32 %v2100, %v2100
  %v2165 = vmul.f32 %v2101, %v2101
  %v2166 = vmul.f32 %v2102, %v2102
  %v2167 = vmul.f32 %v2103, %v2103
  %v2168 = vmul.f32 %v2104, %v2104
  %v2169 = vmul.f32 %v2105, %v2105
  %v2170 = vmul.f32 %v2106, %v2106
  %v2171 = vmul.f32 %v2107, %v2107
  %v2172 = vmul.f32 %v2108, %v2108
  %v2173 = vmul.f32 %v2109, %v2109
  %v2174 = vmul.f32 %v2110, %v2110
  %v2175 = vmul.f32 %v2111, %v2111
  %v2176 = vmul.f32 %v2112, %v2112
  %v2177 = vmul.f32 %v2113, %v2113
  %v2178 = vmul.f32 %v2114, %v2114
  %v2179 = vmul.f32 %v2115, %v2115
  %v2180 = vmul.f32 %v2116, %v2116
  %v2181 = vmul.f32 %v2117, %v2117
  %v2182 = vmul.f32 %v2118, %v2118
  %v2183 = vmul.f32 %v2119, %v2119
  %v2184 = vmul.f32 %v2120, %v2120
  %v2185 = vmul.f32 %v2121, %v2121
  %v2186 = vmul.f32 %v2122, %v2122
  %v2187 = vmul.f32 %v2123, %v2123
  %v2188 = vmul.f32 %v2124, %v2124
  %v2189 = vmul.f32 %v2125, %v2125
  %v2190 = vmul.f32 %v2126, %v2126
  %v2191 = vmul.f32 %v2127, %v2127
  %v2192 = vmul.f32 %v2128, %v2128
  %v2193 = vmul.f32 %v2129, %v2129
  %v2194 = vmul.f32 %v2130, %v2130
  %v2195 = vmul.f32 %v2131, %v2131
  %v2196 = vmul.f32 %v2132, %v2132
  %v2197 = vmul.f32 %v2133, %v2133
  %v2198 = vmul.f32 %v2134, %v2134
  %v2199 = vmul.f32 %v2135, %v2135
  %v2200 = vmul.f32 %v2136, %v2136
  %v2201 = vmul.f32 %v2137, %v2137
  %v2202 = vmul.f32 %v2138, %v2138
  %v2203 = vmul.f32 %v2139, %v2139
  %v2204 = vmul.f32 %v2140, %v2140
  %v2205 = vmul.f32 %v2141, %v2141
  %v2206 = vmul.f32 %v2142, %v2142
  %v2207 = vmul.f32 %v2143, %v2143
  %v2208 = vmul.f32 %v2144, %v2144
  %v2209 = vmul.f32 %v2145, %v2145
  %v2210 = vmul.f32 %v2146, %v2146
  %v2211 = vmul.f32 %v2147, %v2147
  %v2212 = vmul.f32 %v2148, %v2148
  %v2213 = vmul.f32 %v2149, %v2149
  %v2214 = vmul.f32 %v2150, %v2150
  %v2215 = vmul.f32 %v2151, %v2151
  %v2216 = vmul.f32 %v2152, %v2152
  %v2217 = vmul.f32 %v2153, %v2153
  %v2218 = vmul.f32 %v2154, %v2154
  %v2219 = vmul.f32 %v2155, %v2155
  %v2220 = vmul.f32 %v2156, %v2156
  %v2221 = vmul.f32 %v2157, %v2157
  %v2222 = vmul.f32 %v2158, %v2158
  %v2223 = vrot.slane %v2159, 4
  %v2224 = vadd.f32 %v2159, %v2223
  %v2225 = vrot.slane %v2224, 2
  %v2226 = vadd.f32 %v2224, %v2225
  %v2227 = vrot.slane %v2226, 1
  %v2228 = vadd.f32 %v2226, %v2227
  %v2229 = vrot.slane %v2160, 4
  %v2230 = vadd.f32 %v2160, %v2229
  %v2231 = vrot.slane %v2230, 2
  %v2232 = vadd.f32 %v2230, %v2231
  %v2233 = vrot.slane %v2232, 1
  %v2234 = vadd.f32 %v2232, %v2233
  %v2235 = vrot.slane %v2161, 4
  %v2236 = vadd.f32 %v2161, %v2235
  %v2237 = vrot.slane %v2236, 2
  %v2238 = vadd.f32 %v2236, %v2237
  %v2239 = vrot.slane %v2238, 1
  %v2240 = vadd.f32 %v2238, %v2239
  %v2241 = vrot.slane %v2162, 4
  %v2242 = vadd.f32 %v2162, %v2241
  %v2243 = vrot.slane %v2242, 2
  %v2244 = vadd.f32 %v2242, %v2243
  %v2245 = vrot.slane %v2244, 1
  %v2246 = vadd.f32 %v2244, %v2245
  %v2247 = vrot.slane %v2163, 4
  %v2248 = vadd.f32 %v2163, %v2247
  %v2249 = vrot.slane %v2248, 2
  %v2250 = vadd.f32 %v2248, %v2249
  %v2251 = vrot.slane %v2250, 1
  %v2252 = vadd.f32 %v2250, %v2251
  %v2253 = vrot.slane %v2164, 4
  %v2254 = vadd.f32 %v2164, %v2253
  %v2255 = vrot.slane %v2254, 2
  %v2256 = vadd.f32 %v2254, %v2255
  %v2257 = vrot.slane %v2256, 1
  %v2258 = vadd.f32 %v2256, %v2257
  %v2259 = vrot.slane %v2165, 4
  %v2260 = vadd.f32 %v2165, %v2259
  %v2261 = vrot.slane %v2260, 2
  %v2262 = vadd.f32 %v2260, %v2261
  %v2263 = vrot.slane %v2262, 1
  %v2264 = vadd.f32 %v2262, %v2263
  %v2265 = vrot.slane %v2166, 4
  %v2266 = vadd.f32 %v2166, %v2265
  %v2267 = vrot.slane %v2266, 2
  %v2268 = vadd.f32 %v2266, %v2267
  %v2269 = vrot.slane %v2268, 1
  %v2270 = vadd.f32 %v2268, %v2269
  %v2271 = vrot.slane %v2167, 4
  %v2272 = vadd.f32 %v2167, %v2271
  %v2273 = vrot.slane %v2272, 2
  %v2274 = vadd.f32 %v2272, %v2273
  %v2275 = vrot.slane %v2274, 1
  %v2276 = vadd.f32 %v2274, %v2275
  %v2277 = vrot.slane %v2168, 4
  %v2278 = vadd.f32 %v2168, %v2277
  %v2279 = vrot.slane %v2278, 2
  %v2280 = vadd.f32 %v2278, %v2279
  %v2281 = vrot.slane %v2280, 1
  %v2282 = vadd.f32 %v2280, %v2281
  %v2283 = vrot.slane %v2169, 4
  %v2284 = vadd.f32 %v2169, %v2283
  %v2285 = vrot.slane %v2284, 2
  %v2286 = vadd.f32 %v2284, %v2285
  %v2287 = vrot.slane %v2286, 1
  %v2288 = vadd.f32 %v2286, %v2287
  %v2289 = vrot.slane %v2170, 4
  %v2290 = vadd.f32 %v2170, %v2289
  %v2291 = vrot.slane %v2290, 2
  %v2292 = vadd.f32 %v2290, %v2291
  %v2293 = vrot.slane %v2292, 1
  %v2294 = vadd.f32 %v2292, %v2293
  %v2295 = vrot.slane %v2171, 4
  %v2296 = vadd.f32 %v2171, %v2295
  %v2297 = vrot.slane %v2296, 2
  %v2298 = vadd.f32 %v2296, %v2297
  %v2299 = vrot.slane %v2298, 1
  %v2300 = vadd.f32 %v2298, %v2299
  %v2301 = vrot.slane %v2172, 4
  %v2302 = vadd.f32 %v2172, %v2301
  %v2303 = vrot.slane %v2302, 2
  %v2304 = vadd.f32 %v2302, %v2303
  %v2305 = vrot.slane %v2304, 1
  %v2306 = vadd.f32 %v2304, %v2305
  %v2307 = vrot.slane %v2173, 4
  %v2308 = vadd.f32 %v2173, %v2307
  %v2309 = vrot.slane %v2308, 2
  %v2310 = vadd.f32 %v2308, %v2309
  %v2311 = vrot.slane %v2310, 1
  %v2312 = vadd.f32 %v2310, %v2311
  %v2313 = vrot.slane %v2174, 4
  %v2314 = vadd.f32 %v2174, %v2313
  %v2315 = vrot.slane %v2314, 2
  %v2316 = vadd.f32 %v2314, %v2315
  %v2317 = vrot.slane %v2316, 1
  %v2318 = vadd.f32 %v2316, %v2317
  %v2319 = vrot.slane %v2175, 4
  %v2320 = vadd.f32 %v2175, %v2319
  %v2321 = vrot.slane %v2320, 2
  %v2322 = vadd.f32 %v2320, %v2321
  %v2323 = vrot.slane %v2322, 1
  %v2324 = vadd.f32 %v2322, %v2323
  %v2325 = vrot.slane %v2176, 4
  %v2326 = vadd.f32 %v2176, %v2325
  %v2327 = vrot.slane %v2326, 2
  %v2328 = vadd.f32 %v2326, %v2327
  %v2329 = vrot.slane %v2328, 1
  %v2330 = vadd.f32 %v2328, %v2329
  %v2331 = vrot.slane %v2177, 4
  %v2332 = vadd.f32 %v2177, %v2331
  %v2333 = vrot.slane %v2332, 2
  %v2334 = vadd.f32 %v2332, %v2333
  %v2335 = vrot.slane %v2334, 1
  %v2336 = vadd.f32 %v2334, %v2335
  %v2337 = vrot.slane %v2178, 4
  %v2338 = vadd.f32 %v2178, %v2337
  %v2339 = vrot.slane %v2338, 2
  %v2340 = vadd.f32 %v2338, %v2339
  %v2341 = vrot.slane %v2340, 1
  %v2342 = vadd.f32 %v2340, %v2341
  %v2343 = vrot.slane %v2179, 4
  %v2344 = vadd.f32 %v2179, %v2343
  %v2345 = vrot.slane %v2344, 2
  %v2346 = vadd.f32 %v2344, %v2345
  %v2347 = vrot.slane %v2346, 1
  %v2348 = vadd.f32 %v2346, %v2347
  %v2349 = vrot.slane %v2180, 4
  %v2350 = vadd.f32 %v2180, %v2349
  %v2351 = vrot.slane %v2350, 2
  %v2352 = vadd.f32 %v2350, %v2351
  %v2353 = vrot.slane %v2352, 1
  %v2354 = vadd.f32 %v2352, %v2353
  %v2355 = vrot.slane %v2181, 4
  %v2356 = vadd.f32 %v2181, %v2355
  %v2357 = vrot.slane %v2356, 2
  %v2358 = vadd.f32 %v2356, %v2357
  %v2359 = vrot.slane %v2358, 1
  %v2360 = vadd.f32 %v2358, %v2359
  %v2361 = vrot.slane %v2182, 4
  %v2362 = vadd.f32 %v2182, %v2361
  %v2363 = vrot.slane %v2362, 2
  %v2364 = vadd.f32 %v2362, %v2363
  %v2365 = vrot.slane %v2364, 1
  %v2366 = vadd.f32 %v2364, %v2365
  %v2367 = vrot.slane %v2183, 4
  %v2368 = vadd.f32 %v2183, %v2367
  %v2369 = vrot.slane %v2368, 2
  %v2370 = vadd.f32 %v2368, %v2369
  %v2371 = vrot.slane %v2370, 1
  %v2372 = vadd.f32 %v2370, %v2371
  %v2373 = vrot.slane %v2184, 4
  %v2374 = vadd.f32 %v2184, %v2373
  %v2375 = vrot.slane %v2374, 2
  %v2376 = vadd.f32 %v2374, %v2375
  %v2377 = vrot.slane %v2376, 1
  %v2378 = vadd.f32 %v2376, %v2377
  %v2379 = vrot.slane %v2185, 4
  %v2380 = vadd.f32 %v2185, %v2379
  %v2381 = vrot.slane %v2380, 2
  %v2382 = vadd.f32 %v2380, %v2381
  %v2383 = vrot.slane %v2382, 1
  %v2384 = vadd.f32 %v2382, %v2383
  %v2385 = vrot.slane %v2186, 4
  %v2386 = vadd.f32 %v2186, %v2385
  %v2387 = vrot.slane %v2386, 2
  %v2388 = vadd.f32 %v2386, %v2387
  %v2389 = vrot.slane %v2388, 1
  %v2390 = vadd.f32 %v2388, %v2389
  %v2391 = vrot.slane %v2187, 4
  %v2392 = vadd.f32 %v2187, %v2391
  %v2393 = vrot.slane %v2392, 2
  %v2394 = vadd.f32 %v2392, %v2393
  %v2395 = vrot.slane %v2394, 1
  %v2396 = vadd.f32 %v2394, %v2395
  %v2397 = vrot.slane %v2188, 4
  %v2398 = vadd.f32 %v2188, %v2397
  %v2399 = vrot.slane %v2398, 2
  %v2400 = vadd.f32 %v2398, %v2399
  %v2401 = vrot.slane %v2400, 1
  %v2402 = vadd.f32 %v2400, %v2401
  %v2403 = vrot.slane %v2189, 4
  %v2404 = vadd.f32 %v2189, %v2403
  %v2405 = vrot.slane %v2404, 2
  %v2406 = vadd.f32 %v2404, %v2405
  %v2407 = vrot.slane %v2406, 1
  %v2408 = vadd.f32 %v2406, %v2407
  %v2409 = vrot.slane %v2190, 4
  %v2410 = vadd.f32 %v2190, %v2409
  %v2411 = vrot.slane %v2410, 2
  %v2412 = vadd.f32 %v2410, %v2411
  %v2413 = vrot.slane %v2412, 1
  %v2414 = vadd.f32 %v2412, %v2413
  %v2415 = vrot.slane %v2191, 4
  %v2416 = vadd.f32 %v2191, %v2415
  %v2417 = vrot.slane %v2416, 2
  %v2418 = vadd.f32 %v2416, %v2417
  %v2419 = vrot.slane %v2418, 1
  %v2420 = vadd.f32 %v2418, %v2419
  %v2421 = vrot.slane %v2192, 4
  %v2422 = vadd.f32 %v2192, %v2421
  %v2423 = vrot.slane %v2422, 2
  %v2424 = vadd.f32 %v2422, %v2423
  %v2425 = vrot.slane %v2424, 1
  %v2426 = vadd.f32 %v2424, %v2425
  %v2427 = vrot.slane %v2193, 4
  %v2428 = vadd.f32 %v2193, %v2427
  %v2429 = vrot.slane %v2428, 2
  %v2430 = vadd.f32 %v2428, %v2429
  %v2431 = vrot.slane %v2430, 1
  %v2432 = vadd.f32 %v2430, %v2431
  %v2433 = vrot.slane %v2194, 4
  %v2434 = vadd.f32 %v2194, %v2433
  %v2435 = vrot.slane %v2434, 2
  %v2436 = vadd.f32 %v2434, %v2435
  %v2437 = vrot.slane %v2436, 1
  %v2438 = vadd.f32 %v2436, %v2437
  %v2439 = vrot.slane %v2195, 4
  %v2440 = vadd.f32 %v2195, %v2439
  %v2441 = vrot.slane %v2440, 2
  %v2442 = vadd.f32 %v2440, %v2441
  %v2443 = vrot.slane %v2442, 1
  %v2444 = vadd.f32 %v2442, %v2443
  %v2445 = vrot.slane %v2196, 4
  %v2446 = vadd.f32 %v2196, %v2445
  %v2447 = vrot.slane %v2446, 2
  %v2448 = vadd.f32 %v2446, %v2447
  %v2449 = vrot.slane %v2448, 1
  %v2450 = vadd.f32 %v2448, %v2449
  %v2451 = vrot.slane %v2197, 4
  %v2452 = vadd.f32 %v2197, %v2451
  %v2453 = vrot.slane %v2452, 2
  %v2454 = vadd.f32 %v2452, %v2453
  %v2455 = vrot.slane %v2454, 1
  %v2456 = vadd.f32 %v2454, %v2455
  %v2457 = vrot.slane %v2198, 4
  %v2458 = vadd.f32 %v2198, %v2457
  %v2459 = vrot.slane %v2458, 2
  %v2460 = vadd.f32 %v2458, %v2459
  %v2461 = vrot.slane %v2460, 1
  %v2462 = vadd.f32 %v2460, %v2461
  %v2463 = vrot.slane %v2199, 4
  %v2464 = vadd.f32 %v2199, %v2463
  %v2465 = vrot.slane %v2464, 2
  %v2466 = vadd.f32 %v2464, %v2465
  %v2467 = vrot.slane %v2466, 1
  %v2468 = vadd.f32 %v2466, %v2467
  %v2469 = vrot.slane %v2200, 4
  %v2470 = vadd.f32 %v2200, %v2469
  %v2471 = vrot.slane %v2470, 2
  %v2472 = vadd.f32 %v2470, %v2471
  %v2473 = vrot.slane %v2472, 1
  %v2474 = vadd.f32 %v2472, %v2473
  %v2475 = vrot.slane %v2201, 4
  %v2476 = vadd.f32 %v2201, %v2475
  %v2477 = vrot.slane %v2476, 2
  %v2478 = vadd.f32 %v2476, %v2477
  %v2479 = vrot.slane %v2478, 1
  %v2480 = vadd.f32 %v2478, %v2479
  %v2481 = vrot.slane %v2202, 4
  %v2482 = vadd.f32 %v2202, %v2481
  %v2483 = vrot.slane %v2482, 2
  %v2484 = vadd.f32 %v2482, %v2483
  %v2485 = vrot.slane %v2484, 1
  %v2486 = vadd.f32 %v2484, %v2485
  %v2487 = vrot.slane %v2203, 4
  %v2488 = vadd.f32 %v2203, %v2487
  %v2489 = vrot.slane %v2488, 2
  %v2490 = vadd.f32 %v2488, %v2489
  %v2491 = vrot.slane %v2490, 1
  %v2492 = vadd.f32 %v2490, %v2491
  %v2493 = vrot.slane %v2204, 4
  %v2494 = vadd.f32 %v2204, %v2493
  %v2495 = vrot.slane %v2494, 2
  %v2496 = vadd.f32 %v2494, %v2495
  %v2497 = vrot.slane %v2496, 1
  %v2498 = vadd.f32 %v2496, %v2497
  %v2499 = vrot.slane %v2205, 4
  %v2500 = vadd.f32 %v2205, %v2499
  %v2501 = vrot.slane %v2500, 2
  %v2502 = vadd.f32 %v2500, %v2501
  %v2503 = vrot.slane %v2502, 1
  %v2504 = vadd.f32 %v2502, %v2503
  %v2505 = vrot.slane %v2206, 4
  %v2506 = vadd.f32 %v2206, %v2505
  %v2507 = vrot.slane %v2506, 2
  %v2508 = vadd.f32 %v2506, %v2507
  %v2509 = vrot.slane %v2508, 1
  %v2510 = vadd.f32 %v2508, %v2509
  %v2511 = vrot.slane %v2207, 4
  %v2512 = vadd.f32 %v2207, %v2511
  %v2513 = vrot.slane %v2512, 2
  %v2514 = vadd.f32 %v2512, %v2513
  %v2515 = vrot.slane %v2514, 1
  %v2516 = vadd.f32 %v2514, %v2515
  %v2517 = vrot.slane %v2208, 4
  %v2518 = vadd.f32 %v2208, %v2517
  %v2519 = vrot.slane %v2518, 2
  %v2520 = vadd.f32 %v2518, %v2519
  %v2521 = vrot.slane %v2520, 1
  %v2522 = vadd.f32 %v2520, %v2521
  %v2523 = vrot.slane %v2209, 4
  %v2524 = vadd.f32 %v2209, %v2523
  %v2525 = vrot.slane %v2524, 2
  %v2526 = vadd.f32 %v2524, %v2525
  %v2527 = vrot.slane %v2526, 1
  %v2528 = vadd.f32 %v2526, %v2527
  %v2529 = vrot.slane %v2210, 4
  %v2530 = vadd.f32 %v2210, %v2529
  %v2531 = vrot.slane %v2530, 2
  %v2532 = vadd.f32 %v2530, %v2531
  %v2533 = vrot.slane %v2532, 1
  %v2534 = vadd.f32 %v2532, %v2533
  %v2535 = vrot.slane %v2211, 4
  %v2536 = vadd.f32 %v2211, %v2535
  %v2537 = vrot.slane %v2536, 2
  %v2538 = vadd.f32 %v2536, %v2537
  %v2539 = vrot.slane %v2538, 1
  %v2540 = vadd.f32 %v2538, %v2539
  %v2541 = vrot.slane %v2212, 4
  %v2542 = vadd.f32 %v2212, %v2541
  %v2543 = vrot.slane %v2542, 2
  %v2544 = vadd.f32 %v2542, %v2543
  %v2545 = vrot.slane %v2544, 1
  %v2546 = vadd.f32 %v2544, %v2545
  %v2547 = vrot.slane %v2213, 4
  %v2548 = vadd.f32 %v2213, %v2547
  %v2549 = vrot.slane %v2548, 2
  %v2550 = vadd.f32 %v2548, %v2549
  %v2551 = vrot.slane %v2550, 1
  %v2552 = vadd.f32 %v2550, %v2551
  %v2553 = vrot.slane %v2214, 4
  %v2554 = vadd.f32 %v2214, %v2553
  %v2555 = vrot.slane %v2554, 2
  %v2556 = vadd.f32 %v2554, %v2555
  %v2557 = vrot.slane %v2556, 1
  %v2558 = vadd.f32 %v2556, %v2557
  %v2559 = vrot.slane %v2215, 4
  %v2560 = vadd.f32 %v2215, %v2559
  %v2561 = vrot.slane %v2560, 2
  %v2562 = vadd.f32 %v2560, %v2561
  %v2563 = vrot.slane %v2562, 1
  %v2564 = vadd.f32 %v2562, %v2563
  %v2565 = vrot.slane %v2216, 4
  %v2566 = vadd.f32 %v2216, %v2565
  %v2567 = vrot.slane %v2566, 2
  %v2568 = vadd.f32 %v2566, %v2567
  %v2569 = vrot.slane %v2568, 1
  %v2570 = vadd.f32 %v2568, %v2569
  %v2571 = vrot.slane %v2217, 4
  %v2572 = vadd.f32 %v2217, %v2571
  %v2573 = vrot.slane %v2572, 2
  %v2574 = vadd.f32 %v2572, %v2573
  %v2575 = vrot.slane %v2574, 1
  %v2576 = vadd.f32 %v2574, %v2575
  %v2577 = vrot.slane %v2218, 4
  %v2578 = vadd.f32 %v2218, %v2577
  %v2579 = vrot.slane %v2578, 2
  %v2580 = vadd.f32 %v2578, %v2579
  %v2581 = vrot.slane %v2580, 1
  %v2582 = vadd.f32 %v2580, %v2581
  %v2583 = vrot.slane %v2219, 4
  %v2584 = vadd.f32 %v2219, %v2583
  %v2585 = vrot.slane %v2584, 2
  %v2586 = vadd.f32 %v2584, %v2585
  %v2587 = vrot.slane %v2586, 1
  %v2588 = vadd.f32 %v2586, %v2587
  %v2589 = vrot.slane %v2220, 4
  %v2590 = vadd.f32 %v2220, %v2589
  %v2591 = vrot.slane %v2590, 2
  %v2592 = vadd.f32 %v2590, %v2591
  %v2593 = vrot.slane %v2592, 1
  %v2594 = vadd.f32 %v2592, %v2593
  %v2595 = vrot.slane %v2221, 4
  %v2596 = vadd.f32 %v2221, %v2595
  %v2597 = vrot.slane %v2596, 2
  %v2598 = vadd.f32 %v2596, %v2597
  %v2599 = vrot.slane %v2598, 1
  %v2600 = vadd.f32 %v2598, %v2599
  %v2601 = vrot.slane %v2222, 4
  %v2602 = vadd.f32 %v2222, %v2601
  %v2603 = vrot.slane %v2602, 2
  %v2604 = vadd.f32 %v2602, %v2603
  %v2605 = vrot.slane %v2604, 1
  %v2606 = vadd.f32 %v2604, %v2605
  %v2607 = vmul.f32 %v2228, %v2030
  %v2608 = vmul.f32 %v2234, %v2030
  %v2609 = vmul.f32 %v2240, %v2030
  %v2610 = vmul.f32 %v2246, %v2030
  %v2611 = vmul.f32 %v2252, %v2030
  %v2612 = vmul.f32 %v2258, %v2030
  %v2613 = vmul.f32 %v2264, %v2030
  %v2614 = vmul.f32 %v2270, %v2030
  %v2615 = vmul.f32 %v2276, %v2030
  %v2616 = vmul.f32 %v2282, %v2030
  %v2617 = vmul.f32 %v2288, %v2030
  %v2618 = vmul.f32 %v2294, %v2030
  %v2619 = vmul.f32 %v2300, %v2030
  %v2620 = vmul.f32 %v2306, %v2030
  %v2621 = vmul.f32 %v2312, %v2030
  %v2622 = vmul.f32 %v2318, %v2030
  %v2623 = vmul.f32 %v2324, %v2030
  %v2624 = vmul.f32 %v2330, %v2030
  %v2625 = vmul.f32 %v2336, %v2030
  %v2626 = vmul.f32 %v2342, %v2030
  %v2627 = vmul.f32 %v2348, %v2030
  %v2628 = vmul.f32 %v2354, %v2030
  %v2629 = vmul.f32 %v2360, %v2030
  %v2630 = vmul.f32 %v2366, %v2030
  %v2631 = vmul.f32 %v2372, %v2030
  %v2632 = vmul.f32 %v2378, %v2030
  %v2633 = vmul.f32 %v2384, %v2030
  %v2634 = vmul.f32 %v2390, %v2030
  %v2635 = vmul.f32 %v2396, %v2030
  %v2636 = vmul.f32 %v2402, %v2030
  %v2637 = vmul.f32 %v2408, %v2030
  %v2638 = vmul.f32 %v2414, %v2030
  %v2639 = vmul.f32 %v2420, %v2030
  %v2640 = vmul.f32 %v2426, %v2030
  %v2641 = vmul.f32 %v2432, %v2030
  %v2642 = vmul.f32 %v2438, %v2030
  %v2643 = vmul.f32 %v2444, %v2030
  %v2644 = vmul.f32 %v2450, %v2030
  %v2645 = vmul.f32 %v2456, %v2030
  %v2646 = vmul.f32 %v2462, %v2030
  %v2647 = vmul.f32 %v2468, %v2030
  %v2648 = vmul.f32 %v2474, %v2030
  %v2649 = vmul.f32 %v2480, %v2030
  %v2650 = vmul.f32 %v2486, %v2030
  %v2651 = vmul.f32 %v2492, %v2030
  %v2652 = vmul.f32 %v2498, %v2030
  %v2653 = vmul.f32 %v2504, %v2030
  %v2654 = vmul.f32 %v2510, %v2030
  %v2655 = vmul.f32 %v2516, %v2030
  %v2656 = vmul.f32 %v2522, %v2030
  %v2657 = vmul.f32 %v2528, %v2030
  %v2658 = vmul.f32 %v2534, %v2030
  %v2659 = vmul.f32 %v2540, %v2030
  %v2660 = vmul.f32 %v2546, %v2030
  %v2661 = vmul.f32 %v2552, %v2030
  %v2662 = vmul.f32 %v2558, %v2030
  %v2663 = vmul.f32 %v2564, %v2030
  %v2664 = vmul.f32 %v2570, %v2030
  %v2665 = vmul.f32 %v2576, %v2030
  %v2666 = vmul.f32 %v2582, %v2030
  %v2667 = vmul.f32 %v2588, %v2030
  %v2668 = vmul.f32 %v2594, %v2030
  %v2669 = vmul.f32 %v2600, %v2030
  %v2670 = vmul.f32 %v2606, %v2030
  %v2671 = vadd.f32 %v2607, 0.001
  %v2672 = vadd.f32 %v2608, 0.001
  %v2673 = vadd.f32 %v2609, 0.001
  %v2674 = vadd.f32 %v2610, 0.001
  %v2675 = vadd.f32 %v2611, 0.001
  %v2676 = vadd.f32 %v2612, 0.001
  %v2677 = vadd.f32 %v2613, 0.001
  %v2678 = vadd.f32 %v2614, 0.001
  %v2679 = vadd.f32 %v2615, 0.001
  %v2680 = vadd.f32 %v2616, 0.001
  %v2681 = vadd.f32 %v2617, 0.001
  %v2682 = vadd.f32 %v2618, 0.001
  %v2683 = vadd.f32 %v2619, 0.001
  %v2684 = vadd.f32 %v2620, 0.001
  %v2685 = vadd.f32 %v2621, 0.001
  %v2686 = vadd.f32 %v2622, 0.001
  %v2687 = vadd.f32 %v2623, 0.001
  %v2688 = vadd.f32 %v2624, 0.001
  %v2689 = vadd.f32 %v2625, 0.001
  %v2690 = vadd.f32 %v2626, 0.001
  %v2691 = vadd.f32 %v2627, 0.001
  %v2692 = vadd.f32 %v2628, 0.001
  %v2693 = vadd.f32 %v2629, 0.001
  %v2694 = vadd.f32 %v2630, 0.001
  %v2695 = vadd.f32 %v2631, 0.001
  %v2696 = vadd.f32 %v2632, 0.001
  %v2697 = vadd.f32 %v2633, 0.001
  %v2698 = vadd.f32 %v2634, 0.001
  %v2699 = vadd.f32 %v2635, 0.001
  %v2700 = vadd.f32 %v2636, 0.001
  %v2701 = vadd.f32 %v2637, 0.001
  %v2702 = vadd.f32 %v2638, 0.001
  %v2703 = vadd.f32 %v2639, 0.001
  %v2704 = vadd.f32 %v2640, 0.001
  %v2705 = vadd.f32 %v2641, 0.001
  %v2706 = vadd.f32 %v2642, 0.001
  %v2707 = vadd.f32 %v2643, 0.001
  %v2708 = vadd.f32 %v2644, 0.001
  %v2709 = vadd.f32 %v2645, 0.001
  %v2710 = vadd.f32 %v2646, 0.001
  %v2711 = vadd.f32 %v2647, 0.001
  %v2712 = vadd.f32 %v2648, 0.001
  %v2713 = vadd.f32 %v2649, 0.001
  %v2714 = vadd.f32 %v2650, 0.001
  %v2715 = vadd.f32 %v2651, 0.001
  %v2716 = vadd.f32 %v2652, 0.001
  %v2717 = vadd.f32 %v2653, 0.001
  %v2718 = vadd.f32 %v2654, 0.001
  %v2719 = vadd.f32 %v2655, 0.001
  %v2720 = vadd.f32 %v2656, 0.001
  %v2721 = vadd.f32 %v2657, 0.001
  %v2722 = vadd.f32 %v2658, 0.001
  %v2723 = vadd.f32 %v2659, 0.001
  %v2724 = vadd.f32 %v2660, 0.001
  %v2725 = vadd.f32 %v2661, 0.001
  %v2726 = vadd.f32 %v2662, 0.001
  %v2727 = vadd.f32 %v2663, 0.001
  %v2728 = vadd.f32 %v2664, 0.001
  %v2729 = vadd.f32 %v2665, 0.001
  %v2730 = vadd.f32 %v2666, 0.001
  %v2731 = vadd.f32 %v2667, 0.001
  %v2732 = vadd.f32 %v2668, 0.001
  %v2733 = vadd.f32 %v2669, 0.001
  %v2734 = vadd.f32 %v2670, 0.001
  %v2735 = vrsqrt.pop %v2671
  %v2736 = vrsqrt.pop %v2672
  %v2737 = vrsqrt.pop %v2673
  %v2738 = vrsqrt.pop %v2674
  %v2739 = vrsqrt.pop %v2675
  %v2740 = vrsqrt.pop %v2676
  %v2741 = vrsqrt.pop %v2677
  %v2742 = vrsqrt.pop %v2678
  %v2743 = vrsqrt.pop %v2679
  %v2744 = vrsqrt.pop %v2680
  %v2745 = vrsqrt.pop %v2681
  %v2746 = vrsqrt.pop %v2682
  %v2747 = vrsqrt.pop %v2683
  %v2748 = vrsqrt.pop %v2684
  %v2749 = vrsqrt.pop %v2685
  %v2750 = vrsqrt.pop %v2686
  %v2751 = vrsqrt.pop %v2687
  %v2752 = vrsqrt.pop %v2688
  %v2753 = vrsqrt.pop %v2689
  %v2754 = vrsqrt.pop %v2690
  %v2755 = vrsqrt.pop %v2691
  %v2756 = vrsqrt.pop %v2692
  %v2757 = vrsqrt.pop %v2693
  %v2758 = vrsqrt.pop %v2694
  %v2759 = vrsqrt.pop %v2695
  %v2760 = vrsqrt.pop %v2696
  %v2761 = vrsqrt.pop %v2697
  %v2762 = vrsqrt.pop %v2698
  %v2763 = vrsqrt.pop %v2699
  %v2764 = vrsqrt.pop %v2700
  %v2765 = vrsqrt.pop %v2701
  %v2766 = vrsqrt.pop %v2702
  %v2767 = vrsqrt.pop %v2703
  %v2768 = vrsqrt.pop %v2704
  %v2769 = vrsqrt.pop %v2705
  %v2770 = vrsqrt.pop %v2706
  %v2771 = vrsqrt.pop %v2707
  %v2772 = vrsqrt.pop %v2708
  %v2773 = vrsqrt.pop %v2709
  %v2774 = vrsqrt.pop %v2710
  %v2775 = vrsqrt.pop %v2711
  %v2776 = vrsqrt.pop %v2712
  %v2777 = vrsqrt.pop %v2713
  %v2778 = vrsqrt.pop %v2714
  %v2779 = vrsqrt.pop %v2715
  %v2780 = vrsqrt.pop %v2716
  %v2781 = vrsqrt.pop %v2717
  %v2782 = vrsqrt.pop %v2718
  %v2783 = vrsqrt.pop %v2719
  %v2784 = vrsqrt.pop %v2720
  %v2785 = vrsqrt.pop %v2721
  %v2786 = vrsqrt.pop %v2722
  %v2787 = vrsqrt.pop %v2723
  %v2788 = vrsqrt.pop %v2724
  %v2789 = vrsqrt.pop %v2725
  %v2790 = vrsqrt.pop %v2726
  %v2791 = vrsqrt.pop %v2727
  %v2792 = vrsqrt.pop %v2728
  %v2793 = vrsqrt.pop %v2729
  %v2794 = vrsqrt.pop %v2730
  %v2795 = vrsqrt.pop %v2731
  %v2796 = vrsqrt.pop %v2732
  %v2797 = vrsqrt.pop %v2733
  %v2798 = vrsqrt.pop %v2734
  %v2799 = vmul.f32 %v2095, %v2735
  %v2800 = vmul.f32 %v2096, %v2736
  %v2801 = vmul.f32 %v2097, %v2737
  %v2802 = vmul.f32 %v2098, %v2738
  %v2803 = vmul.f32 %v2099, %v2739
  %v2804 = vmul.f32 %v2100, %v2740
  %v2805 = vmul.f32 %v2101, %v2741
  %v2806 = vmul.f32 %v2102, %v2742
  %v2807 = vmul.f32 %v2103, %v2743
  %v2808 = vmul.f32 %v2104, %v2744
  %v2809 = vmul.f32 %v2105, %v2745
  %v2810 = vmul.f32 %v2106, %v2746
  %v2811 = vmul.f32 %v2107, %v2747
  %v2812 = vmul.f32 %v2108, %v2748
  %v2813 = vmul.f32 %v2109, %v2749
  %v2814 = vmul.f32 %v2110, %v2750
  %v2815 = vmul.f32 %v2111, %v2751
  %v2816 = vmul.f32 %v2112, %v2752
  %v2817 = vmul.f32 %v2113, %v2753
  %v2818 = vmul.f32 %v2114, %v2754
  %v2819 = vmul.f32 %v2115, %v2755
  %v2820 = vmul.f32 %v2116, %v2756
  %v2821 = vmul.f32 %v2117, %v2757
  %v2822 = vmul.f32 %v2118, %v2758
  %v2823 = vmul.f32 %v2119, %v2759
  %v2824 = vmul.f32 %v2120, %v2760
  %v2825 = vmul.f32 %v2121, %v2761
  %v2826 = vmul.f32 %v2122, %v2762
  %v2827 = vmul.f32 %v2123, %v2763
  %v2828 = vmul.f32 %v2124, %v2764
  %v2829 = vmul.f32 %v2125, %v2765
  %v2830 = vmul.f32 %v2126, %v2766
  %v2831 = vmul.f32 %v2127, %v2767
  %v2832 = vmul.f32 %v2128, %v2768
  %v2833 = vmul.f32 %v2129, %v2769
  %v2834 = vmul.f32 %v2130, %v2770
  %v2835 = vmul.f32 %v2131, %v2771
  %v2836 = vmul.f32 %v2132, %v2772
  %v2837 = vmul.f32 %v2133, %v2773
  %v2838 = vmul.f32 %v2134, %v2774
  %v2839 = vmul.f32 %v2135, %v2775
  %v2840 = vmul.f32 %v2136, %v2776
  %v2841 = vmul.f32 %v2137, %v2777
  %v2842 = vmul.f32 %v2138, %v2778
  %v2843 = vmul.f32 %v2139, %v2779
  %v2844 = vmul.f32 %v2140, %v2780
  %v2845 = vmul.f32 %v2141, %v2781
  %v2846 = vmul.f32 %v2142, %v2782
  %v2847 = vmul.f32 %v2143, %v2783
  %v2848 = vmul.f32 %v2144, %v2784
  %v2849 = vmul.f32 %v2145, %v2785
  %v2850 = vmul.f32 %v2146, %v2786
  %v2851 = vmul.f32 %v2147, %v2787
  %v2852 = vmul.f32 %v2148, %v2788
  %v2853 = vmul.f32 %v2149, %v2789
  %v2854 = vmul.f32 %v2150, %v2790
  %v2855 = vmul.f32 %v2151, %v2791
  %v2856 = vmul.f32 %v2152, %v2792
  %v2857 = vmul.f32 %v2153, %v2793
  %v2858 = vmul.f32 %v2154, %v2794
  %v2859 = vmul.f32 %v2155, %v2795
  %v2860 = vmul.f32 %v2156, %v2796
  %v2861 = vmul.f32 %v2157, %v2797
  %v2862 = vmul.f32 %v2158, %v2798
  %v2863 = vld [vmem:[%s7] sm:$0xff]
  %v2864 = vld [vmem:[%s7 + $0x8] sm:$0xff]
  %v2867 = vlaneseq
  %v2868 = vshrl.u32 %v2867, 7
  %v2869 = vsub.s32 0, %v2868
  %v2870 = vrot.slane %v2863, %v2869
  %v2871 = vlaneseq
  %v2872 = vshrl.u32 %v2871, 7
  %v2873 = vsub.s32 1, %v2872
  %v2874 = vrot.slane %v2863, %v2873
  %v2875 = vlaneseq
  %v2876 = vshrl.u32 %v2875, 7
  %v2877 = vsub.s32 2, %v2876
  %v2878 = vrot.slane %v2863, %v2877
  %v2879 = vlaneseq
  %v2880 = vshrl.u32 %v2879, 7
  %v2881 = vsub.s32 3, %v2880
  %v2882 = vrot.slane %v2863, %v2881
  %v2883 = vlaneseq
  %v2884 = vshrl.u32 %v2883, 7
  %v2885 = vsub.s32 4, %v2884
  %v2886 = vrot.slane %v2863, %v2885
  %v2887 = vlaneseq
  %v2888 = vshrl.u32 %v2887, 7
  %v2889 = vsub.s32 5, %v2888
  %v2890 = vrot.slane %v2863, %v2889
  %v2891 = vlaneseq
  %v2892 = vshrl.u32 %v2891, 7
  %v2893 = vsub.s32 6, %v2892
  %v2894 = vrot.slane %v2863, %v2893
  %v2895 = vlaneseq
  %v2896 = vshrl.u32 %v2895, 7
  %v2897 = vsub.s32 7, %v2896
  %v2898 = vrot.slane %v2863, %v2897
  %v2899 = vlaneseq
  %v2900 = vshrl.u32 %v2899, 7
  %v2901 = vsub.s32 0, %v2900
  %v2902 = vrot.slane %v2864, %v2901
  %v2903 = vlaneseq
  %v2904 = vshrl.u32 %v2903, 7
  %v2905 = vsub.s32 1, %v2904
  %v2906 = vrot.slane %v2864, %v2905
  %v2907 = vlaneseq
  %v2908 = vshrl.u32 %v2907, 7
  %v2909 = vsub.s32 2, %v2908
  %v2910 = vrot.slane %v2864, %v2909
  %v2911 = vlaneseq
  %v2912 = vshrl.u32 %v2911, 7
  %v2913 = vsub.s32 3, %v2912
  %v2914 = vrot.slane %v2864, %v2913
  %v2915 = vlaneseq
  %v2916 = vshrl.u32 %v2915, 7
  %v2917 = vsub.s32 4, %v2916
  %v2918 = vrot.slane %v2864, %v2917
  %v2919 = vlaneseq
  %v2920 = vshrl.u32 %v2919, 7
  %v2921 = vsub.s32 5, %v2920
  %v2922 = vrot.slane %v2864, %v2921
  %v2923 = vlaneseq
  %v2924 = vshrl.u32 %v2923, 7
  %v2925 = vsub.s32 6, %v2924
  %v2926 = vrot.slane %v2864, %v2925
  %v2927 = vlaneseq
  %v2928 = vshrl.u32 %v2927, 7
  %v2929 = vsub.s32 7, %v2928
  %v2930 = vrot.slane %v2864, %v2929
  %v2947 = vmul.f32 %v2799, %v2870
  %v2948 = vmul.f32 %v2800, %v2874
  %v2949 = vmul.f32 %v2801, %v2878
  %v2950 = vmul.f32 %v2802, %v2882
  %v2951 = vmul.f32 %v2803, %v2886
  %v2952 = vmul.f32 %v2804, %v2890
  %v2953 = vmul.f32 %v2805, %v2894
  %v2954 = vmul.f32 %v2806, %v2898
  %v2955 = vmul.f32 %v2807, %v2902
  %v2956 = vmul.f32 %v2808, %v2906
  %v2957 = vmul.f32 %v2809, %v2910
  %v2958 = vmul.f32 %v2810, %v2914
  %v2959 = vmul.f32 %v2811, %v2918
  %v2960 = vmul.f32 %v2812, %v2922
  %v2961 = vmul.f32 %v2813, %v2926
  %v2962 = vmul.f32 %v2814, %v2930
  %v2963 = vmul.f32 %v2815, %v2870
  %v2964 = vmul.f32 %v2816, %v2874
  %v2965 = vmul.f32 %v2817, %v2878
  %v2966 = vmul.f32 %v2818, %v2882
  %v2967 = vmul.f32 %v2819, %v2886
  %v2968 = vmul.f32 %v2820, %v2890
  %v2969 = vmul.f32 %v2821, %v2894
  %v2970 = vmul.f32 %v2822, %v2898
  %v2971 = vmul.f32 %v2823, %v2902
  %v2972 = vmul.f32 %v2824, %v2906
  %v2973 = vmul.f32 %v2825, %v2910
  %v2974 = vmul.f32 %v2826, %v2914
  %v2975 = vmul.f32 %v2827, %v2918
  %v2976 = vmul.f32 %v2828, %v2922
  %v2977 = vmul.f32 %v2829, %v2926
  %v2978 = vmul.f32 %v2830, %v2930
  %v2979 = vmul.f32 %v2831, %v2870
  %v2980 = vmul.f32 %v2832, %v2874
  %v2981 = vmul.f32 %v2833, %v2878
  %v2982 = vmul.f32 %v2834, %v2882
  %v2983 = vmul.f32 %v2835, %v2886
  %v2984 = vmul.f32 %v2836, %v2890
  %v2985 = vmul.f32 %v2837, %v2894
  %v2986 = vmul.f32 %v2838, %v2898
  %v2987 = vmul.f32 %v2839, %v2902
  %v2988 = vmul.f32 %v2840, %v2906
  %v2989 = vmul.f32 %v2841, %v2910
  %v2990 = vmul.f32 %v2842, %v2914
  %v2991 = vmul.f32 %v2843, %v2918
  %v2992 = vmul.f32 %v2844, %v2922
  %v2993 = vmul.f32 %v2845, %v2926
  %v2994 = vmul.f32 %v2846, %v2930
  %v2995 = vmul.f32 %v2847, %v2870
  %v2996 = vmul.f32 %v2848, %v2874
  %v2997 = vmul.f32 %v2849, %v2878
  %v2998 = vmul.f32 %v2850, %v2882
  %v2999 = vmul.f32 %v2851, %v2886
  %v3000 = vmul.f32 %v2852, %v2890
  %v3001 = vmul.f32 %v2853, %v2894
  %v3002 = vmul.f32 %v2854, %v2898
  %v3003 = vmul.f32 %v2855, %v2902
  %v3004 = vmul.f32 %v2856, %v2906
  %v3005 = vmul.f32 %v2857, %v2910
  %v3006 = vmul.f32 %v2858, %v2914
  %v3007 = vmul.f32 %v2859, %v2918
  %v3008 = vmul.f32 %v2860, %v2922
  %v3009 = vmul.f32 %v2861, %v2926
  %v3010 = vmul.f32 %v2862, %v2930
  %v3011 = vld [vmem:[%s8] sm:$0xff]
  %v3012 = vld [vmem:[%s8 + $0x8] sm:$0xff]
  %v3015 = vlaneseq
  %v3016 = vshrl.u32 %v3015, 7
  %v3017 = vsub.s32 0, %v3016
  %v3018 = vrot.slane %v3011, %v3017
  %v3019 = vlaneseq
  %v3020 = vshrl.u32 %v3019, 7
  %v3021 = vsub.s32 1, %v3020
  %v3022 = vrot.slane %v3011, %v3021
  %v3023 = vlaneseq
  %v3024 = vshrl.u32 %v3023, 7
  %v3025 = vsub.s32 2, %v3024
  %v3026 = vrot.slane %v3011, %v3025
  %v3027 = vlaneseq
  %v3028 = vshrl.u32 %v3027, 7
  %v3029 = vsub.s32 3, %v3028
  %v3030 = vrot.slane %v3011, %v3029
  %v3031 = vlaneseq
  %v3032 = vshrl.u32 %v3031, 7
  %v3033 = vsub.s32 4, %v3032
  %v3034 = vrot.slane %v3011, %v3033
  %v3035 = vlaneseq
  %v3036 = vshrl.u32 %v3035, 7
  %v3037 = vsub.s32 5, %v3036
  %v3038 = vrot.slane %v3011, %v3037
  %v3039 = vlaneseq
  %v3040 = vshrl.u32 %v3039, 7
  %v3041 = vsub.s32 6, %v3040
  %v3042 = vrot.slane %v3011, %v3041
  %v3043 = vlaneseq
  %v3044 = vshrl.u32 %v3043, 7
  %v3045 = vsub.s32 7, %v3044
  %v3046 = vrot.slane %v3011, %v3045
  %v3047 = vlaneseq
  %v3048 = vshrl.u32 %v3047, 7
  %v3049 = vsub.s32 0, %v3048
  %v3050 = vrot.slane %v3012, %v3049
  %v3051 = vlaneseq
  %v3052 = vshrl.u32 %v3051, 7
  %v3053 = vsub.s32 1, %v3052
  %v3054 = vrot.slane %v3012, %v3053
  %v3055 = vlaneseq
  %v3056 = vshrl.u32 %v3055, 7
  %v3057 = vsub.s32 2, %v3056
  %v3058 = vrot.slane %v3012, %v3057
  %v3059 = vlaneseq
  %v3060 = vshrl.u32 %v3059, 7
  %v3061 = vsub.s32 3, %v3060
  %v3062 = vrot.slane %v3012, %v3061
  %v3063 = vlaneseq
  %v3064 = vshrl.u32 %v3063, 7
  %v3065 = vsub.s32 4, %v3064
  %v3066 = vrot.slane %v3012, %v3065
  %v3067 = vlaneseq
  %v3068 = vshrl.u32 %v3067, 7
  %v3069 = vsub.s32 5, %v3068
  %v3070 = vrot.slane %v3012, %v3069
  %v3071 = vlaneseq
  %v3072 = vshrl.u32 %v3071, 7
  %v3073 = vsub.s32 6, %v3072
  %v3074 = vrot.slane %v3012, %v3073
  %v3075 = vlaneseq
  %v3076 = vshrl.u32 %v3075, 7
  %v3077 = vsub.s32 7, %v3076
  %v3078 = vrot.slane %v3012, %v3077
  %v3095 = vadd.f32 %v2947, %v3018
  %v3096 = vadd.f32 %v2948, %v3022
  %v3097 = vadd.f32 %v2949, %v3026
  %v3098 = vadd.f32 %v2950, %v3030
  %v3099 = vadd.f32 %v2951, %v3034
  %v3100 = vadd.f32 %v2952, %v3038
  %v3101 = vadd.f32 %v2953, %v3042
  %v3102 = vadd.f32 %v2954, %v3046
  %v3103 = vadd.f32 %v2955, %v3050
  %v3104 = vadd.f32 %v2956, %v3054
  %v3105 = vadd.f32 %v2957, %v3058
  %v3106 = vadd.f32 %v2958, %v3062
  %v3107 = vadd.f32 %v2959, %v3066
  %v3108 = vadd.f32 %v2960, %v3070
  %v3109 = vadd.f32 %v2961, %v3074
  %v3110 = vadd.f32 %v2962, %v3078
  %v3111 = vadd.f32 %v2963, %v3018
  %v3112 = vadd.f32 %v2964, %v3022
  %v3113 = vadd.f32 %v2965, %v3026
  %v3114 = vadd.f32 %v2966, %v3030
  %v3115 = vadd.f32 %v2967, %v3034
  %v3116 = vadd.f32 %v2968, %v3038
  %v3117 = vadd.f32 %v2969, %v3042
  %v3118 = vadd.f32 %v2970, %v3046
  %v3119 = vadd.f32 %v2971, %v3050
  %v3120 = vadd.f32 %v2972, %v3054
  %v3121 = vadd.f32 %v2973, %v3058
  %v3122 = vadd.f32 %v2974, %v3062
  %v3123 = vadd.f32 %v2975, %v3066
  %v3124 = vadd.f32 %v2976, %v3070
  %v3125 = vadd.f32 %v2977, %v3074
  %v3126 = vadd.f32 %v2978, %v3078
  %v3127 = vadd.f32 %v2979, %v3018
  %v3128 = vadd.f32 %v2980, %v3022
  %v3129 = vadd.f32 %v2981, %v3026
  %v3130 = vadd.f32 %v2982, %v3030
  %v3131 = vadd.f32 %v2983, %v3034
  %v3132 = vadd.f32 %v2984, %v3038
  %v3133 = vadd.f32 %v2985, %v3042
  %v3134 = vadd.f32 %v2986, %v3046
  %v3135 = vadd.f32 %v2987, %v3050
  %v3136 = vadd.f32 %v2988, %v3054
  %v3137 = vadd.f32 %v2989, %v3058
  %v3138 = vadd.f32 %v2990, %v3062
  %v3139 = vadd.f32 %v2991, %v3066
  %v3140 = vadd.f32 %v2992, %v3070
  %v3141 = vadd.f32 %v2993, %v3074
  %v3142 = vadd.f32 %v2994, %v3078
  %v3143 = vadd.f32 %v2995, %v3018
  %v3144 = vadd.f32 %v2996, %v3022
  %v3145 = vadd.f32 %v2997, %v3026
  %v3146 = vadd.f32 %v2998, %v3030
  %v3147 = vadd.f32 %v2999, %v3034
  %v3148 = vadd.f32 %v3000, %v3038
  %v3149 = vadd.f32 %v3001, %v3042
  %v3150 = vadd.f32 %v3002, %v3046
  %v3151 = vadd.f32 %v3003, %v3050
  %v3152 = vadd.f32 %v3004, %v3054
  %v3153 = vadd.f32 %v3005, %v3058
  %v3154 = vadd.f32 %v3006, %v3062
  %v3155 = vadd.f32 %v3007, %v3066
  %v3156 = vadd.f32 %v3008, %v3070
  %v3157 = vadd.f32 %v3009, %v3074
  %v3158 = vadd.f32 %v3010, %v3078
  %v3159 = vmul.f32 %v3095, %v1582
  %v3160 = vmul.f32 %v3096, %v1583
  %v3161 = vmul.f32 %v3097, %v1584
  %v3162 = vmul.f32 %v3098, %v1585
  %v3163 = vmul.f32 %v3099, %v1586
  %v3164 = vmul.f32 %v3100, %v1587
  %v3165 = vmul.f32 %v3101, %v1588
  %v3166 = vmul.f32 %v3102, %v1589
  %v3167 = vmul.f32 %v3103, %v1590
  %v3168 = vmul.f32 %v3104, %v1591
  %v3169 = vmul.f32 %v3105, %v1592
  %v3170 = vmul.f32 %v3106, %v1593
  %v3171 = vmul.f32 %v3107, %v1594
  %v3172 = vmul.f32 %v3108, %v1595
  %v3173 = vmul.f32 %v3109, %v1596
  %v3174 = vmul.f32 %v3110, %v1597
  %v3175 = vmul.f32 %v3111, %v1598
  %v3176 = vmul.f32 %v3112, %v1599
  %v3177 = vmul.f32 %v3113, %v1600
  %v3178 = vmul.f32 %v3114, %v1601
  %v3179 = vmul.f32 %v3115, %v1602
  %v3180 = vmul.f32 %v3116, %v1603
  %v3181 = vmul.f32 %v3117, %v1604
  %v3182 = vmul.f32 %v3118, %v1605
  %v3183 = vmul.f32 %v3119, %v1606
  %v3184 = vmul.f32 %v3120, %v1607
  %v3185 = vmul.f32 %v3121, %v1608
  %v3186 = vmul.f32 %v3122, %v1609
  %v3187 = vmul.f32 %v3123, %v1610
  %v3188 = vmul.f32 %v3124, %v1611
  %v3189 = vmul.f32 %v3125, %v1612
  %v3190 = vmul.f32 %v3126, %v1613
  %v3191 = vmul.f32 %v3127, %v1614
  %v3192 = vmul.f32 %v3128, %v1615
  %v3193 = vmul.f32 %v3129, %v1616
  %v3194 = vmul.f32 %v3130, %v1617
  %v3195 = vmul.f32 %v3131, %v1618
  %v3196 = vmul.f32 %v3132, %v1619
  %v3197 = vmul.f32 %v3133, %v1620
  %v3198 = vmul.f32 %v3134, %v1621
  %v3199 = vmul.f32 %v3135, %v1622
  %v3200 = vmul.f32 %v3136, %v1623
  %v3201 = vmul.f32 %v3137, %v1624
  %v3202 = vmul.f32 %v3138, %v1625
  %v3203 = vmul.f32 %v3139, %v1626
  %v3204 = vmul.f32 %v3140, %v1627
  %v3205 = vmul.f32 %v3141, %v1628
  %v3206 = vmul.f32 %v3142, %v1629
  %v3207 = vmul.f32 %v3143, %v1630
  %v3208 = vmul.f32 %v3144, %v1631
  %v3209 = vmul.f32 %v3145, %v1632
  %v3210 = vmul.f32 %v3146, %v1633
  %v3211 = vmul.f32 %v3147, %v1634
  %v3212 = vmul.f32 %v3148, %v1635
  %v3213 = vmul.f32 %v3149, %v1636
  %v3214 = vmul.f32 %v3150, %v1637
  %v3215 = vmul.f32 %v3151, %v1638
  %v3216 = vmul.f32 %v3152, %v1639
  %v3217 = vmul.f32 %v3153, %v1640
  %v3218 = vmul.f32 %v3154, %v1641
  %v3219 = vmul.f32 %v3155, %v1642
  %v3220 = vmul.f32 %v3156, %v1643
  %v3221 = vmul.f32 %v3157, %v1644
  %v3222 = vmul.f32 %v3158, %v1645
  %v3223 = vpack.c.bf16 %v3175, %v3159
  %v3224 = vpack.c.bf16 %v3176, %v3160
  %v3225 = vpack.c.bf16 %v3177, %v3161
  %v3226 = vpack.c.bf16 %v3178, %v3162
  %v3227 = vpack.c.bf16 %v3179, %v3163
  %v3228 = vpack.c.bf16 %v3180, %v3164
  %v3229 = vpack.c.bf16 %v3181, %v3165
  %v3230 = vpack.c.bf16 %v3182, %v3166
  %v3231 = vpack.c.bf16 %v3183, %v3167
  %v3232 = vpack.c.bf16 %v3184, %v3168
  %v3233 = vpack.c.bf16 %v3185, %v3169
  %v3234 = vpack.c.bf16 %v3186, %v3170
  %v3235 = vpack.c.bf16 %v3187, %v3171
  %v3236 = vpack.c.bf16 %v3188, %v3172
  %v3237 = vpack.c.bf16 %v3189, %v3173
  %v3238 = vpack.c.bf16 %v3190, %v3174
  %v3239 = vpack.c.bf16 %v3207, %v3191
  %v3240 = vpack.c.bf16 %v3208, %v3192
  %v3241 = vpack.c.bf16 %v3209, %v3193
  %v3242 = vpack.c.bf16 %v3210, %v3194
  %v3243 = vpack.c.bf16 %v3211, %v3195
  %v3244 = vpack.c.bf16 %v3212, %v3196
  %v3245 = vpack.c.bf16 %v3213, %v3197
  %v3246 = vpack.c.bf16 %v3214, %v3198
  %v3247 = vpack.c.bf16 %v3215, %v3199
  %v3248 = vpack.c.bf16 %v3216, %v3200
  %v3249 = vpack.c.bf16 %v3217, %v3201
  %v3250 = vpack.c.bf16 %v3218, %v3202
  %v3251 = vpack.c.bf16 %v3219, %v3203
  %v3252 = vpack.c.bf16 %v3220, %v3204
  %v3253 = vpack.c.bf16 %v3221, %v3205
  %v3254 = vpack.c.bf16 %v3222, %v3206
  %v3255 = vld [vmem:[%s9] sm:$0xf]
  %v3256 = vld [vmem:[%s9 + $0x4] sm:$0xf]
  %v3257 = vld [vmem:[%s9 + $0x8] sm:$0xf]
  %v3258 = vld [vmem:[%s9 + $0xc] sm:$0xf]
  %v3259 = vld [vmem:[%s9 + $0x10] sm:$0xf]
  %v3260 = vld [vmem:[%s9 + $0x14] sm:$0xf]
  %v3261 = vld [vmem:[%s9 + $0x18] sm:$0xf]
  %v3262 = vld [vmem:[%s9 + $0x1c] sm:$0xf]
  %v3263 = vld [vmem:[%s9 + $0x20] sm:$0xf]
  %v3264 = vld [vmem:[%s9 + $0x24] sm:$0xf]
  %v3265 = vld [vmem:[%s9 + $0x28] sm:$0xf]
  %v3266 = vld [vmem:[%s9 + $0x2c] sm:$0xf]
  %v3267 = vld [vmem:[%s9 + $0x30] sm:$0xf]
  %v3268 = vld [vmem:[%s9 + $0x34] sm:$0xf]
  %v3269 = vld [vmem:[%s9 + $0x38] sm:$0xf]
  %v3270 = vld [vmem:[%s9 + $0x3c] sm:$0xf]
  %v3271 = vld [vmem:[%s9 + $0x40] sm:$0xf]
  %v3272 = vld [vmem:[%s9 + $0x44] sm:$0xf]
  %v3273 = vld [vmem:[%s9 + $0x48] sm:$0xf]
  %v3274 = vld [vmem:[%s9 + $0x4c] sm:$0xf]
  %v3275 = vld [vmem:[%s9 + $0x50] sm:$0xf]
  %v3276 = vld [vmem:[%s9 + $0x54] sm:$0xf]
  %v3277 = vld [vmem:[%s9 + $0x58] sm:$0xf]
  %v3278 = vld [vmem:[%s9 + $0x5c] sm:$0xf]
  %v3279 = vld [vmem:[%s9 + $0x60] sm:$0xf]
  %v3280 = vld [vmem:[%s9 + $0x64] sm:$0xf]
  %v3281 = vld [vmem:[%s9 + $0x68] sm:$0xf]
  %v3282 = vld [vmem:[%s9 + $0x6c] sm:$0xf]
  %v3283 = vld [vmem:[%s9 + $0x70] sm:$0xf]
  %v3284 = vld [vmem:[%s9 + $0x74] sm:$0xf]
  %v3285 = vld [vmem:[%s9 + $0x78] sm:$0xf]
  %v3286 = vld [vmem:[%s9 + $0x7c] sm:$0xf]
  %v3287 = vld [vmem:[%s9 + $0x80] sm:$0xf]
  %v3288 = vld [vmem:[%s9 + $0x84] sm:$0xf]
  %v3289 = vld [vmem:[%s9 + $0x88] sm:$0xf]
  %v3290 = vld [vmem:[%s9 + $0x8c] sm:$0xf]
  %v3291 = vld [vmem:[%s9 + $0x90] sm:$0xf]
  %v3292 = vld [vmem:[%s9 + $0x94] sm:$0xf]
  %v3293 = vld [vmem:[%s9 + $0x98] sm:$0xf]
  %v3294 = vld [vmem:[%s9 + $0x9c] sm:$0xf]
  %v3295 = vld [vmem:[%s9 + $0xa0] sm:$0xf]
  %v3296 = vld [vmem:[%s9 + $0xa4] sm:$0xf]
  %v3297 = vld [vmem:[%s9 + $0xa8] sm:$0xf]
  %v3298 = vld [vmem:[%s9 + $0xac] sm:$0xf]
  %v3299 = vld [vmem:[%s9 + $0xb0] sm:$0xf]
  %v3300 = vld [vmem:[%s9 + $0xb4] sm:$0xf]
  %v3301 = vld [vmem:[%s9 + $0xb8] sm:$0xf]
  %v3302 = vld [vmem:[%s9 + $0xbc] sm:$0xf]
  %v3303 = vld [vmem:[%s9 + $0xc0] sm:$0xf]
  %v3304 = vld [vmem:[%s9 + $0xc4] sm:$0xf]
  %v3305 = vld [vmem:[%s9 + $0xc8] sm:$0xf]
  %v3306 = vld [vmem:[%s9 + $0xcc] sm:$0xf]
  %v3307 = vld [vmem:[%s9 + $0xd0] sm:$0xf]
  %v3308 = vld [vmem:[%s9 + $0xd4] sm:$0xf]
  %v3309 = vld [vmem:[%s9 + $0xd8] sm:$0xf]
  %v3310 = vld [vmem:[%s9 + $0xdc] sm:$0xf]
  %v3311 = vld [vmem:[%s9 + $0xe0] sm:$0xf]
  %v3312 = vld [vmem:[%s9 + $0xe4] sm:$0xf]
  %v3313 = vld [vmem:[%s9 + $0xe8] sm:$0xf]
  %v3314 = vld [vmem:[%s9 + $0xec] sm:$0xf]
  %v3315 = vld [vmem:[%s9 + $0xf0] sm:$0xf]
  %v3316 = vld [vmem:[%s9 + $0xf4] sm:$0xf]
  %v3317 = vld [vmem:[%s9 + $0xf8] sm:$0xf]
  %v3318 = vld [vmem:[%s9 + $0xfc] sm:$0xf]
  %v3319 = vld [vmem:[%s9 + $0x100] sm:$0xf]
  %v3320 = vld [vmem:[%s9 + $0x104] sm:$0xf]
  %v3321 = vld [vmem:[%s9 + $0x108] sm:$0xf]
  %v3322 = vld [vmem:[%s9 + $0x10c] sm:$0xf]
  %v3323 = vld [vmem:[%s9 + $0x110] sm:$0xf]
  %v3324 = vld [vmem:[%s9 + $0x114] sm:$0xf]
  %v3325 = vld [vmem:[%s9 + $0x118] sm:$0xf]
  %v3326 = vld [vmem:[%s9 + $0x11c] sm:$0xf]
  %v3327 = vld [vmem:[%s9 + $0x120] sm:$0xf]
  %v3328 = vld [vmem:[%s9 + $0x124] sm:$0xf]
  %v3329 = vld [vmem:[%s9 + $0x128] sm:$0xf]
  %v3330 = vld [vmem:[%s9 + $0x12c] sm:$0xf]
  %v3331 = vld [vmem:[%s9 + $0x130] sm:$0xf]
  %v3332 = vld [vmem:[%s9 + $0x134] sm:$0xf]
  %v3333 = vld [vmem:[%s9 + $0x138] sm:$0xf]
  %v3334 = vld [vmem:[%s9 + $0x13c] sm:$0xf]
  %v3335 = vld [vmem:[%s9 + $0x140] sm:$0xf]
  %v3336 = vld [vmem:[%s9 + $0x144] sm:$0xf]
  %v3337 = vld [vmem:[%s9 + $0x148] sm:$0xf]
  %v3338 = vld [vmem:[%s9 + $0x14c] sm:$0xf]
  %v3339 = vld [vmem:[%s9 + $0x150] sm:$0xf]
  %v3340 = vld [vmem:[%s9 + $0x154] sm:$0xf]
  %v3341 = vld [vmem:[%s9 + $0x158] sm:$0xf]
  %v3342 = vld [vmem:[%s9 + $0x15c] sm:$0xf]
  %v3343 = vld [vmem:[%s9 + $0x160] sm:$0xf]
  %v3344 = vld [vmem:[%s9 + $0x164] sm:$0xf]
  %v3345 = vld [vmem:[%s9 + $0x168] sm:$0xf]
  %v3346 = vld [vmem:[%s9 + $0x16c] sm:$0xf]
  %v3347 = vld [vmem:[%s9 + $0x170] sm:$0xf]
  %v3348 = vld [vmem:[%s9 + $0x174] sm:$0xf]
  %v3349 = vld [vmem:[%s9 + $0x178] sm:$0xf]
  %v3350 = vld [vmem:[%s9 + $0x17c] sm:$0xf]
  %v3351 = vld [vmem:[%s9 + $0x180] sm:$0xf]
  %v3352 = vld [vmem:[%s9 + $0x184] sm:$0xf]
  %v3353 = vld [vmem:[%s9 + $0x188] sm:$0xf]
  %v3354 = vld [vmem:[%s9 + $0x18c] sm:$0xf]
  %v3355 = vld [vmem:[%s9 + $0x190] sm:$0xf]
  %v3356 = vld [vmem:[%s9 + $0x194] sm:$0xf]
  %v3357 = vld [vmem:[%s9 + $0x198] sm:$0xf]
  %v3358 = vld [vmem:[%s9 + $0x19c] sm:$0xf]
  %v3359 = vld [vmem:[%s9 + $0x1a0] sm:$0xf]
  %v3360 = vld [vmem:[%s9 + $0x1a4] sm:$0xf]
  %v3361 = vld [vmem:[%s9 + $0x1a8] sm:$0xf]
  %v3362 = vld [vmem:[%s9 + $0x1ac] sm:$0xf]
  %v3363 = vld [vmem:[%s9 + $0x1b0] sm:$0xf]
  %v3364 = vld [vmem:[%s9 + $0x1b4] sm:$0xf]
  %v3365 = vld [vmem:[%s9 + $0x1b8] sm:$0xf]
  %v3366 = vld [vmem:[%s9 + $0x1bc] sm:$0xf]
  %v3367 = vld [vmem:[%s9 + $0x1c0] sm:$0xf]
  %v3368 = vld [vmem:[%s9 + $0x1c4] sm:$0xf]
  %v3369 = vld [vmem:[%s9 + $0x1c8] sm:$0xf]
  %v3370 = vld [vmem:[%s9 + $0x1cc] sm:$0xf]
  %v3371 = vld [vmem:[%s9 + $0x1d0] sm:$0xf]
  %v3372 = vld [vmem:[%s9 + $0x1d4] sm:$0xf]
  %v3373 = vld [vmem:[%s9 + $0x1d8] sm:$0xf]
  %v3374 = vld [vmem:[%s9 + $0x1dc] sm:$0xf]
  %v3375 = vld [vmem:[%s9 + $0x1e0] sm:$0xf]
  %v3376 = vld [vmem:[%s9 + $0x1e4] sm:$0xf]
  %v3377 = vld [vmem:[%s9 + $0x1e8] sm:$0xf]
  %v3378 = vld [vmem:[%s9 + $0x1ec] sm:$0xf]
  %v3379 = vld [vmem:[%s9 + $0x1f0] sm:$0xf]
  %v3380 = vld [vmem:[%s9 + $0x1f4] sm:$0xf]
  %v3381 = vld [vmem:[%s9 + $0x1f8] sm:$0xf]
  %v3382 = vld [vmem:[%s9 + $0x1fc] sm:$0xf]
  %v3383 = vld [vmem:[%s9 + $0x200] sm:$0xf]
  %v3384 = vld [vmem:[%s9 + $0x204] sm:$0xf]
  %v3385 = vld [vmem:[%s9 + $0x208] sm:$0xf]
  %v3386 = vld [vmem:[%s9 + $0x20c] sm:$0xf]
  %v3387 = vld [vmem:[%s9 + $0x210] sm:$0xf]
  %v3388 = vld [vmem:[%s9 + $0x214] sm:$0xf]
  %v3389 = vld [vmem:[%s9 + $0x218] sm:$0xf]
  %v3390 = vld [vmem:[%s9 + $0x21c] sm:$0xf]
  %v3391 = vld [vmem:[%s9 + $0x220] sm:$0xf]
  %v3392 = vld [vmem:[%s9 + $0x224] sm:$0xf]
  %v3393 = vld [vmem:[%s9 + $0x228] sm:$0xf]
  %v3394 = vld [vmem:[%s9 + $0x22c] sm:$0xf]
  %v3395 = vld [vmem:[%s9 + $0x230] sm:$0xf]
  %v3396 = vld [vmem:[%s9 + $0x234] sm:$0xf]
  %v3397 = vld [vmem:[%s9 + $0x238] sm:$0xf]
  %v3398 = vld [vmem:[%s9 + $0x23c] sm:$0xf]
  %v3399 = vld [vmem:[%s9 + $0x240] sm:$0xf]
  %v3400 = vld [vmem:[%s9 + $0x244] sm:$0xf]
  %v3401 = vld [vmem:[%s9 + $0x248] sm:$0xf]
  %v3402 = vld [vmem:[%s9 + $0x24c] sm:$0xf]
  %v3403 = vld [vmem:[%s9 + $0x250] sm:$0xf]
  %v3404 = vld [vmem:[%s9 + $0x254] sm:$0xf]
  %v3405 = vld [vmem:[%s9 + $0x258] sm:$0xf]
  %v3406 = vld [vmem:[%s9 + $0x25c] sm:$0xf]
  %v3407 = vld [vmem:[%s9 + $0x260] sm:$0xf]
  %v3408 = vld [vmem:[%s9 + $0x264] sm:$0xf]
  %v3409 = vld [vmem:[%s9 + $0x268] sm:$0xf]
  %v3410 = vld [vmem:[%s9 + $0x26c] sm:$0xf]
  %v3411 = vld [vmem:[%s9 + $0x270] sm:$0xf]
  %v3412 = vld [vmem:[%s9 + $0x274] sm:$0xf]
  %v3413 = vld [vmem:[%s9 + $0x278] sm:$0xf]
  %v3414 = vld [vmem:[%s9 + $0x27c] sm:$0xf]
  %v3415 = vld [vmem:[%s9 + $0x280] sm:$0xf]
  %v3416 = vld [vmem:[%s9 + $0x284] sm:$0xf]
  %v3417 = vld [vmem:[%s9 + $0x288] sm:$0xf]
  %v3418 = vld [vmem:[%s9 + $0x28c] sm:$0xf]
  %v3419 = vld [vmem:[%s9 + $0x290] sm:$0xf]
  %v3420 = vld [vmem:[%s9 + $0x294] sm:$0xf]
  %v3421 = vld [vmem:[%s9 + $0x298] sm:$0xf]
  %v3422 = vld [vmem:[%s9 + $0x29c] sm:$0xf]
  %v3423 = vld [vmem:[%s9 + $0x2a0] sm:$0xf]
  %v3424 = vld [vmem:[%s9 + $0x2a4] sm:$0xf]
  %v3425 = vld [vmem:[%s9 + $0x2a8] sm:$0xf]
  %v3426 = vld [vmem:[%s9 + $0x2ac] sm:$0xf]
  %v3427 = vld [vmem:[%s9 + $0x2b0] sm:$0xf]
  %v3428 = vld [vmem:[%s9 + $0x2b4] sm:$0xf]
  %v3429 = vld [vmem:[%s9 + $0x2b8] sm:$0xf]
  %v3430 = vld [vmem:[%s9 + $0x2bc] sm:$0xf]
  %v3431 = vld [vmem:[%s9 + $0x2c0] sm:$0xf]
  %v3432 = vld [vmem:[%s9 + $0x2c4] sm:$0xf]
  %v3433 = vld [vmem:[%s9 + $0x2c8] sm:$0xf]
  %v3434 = vld [vmem:[%s9 + $0x2cc] sm:$0xf]
  %v3435 = vld [vmem:[%s9 + $0x2d0] sm:$0xf]
  %v3436 = vld [vmem:[%s9 + $0x2d4] sm:$0xf]
  %v3437 = vld [vmem:[%s9 + $0x2d8] sm:$0xf]
  %v3438 = vld [vmem:[%s9 + $0x2dc] sm:$0xf]
  %v3439 = vld [vmem:[%s9 + $0x2e0] sm:$0xf]
  %v3440 = vld [vmem:[%s9 + $0x2e4] sm:$0xf]
  %v3441 = vld [vmem:[%s9 + $0x2e8] sm:$0xf]
  %v3442 = vld [vmem:[%s9 + $0x2ec] sm:$0xf]
  %v3443 = vld [vmem:[%s9 + $0x2f0] sm:$0xf]
  %v3444 = vld [vmem:[%s9 + $0x2f4] sm:$0xf]
  %v3445 = vld [vmem:[%s9 + $0x2f8] sm:$0xf]
  %v3446 = vld [vmem:[%s9 + $0x2fc] sm:$0xf]
  %v3447 = vld [vmem:[%s9 + $0x300] sm:$0xf]
  %v3448 = vld [vmem:[%s9 + $0x304] sm:$0xf]
  %v3449 = vld [vmem:[%s9 + $0x308] sm:$0xf]
  %v3450 = vld [vmem:[%s9 + $0x30c] sm:$0xf]
  %v3451 = vld [vmem:[%s9 + $0x310] sm:$0xf]
  %v3452 = vld [vmem:[%s9 + $0x314] sm:$0xf]
  %v3453 = vld [vmem:[%s9 + $0x318] sm:$0xf]
  %v3454 = vld [vmem:[%s9 + $0x31c] sm:$0xf]
  %v3455 = vld [vmem:[%s9 + $0x320] sm:$0xf]
  %v3456 = vld [vmem:[%s9 + $0x324] sm:$0xf]
  %v3457 = vld [vmem:[%s9 + $0x328] sm:$0xf]
  %v3458 = vld [vmem:[%s9 + $0x32c] sm:$0xf]
  %v3459 = vld [vmem:[%s9 + $0x330] sm:$0xf]
  %v3460 = vld [vmem:[%s9 + $0x334] sm:$0xf]
  %v3461 = vld [vmem:[%s9 + $0x338] sm:$0xf]
  %v3462 = vld [vmem:[%s9 + $0x33c] sm:$0xf]
  %v3463 = vld [vmem:[%s9 + $0x340] sm:$0xf]
  %v3464 = vld [vmem:[%s9 + $0x344] sm:$0xf]
  %v3465 = vld [vmem:[%s9 + $0x348] sm:$0xf]
  %v3466 = vld [vmem:[%s9 + $0x34c] sm:$0xf]
  %v3467 = vld [vmem:[%s9 + $0x350] sm:$0xf]
  %v3468 = vld [vmem:[%s9 + $0x354] sm:$0xf]
  %v3469 = vld [vmem:[%s9 + $0x358] sm:$0xf]
  %v3470 = vld [vmem:[%s9 + $0x35c] sm:$0xf]
  %v3471 = vld [vmem:[%s9 + $0x360] sm:$0xf]
  %v3472 = vld [vmem:[%s9 + $0x364] sm:$0xf]
  %v3473 = vld [vmem:[%s9 + $0x368] sm:$0xf]
  %v3474 = vld [vmem:[%s9 + $0x36c] sm:$0xf]
  %v3475 = vld [vmem:[%s9 + $0x370] sm:$0xf]
  %v3476 = vld [vmem:[%s9 + $0x374] sm:$0xf]
  %v3477 = vld [vmem:[%s9 + $0x378] sm:$0xf]
  %v3478 = vld [vmem:[%s9 + $0x37c] sm:$0xf]
  %v3479 = vld [vmem:[%s9 + $0x380] sm:$0xf]
  %v3480 = vld [vmem:[%s9 + $0x384] sm:$0xf]
  %v3481 = vld [vmem:[%s9 + $0x388] sm:$0xf]
  %v3482 = vld [vmem:[%s9 + $0x38c] sm:$0xf]
  %v3483 = vld [vmem:[%s9 + $0x390] sm:$0xf]
  %v3484 = vld [vmem:[%s9 + $0x394] sm:$0xf]
  %v3485 = vld [vmem:[%s9 + $0x398] sm:$0xf]
  %v3486 = vld [vmem:[%s9 + $0x39c] sm:$0xf]
  %v3487 = vld [vmem:[%s9 + $0x3a0] sm:$0xf]
  %v3488 = vld [vmem:[%s9 + $0x3a4] sm:$0xf]
  %v3489 = vld [vmem:[%s9 + $0x3a8] sm:$0xf]
  %v3490 = vld [vmem:[%s9 + $0x3ac] sm:$0xf]
  %v3491 = vld [vmem:[%s9 + $0x3b0] sm:$0xf]
  %v3492 = vld [vmem:[%s9 + $0x3b4] sm:$0xf]
  %v3493 = vld [vmem:[%s9 + $0x3b8] sm:$0xf]
  %v3494 = vld [vmem:[%s9 + $0x3bc] sm:$0xf]
  %v3495 = vld [vmem:[%s9 + $0x3c0] sm:$0xf]
  %v3496 = vld [vmem:[%s9 + $0x3c4] sm:$0xf]
  %v3497 = vld [vmem:[%s9 + $0x3c8] sm:$0xf]
  %v3498 = vld [vmem:[%s9 + $0x3cc] sm:$0xf]
  %v3499 = vld [vmem:[%s9 + $0x3d0] sm:$0xf]
  %v3500 = vld [vmem:[%s9 + $0x3d4] sm:$0xf]
  %v3501 = vld [vmem:[%s9 + $0x3d8] sm:$0xf]
  %v3502 = vld [vmem:[%s9 + $0x3dc] sm:$0xf]
  %v3503 = vld [vmem:[%s9 + $0x3e0] sm:$0xf]
  %v3504 = vld [vmem:[%s9 + $0x3e4] sm:$0xf]
  %v3505 = vld [vmem:[%s9 + $0x3e8] sm:$0xf]
  %v3506 = vld [vmem:[%s9 + $0x3ec] sm:$0xf]
  %v3507 = vld [vmem:[%s9 + $0x3f0] sm:$0xf]
  %v3508 = vld [vmem:[%s9 + $0x3f4] sm:$0xf]
  %v3509 = vld [vmem:[%s9 + $0x3f8] sm:$0xf]
  %v3510 = vld [vmem:[%s9 + $0x3fc] sm:$0xf]
  %v3511 = vld [vmem:[%s10] sm:$0x1]
  %v3513 = vlaneseq
  %v3514 = vshrl.u32 %v3513, 7
  %v3515 = vsub.s32 0, %v3514
  %v3516 = vrot.slane %v3511, %v3515
  %v3774 = vunpack.c.l.b16 %v3255
  %v3775 = vunpack.c.l.b16 %v3256
  %v3776 = vunpack.c.l.b16 %v3257
  %v3777 = vunpack.c.l.b16 %v3258
  %v3778 = vunpack.c.l.b16 %v3259
  %v3779 = vunpack.c.l.b16 %v3260
  %v3780 = vunpack.c.l.b16 %v3261
  %v3781 = vunpack.c.l.b16 %v3262
  %v3782 = vunpack.c.l.b16 %v3263
  %v3783 = vunpack.c.l.b16 %v3264
  %v3784 = vunpack.c.l.b16 %v3265
  %v3785 = vunpack.c.l.b16 %v3266
  %v3786 = vunpack.c.l.b16 %v3267
  %v3787 = vunpack.c.l.b16 %v3268
  %v3788 = vunpack.c.l.b16 %v3269
  %v3789 = vunpack.c.l.b16 %v3270
  %v3790 = vunpack.c.l.b16 %v3271
  %v3791 = vunpack.c.l.b16 %v3272
  %v3792 = vunpack.c.l.b16 %v3273
  %v3793 = vunpack.c.l.b16 %v3274
  %v3794 = vunpack.c.l.b16 %v3275
  %v3795 = vunpack.c.l.b16 %v3276
  %v3796 = vunpack.c.l.b16 %v3277
  %v3797 = vunpack.c.l.b16 %v3278
  %v3798 = vunpack.c.l.b16 %v3279
  %v3799 = vunpack.c.l.b16 %v3280
  %v3800 = vunpack.c.l.b16 %v3281
  %v3801 = vunpack.c.l.b16 %v3282
  %v3802 = vunpack.c.l.b16 %v3283
  %v3803 = vunpack.c.l.b16 %v3284
  %v3804 = vunpack.c.l.b16 %v3285
  %v3805 = vunpack.c.l.b16 %v3286
  %v3806 = vunpack.c.l.b16 %v3287
  %v3807 = vunpack.c.l.b16 %v3288
  %v3808 = vunpack.c.l.b16 %v3289
  %v3809 = vunpack.c.l.b16 %v3290
  %v3810 = vunpack.c.l.b16 %v3291
  %v3811 = vunpack.c.l.b16 %v3292
  %v3812 = vunpack.c.l.b16 %v3293
  %v3813 = vunpack.c.l.b16 %v3294
  %v3814 = vunpack.c.l.b16 %v3295
  %v3815 = vunpack.c.l.b16 %v3296
  %v3816 = vunpack.c.l.b16 %v3297
  %v3817 = vunpack.c.l.b16 %v3298
  %v3818 = vunpack.c.l.b16 %v3299
  %v3819 = vunpack.c.l.b16 %v3300
  %v3820 = vunpack.c.l.b16 %v3301
  %v3821 = vunpack.c.l.b16 %v3302
  %v3822 = vunpack.c.l.b16 %v3303
  %v3823 = vunpack.c.l.b16 %v3304
  %v3824 = vunpack.c.l.b16 %v3305
  %v3825 = vunpack.c.l.b16 %v3306
  %v3826 = vunpack.c.l.b16 %v3307
  %v3827 = vunpack.c.l.b16 %v3308
  %v3828 = vunpack.c.l.b16 %v3309
  %v3829 = vunpack.c.l.b16 %v3310
  %v3830 = vunpack.c.l.b16 %v3311
  %v3831 = vunpack.c.l.b16 %v3312
  %v3832 = vunpack.c.l.b16 %v3313
  %v3833 = vunpack.c.l.b16 %v3314
  %v3834 = vunpack.c.l.b16 %v3315
  %v3835 = vunpack.c.l.b16 %v3316
  %v3836 = vunpack.c.l.b16 %v3317
  %v3837 = vunpack.c.l.b16 %v3318
  %v3838 = vunpack.c.l.b16 %v3319
  %v3839 = vunpack.c.l.b16 %v3320
  %v3840 = vunpack.c.l.b16 %v3321
  %v3841 = vunpack.c.l.b16 %v3322
  %v3842 = vunpack.c.l.b16 %v3323
  %v3843 = vunpack.c.l.b16 %v3324
  %v3844 = vunpack.c.l.b16 %v3325
  %v3845 = vunpack.c.l.b16 %v3326
  %v3846 = vunpack.c.l.b16 %v3327
  %v3847 = vunpack.c.l.b16 %v3328
  %v3848 = vunpack.c.l.b16 %v3329
  %v3849 = vunpack.c.l.b16 %v3330
  %v3850 = vunpack.c.l.b16 %v3331
  %v3851 = vunpack.c.l.b16 %v3332
  %v3852 = vunpack.c.l.b16 %v3333
  %v3853 = vunpack.c.l.b16 %v3334
  %v3854 = vunpack.c.l.b16 %v3335
  %v3855 = vunpack.c.l.b16 %v3336
  %v3856 = vunpack.c.l.b16 %v3337
  %v3857 = vunpack.c.l.b16 %v3338
  %v3858 = vunpack.c.l.b16 %v3339
  %v3859 = vunpack.c.l.b16 %v3340
  %v3860 = vunpack.c.l.b16 %v3341
  %v3861 = vunpack.c.l.b16 %v3342
  %v3862 = vunpack.c.l.b16 %v3343
  %v3863 = vunpack.c.l.b16 %v3344
  %v3864 = vunpack.c.l.b16 %v3345
  %v3865 = vunpack.c.l.b16 %v3346
  %v3866 = vunpack.c.l.b16 %v3347
  %v3867 = vunpack.c.l.b16 %v3348
  %v3868 = vunpack.c.l.b16 %v3349
  %v3869 = vunpack.c.l.b16 %v3350
  %v3870 = vunpack.c.l.b16 %v3351
  %v3871 = vunpack.c.l.b16 %v3352
  %v3872 = vunpack.c.l.b16 %v3353
  %v3873 = vunpack.c.l.b16 %v3354
  %v3874 = vunpack.c.l.b16 %v3355
  %v3875 = vunpack.c.l.b16 %v3356
  %v3876 = vunpack.c.l.b16 %v3357
  %v3877 = vunpack.c.l.b16 %v3358
  %v3878 = vunpack.c.l.b16 %v3359
  %v3879 = vunpack.c.l.b16 %v3360
  %v3880 = vunpack.c.l.b16 %v3361
  %v3881 = vunpack.c.l.b16 %v3362
  %v3882 = vunpack.c.l.b16 %v3363
  %v3883 = vunpack.c.l.b16 %v3364
  %v3884 = vunpack.c.l.b16 %v3365
  %v3885 = vunpack.c.l.b16 %v3366
  %v3886 = vunpack.c.l.b16 %v3367
  %v3887 = vunpack.c.l.b16 %v3368
  %v3888 = vunpack.c.l.b16 %v3369
  %v3889 = vunpack.c.l.b16 %v3370
  %v3890 = vunpack.c.l.b16 %v3371
  %v3891 = vunpack.c.l.b16 %v3372
  %v3892 = vunpack.c.l.b16 %v3373
  %v3893 = vunpack.c.l.b16 %v3374
  %v3894 = vunpack.c.l.b16 %v3375
  %v3895 = vunpack.c.l.b16 %v3376
  %v3896 = vunpack.c.l.b16 %v3377
  %v3897 = vunpack.c.l.b16 %v3378
  %v3898 = vunpack.c.l.b16 %v3379
  %v3899 = vunpack.c.l.b16 %v3380
  %v3900 = vunpack.c.l.b16 %v3381
  %v3901 = vunpack.c.l.b16 %v3382
  %v3902 = vunpack.c.l.b16 %v3383
  %v3903 = vunpack.c.l.b16 %v3384
  %v3904 = vunpack.c.l.b16 %v3385
  %v3905 = vunpack.c.l.b16 %v3386
  %v3906 = vunpack.c.l.b16 %v3387
  %v3907 = vunpack.c.l.b16 %v3388
  %v3908 = vunpack.c.l.b16 %v3389
  %v3909 = vunpack.c.l.b16 %v3390
  %v3910 = vunpack.c.l.b16 %v3391
  %v3911 = vunpack.c.l.b16 %v3392
  %v3912 = vunpack.c.l.b16 %v3393
  %v3913 = vunpack.c.l.b16 %v3394
  %v3914 = vunpack.c.l.b16 %v3395
  %v3915 = vunpack.c.l.b16 %v3396
  %v3916 = vunpack.c.l.b16 %v3397
  %v3917 = vunpack.c.l.b16 %v3398
  %v3918 = vunpack.c.l.b16 %v3399
  %v3919 = vunpack.c.l.b16 %v3400
  %v3920 = vunpack.c.l.b16 %v3401
  %v3921 = vunpack.c.l.b16 %v3402
  %v3922 = vunpack.c.l.b16 %v3403
  %v3923 = vunpack.c.l.b16 %v3404
  %v3924 = vunpack.c.l.b16 %v3405
  %v3925 = vunpack.c.l.b16 %v3406
  %v3926 = vunpack.c.l.b16 %v3407
  %v3927 = vunpack.c.l.b16 %v3408
  %v3928 = vunpack.c.l.b16 %v3409
  %v3929 = vunpack.c.l.b16 %v3410
  %v3930 = vunpack.c.l.b16 %v3411
  %v3931 = vunpack.c.l.b16 %v3412
  %v3932 = vunpack.c.l.b16 %v3413
  %v3933 = vunpack.c.l.b16 %v3414
  %v3934 = vunpack.c.l.b16 %v3415
  %v3935 = vunpack.c.l.b16 %v3416
  %v3936 = vunpack.c.l.b16 %v3417
  %v3937 = vunpack.c.l.b16 %v3418
  %v3938 = vunpack.c.l.b16 %v3419
  %v3939 = vunpack.c.l.b16 %v3420
  %v3940 = vunpack.c.l.b16 %v3421
  %v3941 = vunpack.c.l.b16 %v3422
  %v3942 = vunpack.c.l.b16 %v3423
  %v3943 = vunpack.c.l.b16 %v3424
  %v3944 = vunpack.c.l.b16 %v3425
  %v3945 = vunpack.c.l.b16 %v3426
  %v3946 = vunpack.c.l.b16 %v3427
  %v3947 = vunpack.c.l.b16 %v3428
  %v3948 = vunpack.c.l.b16 %v3429
  %v3949 = vunpack.c.l.b16 %v3430
  %v3950 = vunpack.c.l.b16 %v3431
  %v3951 = vunpack.c.l.b16 %v3432
  %v3952 = vunpack.c.l.b16 %v3433
  %v3953 = vunpack.c.l.b16 %v3434
  %v3954 = vunpack.c.l.b16 %v3435
  %v3955 = vunpack.c.l.b16 %v3436
  %v3956 = vunpack.c.l.b16 %v3437
  %v3957 = vunpack.c.l.b16 %v3438
  %v3958 = vunpack.c.l.b16 %v3439
  %v3959 = vunpack.c.l.b16 %v3440
  %v3960 = vunpack.c.l.b16 %v3441
  %v3961 = vunpack.c.l.b16 %v3442
  %v3962 = vunpack.c.l.b16 %v3443
  %v3963 = vunpack.c.l.b16 %v3444
  %v3964 = vunpack.c.l.b16 %v3445
  %v3965 = vunpack.c.l.b16 %v3446
  %v3966 = vunpack.c.l.b16 %v3447
  %v3967 = vunpack.c.l.b16 %v3448
  %v3968 = vunpack.c.l.b16 %v3449
  %v3969 = vunpack.c.l.b16 %v3450
  %v3970 = vunpack.c.l.b16 %v3451
  %v3971 = vunpack.c.l.b16 %v3452
  %v3972 = vunpack.c.l.b16 %v3453
  %v3973 = vunpack.c.l.b16 %v3454
  %v3974 = vunpack.c.l.b16 %v3455
  %v3975 = vunpack.c.l.b16 %v3456
  %v3976 = vunpack.c.l.b16 %v3457
  %v3977 = vunpack.c.l.b16 %v3458
  %v3978 = vunpack.c.l.b16 %v3459
  %v3979 = vunpack.c.l.b16 %v3460
  %v3980 = vunpack.c.l.b16 %v3461
  %v3981 = vunpack.c.l.b16 %v3462
  %v3982 = vunpack.c.l.b16 %v3463
  %v3983 = vunpack.c.l.b16 %v3464
  %v3984 = vunpack.c.l.b16 %v3465
  %v3985 = vunpack.c.l.b16 %v3466
  %v3986 = vunpack.c.l.b16 %v3467
  %v3987 = vunpack.c.l.b16 %v3468
  %v3988 = vunpack.c.l.b16 %v3469
  %v3989 = vunpack.c.l.b16 %v3470
  %v3990 = vunpack.c.l.b16 %v3471
  %v3991 = vunpack.c.l.b16 %v3472
  %v3992 = vunpack.c.l.b16 %v3473
  %v3993 = vunpack.c.l.b16 %v3474
  %v3994 = vunpack.c.l.b16 %v3475
  %v3995 = vunpack.c.l.b16 %v3476
  %v3996 = vunpack.c.l.b16 %v3477
  %v3997 = vunpack.c.l.b16 %v3478
  %v3998 = vunpack.c.l.b16 %v3479
  %v3999 = vunpack.c.l.b16 %v3480
  %v4000 = vunpack.c.l.b16 %v3481
  %v4001 = vunpack.c.l.b16 %v3482
  %v4002 = vunpack.c.l.b16 %v3483
  %v4003 = vunpack.c.l.b16 %v3484
  %v4004 = vunpack.c.l.b16 %v3485
  %v4005 = vunpack.c.l.b16 %v3486
  %v4006 = vunpack.c.l.b16 %v3487
  %v4007 = vunpack.c.l.b16 %v3488
  %v4008 = vunpack.c.l.b16 %v3489
  %v4009 = vunpack.c.l.b16 %v3490
  %v4010 = vunpack.c.l.b16 %v3491
  %v4011 = vunpack.c.l.b16 %v3492
  %v4012 = vunpack.c.l.b16 %v3493
  %v4013 = vunpack.c.l.b16 %v3494
  %v4014 = vunpack.c.l.b16 %v3495
  %v4015 = vunpack.c.l.b16 %v3496
  %v4016 = vunpack.c.l.b16 %v3497
  %v4017 = vunpack.c.l.b16 %v3498
  %v4018 = vunpack.c.l.b16 %v3499
  %v4019 = vunpack.c.l.b16 %v3500
  %v4020 = vunpack.c.l.b16 %v3501
  %v4021 = vunpack.c.l.b16 %v3502
  %v4022 = vunpack.c.l.b16 %v3503
  %v4023 = vunpack.c.l.b16 %v3504
  %v4024 = vunpack.c.l.b16 %v3505
  %v4025 = vunpack.c.l.b16 %v3506
  %v4026 = vunpack.c.l.b16 %v3507
  %v4027 = vunpack.c.l.b16 %v3508
  %v4028 = vunpack.c.l.b16 %v3509
  %v4029 = vunpack.c.l.b16 %v3510
  %v4030 = vpack.c.b16 %v3775, %v3774
  %v4031 = vpack.c.b16 %v3777, %v3776
  %v4032 = vpack.c.b16 %v3779, %v3778
  %v4033 = vpack.c.b16 %v3781, %v3780
  %v4034 = vpack.c.b16 %v3783, %v3782
  %v4035 = vpack.c.b16 %v3785, %v3784
  %v4036 = vpack.c.b16 %v3787, %v3786
  %v4037 = vpack.c.b16 %v3789, %v3788
  %v4038 = vpack.c.b16 %v3791, %v3790
  %v4039 = vpack.c.b16 %v3793, %v3792
  %v4040 = vpack.c.b16 %v3795, %v3794
  %v4041 = vpack.c.b16 %v3797, %v3796
  %v4042 = vpack.c.b16 %v3799, %v3798
  %v4043 = vpack.c.b16 %v3801, %v3800
  %v4044 = vpack.c.b16 %v3803, %v3802
  %v4045 = vpack.c.b16 %v3805, %v3804
  %v4046 = vpack.c.b16 %v3807, %v3806
  %v4047 = vpack.c.b16 %v3809, %v3808
  %v4048 = vpack.c.b16 %v3811, %v3810
  %v4049 = vpack.c.b16 %v3813, %v3812
  %v4050 = vpack.c.b16 %v3815, %v3814
  %v4051 = vpack.c.b16 %v3817, %v3816
  %v4052 = vpack.c.b16 %v3819, %v3818
  %v4053 = vpack.c.b16 %v3821, %v3820
  %v4054 = vpack.c.b16 %v3823, %v3822
  %v4055 = vpack.c.b16 %v3825, %v3824
  %v4056 = vpack.c.b16 %v3827, %v3826
  %v4057 = vpack.c.b16 %v3829, %v3828
  %v4058 = vpack.c.b16 %v3831, %v3830
  %v4059 = vpack.c.b16 %v3833, %v3832
  %v4060 = vpack.c.b16 %v3835, %v3834
  %v4061 = vpack.c.b16 %v3837, %v3836
  %v4062 = vpack.c.b16 %v3839, %v3838
  %v4063 = vpack.c.b16 %v3841, %v3840
  %v4064 = vpack.c.b16 %v3843, %v3842
  %v4065 = vpack.c.b16 %v3845, %v3844
  %v4066 = vpack.c.b16 %v3847, %v3846
  %v4067 = vpack.c.b16 %v3849, %v3848
  %v4068 = vpack.c.b16 %v3851, %v3850
  %v4069 = vpack.c.b16 %v3853, %v3852
  %v4070 = vpack.c.b16 %v3855, %v3854
  %v4071 = vpack.c.b16 %v3857, %v3856
  %v4072 = vpack.c.b16 %v3859, %v3858
  %v4073 = vpack.c.b16 %v3861, %v3860
  %v4074 = vpack.c.b16 %v3863, %v3862
  %v4075 = vpack.c.b16 %v3865, %v3864
  %v4076 = vpack.c.b16 %v3867, %v3866
  %v4077 = vpack.c.b16 %v3869, %v3868
  %v4078 = vpack.c.b16 %v3871, %v3870
  %v4079 = vpack.c.b16 %v3873, %v3872
  %v4080 = vpack.c.b16 %v3875, %v3874
  %v4081 = vpack.c.b16 %v3877, %v3876
  %v4082 = vpack.c.b16 %v3879, %v3878
  %v4083 = vpack.c.b16 %v3881, %v3880
  %v4084 = vpack.c.b16 %v3883, %v3882
  %v4085 = vpack.c.b16 %v3885, %v3884
  %v4086 = vpack.c.b16 %v3887, %v3886
  %v4087 = vpack.c.b16 %v3889, %v3888
  %v4088 = vpack.c.b16 %v3891, %v3890
  %v4089 = vpack.c.b16 %v3893, %v3892
  %v4090 = vpack.c.b16 %v3895, %v3894
  %v4091 = vpack.c.b16 %v3897, %v3896
  %v4092 = vpack.c.b16 %v3899, %v3898
  %v4093 = vpack.c.b16 %v3901, %v3900
  %v4094 = vpack.c.b16 %v3903, %v3902
  %v4095 = vpack.c.b16 %v3905, %v3904
  %v4096 = vpack.c.b16 %v3907, %v3906
  %v4097 = vpack.c.b16 %v3909, %v3908
  %v4098 = vpack.c.b16 %v3911, %v3910
  %v4099 = vpack.c.b16 %v3913, %v3912
  %v4100 = vpack.c.b16 %v3915, %v3914
  %v4101 = vpack.c.b16 %v3917, %v3916
  %v4102 = vpack.c.b16 %v3919, %v3918
  %v4103 = vpack.c.b16 %v3921, %v3920
  %v4104 = vpack.c.b16 %v3923, %v3922
  %v4105 = vpack.c.b16 %v3925, %v3924
  %v4106 = vpack.c.b16 %v3927, %v3926
  %v4107 = vpack.c.b16 %v3929, %v3928
  %v4108 = vpack.c.b16 %v3931, %v3930
  %v4109 = vpack.c.b16 %v3933, %v3932
  %v4110 = vpack.c.b16 %v3935, %v3934
  %v4111 = vpack.c.b16 %v3937, %v3936
  %v4112 = vpack.c.b16 %v3939, %v3938
  %v4113 = vpack.c.b16 %v3941, %v3940
  %v4114 = vpack.c.b16 %v3943, %v3942
  %v4115 = vpack.c.b16 %v3945, %v3944
  %v4116 = vpack.c.b16 %v3947, %v3946
  %v4117 = vpack.c.b16 %v3949, %v3948
  %v4118 = vpack.c.b16 %v3951, %v3950
  %v4119 = vpack.c.b16 %v3953, %v3952
  %v4120 = vpack.c.b16 %v3955, %v3954
  %v4121 = vpack.c.b16 %v3957, %v3956
  %v4122 = vpack.c.b16 %v3959, %v3958
  %v4123 = vpack.c.b16 %v3961, %v3960
  %v4124 = vpack.c.b16 %v3963, %v3962
  %v4125 = vpack.c.b16 %v3965, %v3964
  %v4126 = vpack.c.b16 %v3967, %v3966
  %v4127 = vpack.c.b16 %v3969, %v3968
  %v4128 = vpack.c.b16 %v3971, %v3970
  %v4129 = vpack.c.b16 %v3973, %v3972
  %v4130 = vpack.c.b16 %v3975, %v3974
  %v4131 = vpack.c.b16 %v3977, %v3976
  %v4132 = vpack.c.b16 %v3979, %v3978
  %v4133 = vpack.c.b16 %v3981, %v3980
  %v4134 = vpack.c.b16 %v3983, %v3982
  %v4135 = vpack.c.b16 %v3985, %v3984
  %v4136 = vpack.c.b16 %v3987, %v3986
  %v4137 = vpack.c.b16 %v3989, %v3988
  %v4138 = vpack.c.b16 %v3991, %v3990
  %v4139 = vpack.c.b16 %v3993, %v3992
  %v4140 = vpack.c.b16 %v3995, %v3994
  %v4141 = vpack.c.b16 %v3997, %v3996
  %v4142 = vpack.c.b16 %v3999, %v3998
  %v4143 = vpack.c.b16 %v4001, %v4000
  %v4144 = vpack.c.b16 %v4003, %v4002
  %v4145 = vpack.c.b16 %v4005, %v4004
  %v4146 = vpack.c.b16 %v4007, %v4006
  %v4147 = vpack.c.b16 %v4009, %v4008
  %v4148 = vpack.c.b16 %v4011, %v4010
  %v4149 = vpack.c.b16 %v4013, %v4012
  %v4150 = vpack.c.b16 %v4015, %v4014
  %v4151 = vpack.c.b16 %v4017, %v4016
  %v4152 = vpack.c.b16 %v4019, %v4018
  %v4153 = vpack.c.b16 %v4021, %v4020
  %v4154 = vpack.c.b16 %v4023, %v4022
  %v4155 = vpack.c.b16 %v4025, %v4024
  %v4156 = vpack.c.b16 %v4027, %v4026
  %v4157 = vpack.c.b16 %v4029, %v4028
  %4286 = vmatprep.subr.bf16.mxu0 0
  %4287 = vmatpush1.bf16.msra.mxu0 %v4037
  %4288 = vmatprep.subr.bf16.mxu0 0
  %4289 = vmatpush1.bf16.msra.mxu0 %v4036
  %4290 = vmatprep.subr.bf16.mxu0 0
  %4291 = vmatpush1.bf16.msra.mxu0 %v4035
  %4292 = vmatprep.subr.bf16.mxu0 0
  %4293 = vmatpush1.bf16.msra.mxu0 %v4034
  %4294 = vmatprep.subr.bf16.mxu0 0
  %4295 = vmatpush1.bf16.msra.mxu0 %v4033
  %4296 = vmatprep.subr.bf16.mxu0 0
  %4297 = vmatpush1.bf16.msra.mxu0 %v4032
  %4298 = vmatprep.subr.bf16.mxu0 0
  %4299 = vmatpush1.bf16.msra.mxu0 %v4031
  %4300 = vmatprep.subr.bf16.mxu0 0
  %4301 = vmatpush1.bf16.msra.mxu0 %v4030
  %4302 = vmatprep.subr.bf16.mxu0 0
  %4303 = vmatpush2.bf16.msra.mxu0 %v4045
  %4304 = vmatprep.subr.bf16.mxu0 0
  %4305 = vmatpush2.bf16.msra.mxu0 %v4044
  %4306 = vmatprep.subr.bf16.mxu0 0
  %4307 = vmatpush2.bf16.msra.mxu0 %v4043
  %4308 = vmatprep.subr.bf16.mxu0 0
  %4309 = vmatpush2.bf16.msra.mxu0 %v4042
  %4310 = vmatprep.subr.bf16.mxu0 0
  %4311 = vmatpush2.bf16.msra.mxu0 %v4041
  %4312 = vmatprep.subr.bf16.mxu0 0
  %4313 = vmatpush2.bf16.msra.mxu0 %v4040
  %4314 = vmatprep.subr.bf16.mxu0 0
  %4315 = vmatpush2.bf16.msra.mxu0 %v4039
  %4316 = vmatprep.subr.bf16.mxu0 0
  %4317 = vmatpush2.bf16.msra.mxu0 %v4038
  %4318 = vmatprep.mubr.bf16.mxu0 %v3224
  %4319 = vmatmul.mubr.bf16.gmra.mxu0 %v3223
  %v4320 = vpop.f32.mrf.mxu0
  %v4321 = vadd.f32 %v3516, %v4320
  %v4322 = vpop.f32.mrf.mxu0
  %v4323 = vpop.f32.mrf.mxu0
  %v4324 = vadd.f32 %v3516, %v4323
  %v4325 = vpop.f32.mrf.mxu0
  %4326 = vmatprep.mubr.bf16.mxu0 %v3240
  %4327 = vmatmul.mubr.bf16.gmra.mxu0 %v3239
  %v4328 = vpop.f32.mrf.mxu0
  %v4329 = vadd.f32 %v3516, %v4328
  %v4330 = vpop.f32.mrf.mxu0
  %v4331 = vpop.f32.mrf.mxu0
  %v4332 = vadd.f32 %v3516, %v4331
  %v4333 = vpop.f32.mrf.mxu0
  %4334 = vdwg.mxu0
  %4335 = vmatprep.subr.bf16.mxu0 0
  %4336 = vmatpush1.bf16.msra.mxu0 %v4053
  %4337 = vmatprep.subr.bf16.mxu0 0
  %4338 = vmatpush1.bf16.msra.mxu0 %v4052
  %4339 = vmatprep.subr.bf16.mxu0 0
  %4340 = vmatpush1.bf16.msra.mxu0 %v4051
  %4341 = vmatprep.subr.bf16.mxu0 0
  %4342 = vmatpush1.bf16.msra.mxu0 %v4050
  %4343 = vmatprep.subr.bf16.mxu0 0
  %4344 = vmatpush1.bf16.msra.mxu0 %v4049
  %4345 = vmatprep.subr.bf16.mxu0 0
  %4346 = vmatpush1.bf16.msra.mxu0 %v4048
  %4347 = vmatprep.subr.bf16.mxu0 0
  %4348 = vmatpush1.bf16.msra.mxu0 %v4047
  %4349 = vmatprep.subr.bf16.mxu0 0
  %4350 = vmatpush1.bf16.msra.mxu0 %v4046
  %4351 = vmatprep.subr.bf16.mxu0 0
  %4352 = vmatpush2.bf16.msra.mxu0 %v4061
  %4353 = vmatprep.subr.bf16.mxu0 0
  %4354 = vmatpush2.bf16.msra.mxu0 %v4060
  %4355 = vmatprep.subr.bf16.mxu0 0
  %4356 = vmatpush2.bf16.msra.mxu0 %v4059
  %4357 = vmatprep.subr.bf16.mxu0 0
  %4358 = vmatpush2.bf16.msra.mxu0 %v4058
  %4359 = vmatprep.subr.bf16.mxu0 0
  %4360 = vmatpush2.bf16.msra.mxu0 %v4057
  %4361 = vmatprep.subr.bf16.mxu0 0
  %4362 = vmatpush2.bf16.msra.mxu0 %v4056
  %4363 = vmatprep.subr.bf16.mxu0 0
  %4364 = vmatpush2.bf16.msra.mxu0 %v4055
  %4365 = vmatprep.subr.bf16.mxu0 0
  %4366 = vmatpush2.bf16.msra.mxu0 %v4054
  %4367 = vmatprep.mubr.bf16.mxu0 %v3226
  %4368 = vmatmul.mubr.bf16.gmra.mxu0 %v3225
  %v4369 = vpop.f32.mrf.mxu0
  %v4370 = vadd.f32 %v4321, %v4369
  %v4371 = vpop.f32.mrf.mxu0
  %v4372 = vpop.f32.mrf.mxu0
  %v4373 = vadd.f32 %v4324, %v4372
  %v4374 = vpop.f32.mrf.mxu0
  %4375 = vmatprep.mubr.bf16.mxu0 %v3242
  %4376 = vmatmul.mubr.bf16.gmra.mxu0 %v3241
  %v4377 = vpop.f32.mrf.mxu0
  %v4378 = vadd.f32 %v4329, %v4377
  %v4379 = vpop.f32.mrf.mxu0
  %v4380 = vpop.f32.mrf.mxu0
  %v4381 = vadd.f32 %v4332, %v4380
  %v4382 = vpop.f32.mrf.mxu0
  %4383 = vdwg.mxu0
  %4384 = vmatprep.subr.bf16.mxu0 0
  %4385 = vmatpush1.bf16.msra.mxu0 %v4069
  %4386 = vmatprep.subr.bf16.mxu0 0
  %4387 = vmatpush1.bf16.msra.mxu0 %v4068
  %4388 = vmatprep.subr.bf16.mxu0 0
  %4389 = vmatpush1.bf16.msra.mxu0 %v4067
  %4390 = vmatprep.subr.bf16.mxu0 0
  %4391 = vmatpush1.bf16.msra.mxu0 %v4066
  %4392 = vmatprep.subr.bf16.mxu0 0
  %4393 = vmatpush1.bf16.msra.mxu0 %v4065
  %4394 = vmatprep.subr.bf16.mxu0 0
  %4395 = vmatpush1.bf16.msra.mxu0 %v4064
  %4396 = vmatprep.subr.bf16.mxu0 0
  %4397 = vmatpush1.bf16.msra.mxu0 %v4063
  %4398 = vmatprep.subr.bf16.mxu0 0
  %4399 = vmatpush1.bf16.msra.mxu0 %v4062
  %4400 = vmatprep.subr.bf16.mxu0 0
  %4401 = vmatpush2.bf16.msra.mxu0 %v4077
  %4402 = vmatprep.subr.bf16.mxu0 0
  %4403 = vmatpush2.bf16.msra.mxu0 %v4076
  %4404 = vmatprep.subr.bf16.mxu0 0
  %4405 = vmatpush2.bf16.msra.mxu0 %v4075
  %4406 = vmatprep.subr.bf16.mxu0 0
  %4407 = vmatpush2.bf16.msra.mxu0 %v4074
  %4408 = vmatprep.subr.bf16.mxu0 0
  %4409 = vmatpush2.bf16.msra.mxu0 %v4073
  %4410 = vmatprep.subr.bf16.mxu0 0
  %4411 = vmatpush2.bf16.msra.mxu0 %v4072
  %4412 = vmatprep.subr.bf16.mxu0 0
  %4413 = vmatpush2.bf16.msra.mxu0 %v4071
  %4414 = vmatprep.subr.bf16.mxu0 0
  %4415 = vmatpush2.bf16.msra.mxu0 %v4070
  %4416 = vmatprep.mubr.bf16.mxu0 %v3228
  %4417 = vmatmul.mubr.bf16.gmra.mxu0 %v3227
  %v4418 = vpop.f32.mrf.mxu0
  %v4419 = vadd.f32 %v4370, %v4418
  %v4420 = vpop.f32.mrf.mxu0
  %v4421 = vpop.f32.mrf.mxu0
  %v4422 = vadd.f32 %v4373, %v4421
  %v4423 = vpop.f32.mrf.mxu0
  %4424 = vmatprep.mubr.bf16.mxu0 %v3244
  %4425 = vmatmul.mubr.bf16.gmra.mxu0 %v3243
  %v4426 = vpop.f32.mrf.mxu0
  %v4427 = vadd.f32 %v4378, %v4426
  %v4428 = vpop.f32.mrf.mxu0
  %v4429 = vpop.f32.mrf.mxu0
  %v4430 = vadd.f32 %v4381, %v4429
  %v4431 = vpop.f32.mrf.mxu0
  %4432 = vdwg.mxu0
  %4433 = vmatprep.subr.bf16.mxu0 0
  %4434 = vmatpush1.bf16.msra.mxu0 %v4085
  %4435 = vmatprep.subr.bf16.mxu0 0
  %4436 = vmatpush1.bf16.msra.mxu0 %v4084
  %4437 = vmatprep.subr.bf16.mxu0 0
  %4438 = vmatpush1.bf16.msra.mxu0 %v4083
  %4439 = vmatprep.subr.bf16.mxu0 0
  %4440 = vmatpush1.bf16.msra.mxu0 %v4082
  %4441 = vmatprep.subr.bf16.mxu0 0
  %4442 = vmatpush1.bf16.msra.mxu0 %v4081
  %4443 = vmatprep.subr.bf16.mxu0 0
  %4444 = vmatpush1.bf16.msra.mxu0 %v4080
  %4445 = vmatprep.subr.bf16.mxu0 0
  %4446 = vmatpush1.bf16.msra.mxu0 %v4079
  %4447 = vmatprep.subr.bf16.mxu0 0
  %4448 = vmatpush1.bf16.msra.mxu0 %v4078
  %4449 = vmatprep.subr.bf16.mxu0 0
  %4450 = vmatpush2.bf16.msra.mxu0 %v4093
  %4451 = vmatprep.subr.bf16.mxu0 0
  %4452 = vmatpush2.bf16.msra.mxu0 %v4092
  %4453 = vmatprep.subr.bf16.mxu0 0
  %4454 = vmatpush2.bf16.msra.mxu0 %v4091
  %4455 = vmatprep.subr.bf16.mxu0 0
  %4456 = vmatpush2.bf16.msra.mxu0 %v4090
  %4457 = vmatprep.subr.bf16.mxu0 0
  %4458 = vmatpush2.bf16.msra.mxu0 %v4089
  %4459 = vmatprep.subr.bf16.mxu0 0
  %4460 = vmatpush2.bf16.msra.mxu0 %v4088
  %4461 = vmatprep.subr.bf16.mxu0 0
  %4462 = vmatpush2.bf16.msra.mxu0 %v4087
  %4463 = vmatprep.subr.bf16.mxu0 0
  %4464 = vmatpush2.bf16.msra.mxu0 %v4086
  %4465 = vmatprep.mubr.bf16.mxu0 %v3230
  %4466 = vmatmul.mubr.bf16.gmra.mxu0 %v3229
  %v4467 = vpop.f32.mrf.mxu0
  %v4468 = vadd.f32 %v4419, %v4467
  %v4469 = vpop.f32.mrf.mxu0
  %v4470 = vpop.f32.mrf.mxu0
  %v4471 = vadd.f32 %v4422, %v4470
  %v4472 = vpop.f32.mrf.mxu0
  %4473 = vmatprep.mubr.bf16.mxu0 %v3246
  %4474 = vmatmul.mubr.bf16.gmra.mxu0 %v3245
  %v4475 = vpop.f32.mrf.mxu0
  %v4476 = vadd.f32 %v4427, %v4475
  %v4477 = vpop.f32.mrf.mxu0
  %v4478 = vpop.f32.mrf.mxu0
  %v4479 = vadd.f32 %v4430, %v4478
  %v4480 = vpop.f32.mrf.mxu0
  %4481 = vdwg.mxu0
  %4482 = vmatprep.subr.bf16.mxu0 0
  %4483 = vmatpush1.bf16.msra.mxu0 %v4101
  %4484 = vmatprep.subr.bf16.mxu0 0
  %4485 = vmatpush1.bf16.msra.mxu0 %v4100
  %4486 = vmatprep.subr.bf16.mxu0 0
  %4487 = vmatpush1.bf16.msra.mxu0 %v4099
  %4488 = vmatprep.subr.bf16.mxu0 0
  %4489 = vmatpush1.bf16.msra.mxu0 %v4098
  %4490 = vmatprep.subr.bf16.mxu0 0
  %4491 = vmatpush1.bf16.msra.mxu0 %v4097
  %4492 = vmatprep.subr.bf16.mxu0 0
  %4493 = vmatpush1.bf16.msra.mxu0 %v4096
  %4494 = vmatprep.subr.bf16.mxu0 0
  %4495 = vmatpush1.bf16.msra.mxu0 %v4095
  %4496 = vmatprep.subr.bf16.mxu0 0
  %4497 = vmatpush1.bf16.msra.mxu0 %v4094
  %4498 = vmatprep.subr.bf16.mxu0 0
  %4499 = vmatpush2.bf16.msra.mxu0 %v4109
  %4500 = vmatprep.subr.bf16.mxu0 0
  %4501 = vmatpush2.bf16.msra.mxu0 %v4108
  %4502 = vmatprep.subr.bf16.mxu0 0
  %4503 = vmatpush2.bf16.msra.mxu0 %v4107
  %4504 = vmatprep.subr.bf16.mxu0 0
  %4505 = vmatpush2.bf16.msra.mxu0 %v4106
  %4506 = vmatprep.subr.bf16.mxu0 0
  %4507 = vmatpush2.bf16.msra.mxu0 %v4105
  %4508 = vmatprep.subr.bf16.mxu0 0
  %4509 = vmatpush2.bf16.msra.mxu0 %v4104
  %4510 = vmatprep.subr.bf16.mxu0 0
  %4511 = vmatpush2.bf16.msra.mxu0 %v4103
  %4512 = vmatprep.subr.bf16.mxu0 0
  %4513 = vmatpush2.bf16.msra.mxu0 %v4102
  %4514 = vmatprep.mubr.bf16.mxu0 %v3232
  %4515 = vmatmul.mubr.bf16.gmra.mxu0 %v3231
  %v4516 = vpop.f32.mrf.mxu0
  %v4517 = vadd.f32 %v4468, %v4516
  %v4518 = vpop.f32.mrf.mxu0
  %v4519 = vpop.f32.mrf.mxu0
  %v4520 = vadd.f32 %v4471, %v4519
  %v4521 = vpop.f32.mrf.mxu0
  %4522 = vmatprep.mubr.bf16.mxu0 %v3248
  %4523 = vmatmul.mubr.bf16.gmra.mxu0 %v3247
  %v4524 = vpop.f32.mrf.mxu0
  %v4525 = vadd.f32 %v4476, %v4524
  %v4526 = vpop.f32.mrf.mxu0
  %v4527 = vpop.f32.mrf.mxu0
  %v4528 = vadd.f32 %v4479, %v4527
  %v4529 = vpop.f32.mrf.mxu0
  %4530 = vdwg.mxu0
  %4531 = vmatprep.subr.bf16.mxu0 0
  %4532 = vmatpush1.bf16.msra.mxu0 %v4117
  %4533 = vmatprep.subr.bf16.mxu0 0
  %4534 = vmatpush1.bf16.msra.mxu0 %v4116
  %4535 = vmatprep.subr.bf16.mxu0 0
  %4536 = vmatpush1.bf16.msra.mxu0 %v4115
  %4537 = vmatprep.subr.bf16.mxu0 0
  %4538 = vmatpush1.bf16.msra.mxu0 %v4114
  %4539 = vmatprep.subr.bf16.mxu0 0
  %4540 = vmatpush1.bf16.msra.mxu0 %v4113
  %4541 = vmatprep.subr.bf16.mxu0 0
  %4542 = vmatpush1.bf16.msra.mxu0 %v4112
  %4543 = vmatprep.subr.bf16.mxu0 0
  %4544 = vmatpush1.bf16.msra.mxu0 %v4111
  %4545 = vmatprep.subr.bf16.mxu0 0
  %4546 = vmatpush1.bf16.msra.mxu0 %v4110
  %4547 = vmatprep.subr.bf16.mxu0 0
  %4548 = vmatpush2.bf16.msra.mxu0 %v4125
  %4549 = vmatprep.subr.bf16.mxu0 0
  %4550 = vmatpush2.bf16.msra.mxu0 %v4124
  %4551 = vmatprep.subr.bf16.mxu0 0
  %4552 = vmatpush2.bf16.msra.mxu0 %v4123
  %4553 = vmatprep.subr.bf16.mxu0 0
  %4554 = vmatpush2.bf16.msra.mxu0 %v4122
  %4555 = vmatprep.subr.bf16.mxu0 0
  %4556 = vmatpush2.bf16.msra.mxu0 %v4121
  %4557 = vmatprep.subr.bf16.mxu0 0
  %4558 = vmatpush2.bf16.msra.mxu0 %v4120
  %4559 = vmatprep.subr.bf16.mxu0 0
  %4560 = vmatpush2.bf16.msra.mxu0 %v4119
  %4561 = vmatprep.subr.bf16.mxu0 0
  %4562 = vmatpush2.bf16.msra.mxu0 %v4118
  %4563 = vmatprep.mubr.bf16.mxu0 %v3234
  %4564 = vmatmul.mubr.bf16.gmra.mxu0 %v3233
  %v4565 = vpop.f32.mrf.mxu0
  %v4566 = vadd.f32 %v4517, %v4565
  %v4567 = vpop.f32.mrf.mxu0
  %v4568 = vpop.f32.mrf.mxu0
  %v4569 = vadd.f32 %v4520, %v4568
  %v4570 = vpop.f32.mrf.mxu0
  %4571 = vmatprep.mubr.bf16.mxu0 %v3250
  %4572 = vmatmul.mubr.bf16.gmra.mxu0 %v3249
  %v4573 = vpop.f32.mrf.mxu0
  %v4574 = vadd.f32 %v4525, %v4573
  %v4575 = vpop.f32.mrf.mxu0
  %v4576 = vpop.f32.mrf.mxu0
  %v4577 = vadd.f32 %v4528, %v4576
  %v4578 = vpop.f32.mrf.mxu0
  %4579 = vdwg.mxu0
  %4580 = vmatprep.subr.bf16.mxu0 0
  %4581 = vmatpush1.bf16.msra.mxu0 %v4133
  %4582 = vmatprep.subr.bf16.mxu0 0
  %4583 = vmatpush1.bf16.msra.mxu0 %v4132
  %4584 = vmatprep.subr.bf16.mxu0 0
  %4585 = vmatpush1.bf16.msra.mxu0 %v4131
  %4586 = vmatprep.subr.bf16.mxu0 0
  %4587 = vmatpush1.bf16.msra.mxu0 %v4130
  %4588 = vmatprep.subr.bf16.mxu0 0
  %4589 = vmatpush1.bf16.msra.mxu0 %v4129
  %4590 = vmatprep.subr.bf16.mxu0 0
  %4591 = vmatpush1.bf16.msra.mxu0 %v4128
  %4592 = vmatprep.subr.bf16.mxu0 0
  %4593 = vmatpush1.bf16.msra.mxu0 %v4127
  %4594 = vmatprep.subr.bf16.mxu0 0
  %4595 = vmatpush1.bf16.msra.mxu0 %v4126
  %4596 = vmatprep.subr.bf16.mxu0 0
  %4597 = vmatpush2.bf16.msra.mxu0 %v4141
  %4598 = vmatprep.subr.bf16.mxu0 0
  %4599 = vmatpush2.bf16.msra.mxu0 %v4140
  %4600 = vmatprep.subr.bf16.mxu0 0
  %4601 = vmatpush2.bf16.msra.mxu0 %v4139
  %4602 = vmatprep.subr.bf16.mxu0 0
  %4603 = vmatpush2.bf16.msra.mxu0 %v4138
  %4604 = vmatprep.subr.bf16.mxu0 0
  %4605 = vmatpush2.bf16.msra.mxu0 %v4137
  %4606 = vmatprep.subr.bf16.mxu0 0
  %4607 = vmatpush2.bf16.msra.mxu0 %v4136
  %4608 = vmatprep.subr.bf16.mxu0 0
  %4609 = vmatpush2.bf16.msra.mxu0 %v4135
  %4610 = vmatprep.subr.bf16.mxu0 0
  %4611 = vmatpush2.bf16.msra.mxu0 %v4134
  %4612 = vmatprep.mubr.bf16.mxu0 %v3236
  %4613 = vmatmul.mubr.bf16.gmra.mxu0 %v3235
  %v4614 = vpop.f32.mrf.mxu0
  %v4615 = vadd.f32 %v4566, %v4614
  %v4616 = vpop.f32.mrf.mxu0
  %v4617 = vpop.f32.mrf.mxu0
  %v4618 = vadd.f32 %v4569, %v4617
  %v4619 = vpop.f32.mrf.mxu0
  %4620 = vmatprep.mubr.bf16.mxu0 %v3252
  %4621 = vmatmul.mubr.bf16.gmra.mxu0 %v3251
  %v4622 = vpop.f32.mrf.mxu0
  %v4623 = vadd.f32 %v4574, %v4622
  %v4624 = vpop.f32.mrf.mxu0
  %v4625 = vpop.f32.mrf.mxu0
  %v4626 = vadd.f32 %v4577, %v4625
  %v4627 = vpop.f32.mrf.mxu0
  %4628 = vdwg.mxu0
  %4629 = vmatprep.subr.bf16.mxu0 0
  %4630 = vmatpush1.bf16.msra.mxu0 %v4149
  %4631 = vmatprep.subr.bf16.mxu0 0
  %4632 = vmatpush1.bf16.msra.mxu0 %v4148
  %4633 = vmatprep.subr.bf16.mxu0 0
  %4634 = vmatpush1.bf16.msra.mxu0 %v4147
  %4635 = vmatprep.subr.bf16.mxu0 0
  %4636 = vmatpush1.bf16.msra.mxu0 %v4146
  %4637 = vmatprep.subr.bf16.mxu0 0
  %4638 = vmatpush1.bf16.msra.mxu0 %v4145
  %4639 = vmatprep.subr.bf16.mxu0 0
  %4640 = vmatpush1.bf16.msra.mxu0 %v4144
  %4641 = vmatprep.subr.bf16.mxu0 0
  %4642 = vmatpush1.bf16.msra.mxu0 %v4143
  %4643 = vmatprep.subr.bf16.mxu0 0
  %4644 = vmatpush1.bf16.msra.mxu0 %v4142
  %4645 = vmatprep.subr.bf16.mxu0 0
  %4646 = vmatpush2.bf16.msra.mxu0 %v4157
  %4647 = vmatprep.subr.bf16.mxu0 0
  %4648 = vmatpush2.bf16.msra.mxu0 %v4156
  %4649 = vmatprep.subr.bf16.mxu0 0
  %4650 = vmatpush2.bf16.msra.mxu0 %v4155
  %4651 = vmatprep.subr.bf16.mxu0 0
  %4652 = vmatpush2.bf16.msra.mxu0 %v4154
  %4653 = vmatprep.subr.bf16.mxu0 0
  %4654 = vmatpush2.bf16.msra.mxu0 %v4153
  %4655 = vmatprep.subr.bf16.mxu0 0
  %4656 = vmatpush2.bf16.msra.mxu0 %v4152
  %4657 = vmatprep.subr.bf16.mxu0 0
  %4658 = vmatpush2.bf16.msra.mxu0 %v4151
  %4659 = vmatprep.subr.bf16.mxu0 0
  %4660 = vmatpush2.bf16.msra.mxu0 %v4150
  %4661 = vmatprep.mubr.bf16.mxu0 %v3238
  %4662 = vmatmul.mubr.bf16.gmra.mxu0 %v3237
  %v4663 = vpop.f32.mrf.mxu0
  %v4664 = vadd.f32 %v4615, %v4663
  %v4665 = vpop.f32.mrf.mxu0
  %v4666 = vpop.f32.mrf.mxu0
  %v4667 = vadd.f32 %v4618, %v4666
  %v4668 = vpop.f32.mrf.mxu0
  %4669 = vmatprep.mubr.bf16.mxu0 %v3254
  %4670 = vmatmul.mubr.bf16.gmra.mxu0 %v3253
  %v4671 = vpop.f32.mrf.mxu0
  %v4672 = vadd.f32 %v4623, %v4671
  %v4673 = vpop.f32.mrf.mxu0
  %v4674 = vpop.f32.mrf.mxu0
  %v4675 = vadd.f32 %v4626, %v4674
  %v4676 = vpop.f32.mrf.mxu0
  %4677 = vdwg.mxu0
  %v4678 = vmax.f32 %v4664, 0.0
  %v4679 = vmax.f32 %v4667, 0.0
  %v4680 = vmax.f32 %v4672, 0.0
  %v4681 = vmax.f32 %v4675, 0.0
  %vm4682 = vcmask 261120
  %v4683 = vsel %vm4682, %v4678, 0.0
  %v4684 = vrot.slane %v4683, 4
  %v4685 = vadd.f32 %v4683, %v4684
  %v4686 = vrot.slane %v4685, 2
  %v4687 = vadd.f32 %v4685, %v4686
  %v4688 = vrot.slane %v4687, 1
  %v4689 = vadd.f32 %v4687, %v4688
  %v4690 = vsel %vm4682, %v4679, 0.0
  %v4691 = vrot.slane %v4690, 4
  %v4692 = vadd.f32 %v4690, %v4691
  %v4693 = vrot.slane %v4692, 2
  %v4694 = vadd.f32 %v4692, %v4693
  %v4695 = vrot.slane %v4694, 1
  %v4696 = vadd.f32 %v4694, %v4695
  %v4697 = vsel %vm4682, %v4680, 0.0
  %v4698 = vrot.slane %v4697, 4
  %v4699 = vadd.f32 %v4697, %v4698
  %v4700 = vrot.slane %v4699, 2
  %v4701 = vadd.f32 %v4699, %v4700
  %v4702 = vrot.slane %v4701, 1
  %v4703 = vadd.f32 %v4701, %v4702
  %v4704 = vsel %vm4682, %v4681, 0.0
  %v4705 = vrot.slane %v4704, 4
  %v4706 = vadd.f32 %v4704, %v4705
  %v4707 = vrot.slane %v4706, 2
  %v4708 = vadd.f32 %v4706, %v4707
  %v4709 = vrot.slane %v4708, 1
  %v4710 = vadd.f32 %v4708, %v4709
  %v4711 = vmul.f32 %v4689, %v2030
  %v4712 = vmul.f32 %v4696, %v2030
  %v4713 = vmul.f32 %v4703, %v2030
  %v4714 = vmul.f32 %v4710, %v2030
  %v4715 = vsub.f32 %v4678, %v4711
  %v4716 = vsub.f32 %v4679, %v4712
  %v4717 = vsub.f32 %v4680, %v4713
  %v4718 = vsub.f32 %v4681, %v4714
  %v4719 = vmul.f32 %v4715, %v4715
  %v4720 = vmul.f32 %v4716, %v4716
  %v4721 = vmul.f32 %v4717, %v4717
  %v4722 = vmul.f32 %v4718, %v4718
  %v4723 = vsel %vm4682, %v4719, 0.0
  %v4724 = vrot.slane %v4723, 4
  %v4725 = vadd.f32 %v4723, %v4724
  %v4726 = vrot.slane %v4725, 2
  %v4727 = vadd.f32 %v4725, %v4726
  %v4728 = vrot.slane %v4727, 1
  %v4729 = vadd.f32 %v4727, %v4728
  %v4730 = vsel %vm4682, %v4720, 0.0
  %v4731 = vrot.slane %v4730, 4
  %v4732 = vadd.f32 %v4730, %v4731
  %v4733 = vrot.slane %v4732, 2
  %v4734 = vadd.f32 %v4732, %v4733
  %v4735 = vrot.slane %v4734, 1
  %v4736 = vadd.f32 %v4734, %v4735
  %v4737 = vsel %vm4682, %v4721, 0.0
  %v4738 = vrot.slane %v4737, 4
  %v4739 = vadd.f32 %v4737, %v4738
  %v4740 = vrot.slane %v4739, 2
  %v4741 = vadd.f32 %v4739, %v4740
  %v4742 = vrot.slane %v4741, 1
  %v4743 = vadd.f32 %v4741, %v4742
  %v4744 = vsel %vm4682, %v4722, 0.0
  %v4745 = vrot.slane %v4744, 4
  %v4746 = vadd.f32 %v4744, %v4745
  %v4747 = vrot.slane %v4746, 2
  %v4748 = vadd.f32 %v4746, %v4747
  %v4749 = vrot.slane %v4748, 1
  %v4750 = vadd.f32 %v4748, %v4749
  %v4751 = vmul.f32 %v4729, %v2030
  %v4752 = vmul.f32 %v4736, %v2030
  %v4753 = vmul.f32 %v4743, %v2030
  %v4754 = vmul.f32 %v4750, %v2030
  %v4755 = vadd.f32 %v4751, 0.001
  %v4756 = vadd.f32 %v4752, 0.001
  %v4757 = vadd.f32 %v4753, 0.001
  %v4758 = vadd.f32 %v4754, 0.001
  %v4759 = vrsqrt.pop %v4755
  %v4760 = vrsqrt.pop %v4756
  %v4761 = vrsqrt.pop %v4757
  %v4762 = vrsqrt.pop %v4758
  %v4763 = vmul.f32 %v4715, %v4759
  %v4764 = vmul.f32 %v4716, %v4760
  %v4765 = vmul.f32 %v4717, %v4761
  %v4766 = vmul.f32 %v4718, %v4762
  %v4767 = vld [vmem:[%s11] sm:$0x1]
  %v4769 = vlaneseq
  %v4770 = vshrl.u32 %v4769, 7
  %v4771 = vsub.s32 0, %v4770
  %v4772 = vrot.slane %v4767, %v4771
  %v4774 = vmul.f32 %v4763, %v4772
  %v4775 = vmul.f32 %v4764, %v4772
  %v4776 = vmul.f32 %v4765, %v4772
  %v4777 = vmul.f32 %v4766, %v4772
  %v4778 = vld [vmem:[%s12] sm:$0x1]
  %v4780 = vlaneseq
  %v4781 = vshrl.u32 %v4780, 7
  %v4782 = vsub.s32 0, %v4781
  %v4783 = vrot.slane %v4778, %v4782
  %v4785 = vadd.f32 %v4774, %v4783
  %v4786 = vadd.f32 %v4775, %v4783
  %v4787 = vadd.f32 %v4776, %v4783
  %v4788 = vadd.f32 %v4777, %v4783
  %v4789 = vpack.c.bf16 %v4786, %v4785
  %v4790 = vpack.c.bf16 %v4788, %v4787
  %v4791 = vld [vmem:[%s13] sm:$0xf]
  %v4792 = vld [vmem:[%s13 + $0x4] sm:$0xf]
  %v4793 = vld [vmem:[%s13 + $0x8] sm:$0xf]
  %v4794 = vld [vmem:[%s13 + $0xc] sm:$0xf]
  %v4795 = vld [vmem:[%s14] sm:$0x1]
  %v4797 = vlaneseq
  %v4798 = vshrl.u32 %v4797, 7
  %v4799 = vsub.s32 0, %v4798
  %v4800 = vrot.slane %v4795, %v4799
  %v4806 = vunpack.c.l.b16 %v4791
  %v4807 = vunpack.c.l.b16 %v4792
  %v4808 = vunpack.c.l.b16 %v4793
  %v4809 = vunpack.c.l.b16 %v4794
  %v4810 = vpack.c.b16 %v4807, %v4806
  %v4811 = vpack.c.b16 %v4809, %v4808
  %v4815 = vsel %vm4682, %v4789, 0
  %v4818 = vsel %vm4682, %v4790, 0
  %4820 = vmatprep.subr.bf16.mxu0 0
  %4821 = vmatpush1.bf16.msra.mxu0 0
  %4822 = vmatprep.subr.bf16.mxu0 0
  %4823 = vmatpush1.bf16.msra.mxu0 0
  %4824 = vmatprep.subr.bf16.mxu0 0
  %4825 = vmatpush1.bf16.msra.mxu0 0
  %4826 = vmatprep.subr.bf16.mxu0 0
  %4827 = vmatpush1.bf16.msra.mxu0 0
  %4828 = vmatprep.subr.bf16.mxu0 0
  %4829 = vmatpush1.bf16.msra.mxu0 0
  %4830 = vmatprep.subr.bf16.mxu0 0
  %4831 = vmatpush1.bf16.msra.mxu0 0
  %4832 = vmatprep.subr.bf16.mxu0 0
  %4833 = vmatpush1.bf16.msra.mxu0 %v4811
  %4834 = vmatprep.subr.bf16.mxu0 0
  %4835 = vmatpush1.bf16.msra.mxu0 %v4810
  %4836 = vmatprep.subr.bf16.mxu0 0
  %4837 = vmatpush2.bf16.msra.mxu0 0
  %4838 = vmatprep.subr.bf16.mxu0 0
  %4839 = vmatpush2.bf16.msra.mxu0 0
  %4840 = vmatprep.subr.bf16.mxu0 0
  %4841 = vmatpush2.bf16.msra.mxu0 0
  %4842 = vmatprep.subr.bf16.mxu0 0
  %4843 = vmatpush2.bf16.msra.mxu0 0
  %4844 = vmatprep.subr.bf16.mxu0 0
  %4845 = vmatpush2.bf16.msra.mxu0 0
  %4846 = vmatprep.subr.bf16.mxu0 0
  %4847 = vmatpush2.bf16.msra.mxu0 0
  %4848 = vmatprep.subr.bf16.mxu0 0
  %4849 = vmatpush2.bf16.msra.mxu0 0
  %4850 = vmatprep.subr.bf16.mxu0 0
  %4851 = vmatpush2.bf16.msra.mxu0 0
  %4852 = vmatprep.mubr.bf16.mxu0 0
  %4853 = vmatmul.mubr.bf16.gmra.mxu0 %v4815
  %v4854 = vpop.f32.mrf.mxu0
  %v4855 = vadd.f32 %v4800, %v4854
  %v4856 = vpop.f32.mrf.mxu0
  %v4857 = vpop.f32.mrf.mxu0
  %v4858 = vadd.f32 %v4800, %v4857
  %v4859 = vpop.f32.mrf.mxu0
  %4860 = vmatprep.mubr.bf16.mxu0 0
  %4861 = vmatmul.mubr.bf16.gmra.mxu0 %v4818
  %v4862 = vpop.f32.mrf.mxu0
  %v4863 = vadd.f32 %v4800, %v4862
  %v4864 = vpop.f32.mrf.mxu0
  %v4865 = vpop.f32.mrf.mxu0
  %v4866 = vadd.f32 %v4800, %v4865
  %v4867 = vpop.f32.mrf.mxu0
  %4868 = vdwg.mxu0
  %v4869 = vtanh.pop %v4855
  %v4870 = vtanh.pop %v4858
  %v4871 = vtanh.pop %v4863
  %v4872 = vtanh.pop %v4866
  %v4873 = vld [vmem:[%s15] sm:$0xf]
  %v4874 = vld [vmem:[%s15 + $0x4] sm:$0xf]
  %v4875 = vld [vmem:[%s15 + $0x8] sm:$0xf]
  %v4876 = vld [vmem:[%s15 + $0xc] sm:$0xf]
  %v4877 = vld [vmem:[%s16] sm:$0x1]
  %v4879 = vlaneseq
  %v4880 = vshrl.u32 %v4879, 7
  %v4881 = vsub.s32 0, %v4880
  %v4882 = vrot.slane %v4877, %v4881
  %v4888 = vunpack.c.l.b16 %v4873
  %v4889 = vunpack.c.l.b16 %v4874
  %v4890 = vunpack.c.l.b16 %v4875
  %v4891 = vunpack.c.l.b16 %v4876
  %v4892 = vpack.c.b16 %v4889, %v4888
  %v4893 = vpack.c.b16 %v4891, %v4890
  %4896 = vmatprep.subr.bf16.mxu0 0
  %4897 = vmatpush1.bf16.msra.mxu0 0
  %4898 = vmatprep.subr.bf16.mxu0 0
  %4899 = vmatpush1.bf16.msra.mxu0 0
  %4900 = vmatprep.subr.bf16.mxu0 0
  %4901 = vmatpush1.bf16.msra.mxu0 0
  %4902 = vmatprep.subr.bf16.mxu0 0
  %4903 = vmatpush1.bf16.msra.mxu0 0
  %4904 = vmatprep.subr.bf16.mxu0 0
  %4905 = vmatpush1.bf16.msra.mxu0 0
  %4906 = vmatprep.subr.bf16.mxu0 0
  %4907 = vmatpush1.bf16.msra.mxu0 0
  %4908 = vmatprep.subr.bf16.mxu0 0
  %4909 = vmatpush1.bf16.msra.mxu0 %v4893
  %4910 = vmatprep.subr.bf16.mxu0 0
  %4911 = vmatpush1.bf16.msra.mxu0 %v4892
  %4912 = vmatprep.subr.bf16.mxu0 0
  %4913 = vmatpush2.bf16.msra.mxu0 0
  %4914 = vmatprep.subr.bf16.mxu0 0
  %4915 = vmatpush2.bf16.msra.mxu0 0
  %4916 = vmatprep.subr.bf16.mxu0 0
  %4917 = vmatpush2.bf16.msra.mxu0 0
  %4918 = vmatprep.subr.bf16.mxu0 0
  %4919 = vmatpush2.bf16.msra.mxu0 0
  %4920 = vmatprep.subr.bf16.mxu0 0
  %4921 = vmatpush2.bf16.msra.mxu0 0
  %4922 = vmatprep.subr.bf16.mxu0 0
  %4923 = vmatpush2.bf16.msra.mxu0 0
  %4924 = vmatprep.subr.bf16.mxu0 0
  %4925 = vmatpush2.bf16.msra.mxu0 0
  %4926 = vmatprep.subr.bf16.mxu0 0
  %4927 = vmatpush2.bf16.msra.mxu0 0
  %4928 = vmatprep.mubr.bf16.mxu0 0
  %4929 = vmatmul.mubr.bf16.gmra.mxu0 %v4815
  %v4930 = vpop.f32.mrf.mxu0
  %v4931 = vadd.f32 %v4882, %v4930
  %v4932 = vpop.f32.mrf.mxu0
  %v4933 = vpop.f32.mrf.mxu0
  %v4934 = vadd.f32 %v4882, %v4933
  %v4935 = vpop.f32.mrf.mxu0
  %4936 = vmatprep.mubr.bf16.mxu0 0
  %4937 = vmatmul.mubr.bf16.gmra.mxu0 %v4818
  %v4938 = vpop.f32.mrf.mxu0
  %v4939 = vadd.f32 %v4882, %v4938
  %v4940 = vpop.f32.mrf.mxu0
  %v4941 = vpop.f32.mrf.mxu0
  %v4942 = vadd.f32 %v4882, %v4941
  %v4943 = vpop.f32.mrf.mxu0
  %4944 = vdwg.mxu0
  %v4945 = vtanh.pop %v4931
  %v4946 = vtanh.pop %v4934
  %v4947 = vtanh.pop %v4939
  %v4948 = vtanh.pop %v4942
  %v4949 = vmul.f32 %v4945, 0.5
  %v4950 = vmul.f32 %v4946, 0.5
  %v4951 = vmul.f32 %v4947, 0.5
  %v4952 = vmul.f32 %v4948, 0.5
  %v4953 = vmul.f32 %v4949, 1.442695
  %v4954 = vpow.pop %v4953
  %v4955 = vmul.f32 %v4950, 1.442695
  %v4956 = vpow.pop %v4955
  %v4957 = vmul.f32 %v4951, 1.442695
  %v4958 = vpow.pop %v4957
  %v4959 = vmul.f32 %v4952, 1.442695
  %v4960 = vpow.pop %v4959
  %v4961 = vmul.f32 %v4954, %v4954
  %v4962 = vmul.f32 %v4956, %v4956
  %v4963 = vmul.f32 %v4958, %v4958
  %v4964 = vmul.f32 %v4960, %v4960
  %v4965 = vld [vmem:[%s3] sm:$0xff]
  %v4966 = vld [vmem:[%s3 + $0x8] sm:$0xff]
  %v4967 = vld [vmem:[%s3 + $0x10] sm:$0xff]
  %v4968 = vld [vmem:[%s3 + $0x18] sm:$0xff]
  %v4969 = vmul.f32 %v4965, %v4954
  %v4970 = vmul.f32 %v4966, %v4956
  %v4971 = vmul.f32 %v4967, %v4958
  %v4972 = vmul.f32 %v4968, %v4960
  %v4973 = vadd.f32 %v4869, %v4969
  %v4974 = vadd.f32 %v4870, %v4970
  %v4975 = vadd.f32 %v4871, %v4971
  %v4976 = vadd.f32 %v4872, %v4972
  %v4977 = vadd.f32 %v4945, 1.0
  %v4978 = vadd.f32 %v4946, 1.0
  %v4979 = vadd.f32 %v4947, 1.0
  %v4980 = vadd.f32 %v4948, 1.0
  %v4981 = vmul.f32 %v4869, %v4869
  %v4982 = vmul.f32 %v4870, %v4870
  %v4983 = vmul.f32 %v4871, %v4871
  %v4984 = vmul.f32 %v4872, %v4872
  %v4985 = vsub.f32 %v4977, %v4981
  %v4986 = vsub.f32 %v4978, %v4982
  %v4987 = vsub.f32 %v4979, %v4983
  %v4988 = vsub.f32 %v4980, %v4984
  %v4989 = vsub.f32 %v4985, %v4961
  %v4990 = vsub.f32 %v4986, %v4962
  %v4991 = vsub.f32 %v4987, %v4963
  %v4992 = vsub.f32 %v4988, %v4964
  %v4993 = vsel %vm4682, %v4989, 0.0
  %4994 = vadd.xlane.f32.xlu0 %v4993
  %v4995 = vpop.xlane.xlu0 %4994
  %v4996 = vsel %vm4682, %v4990, 0.0
  %4997 = vadd.xlane.f32.xlu0 %v4996
  %v4998 = vpop.xlane.xlu0 %4997
  %v4999 = vsel %vm4682, %v4991, 0.0
  %5000 = vadd.xlane.f32.xlu0 %v4999
  %v5001 = vpop.xlane.xlu0 %5000
  %v5002 = vsel %vm4682, %v4992, 0.0
  %5003 = vadd.xlane.f32.xlu0 %v5002
  %v5004 = vpop.xlane.xlu0 %5003
  %v5005 = vmul.f32 %v4995, -0.5
  %v5006 = vmul.f32 %v4998, -0.5
  %v5007 = vmul.f32 %v5001, -0.5
  %v5008 = vmul.f32 %v5004, -0.5
  %v5013 = vlaneseq
  %v5014 = vand.u32 %v5013, 127
  %v5015 = vlaneseq
  %v5016 = vshrl.u32 %v5015, 7
  %v5017 = vsub.s32 %v5014, %v5016
  %v5018 = vrot.slane %v5005, %v5017
  %v5019 = vlaneseq
  %v5020 = vshrl.u32 %v5019, 7
  %v5021 = vsub.s32 %v5014, %v5020
  %v5022 = vrot.slane %v5006, %v5021
  %v5023 = vlaneseq
  %v5024 = vshrl.u32 %v5023, 7
  %v5025 = vsub.s32 %v5014, %v5024
  %v5026 = vrot.slane %v5007, %v5025
  %v5027 = vlaneseq
  %v5028 = vshrl.u32 %v5027, 7
  %v5029 = vsub.s32 %v5014, %v5028
  %v5030 = vrot.slane %v5008, %v5029
  %vm5031 = vcmask 1041409
  %v5032 = vsel %vm5031, %v5022, %v5018
  %vm5033 = vcmask 1042434
  %v5034 = vsel %vm5033, %v5026, %v5032
  %vm5035 = vcmask 1043459
  %v5036 = vsel %vm5035, %v5030, %v5034
  %vm5038 = vcmask 60416
  %v5039 = vsel %vm5038, %v5036, 0.0
  %5040 = vadd.xlane.f32.xlu0 %v5039
  %v5041 = vpop.xlane.xlu0 %5040
  %v5042 = vmul.f32 %v5041, %v2030
  %v5043 = vpack.c.bf16 %v4974, %v4973
  %v5044 = vpack.c.bf16 %v4976, %v4975
  %v5045 = vld [vmem:[%s17] sm:$0xff]
  %v5046 = vld [vmem:[%s17 + $0x8] sm:$0xff]
  %v5047 = vld [vmem:[%s17 + $0x10] sm:$0xff]
  %v5048 = vld [vmem:[%s17 + $0x18] sm:$0xff]
  %v5049 = vld [vmem:[%s17 + $0x20] sm:$0xff]
  %v5050 = vld [vmem:[%s17 + $0x28] sm:$0xff]
  %v5051 = vld [vmem:[%s17 + $0x30] sm:$0xff]
  %v5052 = vld [vmem:[%s17 + $0x38] sm:$0xff]
  %v5053 = vld [vmem:[%s17 + $0x40] sm:$0xff]
  %v5054 = vld [vmem:[%s17 + $0x48] sm:$0xff]
  %v5055 = vld [vmem:[%s17 + $0x50] sm:$0xff]
  %v5056 = vld [vmem:[%s17 + $0x58] sm:$0xff]
  %v5057 = vld [vmem:[%s17 + $0x60] sm:$0xff]
  %v5058 = vld [vmem:[%s17 + $0x68] sm:$0xff]
  %v5059 = vld [vmem:[%s17 + $0x70] sm:$0xff]
  %v5060 = vld [vmem:[%s17 + $0x78] sm:$0xff]
  %v5061 = vld [vmem:[%s17 + $0x80] sm:$0xff]
  %v5062 = vld [vmem:[%s17 + $0x88] sm:$0xff]
  %v5063 = vld [vmem:[%s17 + $0x90] sm:$0xff]
  %v5064 = vld [vmem:[%s17 + $0x98] sm:$0xff]
  %v5065 = vld [vmem:[%s17 + $0xa0] sm:$0xff]
  %v5066 = vld [vmem:[%s17 + $0xa8] sm:$0xff]
  %v5067 = vld [vmem:[%s17 + $0xb0] sm:$0xff]
  %v5068 = vld [vmem:[%s17 + $0xb8] sm:$0xff]
  %v5069 = vld [vmem:[%s17 + $0xc0] sm:$0xff]
  %v5070 = vld [vmem:[%s17 + $0xc8] sm:$0xff]
  %v5071 = vld [vmem:[%s17 + $0xd0] sm:$0xff]
  %v5072 = vld [vmem:[%s17 + $0xd8] sm:$0xff]
  %v5073 = vld [vmem:[%s17 + $0xe0] sm:$0xff]
  %v5074 = vld [vmem:[%s17 + $0xe8] sm:$0xff]
  %v5075 = vld [vmem:[%s17 + $0xf0] sm:$0xff]
  %v5076 = vld [vmem:[%s17 + $0xf8] sm:$0xff]
  %v5077 = vpack.c.bf16 %v89, %v88
  %v5078 = vpack.c.bf16 %v91, %v90
  %v5079 = vld [vmem:[%s18] sm:$0xff]
  %v5080 = vld [vmem:[%s18 + $0x8] sm:$0xff]
  %v5081 = vld [vmem:[%s18 + $0x10] sm:$0xff]
  %v5082 = vld [vmem:[%s18 + $0x18] sm:$0xff]
  %v5083 = vld [vmem:[%s18 + $0x20] sm:$0xff]
  %v5084 = vld [vmem:[%s18 + $0x28] sm:$0xff]
  %v5085 = vld [vmem:[%s18 + $0x30] sm:$0xff]
  %v5086 = vld [vmem:[%s18 + $0x38] sm:$0xff]
  %v5087 = vld [vmem:[%s18 + $0x40] sm:$0xff]
  %v5088 = vld [vmem:[%s18 + $0x48] sm:$0xff]
  %v5089 = vld [vmem:[%s18 + $0x50] sm:$0xff]
  %v5090 = vld [vmem:[%s18 + $0x58] sm:$0xff]
  %v5091 = vld [vmem:[%s18 + $0x60] sm:$0xff]
  %v5092 = vld [vmem:[%s18 + $0x68] sm:$0xff]
  %v5093 = vld [vmem:[%s18 + $0x70] sm:$0xff]
  %v5094 = vld [vmem:[%s18 + $0x78] sm:$0xff]
  %v5095 = vld [vmem:[%s18 + $0x80] sm:$0xff]
  %v5096 = vld [vmem:[%s18 + $0x88] sm:$0xff]
  %v5097 = vld [vmem:[%s18 + $0x90] sm:$0xff]
  %v5098 = vld [vmem:[%s18 + $0x98] sm:$0xff]
  %v5099 = vld [vmem:[%s18 + $0xa0] sm:$0xff]
  %v5100 = vld [vmem:[%s18 + $0xa8] sm:$0xff]
  %v5101 = vld [vmem:[%s18 + $0xb0] sm:$0xff]
  %v5102 = vld [vmem:[%s18 + $0xb8] sm:$0xff]
  %v5103 = vld [vmem:[%s18 + $0xc0] sm:$0xff]
  %v5104 = vld [vmem:[%s18 + $0xc8] sm:$0xff]
  %v5105 = vld [vmem:[%s18 + $0xd0] sm:$0xff]
  %v5106 = vld [vmem:[%s18 + $0xd8] sm:$0xff]
  %v5107 = vld [vmem:[%s18 + $0xe0] sm:$0xff]
  %v5108 = vld [vmem:[%s18 + $0xe8] sm:$0xff]
  %v5109 = vld [vmem:[%s18 + $0xf0] sm:$0xff]
  %v5110 = vld [vmem:[%s18 + $0xf8] sm:$0xff]
  %v5111 = vld [vmem:[%s18 + $0x100] sm:$0xff]
  %v5112 = vld [vmem:[%s18 + $0x108] sm:$0xff]
  %v5113 = vld [vmem:[%s18 + $0x110] sm:$0xff]
  %v5114 = vld [vmem:[%s18 + $0x118] sm:$0xff]
  %v5115 = vld [vmem:[%s18 + $0x120] sm:$0xff]
  %v5116 = vld [vmem:[%s18 + $0x128] sm:$0xff]
  %v5117 = vld [vmem:[%s18 + $0x130] sm:$0xff]
  %v5118 = vld [vmem:[%s18 + $0x138] sm:$0xff]
  %v5119 = vld [vmem:[%s18 + $0x140] sm:$0xff]
  %v5120 = vld [vmem:[%s18 + $0x148] sm:$0xff]
  %v5121 = vld [vmem:[%s18 + $0x150] sm:$0xff]
  %v5122 = vld [vmem:[%s18 + $0x158] sm:$0xff]
  %v5123 = vld [vmem:[%s18 + $0x160] sm:$0xff]
  %v5124 = vld [vmem:[%s18 + $0x168] sm:$0xff]
  %v5125 = vld [vmem:[%s18 + $0x170] sm:$0xff]
  %v5126 = vld [vmem:[%s18 + $0x178] sm:$0xff]
  %v5127 = vld [vmem:[%s18 + $0x180] sm:$0xff]
  %v5128 = vld [vmem:[%s18 + $0x188] sm:$0xff]
  %v5129 = vld [vmem:[%s18 + $0x190] sm:$0xff]
  %v5130 = vld [vmem:[%s18 + $0x198] sm:$0xff]
  %v5131 = vld [vmem:[%s18 + $0x1a0] sm:$0xff]
  %v5132 = vld [vmem:[%s18 + $0x1a8] sm:$0xff]
  %v5133 = vld [vmem:[%s18 + $0x1b0] sm:$0xff]
  %v5134 = vld [vmem:[%s18 + $0x1b8] sm:$0xff]
  %v5135 = vld [vmem:[%s18 + $0x1c0] sm:$0xff]
  %v5136 = vld [vmem:[%s18 + $0x1c8] sm:$0xff]
  %v5137 = vld [vmem:[%s18 + $0x1d0] sm:$0xff]
  %v5138 = vld [vmem:[%s18 + $0x1d8] sm:$0xff]
  %v5139 = vld [vmem:[%s18 + $0x1e0] sm:$0xff]
  %v5140 = vld [vmem:[%s18 + $0x1e8] sm:$0xff]
  %v5141 = vld [vmem:[%s18 + $0x1f0] sm:$0xff]
  %v5142 = vld [vmem:[%s18 + $0x1f8] sm:$0xff]
  %v5207 = vunpack.c.l.b16 %v5079
  %v5208 = vunpack.c.h.b16 %v5079
  %v5209 = vunpack.c.l.b16 %v5080
  %v5210 = vunpack.c.h.b16 %v5080
  %v5211 = vunpack.c.l.b16 %v5081
  %v5212 = vunpack.c.h.b16 %v5081
  %v5213 = vunpack.c.l.b16 %v5082
  %v5214 = vunpack.c.h.b16 %v5082
  %v5215 = vunpack.c.l.b16 %v5083
  %v5216 = vunpack.c.h.b16 %v5083
  %v5217 = vunpack.c.l.b16 %v5084
  %v5218 = vunpack.c.h.b16 %v5084
  %v5219 = vunpack.c.l.b16 %v5085
  %v5220 = vunpack.c.h.b16 %v5085
  %v5221 = vunpack.c.l.b16 %v5086
  %v5222 = vunpack.c.h.b16 %v5086
  %v5223 = vunpack.c.l.b16 %v5087
  %v5224 = vunpack.c.h.b16 %v5087
  %v5225 = vunpack.c.l.b16 %v5088
  %v5226 = vunpack.c.h.b16 %v5088
  %v5227 = vunpack.c.l.b16 %v5089
  %v5228 = vunpack.c.h.b16 %v5089
  %v5229 = vunpack.c.l.b16 %v5090
  %v5230 = vunpack.c.h.b16 %v5090
  %v5231 = vunpack.c.l.b16 %v5091
  %v5232 = vunpack.c.h.b16 %v5091
  %v5233 = vunpack.c.l.b16 %v5092
  %v5234 = vunpack.c.h.b16 %v5092
  %v5235 = vunpack.c.l.b16 %v5093
  %v5236 = vunpack.c.h.b16 %v5093
  %v5237 = vunpack.c.l.b16 %v5094
  %v5238 = vunpack.c.h.b16 %v5094
  %v5239 = vunpack.c.l.b16 %v5095
  %v5240 = vunpack.c.h.b16 %v5095
  %v5241 = vunpack.c.l.b16 %v5096
  %v5242 = vunpack.c.h.b16 %v5096
  %v5243 = vunpack.c.l.b16 %v5097
  %v5244 = vunpack.c.h.b16 %v5097
  %v5245 = vunpack.c.l.b16 %v5098
  %v5246 = vunpack.c.h.b16 %v5098
  %v5247 = vunpack.c.l.b16 %v5099
  %v5248 = vunpack.c.h.b16 %v5099
  %v5249 = vunpack.c.l.b16 %v5100
  %v5250 = vunpack.c.h.b16 %v5100
  %v5251 = vunpack.c.l.b16 %v5101
  %v5252 = vunpack.c.h.b16 %v5101
  %v5253 = vunpack.c.l.b16 %v5102
  %v5254 = vunpack.c.h.b16 %v5102
  %v5255 = vunpack.c.l.b16 %v5103
  %v5256 = vunpack.c.h.b16 %v5103
  %v5257 = vunpack.c.l.b16 %v5104
  %v5258 = vunpack.c.h.b16 %v5104
  %v5259 = vunpack.c.l.b16 %v5105
  %v5260 = vunpack.c.h.b16 %v5105
  %v5261 = vunpack.c.l.b16 %v5106
  %v5262 = vunpack.c.h.b16 %v5106
  %v5263 = vunpack.c.l.b16 %v5107
  %v5264 = vunpack.c.h.b16 %v5107
  %v5265 = vunpack.c.l.b16 %v5108
  %v5266 = vunpack.c.h.b16 %v5108
  %v5267 = vunpack.c.l.b16 %v5109
  %v5268 = vunpack.c.h.b16 %v5109
  %v5269 = vunpack.c.l.b16 %v5110
  %v5270 = vunpack.c.h.b16 %v5110
  %v5271 = vunpack.c.l.b16 %v5111
  %v5272 = vunpack.c.h.b16 %v5111
  %v5273 = vunpack.c.l.b16 %v5112
  %v5274 = vunpack.c.h.b16 %v5112
  %v5275 = vunpack.c.l.b16 %v5113
  %v5276 = vunpack.c.h.b16 %v5113
  %v5277 = vunpack.c.l.b16 %v5114
  %v5278 = vunpack.c.h.b16 %v5114
  %v5279 = vunpack.c.l.b16 %v5115
  %v5280 = vunpack.c.h.b16 %v5115
  %v5281 = vunpack.c.l.b16 %v5116
  %v5282 = vunpack.c.h.b16 %v5116
  %v5283 = vunpack.c.l.b16 %v5117
  %v5284 = vunpack.c.h.b16 %v5117
  %v5285 = vunpack.c.l.b16 %v5118
  %v5286 = vunpack.c.h.b16 %v5118
  %v5287 = vunpack.c.l.b16 %v5119
  %v5288 = vunpack.c.h.b16 %v5119
  %v5289 = vunpack.c.l.b16 %v5120
  %v5290 = vunpack.c.h.b16 %v5120
  %v5291 = vunpack.c.l.b16 %v5121
  %v5292 = vunpack.c.h.b16 %v5121
  %v5293 = vunpack.c.l.b16 %v5122
  %v5294 = vunpack.c.h.b16 %v5122
  %v5295 = vunpack.c.l.b16 %v5123
  %v5296 = vunpack.c.h.b16 %v5123
  %v5297 = vunpack.c.l.b16 %v5124
  %v5298 = vunpack.c.h.b16 %v5124
  %v5299 = vunpack.c.l.b16 %v5125
  %v5300 = vunpack.c.h.b16 %v5125
  %v5301 = vunpack.c.l.b16 %v5126
  %v5302 = vunpack.c.h.b16 %v5126
  %v5303 = vunpack.c.l.b16 %v5127
  %v5304 = vunpack.c.h.b16 %v5127
  %v5305 = vunpack.c.l.b16 %v5128
  %v5306 = vunpack.c.h.b16 %v5128
  %v5307 = vunpack.c.l.b16 %v5129
  %v5308 = vunpack.c.h.b16 %v5129
  %v5309 = vunpack.c.l.b16 %v5130
  %v5310 = vunpack.c.h.b16 %v5130
  %v5311 = vunpack.c.l.b16 %v5131
  %v5312 = vunpack.c.h.b16 %v5131
  %v5313 = vunpack.c.l.b16 %v5132
  %v5314 = vunpack.c.h.b16 %v5132
  %v5315 = vunpack.c.l.b16 %v5133
  %v5316 = vunpack.c.h.b16 %v5133
  %v5317 = vunpack.c.l.b16 %v5134
  %v5318 = vunpack.c.h.b16 %v5134
  %v5319 = vunpack.c.l.b16 %v5135
  %v5320 = vunpack.c.h.b16 %v5135
  %v5321 = vunpack.c.l.b16 %v5136
  %v5322 = vunpack.c.h.b16 %v5136
  %v5323 = vunpack.c.l.b16 %v5137
  %v5324 = vunpack.c.h.b16 %v5137
  %v5325 = vunpack.c.l.b16 %v5138
  %v5326 = vunpack.c.h.b16 %v5138
  %v5327 = vunpack.c.l.b16 %v5139
  %v5328 = vunpack.c.h.b16 %v5139
  %v5329 = vunpack.c.l.b16 %v5140
  %v5330 = vunpack.c.h.b16 %v5140
  %v5331 = vunpack.c.l.b16 %v5141
  %v5332 = vunpack.c.h.b16 %v5141
  %v5333 = vunpack.c.l.b16 %v5142
  %v5334 = vunpack.c.h.b16 %v5142
  %v5335 = vpack.c.b16 %v5223, %v5207
  %v5336 = vpack.c.b16 %v5224, %v5208
  %v5337 = vpack.c.b16 %v5225, %v5209
  %v5338 = vpack.c.b16 %v5226, %v5210
  %v5339 = vpack.c.b16 %v5227, %v5211
  %v5340 = vpack.c.b16 %v5228, %v5212
  %v5341 = vpack.c.b16 %v5229, %v5213
  %v5342 = vpack.c.b16 %v5230, %v5214
  %v5343 = vpack.c.b16 %v5231, %v5215
  %v5344 = vpack.c.b16 %v5232, %v5216
  %v5345 = vpack.c.b16 %v5233, %v5217
  %v5346 = vpack.c.b16 %v5234, %v5218
  %v5347 = vpack.c.b16 %v5235, %v5219
  %v5348 = vpack.c.b16 %v5236, %v5220
  %v5349 = vpack.c.b16 %v5237, %v5221
  %v5350 = vpack.c.b16 %v5238, %v5222
  %v5351 = vpack.c.b16 %v5255, %v5239
  %v5352 = vpack.c.b16 %v5256, %v5240
  %v5353 = vpack.c.b16 %v5257, %v5241
  %v5354 = vpack.c.b16 %v5258, %v5242
  %v5355 = vpack.c.b16 %v5259, %v5243
  %v5356 = vpack.c.b16 %v5260, %v5244
  %v5357 = vpack.c.b16 %v5261, %v5245
  %v5358 = vpack.c.b16 %v5262, %v5246
  %v5359 = vpack.c.b16 %v5263, %v5247
  %v5360 = vpack.c.b16 %v5264, %v5248
  %v5361 = vpack.c.b16 %v5265, %v5249
  %v5362 = vpack.c.b16 %v5266, %v5250
  %v5363 = vpack.c.b16 %v5267, %v5251
  %v5364 = vpack.c.b16 %v5268, %v5252
  %v5365 = vpack.c.b16 %v5269, %v5253
  %v5366 = vpack.c.b16 %v5270, %v5254
  %v5367 = vpack.c.b16 %v5287, %v5271
  %v5368 = vpack.c.b16 %v5288, %v5272
  %v5369 = vpack.c.b16 %v5289, %v5273
  %v5370 = vpack.c.b16 %v5290, %v5274
  %v5371 = vpack.c.b16 %v5291, %v5275
  %v5372 = vpack.c.b16 %v5292, %v5276
  %v5373 = vpack.c.b16 %v5293, %v5277
  %v5374 = vpack.c.b16 %v5294, %v5278
  %v5375 = vpack.c.b16 %v5295, %v5279
  %v5376 = vpack.c.b16 %v5296, %v5280
  %v5377 = vpack.c.b16 %v5297, %v5281
  %v5378 = vpack.c.b16 %v5298, %v5282
  %v5379 = vpack.c.b16 %v5299, %v5283
  %v5380 = vpack.c.b16 %v5300, %v5284
  %v5381 = vpack.c.b16 %v5301, %v5285
  %v5382 = vpack.c.b16 %v5302, %v5286
  %v5383 = vpack.c.b16 %v5319, %v5303
  %v5384 = vpack.c.b16 %v5320, %v5304
  %v5385 = vpack.c.b16 %v5321, %v5305
  %v5386 = vpack.c.b16 %v5322, %v5306
  %v5387 = vpack.c.b16 %v5323, %v5307
  %v5388 = vpack.c.b16 %v5324, %v5308
  %v5389 = vpack.c.b16 %v5325, %v5309
  %v5390 = vpack.c.b16 %v5326, %v5310
  %v5391 = vpack.c.b16 %v5327, %v5311
  %v5392 = vpack.c.b16 %v5328, %v5312
  %v5393 = vpack.c.b16 %v5329, %v5313
  %v5394 = vpack.c.b16 %v5330, %v5314
  %v5395 = vpack.c.b16 %v5331, %v5315
  %v5396 = vpack.c.b16 %v5332, %v5316
  %v5397 = vpack.c.b16 %v5333, %v5317
  %v5398 = vpack.c.b16 %v5334, %v5318
  %vm5463 = vcmask 523264
  %v5465 = vsel %vm5463, %v5077, 0
  %v5468 = vsel %vm5463, %v5078, 0
  %5470 = vmatprep.subr.bf16.mxu0 0
  %5471 = vmatpush1.bf16.msra.mxu0 0
  %5472 = vmatprep.subr.bf16.mxu0 0
  %5473 = vmatpush1.bf16.msra.mxu0 0
  %5474 = vmatprep.subr.bf16.mxu0 0
  %5475 = vmatpush1.bf16.msra.mxu0 0
  %5476 = vmatprep.subr.bf16.mxu0 0
  %5477 = vmatpush1.bf16.msra.mxu0 0
  %5478 = vmatprep.subr.bf16.mxu0 %v5384
  %5479 = vmatpush1.bf16.msra.mxu0 %v5383
  %5480 = vmatprep.subr.bf16.mxu0 %v5368
  %5481 = vmatpush1.bf16.msra.mxu0 %v5367
  %5482 = vmatprep.subr.bf16.mxu0 %v5352
  %5483 = vmatpush1.bf16.msra.mxu0 %v5351
  %5484 = vmatprep.subr.bf16.mxu0 %v5336
  %5485 = vmatpush1.bf16.msra.mxu0 %v5335
  %5486 = vmatprep.subr.bf16.mxu0 0
  %5487 = vmatpush2.bf16.msra.mxu0 0
  %5488 = vmatprep.subr.bf16.mxu0 0
  %5489 = vmatpush2.bf16.msra.mxu0 0
  %5490 = vmatprep.subr.bf16.mxu0 0
  %5491 = vmatpush2.bf16.msra.mxu0 0
  %5492 = vmatprep.subr.bf16.mxu0 0
  %5493 = vmatpush2.bf16.msra.mxu0 0
  %5494 = vmatprep.subr.bf16.mxu0 0
  %5495 = vmatpush2.bf16.msra.mxu0 0
  %5496 = vmatprep.subr.bf16.mxu0 0
  %5497 = vmatpush2.bf16.msra.mxu0 0
  %5498 = vmatprep.subr.bf16.mxu0 0
  %5499 = vmatpush2.bf16.msra.mxu0 0
  %5500 = vmatprep.subr.bf16.mxu0 0
  %5501 = vmatpush2.bf16.msra.mxu0 0
  %5502 = vmatprep.mubr.bf16.mxu0 0
  %5503 = vmatmul.mubr.bf16.gmra.mxu0 %v5465
  %v5504 = vpop.f32.mrf.mxu0
  %v5505 = vadd.f32 0.0, %v5504
  %v5506 = vpop.f32.mrf.mxu0
  %v5507 = vadd.f32 0.0, %v5506
  %v5508 = vpop.f32.mrf.mxu0
  %v5509 = vadd.f32 0.0, %v5508
  %v5510 = vpop.f32.mrf.mxu0
  %v5511 = vadd.f32 0.0, %v5510
  %5512 = vmatprep.mubr.bf16.mxu0 0
  %5513 = vmatmul.mubr.bf16.gmra.mxu0 %v5468
  %v5514 = vpop.f32.mrf.mxu0
  %v5515 = vadd.f32 0.0, %v5514
  %v5516 = vpop.f32.mrf.mxu0
  %v5517 = vadd.f32 0.0, %v5516
  %v5518 = vpop.f32.mrf.mxu0
  %v5519 = vadd.f32 0.0, %v5518
  %v5520 = vpop.f32.mrf.mxu0
  %v5521 = vadd.f32 0.0, %v5520
  %5522 = vdwg.mxu0
  %5523 = vmatprep.subr.bf16.mxu0 0
  %5524 = vmatpush1.bf16.msra.mxu0 0
  %5525 = vmatprep.subr.bf16.mxu0 0
  %5526 = vmatpush1.bf16.msra.mxu0 0
  %5527 = vmatprep.subr.bf16.mxu0 0
  %5528 = vmatpush1.bf16.msra.mxu0 0
  %5529 = vmatprep.subr.bf16.mxu0 0
  %5530 = vmatpush1.bf16.msra.mxu0 0
  %5531 = vmatprep.subr.bf16.mxu0 %v5386
  %5532 = vmatpush1.bf16.msra.mxu0 %v5385
  %5533 = vmatprep.subr.bf16.mxu0 %v5370
  %5534 = vmatpush1.bf16.msra.mxu0 %v5369
  %5535 = vmatprep.subr.bf16.mxu0 %v5354
  %5536 = vmatpush1.bf16.msra.mxu0 %v5353
  %5537 = vmatprep.subr.bf16.mxu0 %v5338
  %5538 = vmatpush1.bf16.msra.mxu0 %v5337
  %5539 = vmatprep.subr.bf16.mxu0 0
  %5540 = vmatpush2.bf16.msra.mxu0 0
  %5541 = vmatprep.subr.bf16.mxu0 0
  %5542 = vmatpush2.bf16.msra.mxu0 0
  %5543 = vmatprep.subr.bf16.mxu0 0
  %5544 = vmatpush2.bf16.msra.mxu0 0
  %5545 = vmatprep.subr.bf16.mxu0 0
  %5546 = vmatpush2.bf16.msra.mxu0 0
  %5547 = vmatprep.subr.bf16.mxu0 0
  %5548 = vmatpush2.bf16.msra.mxu0 0
  %5549 = vmatprep.subr.bf16.mxu0 0
  %5550 = vmatpush2.bf16.msra.mxu0 0
  %5551 = vmatprep.subr.bf16.mxu0 0
  %5552 = vmatpush2.bf16.msra.mxu0 0
  %5553 = vmatprep.subr.bf16.mxu0 0
  %5554 = vmatpush2.bf16.msra.mxu0 0
  %5555 = vmatprep.mubr.bf16.mxu0 0
  %5556 = vmatmul.mubr.bf16.gmra.mxu0 %v5465
  %v5557 = vpop.f32.mrf.mxu0
  %v5558 = vadd.f32 0.0, %v5557
  %v5559 = vpop.f32.mrf.mxu0
  %v5560 = vadd.f32 0.0, %v5559
  %v5561 = vpop.f32.mrf.mxu0
  %v5562 = vadd.f32 0.0, %v5561
  %v5563 = vpop.f32.mrf.mxu0
  %v5564 = vadd.f32 0.0, %v5563
  %5565 = vmatprep.mubr.bf16.mxu0 0
  %5566 = vmatmul.mubr.bf16.gmra.mxu0 %v5468
  %v5567 = vpop.f32.mrf.mxu0
  %v5568 = vadd.f32 0.0, %v5567
  %v5569 = vpop.f32.mrf.mxu0
  %v5570 = vadd.f32 0.0, %v5569
  %v5571 = vpop.f32.mrf.mxu0
  %v5572 = vadd.f32 0.0, %v5571
  %v5573 = vpop.f32.mrf.mxu0
  %v5574 = vadd.f32 0.0, %v5573
  %5575 = vdwg.mxu0
  %5576 = vmatprep.subr.bf16.mxu0 0
  %5577 = vmatpush1.bf16.msra.mxu0 0
  %5578 = vmatprep.subr.bf16.mxu0 0
  %5579 = vmatpush1.bf16.msra.mxu0 0
  %5580 = vmatprep.subr.bf16.mxu0 0
  %5581 = vmatpush1.bf16.msra.mxu0 0
  %5582 = vmatprep.subr.bf16.mxu0 0
  %5583 = vmatpush1.bf16.msra.mxu0 0
  %5584 = vmatprep.subr.bf16.mxu0 %v5388
  %5585 = vmatpush1.bf16.msra.mxu0 %v5387
  %5586 = vmatprep.subr.bf16.mxu0 %v5372
  %5587 = vmatpush1.bf16.msra.mxu0 %v5371
  %5588 = vmatprep.subr.bf16.mxu0 %v5356
  %5589 = vmatpush1.bf16.msra.mxu0 %v5355
  %5590 = vmatprep.subr.bf16.mxu0 %v5340
  %5591 = vmatpush1.bf16.msra.mxu0 %v5339
  %5592 = vmatprep.subr.bf16.mxu0 0
  %5593 = vmatpush2.bf16.msra.mxu0 0
  %5594 = vmatprep.subr.bf16.mxu0 0
  %5595 = vmatpush2.bf16.msra.mxu0 0
  %5596 = vmatprep.subr.bf16.mxu0 0
  %5597 = vmatpush2.bf16.msra.mxu0 0
  %5598 = vmatprep.subr.bf16.mxu0 0
  %5599 = vmatpush2.bf16.msra.mxu0 0
  %5600 = vmatprep.subr.bf16.mxu0 0
  %5601 = vmatpush2.bf16.msra.mxu0 0
  %5602 = vmatprep.subr.bf16.mxu0 0
  %5603 = vmatpush2.bf16.msra.mxu0 0
  %5604 = vmatprep.subr.bf16.mxu0 0
  %5605 = vmatpush2.bf16.msra.mxu0 0
  %5606 = vmatprep.subr.bf16.mxu0 0
  %5607 = vmatpush2.bf16.msra.mxu0 0
  %5608 = vmatprep.mubr.bf16.mxu0 0
  %5609 = vmatmul.mubr.bf16.gmra.mxu0 %v5465
  %v5610 = vpop.f32.mrf.mxu0
  %v5611 = vadd.f32 0.0, %v5610
  %v5612 = vpop.f32.mrf.mxu0
  %v5613 = vadd.f32 0.0, %v5612
  %v5614 = vpop.f32.mrf.mxu0
  %v5615 = vadd.f32 0.0, %v5614
  %v5616 = vpop.f32.mrf.mxu0
  %v5617 = vadd.f32 0.0, %v5616
  %5618 = vmatprep.mubr.bf16.mxu0 0
  %5619 = vmatmul.mubr.bf16.gmra.mxu0 %v5468
  %v5620 = vpop.f32.mrf.mxu0
  %v5621 = vadd.f32 0.0, %v5620
  %v5622 = vpop.f32.mrf.mxu0
  %v5623 = vadd.f32 0.0, %v5622
  %v5624 = vpop.f32.mrf.mxu0
  %v5625 = vadd.f32 0.0, %v5624
  %v5626 = vpop.f32.mrf.mxu0
  %v5627 = vadd.f32 0.0, %v5626
  %5628 = vdwg.mxu0
  %5629 = vmatprep.subr.bf16.mxu0 0
  %5630 = vmatpush1.bf16.msra.mxu0 0
  %5631 = vmatprep.subr.bf16.mxu0 0
  %5632 = vmatpush1.bf16.msra.mxu0 0
  %5633 = vmatprep.subr.bf16.mxu0 0
  %5634 = vmatpush1.bf16.msra.mxu0 0
  %5635 = vmatprep.subr.bf16.mxu0 0
  %5636 = vmatpush1.bf16.msra.mxu0 0
  %5637 = vmatprep.subr.bf16.mxu0 %v5390
  %5638 = vmatpush1.bf16.msra.mxu0 %v5389
  %5639 = vmatprep.subr.bf16.mxu0 %v5374
  %5640 = vmatpush1.bf16.msra.mxu0 %v5373
  %5641 = vmatprep.subr.bf16.mxu0 %v5358
  %5642 = vmatpush1.bf16.msra.mxu0 %v5357
  %5643 = vmatprep.subr.bf16.mxu0 %v5342
  %5644 = vmatpush1.bf16.msra.mxu0 %v5341
  %5645 = vmatprep.subr.bf16.mxu0 0
  %5646 = vmatpush2.bf16.msra.mxu0 0
  %5647 = vmatprep.subr.bf16.mxu0 0
  %5648 = vmatpush2.bf16.msra.mxu0 0
  %5649 = vmatprep.subr.bf16.mxu0 0
  %5650 = vmatpush2.bf16.msra.mxu0 0
  %5651 = vmatprep.subr.bf16.mxu0 0
  %5652 = vmatpush2.bf16.msra.mxu0 0
  %5653 = vmatprep.subr.bf16.mxu0 0
  %5654 = vmatpush2.bf16.msra.mxu0 0
  %5655 = vmatprep.subr.bf16.mxu0 0
  %5656 = vmatpush2.bf16.msra.mxu0 0
  %5657 = vmatprep.subr.bf16.mxu0 0
  %5658 = vmatpush2.bf16.msra.mxu0 0
  %5659 = vmatprep.subr.bf16.mxu0 0
  %5660 = vmatpush2.bf16.msra.mxu0 0
  %5661 = vmatprep.mubr.bf16.mxu0 0
  %5662 = vmatmul.mubr.bf16.gmra.mxu0 %v5465
  %v5663 = vpop.f32.mrf.mxu0
  %v5664 = vadd.f32 0.0, %v5663
  %v5665 = vpop.f32.mrf.mxu0
  %v5666 = vadd.f32 0.0, %v5665
  %v5667 = vpop.f32.mrf.mxu0
  %v5668 = vadd.f32 0.0, %v5667
  %v5669 = vpop.f32.mrf.mxu0
  %v5670 = vadd.f32 0.0, %v5669
  %5671 = vmatprep.mubr.bf16.mxu0 0
  %5672 = vmatmul.mubr.bf16.gmra.mxu0 %v5468
  %v5673 = vpop.f32.mrf.mxu0
  %v5674 = vadd.f32 0.0, %v5673
  %v5675 = vpop.f32.mrf.mxu0
  %v5676 = vadd.f32 0.0, %v5675
  %v5677 = vpop.f32.mrf.mxu0
  %v5678 = vadd.f32 0.0, %v5677
  %v5679 = vpop.f32.mrf.mxu0
  %v5680 = vadd.f32 0.0, %v5679
  %5681 = vdwg.mxu0
  %5682 = vmatprep.subr.bf16.mxu0 0
  %5683 = vmatpush1.bf16.msra.mxu0 0
  %5684 = vmatprep.subr.bf16.mxu0 0
  %5685 = vmatpush1.bf16.msra.mxu0 0
  %5686 = vmatprep.subr.bf16.mxu0 0
  %5687 = vmatpush1.bf16.msra.mxu0 0
  %5688 = vmatprep.subr.bf16.mxu0 0
  %5689 = vmatpush1.bf16.msra.mxu0 0
  %5690 = vmatprep.subr.bf16.mxu0 %v5392
  %5691 = vmatpush1.bf16.msra.mxu0 %v5391
  %5692 = vmatprep.subr.bf16.mxu0 %v5376
  %5693 = vmatpush1.bf16.msra.mxu0 %v5375
  %5694 = vmatprep.subr.bf16.mxu0 %v5360
  %5695 = vmatpush1.bf16.msra.mxu0 %v5359
  %5696 = vmatprep.subr.bf16.mxu0 %v5344
  %5697 = vmatpush1.bf16.msra.mxu0 %v5343
  %5698 = vmatprep.subr.bf16.mxu0 0
  %5699 = vmatpush2.bf16.msra.mxu0 0
  %5700 = vmatprep.subr.bf16.mxu0 0
  %5701 = vmatpush2.bf16.msra.mxu0 0
  %5702 = vmatprep.subr.bf16.mxu0 0
  %5703 = vmatpush2.bf16.msra.mxu0 0
  %5704 = vmatprep.subr.bf16.mxu0 0
  %5705 = vmatpush2.bf16.msra.mxu0 0
  %5706 = vmatprep.subr.bf16.mxu0 0
  %5707 = vmatpush2.bf16.msra.mxu0 0
  %5708 = vmatprep.subr.bf16.mxu0 0
  %5709 = vmatpush2.bf16.msra.mxu0 0
  %5710 = vmatprep.subr.bf16.mxu0 0
  %5711 = vmatpush2.bf16.msra.mxu0 0
  %5712 = vmatprep.subr.bf16.mxu0 0
  %5713 = vmatpush2.bf16.msra.mxu0 0
  %5714 = vmatprep.mubr.bf16.mxu0 0
  %5715 = vmatmul.mubr.bf16.gmra.mxu0 %v5465
  %v5716 = vpop.f32.mrf.mxu0
  %v5717 = vadd.f32 0.0, %v5716
  %v5718 = vpop.f32.mrf.mxu0
  %v5719 = vadd.f32 0.0, %v5718
  %v5720 = vpop.f32.mrf.mxu0
  %v5721 = vadd.f32 0.0, %v5720
  %v5722 = vpop.f32.mrf.mxu0
  %v5723 = vadd.f32 0.0, %v5722
  %5724 = vmatprep.mubr.bf16.mxu0 0
  %5725 = vmatmul.mubr.bf16.gmra.mxu0 %v5468
  %v5726 = vpop.f32.mrf.mxu0
  %v5727 = vadd.f32 0.0, %v5726
  %v5728 = vpop.f32.mrf.mxu0
  %v5729 = vadd.f32 0.0, %v5728
  %v5730 = vpop.f32.mrf.mxu0
  %v5731 = vadd.f32 0.0, %v5730
  %v5732 = vpop.f32.mrf.mxu0
  %v5733 = vadd.f32 0.0, %v5732
  %5734 = vdwg.mxu0
  %5735 = vmatprep.subr.bf16.mxu0 0
  %5736 = vmatpush1.bf16.msra.mxu0 0
  %5737 = vmatprep.subr.bf16.mxu0 0
  %5738 = vmatpush1.bf16.msra.mxu0 0
  %5739 = vmatprep.subr.bf16.mxu0 0
  %5740 = vmatpush1.bf16.msra.mxu0 0
  %5741 = vmatprep.subr.bf16.mxu0 0
  %5742 = vmatpush1.bf16.msra.mxu0 0
  %5743 = vmatprep.subr.bf16.mxu0 %v5394
  %5744 = vmatpush1.bf16.msra.mxu0 %v5393
  %5745 = vmatprep.subr.bf16.mxu0 %v5378
  %5746 = vmatpush1.bf16.msra.mxu0 %v5377
  %5747 = vmatprep.subr.bf16.mxu0 %v5362
  %5748 = vmatpush1.bf16.msra.mxu0 %v5361
  %5749 = vmatprep.subr.bf16.mxu0 %v5346
  %5750 = vmatpush1.bf16.msra.mxu0 %v5345
  %5751 = vmatprep.subr.bf16.mxu0 0
  %5752 = vmatpush2.bf16.msra.mxu0 0
  %5753 = vmatprep.subr.bf16.mxu0 0
  %5754 = vmatpush2.bf16.msra.mxu0 0
  %5755 = vmatprep.subr.bf16.mxu0 0
  %5756 = vmatpush2.bf16.msra.mxu0 0
  %5757 = vmatprep.subr.bf16.mxu0 0
  %5758 = vmatpush2.bf16.msra.mxu0 0
  %5759 = vmatprep.subr.bf16.mxu0 0
  %5760 = vmatpush2.bf16.msra.mxu0 0
  %5761 = vmatprep.subr.bf16.mxu0 0
  %5762 = vmatpush2.bf16.msra.mxu0 0
  %5763 = vmatprep.subr.bf16.mxu0 0
  %5764 = vmatpush2.bf16.msra.mxu0 0
  %5765 = vmatprep.subr.bf16.mxu0 0
  %5766 = vmatpush2.bf16.msra.mxu0 0
  %5767 = vmatprep.mubr.bf16.mxu0 0
  %5768 = vmatmul.mubr.bf16.gmra.mxu0 %v5465
  %v5769 = vpop.f32.mrf.mxu0
  %v5770 = vadd.f32 0.0, %v5769
  %v5771 = vpop.f32.mrf.mxu0
  %v5772 = vadd.f32 0.0, %v5771
  %v5773 = vpop.f32.mrf.mxu0
  %v5774 = vadd.f32 0.0, %v5773
  %v5775 = vpop.f32.mrf.mxu0
  %v5776 = vadd.f32 0.0, %v5775
  %5777 = vmatprep.mubr.bf16.mxu0 0
  %5778 = vmatmul.mubr.bf16.gmra.mxu0 %v5468
  %v5779 = vpop.f32.mrf.mxu0
  %v5780 = vadd.f32 0.0, %v5779
  %v5781 = vpop.f32.mrf.mxu0
  %v5782 = vadd.f32 0.0, %v5781
  %v5783 = vpop.f32.mrf.mxu0
  %v5784 = vadd.f32 0.0, %v5783
  %v5785 = vpop.f32.mrf.mxu0
  %v5786 = vadd.f32 0.0, %v5785
  %5787 = vdwg.mxu0
  %5788 = vmatprep.subr.bf16.mxu0 0
  %5789 = vmatpush1.bf16.msra.mxu0 0
  %5790 = vmatprep.subr.bf16.mxu0 0
  %5791 = vmatpush1.bf16.msra.mxu0 0
  %5792 = vmatprep.subr.bf16.mxu0 0
  %5793 = vmatpush1.bf16.msra.mxu0 0
  %5794 = vmatprep.subr.bf16.mxu0 0
  %5795 = vmatpush1.bf16.msra.mxu0 0
  %5796 = vmatprep.subr.bf16.mxu0 %v5396
  %5797 = vmatpush1.bf16.msra.mxu0 %v5395
  %5798 = vmatprep.subr.bf16.mxu0 %v5380
  %5799 = vmatpush1.bf16.msra.mxu0 %v5379
  %5800 = vmatprep.subr.bf16.mxu0 %v5364
  %5801 = vmatpush1.bf16.msra.mxu0 %v5363
  %5802 = vmatprep.subr.bf16.mxu0 %v5348
  %5803 = vmatpush1.bf16.msra.mxu0 %v5347
  %5804 = vmatprep.subr.bf16.mxu0 0
  %5805 = vmatpush2.bf16.msra.mxu0 0
  %5806 = vmatprep.subr.bf16.mxu0 0
  %5807 = vmatpush2.bf16.msra.mxu0 0
  %5808 = vmatprep.subr.bf16.mxu0 0
  %5809 = vmatpush2.bf16.msra.mxu0 0
  %5810 = vmatprep.subr.bf16.mxu0 0
  %5811 = vmatpush2.bf16.msra.mxu0 0
  %5812 = vmatprep.subr.bf16.mxu0 0
  %5813 = vmatpush2.bf16.msra.mxu0 0
  %5814 = vmatprep.subr.bf16.mxu0 0
  %5815 = vmatpush2.bf16.msra.mxu0 0
  %5816 = vmatprep.subr.bf16.mxu0 0
  %5817 = vmatpush2.bf16.msra.mxu0 0
  %5818 = vmatprep.subr.bf16.mxu0 0
  %5819 = vmatpush2.bf16.msra.mxu0 0
  %5820 = vmatprep.mubr.bf16.mxu0 0
  %5821 = vmatmul.mubr.bf16.gmra.mxu0 %v5465
  %v5822 = vpop.f32.mrf.mxu0
  %v5823 = vadd.f32 0.0, %v5822
  %v5824 = vpop.f32.mrf.mxu0
  %v5825 = vadd.f32 0.0, %v5824
  %v5826 = vpop.f32.mrf.mxu0
  %v5827 = vadd.f32 0.0, %v5826
  %v5828 = vpop.f32.mrf.mxu0
  %v5829 = vadd.f32 0.0, %v5828
  %5830 = vmatprep.mubr.bf16.mxu0 0
  %5831 = vmatmul.mubr.bf16.gmra.mxu0 %v5468
  %v5832 = vpop.f32.mrf.mxu0
  %v5833 = vadd.f32 0.0, %v5832
  %v5834 = vpop.f32.mrf.mxu0
  %v5835 = vadd.f32 0.0, %v5834
  %v5836 = vpop.f32.mrf.mxu0
  %v5837 = vadd.f32 0.0, %v5836
  %v5838 = vpop.f32.mrf.mxu0
  %v5839 = vadd.f32 0.0, %v5838
  %5840 = vdwg.mxu0
  %5841 = vmatprep.subr.bf16.mxu0 0
  %5842 = vmatpush1.bf16.msra.mxu0 0
  %5843 = vmatprep.subr.bf16.mxu0 0
  %5844 = vmatpush1.bf16.msra.mxu0 0
  %5845 = vmatprep.subr.bf16.mxu0 0
  %5846 = vmatpush1.bf16.msra.mxu0 0
  %5847 = vmatprep.subr.bf16.mxu0 0
  %5848 = vmatpush1.bf16.msra.mxu0 0
  %5849 = vmatprep.subr.bf16.mxu0 %v5398
  %5850 = vmatpush1.bf16.msra.mxu0 %v5397
  %5851 = vmatprep.subr.bf16.mxu0 %v5382
  %5852 = vmatpush1.bf16.msra.mxu0 %v5381
  %5853 = vmatprep.subr.bf16.mxu0 %v5366
  %5854 = vmatpush1.bf16.msra.mxu0 %v5365
  %5855 = vmatprep.subr.bf16.mxu0 %v5350
  %5856 = vmatpush1.bf16.msra.mxu0 %v5349
  %5857 = vmatprep.subr.bf16.mxu0 0
  %5858 = vmatpush2.bf16.msra.mxu0 0
  %5859 = vmatprep.subr.bf16.mxu0 0
  %5860 = vmatpush2.bf16.msra.mxu0 0
  %5861 = vmatprep.subr.bf16.mxu0 0
  %5862 = vmatpush2.bf16.msra.mxu0 0
  %5863 = vmatprep.subr.bf16.mxu0 0
  %5864 = vmatpush2.bf16.msra.mxu0 0
  %5865 = vmatprep.subr.bf16.mxu0 0
  %5866 = vmatpush2.bf16.msra.mxu0 0
  %5867 = vmatprep.subr.bf16.mxu0 0
  %5868 = vmatpush2.bf16.msra.mxu0 0
  %5869 = vmatprep.subr.bf16.mxu0 0
  %5870 = vmatpush2.bf16.msra.mxu0 0
  %5871 = vmatprep.subr.bf16.mxu0 0
  %5872 = vmatpush2.bf16.msra.mxu0 0
  %5873 = vmatprep.mubr.bf16.mxu0 0
  %5874 = vmatmul.mubr.bf16.gmra.mxu0 %v5465
  %v5875 = vpop.f32.mrf.mxu0
  %v5876 = vadd.f32 0.0, %v5875
  %v5877 = vpop.f32.mrf.mxu0
  %v5878 = vadd.f32 0.0, %v5877
  %v5879 = vpop.f32.mrf.mxu0
  %v5880 = vadd.f32 0.0, %v5879
  %v5881 = vpop.f32.mrf.mxu0
  %v5882 = vadd.f32 0.0, %v5881
  %5883 = vmatprep.mubr.bf16.mxu0 0
  %5884 = vmatmul.mubr.bf16.gmra.mxu0 %v5468
  %v5885 = vpop.f32.mrf.mxu0
  %v5886 = vadd.f32 0.0, %v5885
  %v5887 = vpop.f32.mrf.mxu0
  %v5888 = vadd.f32 0.0, %v5887
  %v5889 = vpop.f32.mrf.mxu0
  %v5890 = vadd.f32 0.0, %v5889
  %v5891 = vpop.f32.mrf.mxu0
  %v5892 = vadd.f32 0.0, %v5891
  %5893 = vdwg.mxu0
  %v5926 = vunpack.c.l.b16 %v5045
  %v5927 = vunpack.c.h.b16 %v5045
  %v5928 = vunpack.c.l.b16 %v5046
  %v5929 = vunpack.c.h.b16 %v5046
  %v5930 = vunpack.c.l.b16 %v5047
  %v5931 = vunpack.c.h.b16 %v5047
  %v5932 = vunpack.c.l.b16 %v5048
  %v5933 = vunpack.c.h.b16 %v5048
  %v5934 = vunpack.c.l.b16 %v5049
  %v5935 = vunpack.c.h.b16 %v5049
  %v5936 = vunpack.c.l.b16 %v5050
  %v5937 = vunpack.c.h.b16 %v5050
  %v5938 = vunpack.c.l.b16 %v5051
  %v5939 = vunpack.c.h.b16 %v5051
  %v5940 = vunpack.c.l.b16 %v5052
  %v5941 = vunpack.c.h.b16 %v5052
  %v5942 = vunpack.c.l.b16 %v5053
  %v5943 = vunpack.c.h.b16 %v5053
  %v5944 = vunpack.c.l.b16 %v5054
  %v5945 = vunpack.c.h.b16 %v5054
  %v5946 = vunpack.c.l.b16 %v5055
  %v5947 = vunpack.c.h.b16 %v5055
  %v5948 = vunpack.c.l.b16 %v5056
  %v5949 = vunpack.c.h.b16 %v5056
  %v5950 = vunpack.c.l.b16 %v5057
  %v5951 = vunpack.c.h.b16 %v5057
  %v5952 = vunpack.c.l.b16 %v5058
  %v5953 = vunpack.c.h.b16 %v5058
  %v5954 = vunpack.c.l.b16 %v5059
  %v5955 = vunpack.c.h.b16 %v5059
  %v5956 = vunpack.c.l.b16 %v5060
  %v5957 = vunpack.c.h.b16 %v5060
  %v5958 = vunpack.c.l.b16 %v5061
  %v5959 = vunpack.c.h.b16 %v5061
  %v5960 = vunpack.c.l.b16 %v5062
  %v5961 = vunpack.c.h.b16 %v5062
  %v5962 = vunpack.c.l.b16 %v5063
  %v5963 = vunpack.c.h.b16 %v5063
  %v5964 = vunpack.c.l.b16 %v5064
  %v5965 = vunpack.c.h.b16 %v5064
  %v5966 = vunpack.c.l.b16 %v5065
  %v5967 = vunpack.c.h.b16 %v5065
  %v5968 = vunpack.c.l.b16 %v5066
  %v5969 = vunpack.c.h.b16 %v5066
  %v5970 = vunpack.c.l.b16 %v5067
  %v5971 = vunpack.c.h.b16 %v5067
  %v5972 = vunpack.c.l.b16 %v5068
  %v5973 = vunpack.c.h.b16 %v5068
  %v5974 = vunpack.c.l.b16 %v5069
  %v5975 = vunpack.c.h.b16 %v5069
  %v5976 = vunpack.c.l.b16 %v5070
  %v5977 = vunpack.c.h.b16 %v5070
  %v5978 = vunpack.c.l.b16 %v5071
  %v5979 = vunpack.c.h.b16 %v5071
  %v5980 = vunpack.c.l.b16 %v5072
  %v5981 = vunpack.c.h.b16 %v5072
  %v5982 = vunpack.c.l.b16 %v5073
  %v5983 = vunpack.c.h.b16 %v5073
  %v5984 = vunpack.c.l.b16 %v5074
  %v5985 = vunpack.c.h.b16 %v5074
  %v5986 = vunpack.c.l.b16 %v5075
  %v5987 = vunpack.c.h.b16 %v5075
  %v5988 = vunpack.c.l.b16 %v5076
  %v5989 = vunpack.c.h.b16 %v5076
  %v5990 = vpack.c.b16 %v5942, %v5926
  %v5991 = vpack.c.b16 %v5943, %v5927
  %v5992 = vpack.c.b16 %v5944, %v5928
  %v5993 = vpack.c.b16 %v5945, %v5929
  %v5994 = vpack.c.b16 %v5946, %v5930
  %v5995 = vpack.c.b16 %v5947, %v5931
  %v5996 = vpack.c.b16 %v5948, %v5932
  %v5997 = vpack.c.b16 %v5949, %v5933
  %v5998 = vpack.c.b16 %v5950, %v5934
  %v5999 = vpack.c.b16 %v5951, %v5935
  %v6000 = vpack.c.b16 %v5952, %v5936
  %v6001 = vpack.c.b16 %v5953, %v5937
  %v6002 = vpack.c.b16 %v5954, %v5938
  %v6003 = vpack.c.b16 %v5955, %v5939
  %v6004 = vpack.c.b16 %v5956, %v5940
  %v6005 = vpack.c.b16 %v5957, %v5941
  %v6006 = vpack.c.b16 %v5974, %v5958
  %v6007 = vpack.c.b16 %v5975, %v5959
  %v6008 = vpack.c.b16 %v5976, %v5960
  %v6009 = vpack.c.b16 %v5977, %v5961
  %v6010 = vpack.c.b16 %v5978, %v5962
  %v6011 = vpack.c.b16 %v5979, %v5963
  %v6012 = vpack.c.b16 %v5980, %v5964
  %v6013 = vpack.c.b16 %v5981, %v5965
  %v6014 = vpack.c.b16 %v5982, %v5966
  %v6015 = vpack.c.b16 %v5983, %v5967
  %v6016 = vpack.c.b16 %v5984, %v5968
  %v6017 = vpack.c.b16 %v5985, %v5969
  %v6018 = vpack.c.b16 %v5986, %v5970
  %v6019 = vpack.c.b16 %v5987, %v5971
  %v6020 = vpack.c.b16 %v5988, %v5972
  %v6021 = vpack.c.b16 %v5989, %v5973
  %v6055 = vsel %vm4682, %v5043, 0
  %v6058 = vsel %vm4682, %v5044, 0
  %6060 = vmatprep.subr.bf16.mxu0 0
  %6061 = vmatpush1.bf16.msra.mxu0 0
  %6062 = vmatprep.subr.bf16.mxu0 0
  %6063 = vmatpush1.bf16.msra.mxu0 0
  %6064 = vmatprep.subr.bf16.mxu0 0
  %6065 = vmatpush1.bf16.msra.mxu0 0
  %6066 = vmatprep.subr.bf16.mxu0 0
  %6067 = vmatpush1.bf16.msra.mxu0 0
  %6068 = vmatprep.subr.bf16.mxu0 0
  %6069 = vmatpush1.bf16.msra.mxu0 0
  %6070 = vmatprep.subr.bf16.mxu0 0
  %6071 = vmatpush1.bf16.msra.mxu0 0
  %6072 = vmatprep.subr.bf16.mxu0 %v6007
  %6073 = vmatpush1.bf16.msra.mxu0 %v6006
  %6074 = vmatprep.subr.bf16.mxu0 %v5991
  %6075 = vmatpush1.bf16.msra.mxu0 %v5990
  %6076 = vmatprep.subr.bf16.mxu0 0
  %6077 = vmatpush2.bf16.msra.mxu0 0
  %6078 = vmatprep.subr.bf16.mxu0 0
  %6079 = vmatpush2.bf16.msra.mxu0 0
  %6080 = vmatprep.subr.bf16.mxu0 0
  %6081 = vmatpush2.bf16.msra.mxu0 0
  %6082 = vmatprep.subr.bf16.mxu0 0
  %6083 = vmatpush2.bf16.msra.mxu0 0
  %6084 = vmatprep.subr.bf16.mxu0 0
  %6085 = vmatpush2.bf16.msra.mxu0 0
  %6086 = vmatprep.subr.bf16.mxu0 0
  %6087 = vmatpush2.bf16.msra.mxu0 0
  %6088 = vmatprep.subr.bf16.mxu0 0
  %6089 = vmatpush2.bf16.msra.mxu0 0
  %6090 = vmatprep.subr.bf16.mxu0 0
  %6091 = vmatpush2.bf16.msra.mxu0 0
  %6092 = vmatprep.mubr.bf16.mxu0 0
  %6093 = vmatmul.mubr.bf16.gmra.mxu0 %v6055
  %v6094 = vpop.f32.mrf.mxu0
  %v6095 = vadd.f32 %v5505, %v6094
  %v6096 = vpop.f32.mrf.mxu0
  %v6097 = vadd.f32 %v5507, %v6096
  %v6098 = vpop.f32.mrf.mxu0
  %v6099 = vadd.f32 %v5509, %v6098
  %v6100 = vpop.f32.mrf.mxu0
  %v6101 = vadd.f32 %v5511, %v6100
  %6102 = vmatprep.mubr.bf16.mxu0 0
  %6103 = vmatmul.mubr.bf16.gmra.mxu0 %v6058
  %v6104 = vpop.f32.mrf.mxu0
  %v6105 = vadd.f32 %v5515, %v6104
  %v6106 = vpop.f32.mrf.mxu0
  %v6107 = vadd.f32 %v5517, %v6106
  %v6108 = vpop.f32.mrf.mxu0
  %v6109 = vadd.f32 %v5519, %v6108
  %v6110 = vpop.f32.mrf.mxu0
  %v6111 = vadd.f32 %v5521, %v6110
  %6112 = vdwg.mxu0
  %6113 = vmatprep.subr.bf16.mxu0 0
  %6114 = vmatpush1.bf16.msra.mxu0 0
  %6115 = vmatprep.subr.bf16.mxu0 0
  %6116 = vmatpush1.bf16.msra.mxu0 0
  %6117 = vmatprep.subr.bf16.mxu0 0
  %6118 = vmatpush1.bf16.msra.mxu0 0
  %6119 = vmatprep.subr.bf16.mxu0 0
  %6120 = vmatpush1.bf16.msra.mxu0 0
  %6121 = vmatprep.subr.bf16.mxu0 0
  %6122 = vmatpush1.bf16.msra.mxu0 0
  %6123 = vmatprep.subr.bf16.mxu0 0
  %6124 = vmatpush1.bf16.msra.mxu0 0
  %6125 = vmatprep.subr.bf16.mxu0 %v6009
  %6126 = vmatpush1.bf16.msra.mxu0 %v6008
  %6127 = vmatprep.subr.bf16.mxu0 %v5993
  %6128 = vmatpush1.bf16.msra.mxu0 %v5992
  %6129 = vmatprep.subr.bf16.mxu0 0
  %6130 = vmatpush2.bf16.msra.mxu0 0
  %6131 = vmatprep.subr.bf16.mxu0 0
  %6132 = vmatpush2.bf16.msra.mxu0 0
  %6133 = vmatprep.subr.bf16.mxu0 0
  %6134 = vmatpush2.bf16.msra.mxu0 0
  %6135 = vmatprep.subr.bf16.mxu0 0
  %6136 = vmatpush2.bf16.msra.mxu0 0
  %6137 = vmatprep.subr.bf16.mxu0 0
  %6138 = vmatpush2.bf16.msra.mxu0 0
  %6139 = vmatprep.subr.bf16.mxu0 0
  %6140 = vmatpush2.bf16.msra.mxu0 0
  %6141 = vmatprep.subr.bf16.mxu0 0
  %6142 = vmatpush2.bf16.msra.mxu0 0
  %6143 = vmatprep.subr.bf16.mxu0 0
  %6144 = vmatpush2.bf16.msra.mxu0 0
  %6145 = vmatprep.mubr.bf16.mxu0 0
  %6146 = vmatmul.mubr.bf16.gmra.mxu0 %v6055
  %v6147 = vpop.f32.mrf.mxu0
  %v6148 = vadd.f32 %v5558, %v6147
  %v6149 = vpop.f32.mrf.mxu0
  %v6150 = vadd.f32 %v5560, %v6149
  %v6151 = vpop.f32.mrf.mxu0
  %v6152 = vadd.f32 %v5562, %v6151
  %v6153 = vpop.f32.mrf.mxu0
  %v6154 = vadd.f32 %v5564, %v6153
  %6155 = vmatprep.mubr.bf16.mxu0 0
  %6156 = vmatmul.mubr.bf16.gmra.mxu0 %v6058
  %v6157 = vpop.f32.mrf.mxu0
  %v6158 = vadd.f32 %v5568, %v6157
  %v6159 = vpop.f32.mrf.mxu0
  %v6160 = vadd.f32 %v5570, %v6159
  %v6161 = vpop.f32.mrf.mxu0
  %v6162 = vadd.f32 %v5572, %v6161
  %v6163 = vpop.f32.mrf.mxu0
  %v6164 = vadd.f32 %v5574, %v6163
  %6165 = vdwg.mxu0
  %6166 = vmatprep.subr.bf16.mxu0 0
  %6167 = vmatpush1.bf16.msra.mxu0 0
  %6168 = vmatprep.subr.bf16.mxu0 0
  %6169 = vmatpush1.bf16.msra.mxu0 0
  %6170 = vmatprep.subr.bf16.mxu0 0
  %6171 = vmatpush1.bf16.msra.mxu0 0
  %6172 = vmatprep.subr.bf16.mxu0 0
  %6173 = vmatpush1.bf16.msra.mxu0 0
  %6174 = vmatprep.subr.bf16.mxu0 0
  %6175 = vmatpush1.bf16.msra.mxu0 0
  %6176 = vmatprep.subr.bf16.mxu0 0
  %6177 = vmatpush1.bf16.msra.mxu0 0
  %6178 = vmatprep.subr.bf16.mxu0 %v6011
  %6179 = vmatpush1.bf16.msra.mxu0 %v6010
  %6180 = vmatprep.subr.bf16.mxu0 %v5995
  %6181 = vmatpush1.bf16.msra.mxu0 %v5994
  %6182 = vmatprep.subr.bf16.mxu0 0
  %6183 = vmatpush2.bf16.msra.mxu0 0
  %6184 = vmatprep.subr.bf16.mxu0 0
  %6185 = vmatpush2.bf16.msra.mxu0 0
  %6186 = vmatprep.subr.bf16.mxu0 0
  %6187 = vmatpush2.bf16.msra.mxu0 0
  %6188 = vmatprep.subr.bf16.mxu0 0
  %6189 = vmatpush2.bf16.msra.mxu0 0
  %6190 = vmatprep.subr.bf16.mxu0 0
  %6191 = vmatpush2.bf16.msra.mxu0 0
  %6192 = vmatprep.subr.bf16.mxu0 0
  %6193 = vmatpush2.bf16.msra.mxu0 0
  %6194 = vmatprep.subr.bf16.mxu0 0
  %6195 = vmatpush2.bf16.msra.mxu0 0
  %6196 = vmatprep.subr.bf16.mxu0 0
  %6197 = vmatpush2.bf16.msra.mxu0 0
  %6198 = vmatprep.mubr.bf16.mxu0 0
  %6199 = vmatmul.mubr.bf16.gmra.mxu0 %v6055
  %v6200 = vpop.f32.mrf.mxu0
  %v6201 = vadd.f32 %v5611, %v6200
  %v6202 = vpop.f32.mrf.mxu0
  %v6203 = vadd.f32 %v5613, %v6202
  %v6204 = vpop.f32.mrf.mxu0
  %v6205 = vadd.f32 %v5615, %v6204
  %v6206 = vpop.f32.mrf.mxu0
  %v6207 = vadd.f32 %v5617, %v6206
  %6208 = vmatprep.mubr.bf16.mxu0 0
  %6209 = vmatmul.mubr.bf16.gmra.mxu0 %v6058
  %v6210 = vpop.f32.mrf.mxu0
  %v6211 = vadd.f32 %v5621, %v6210
  %v6212 = vpop.f32.mrf.mxu0
  %v6213 = vadd.f32 %v5623, %v6212
  %v6214 = vpop.f32.mrf.mxu0
  %v6215 = vadd.f32 %v5625, %v6214
  %v6216 = vpop.f32.mrf.mxu0
  %v6217 = vadd.f32 %v5627, %v6216
  %6218 = vdwg.mxu0
  %6219 = vmatprep.subr.bf16.mxu0 0
  %6220 = vmatpush1.bf16.msra.mxu0 0
  %6221 = vmatprep.subr.bf16.mxu0 0
  %6222 = vmatpush1.bf16.msra.mxu0 0
  %6223 = vmatprep.subr.bf16.mxu0 0
  %6224 = vmatpush1.bf16.msra.mxu0 0
  %6225 = vmatprep.subr.bf16.mxu0 0
  %6226 = vmatpush1.bf16.msra.mxu0 0
  %6227 = vmatprep.subr.bf16.mxu0 0
  %6228 = vmatpush1.bf16.msra.mxu0 0
  %6229 = vmatprep.subr.bf16.mxu0 0
  %6230 = vmatpush1.bf16.msra.mxu0 0
  %6231 = vmatprep.subr.bf16.mxu0 %v6013
  %6232 = vmatpush1.bf16.msra.mxu0 %v6012
  %6233 = vmatprep.subr.bf16.mxu0 %v5997
  %6234 = vmatpush1.bf16.msra.mxu0 %v5996
  %6235 = vmatprep.subr.bf16.mxu0 0
  %6236 = vmatpush2.bf16.msra.mxu0 0
  %6237 = vmatprep.subr.bf16.mxu0 0
  %6238 = vmatpush2.bf16.msra.mxu0 0
  %6239 = vmatprep.subr.bf16.mxu0 0
  %6240 = vmatpush2.bf16.msra.mxu0 0
  %6241 = vmatprep.subr.bf16.mxu0 0
  %6242 = vmatpush2.bf16.msra.mxu0 0
  %6243 = vmatprep.subr.bf16.mxu0 0
  %6244 = vmatpush2.bf16.msra.mxu0 0
  %6245 = vmatprep.subr.bf16.mxu0 0
  %6246 = vmatpush2.bf16.msra.mxu0 0
  %6247 = vmatprep.subr.bf16.mxu0 0
  %6248 = vmatpush2.bf16.msra.mxu0 0
  %6249 = vmatprep.subr.bf16.mxu0 0
  %6250 = vmatpush2.bf16.msra.mxu0 0
  %6251 = vmatprep.mubr.bf16.mxu0 0
  %6252 = vmatmul.mubr.bf16.gmra.mxu0 %v6055
  %v6253 = vpop.f32.mrf.mxu0
  %v6254 = vadd.f32 %v5664, %v6253
  %v6255 = vpop.f32.mrf.mxu0
  %v6256 = vadd.f32 %v5666, %v6255
  %v6257 = vpop.f32.mrf.mxu0
  %v6258 = vadd.f32 %v5668, %v6257
  %v6259 = vpop.f32.mrf.mxu0
  %v6260 = vadd.f32 %v5670, %v6259
  %6261 = vmatprep.mubr.bf16.mxu0 0
  %6262 = vmatmul.mubr.bf16.gmra.mxu0 %v6058
  %v6263 = vpop.f32.mrf.mxu0
  %v6264 = vadd.f32 %v5674, %v6263
  %v6265 = vpop.f32.mrf.mxu0
  %v6266 = vadd.f32 %v5676, %v6265
  %v6267 = vpop.f32.mrf.mxu0
  %v6268 = vadd.f32 %v5678, %v6267
  %v6269 = vpop.f32.mrf.mxu0
  %v6270 = vadd.f32 %v5680, %v6269
  %6271 = vdwg.mxu0
  %6272 = vmatprep.subr.bf16.mxu0 0
  %6273 = vmatpush1.bf16.msra.mxu0 0
  %6274 = vmatprep.subr.bf16.mxu0 0
  %6275 = vmatpush1.bf16.msra.mxu0 0
  %6276 = vmatprep.subr.bf16.mxu0 0
  %6277 = vmatpush1.bf16.msra.mxu0 0
  %6278 = vmatprep.subr.bf16.mxu0 0
  %6279 = vmatpush1.bf16.msra.mxu0 0
  %6280 = vmatprep.subr.bf16.mxu0 0
  %6281 = vmatpush1.bf16.msra.mxu0 0
  %6282 = vmatprep.subr.bf16.mxu0 0
  %6283 = vmatpush1.bf16.msra.mxu0 0
  %6284 = vmatprep.subr.bf16.mxu0 %v6015
  %6285 = vmatpush1.bf16.msra.mxu0 %v6014
  %6286 = vmatprep.subr.bf16.mxu0 %v5999
  %6287 = vmatpush1.bf16.msra.mxu0 %v5998
  %6288 = vmatprep.subr.bf16.mxu0 0
  %6289 = vmatpush2.bf16.msra.mxu0 0
  %6290 = vmatprep.subr.bf16.mxu0 0
  %6291 = vmatpush2.bf16.msra.mxu0 0
  %6292 = vmatprep.subr.bf16.mxu0 0
  %6293 = vmatpush2.bf16.msra.mxu0 0
  %6294 = vmatprep.subr.bf16.mxu0 0
  %6295 = vmatpush2.bf16.msra.mxu0 0
  %6296 = vmatprep.subr.bf16.mxu0 0
  %6297 = vmatpush2.bf16.msra.mxu0 0
  %6298 = vmatprep.subr.bf16.mxu0 0
  %6299 = vmatpush2.bf16.msra.mxu0 0
  %6300 = vmatprep.subr.bf16.mxu0 0
  %6301 = vmatpush2.bf16.msra.mxu0 0
  %6302 = vmatprep.subr.bf16.mxu0 0
  %6303 = vmatpush2.bf16.msra.mxu0 0
  %6304 = vmatprep.mubr.bf16.mxu0 0
  %6305 = vmatmul.mubr.bf16.gmra.mxu0 %v6055
  %v6306 = vpop.f32.mrf.mxu0
  %v6307 = vadd.f32 %v5717, %v6306
  %v6308 = vpop.f32.mrf.mxu0
  %v6309 = vadd.f32 %v5719, %v6308
  %v6310 = vpop.f32.mrf.mxu0
  %v6311 = vadd.f32 %v5721, %v6310
  %v6312 = vpop.f32.mrf.mxu0
  %v6313 = vadd.f32 %v5723, %v6312
  %6314 = vmatprep.mubr.bf16.mxu0 0
  %6315 = vmatmul.mubr.bf16.gmra.mxu0 %v6058
  %v6316 = vpop.f32.mrf.mxu0
  %v6317 = vadd.f32 %v5727, %v6316
  %v6318 = vpop.f32.mrf.mxu0
  %v6319 = vadd.f32 %v5729, %v6318
  %v6320 = vpop.f32.mrf.mxu0
  %v6321 = vadd.f32 %v5731, %v6320
  %v6322 = vpop.f32.mrf.mxu0
  %v6323 = vadd.f32 %v5733, %v6322
  %6324 = vdwg.mxu0
  %6325 = vmatprep.subr.bf16.mxu0 0
  %6326 = vmatpush1.bf16.msra.mxu0 0
  %6327 = vmatprep.subr.bf16.mxu0 0
  %6328 = vmatpush1.bf16.msra.mxu0 0
  %6329 = vmatprep.subr.bf16.mxu0 0
  %6330 = vmatpush1.bf16.msra.mxu0 0
  %6331 = vmatprep.subr.bf16.mxu0 0
  %6332 = vmatpush1.bf16.msra.mxu0 0
  %6333 = vmatprep.subr.bf16.mxu0 0
  %6334 = vmatpush1.bf16.msra.mxu0 0
  %6335 = vmatprep.subr.bf16.mxu0 0
  %6336 = vmatpush1.bf16.msra.mxu0 0
  %6337 = vmatprep.subr.bf16.mxu0 %v6017
  %6338 = vmatpush1.bf16.msra.mxu0 %v6016
  %6339 = vmatprep.subr.bf16.mxu0 %v6001
  %6340 = vmatpush1.bf16.msra.mxu0 %v6000
  %6341 = vmatprep.subr.bf16.mxu0 0
  %6342 = vmatpush2.bf16.msra.mxu0 0
  %6343 = vmatprep.subr.bf16.mxu0 0
  %6344 = vmatpush2.bf16.msra.mxu0 0
  %6345 = vmatprep.subr.bf16.mxu0 0
  %6346 = vmatpush2.bf16.msra.mxu0 0
  %6347 = vmatprep.subr.bf16.mxu0 0
  %6348 = vmatpush2.bf16.msra.mxu0 0
  %6349 = vmatprep.subr.bf16.mxu0 0
  %6350 = vmatpush2.bf16.msra.mxu0 0
  %6351 = vmatprep.subr.bf16.mxu0 0
  %6352 = vmatpush2.bf16.msra.mxu0 0
  %6353 = vmatprep.subr.bf16.mxu0 0
  %6354 = vmatpush2.bf16.msra.mxu0 0
  %6355 = vmatprep.subr.bf16.mxu0 0
  %6356 = vmatpush2.bf16.msra.mxu0 0
  %6357 = vmatprep.mubr.bf16.mxu0 0
  %6358 = vmatmul.mubr.bf16.gmra.mxu0 %v6055
  %v6359 = vpop.f32.mrf.mxu0
  %v6360 = vadd.f32 %v5770, %v6359
  %v6361 = vpop.f32.mrf.mxu0
  %v6362 = vadd.f32 %v5772, %v6361
  %v6363 = vpop.f32.mrf.mxu0
  %v6364 = vadd.f32 %v5774, %v6363
  %v6365 = vpop.f32.mrf.mxu0
  %v6366 = vadd.f32 %v5776, %v6365
  %6367 = vmatprep.mubr.bf16.mxu0 0
  %6368 = vmatmul.mubr.bf16.gmra.mxu0 %v6058
  %v6369 = vpop.f32.mrf.mxu0
  %v6370 = vadd.f32 %v5780, %v6369
  %v6371 = vpop.f32.mrf.mxu0
  %v6372 = vadd.f32 %v5782, %v6371
  %v6373 = vpop.f32.mrf.mxu0
  %v6374 = vadd.f32 %v5784, %v6373
  %v6375 = vpop.f32.mrf.mxu0
  %v6376 = vadd.f32 %v5786, %v6375
  %6377 = vdwg.mxu0
  %6378 = vmatprep.subr.bf16.mxu0 0
  %6379 = vmatpush1.bf16.msra.mxu0 0
  %6380 = vmatprep.subr.bf16.mxu0 0
  %6381 = vmatpush1.bf16.msra.mxu0 0
  %6382 = vmatprep.subr.bf16.mxu0 0
  %6383 = vmatpush1.bf16.msra.mxu0 0
  %6384 = vmatprep.subr.bf16.mxu0 0
  %6385 = vmatpush1.bf16.msra.mxu0 0
  %6386 = vmatprep.subr.bf16.mxu0 0
  %6387 = vmatpush1.bf16.msra.mxu0 0
  %6388 = vmatprep.subr.bf16.mxu0 0
  %6389 = vmatpush1.bf16.msra.mxu0 0
  %6390 = vmatprep.subr.bf16.mxu0 %v6019
  %6391 = vmatpush1.bf16.msra.mxu0 %v6018
  %6392 = vmatprep.subr.bf16.mxu0 %v6003
  %6393 = vmatpush1.bf16.msra.mxu0 %v6002
  %6394 = vmatprep.subr.bf16.mxu0 0
  %6395 = vmatpush2.bf16.msra.mxu0 0
  %6396 = vmatprep.subr.bf16.mxu0 0
  %6397 = vmatpush2.bf16.msra.mxu0 0
  %6398 = vmatprep.subr.bf16.mxu0 0
  %6399 = vmatpush2.bf16.msra.mxu0 0
  %6400 = vmatprep.subr.bf16.mxu0 0
  %6401 = vmatpush2.bf16.msra.mxu0 0
  %6402 = vmatprep.subr.bf16.mxu0 0
  %6403 = vmatpush2.bf16.msra.mxu0 0
  %6404 = vmatprep.subr.bf16.mxu0 0
  %6405 = vmatpush2.bf16.msra.mxu0 0
  %6406 = vmatprep.subr.bf16.mxu0 0
  %6407 = vmatpush2.bf16.msra.mxu0 0
  %6408 = vmatprep.subr.bf16.mxu0 0
  %6409 = vmatpush2.bf16.msra.mxu0 0
  %6410 = vmatprep.mubr.bf16.mxu0 0
  %6411 = vmatmul.mubr.bf16.gmra.mxu0 %v6055
  %v6412 = vpop.f32.mrf.mxu0
  %v6413 = vadd.f32 %v5823, %v6412
  %v6414 = vpop.f32.mrf.mxu0
  %v6415 = vadd.f32 %v5825, %v6414
  %v6416 = vpop.f32.mrf.mxu0
  %v6417 = vadd.f32 %v5827, %v6416
  %v6418 = vpop.f32.mrf.mxu0
  %v6419 = vadd.f32 %v5829, %v6418
  %6420 = vmatprep.mubr.bf16.mxu0 0
  %6421 = vmatmul.mubr.bf16.gmra.mxu0 %v6058
  %v6422 = vpop.f32.mrf.mxu0
  %v6423 = vadd.f32 %v5833, %v6422
  %v6424 = vpop.f32.mrf.mxu0
  %v6425 = vadd.f32 %v5835, %v6424
  %v6426 = vpop.f32.mrf.mxu0
  %v6427 = vadd.f32 %v5837, %v6426
  %v6428 = vpop.f32.mrf.mxu0
  %v6429 = vadd.f32 %v5839, %v6428
  %6430 = vdwg.mxu0
  %6431 = vmatprep.subr.bf16.mxu0 0
  %6432 = vmatpush1.bf16.msra.mxu0 0
  %6433 = vmatprep.subr.bf16.mxu0 0
  %6434 = vmatpush1.bf16.msra.mxu0 0
  %6435 = vmatprep.subr.bf16.mxu0 0
  %6436 = vmatpush1.bf16.msra.mxu0 0
  %6437 = vmatprep.subr.bf16.mxu0 0
  %6438 = vmatpush1.bf16.msra.mxu0 0
  %6439 = vmatprep.subr.bf16.mxu0 0
  %6440 = vmatpush1.bf16.msra.mxu0 0
  %6441 = vmatprep.subr.bf16.mxu0 0
  %6442 = vmatpush1.bf16.msra.mxu0 0
  %6443 = vmatprep.subr.bf16.mxu0 %v6021
  %6444 = vmatpush1.bf16.msra.mxu0 %v6020
  %6445 = vmatprep.subr.bf16.mxu0 %v6005
  %6446 = vmatpush1.bf16.msra.mxu0 %v6004
  %6447 = vmatprep.subr.bf16.mxu0 0
  %6448 = vmatpush2.bf16.msra.mxu0 0
  %6449 = vmatprep.subr.bf16.mxu0 0
  %6450 = vmatpush2.bf16.msra.mxu0 0
  %6451 = vmatprep.subr.bf16.mxu0 0
  %6452 = vmatpush2.bf16.msra.mxu0 0
  %6453 = vmatprep.subr.bf16.mxu0 0
  %6454 = vmatpush2.bf16.msra.mxu0 0
  %6455 = vmatprep.subr.bf16.mxu0 0
  %6456 = vmatpush2.bf16.msra.mxu0 0
  %6457 = vmatprep.subr.bf16.mxu0 0
  %6458 = vmatpush2.bf16.msra.mxu0 0
  %6459 = vmatprep.subr.bf16.mxu0 0
  %6460 = vmatpush2.bf16.msra.mxu0 0
  %6461 = vmatprep.subr.bf16.mxu0 0
  %6462 = vmatpush2.bf16.msra.mxu0 0
  %6463 = vmatprep.mubr.bf16.mxu0 0
  %6464 = vmatmul.mubr.bf16.gmra.mxu0 %v6055
  %v6465 = vpop.f32.mrf.mxu0
  %v6466 = vadd.f32 %v5876, %v6465
  %v6467 = vpop.f32.mrf.mxu0
  %v6468 = vadd.f32 %v5878, %v6467
  %v6469 = vpop.f32.mrf.mxu0
  %v6470 = vadd.f32 %v5880, %v6469
  %v6471 = vpop.f32.mrf.mxu0
  %v6472 = vadd.f32 %v5882, %v6471
  %6473 = vmatprep.mubr.bf16.mxu0 0
  %6474 = vmatmul.mubr.bf16.gmra.mxu0 %v6058
  %v6475 = vpop.f32.mrf.mxu0
  %v6476 = vadd.f32 %v5886, %v6475
  %v6477 = vpop.f32.mrf.mxu0
  %v6478 = vadd.f32 %v5888, %v6477
  %v6479 = vpop.f32.mrf.mxu0
  %v6480 = vadd.f32 %v5890, %v6479
  %v6481 = vpop.f32.mrf.mxu0
  %v6482 = vadd.f32 %v5892, %v6481
  %6483 = vdwg.mxu0
  %v6484 = vld [vmem:[%s19] sm:$0xff]
  %v6485 = vld [vmem:[%s19 + $0x8] sm:$0xff]
  %v6488 = vlaneseq
  %v6489 = vshrl.u32 %v6488, 7
  %v6490 = vsub.s32 0, %v6489
  %v6491 = vrot.slane %v6484, %v6490
  %v6492 = vlaneseq
  %v6493 = vshrl.u32 %v6492, 7
  %v6494 = vsub.s32 1, %v6493
  %v6495 = vrot.slane %v6484, %v6494
  %v6496 = vlaneseq
  %v6497 = vshrl.u32 %v6496, 7
  %v6498 = vsub.s32 2, %v6497
  %v6499 = vrot.slane %v6484, %v6498
  %v6500 = vlaneseq
  %v6501 = vshrl.u32 %v6500, 7
  %v6502 = vsub.s32 3, %v6501
  %v6503 = vrot.slane %v6484, %v6502
  %v6504 = vlaneseq
  %v6505 = vshrl.u32 %v6504, 7
  %v6506 = vsub.s32 4, %v6505
  %v6507 = vrot.slane %v6484, %v6506
  %v6508 = vlaneseq
  %v6509 = vshrl.u32 %v6508, 7
  %v6510 = vsub.s32 5, %v6509
  %v6511 = vrot.slane %v6484, %v6510
  %v6512 = vlaneseq
  %v6513 = vshrl.u32 %v6512, 7
  %v6514 = vsub.s32 6, %v6513
  %v6515 = vrot.slane %v6484, %v6514
  %v6516 = vlaneseq
  %v6517 = vshrl.u32 %v6516, 7
  %v6518 = vsub.s32 7, %v6517
  %v6519 = vrot.slane %v6484, %v6518
  %v6520 = vlaneseq
  %v6521 = vshrl.u32 %v6520, 7
  %v6522 = vsub.s32 0, %v6521
  %v6523 = vrot.slane %v6485, %v6522
  %v6524 = vlaneseq
  %v6525 = vshrl.u32 %v6524, 7
  %v6526 = vsub.s32 1, %v6525
  %v6527 = vrot.slane %v6485, %v6526
  %v6528 = vlaneseq
  %v6529 = vshrl.u32 %v6528, 7
  %v6530 = vsub.s32 2, %v6529
  %v6531 = vrot.slane %v6485, %v6530
  %v6532 = vlaneseq
  %v6533 = vshrl.u32 %v6532, 7
  %v6534 = vsub.s32 3, %v6533
  %v6535 = vrot.slane %v6485, %v6534
  %v6536 = vlaneseq
  %v6537 = vshrl.u32 %v6536, 7
  %v6538 = vsub.s32 4, %v6537
  %v6539 = vrot.slane %v6485, %v6538
  %v6540 = vlaneseq
  %v6541 = vshrl.u32 %v6540, 7
  %v6542 = vsub.s32 5, %v6541
  %v6543 = vrot.slane %v6485, %v6542
  %v6544 = vlaneseq
  %v6545 = vshrl.u32 %v6544, 7
  %v6546 = vsub.s32 6, %v6545
  %v6547 = vrot.slane %v6485, %v6546
  %v6548 = vlaneseq
  %v6549 = vshrl.u32 %v6548, 7
  %v6550 = vsub.s32 7, %v6549
  %v6551 = vrot.slane %v6485, %v6550
  %v6568 = vadd.f32 %v6095, %v6491
  %v6569 = vadd.f32 %v6097, %v6495
  %v6570 = vadd.f32 %v6148, %v6499
  %v6571 = vadd.f32 %v6150, %v6503
  %v6572 = vadd.f32 %v6201, %v6507
  %v6573 = vadd.f32 %v6203, %v6511
  %v6574 = vadd.f32 %v6254, %v6515
  %v6575 = vadd.f32 %v6256, %v6519
  %v6576 = vadd.f32 %v6307, %v6523
  %v6577 = vadd.f32 %v6309, %v6527
  %v6578 = vadd.f32 %v6360, %v6531
  %v6579 = vadd.f32 %v6362, %v6535
  %v6580 = vadd.f32 %v6413, %v6539
  %v6581 = vadd.f32 %v6415, %v6543
  %v6582 = vadd.f32 %v6466, %v6547
  %v6583 = vadd.f32 %v6468, %v6551
  %v6584 = vadd.f32 %v6099, %v6491
  %v6585 = vadd.f32 %v6101, %v6495
  %v6586 = vadd.f32 %v6152, %v6499
  %v6587 = vadd.f32 %v6154, %v6503
  %v6588 = vadd.f32 %v6205, %v6507
  %v6589 = vadd.f32 %v6207, %v6511
  %v6590 = vadd.f32 %v6258, %v6515
  %v6591 = vadd.f32 %v6260, %v6519
  %v6592 = vadd.f32 %v6311, %v6523
  %v6593 = vadd.f32 %v6313, %v6527
  %v6594 = vadd.f32 %v6364, %v6531
  %v6595 = vadd.f32 %v6366, %v6535
  %v6596 = vadd.f32 %v6417, %v6539
  %v6597 = vadd.f32 %v6419, %v6543
  %v6598 = vadd.f32 %v6470, %v6547
  %v6599 = vadd.f32 %v6472, %v6551
  %v6600 = vadd.f32 %v6105, %v6491
  %v6601 = vadd.f32 %v6107, %v6495
  %v6602 = vadd.f32 %v6158, %v6499
  %v6603 = vadd.f32 %v6160, %v6503
  %v6604 = vadd.f32 %v6211, %v6507
  %v6605 = vadd.f32 %v6213, %v6511
  %v6606 = vadd.f32 %v6264, %v6515
  %v6607 = vadd.f32 %v6266, %v6519
  %v6608 = vadd.f32 %v6317, %v6523
  %v6609 = vadd.f32 %v6319, %v6527
  %v6610 = vadd.f32 %v6370, %v6531
  %v6611 = vadd.f32 %v6372, %v6535
  %v6612 = vadd.f32 %v6423, %v6539
  %v6613 = vadd.f32 %v6425, %v6543
  %v6614 = vadd.f32 %v6476, %v6547
  %v6615 = vadd.f32 %v6478, %v6551
  %v6616 = vadd.f32 %v6109, %v6491
  %v6617 = vadd.f32 %v6111, %v6495
  %v6618 = vadd.f32 %v6162, %v6499
  %v6619 = vadd.f32 %v6164, %v6503
  %v6620 = vadd.f32 %v6215, %v6507
  %v6621 = vadd.f32 %v6217, %v6511
  %v6622 = vadd.f32 %v6268, %v6515
  %v6623 = vadd.f32 %v6270, %v6519
  %v6624 = vadd.f32 %v6321, %v6523
  %v6625 = vadd.f32 %v6323, %v6527
  %v6626 = vadd.f32 %v6374, %v6531
  %v6627 = vadd.f32 %v6376, %v6535
  %v6628 = vadd.f32 %v6427, %v6539
  %v6629 = vadd.f32 %v6429, %v6543
  %v6630 = vadd.f32 %v6480, %v6547
  %v6631 = vadd.f32 %v6482, %v6551
  %v6632 = vmax.f32 %v6568, 0.0
  %v6633 = vmax.f32 %v6569, 0.0
  %v6634 = vmax.f32 %v6570, 0.0
  %v6635 = vmax.f32 %v6571, 0.0
  %v6636 = vmax.f32 %v6572, 0.0
  %v6637 = vmax.f32 %v6573, 0.0
  %v6638 = vmax.f32 %v6574, 0.0
  %v6639 = vmax.f32 %v6575, 0.0
  %v6640 = vmax.f32 %v6576, 0.0
  %v6641 = vmax.f32 %v6577, 0.0
  %v6642 = vmax.f32 %v6578, 0.0
  %v6643 = vmax.f32 %v6579, 0.0
  %v6644 = vmax.f32 %v6580, 0.0
  %v6645 = vmax.f32 %v6581, 0.0
  %v6646 = vmax.f32 %v6582, 0.0
  %v6647 = vmax.f32 %v6583, 0.0
  %v6648 = vmax.f32 %v6584, 0.0
  %v6649 = vmax.f32 %v6585, 0.0
  %v6650 = vmax.f32 %v6586, 0.0
  %v6651 = vmax.f32 %v6587, 0.0
  %v6652 = vmax.f32 %v6588, 0.0
  %v6653 = vmax.f32 %v6589, 0.0
  %v6654 = vmax.f32 %v6590, 0.0
  %v6655 = vmax.f32 %v6591, 0.0
  %v6656 = vmax.f32 %v6592, 0.0
  %v6657 = vmax.f32 %v6593, 0.0
  %v6658 = vmax.f32 %v6594, 0.0
  %v6659 = vmax.f32 %v6595, 0.0
  %v6660 = vmax.f32 %v6596, 0.0
  %v6661 = vmax.f32 %v6597, 0.0
  %v6662 = vmax.f32 %v6598, 0.0
  %v6663 = vmax.f32 %v6599, 0.0
  %v6664 = vmax.f32 %v6600, 0.0
  %v6665 = vmax.f32 %v6601, 0.0
  %v6666 = vmax.f32 %v6602, 0.0
  %v6667 = vmax.f32 %v6603, 0.0
  %v6668 = vmax.f32 %v6604, 0.0
  %v6669 = vmax.f32 %v6605, 0.0
  %v6670 = vmax.f32 %v6606, 0.0
  %v6671 = vmax.f32 %v6607, 0.0
  %v6672 = vmax.f32 %v6608, 0.0
  %v6673 = vmax.f32 %v6609, 0.0
  %v6674 = vmax.f32 %v6610, 0.0
  %v6675 = vmax.f32 %v6611, 0.0
  %v6676 = vmax.f32 %v6612, 0.0
  %v6677 = vmax.f32 %v6613, 0.0
  %v6678 = vmax.f32 %v6614, 0.0
  %v6679 = vmax.f32 %v6615, 0.0
  %v6680 = vmax.f32 %v6616, 0.0
  %v6681 = vmax.f32 %v6617, 0.0
  %v6682 = vmax.f32 %v6618, 0.0
  %v6683 = vmax.f32 %v6619, 0.0
  %v6684 = vmax.f32 %v6620, 0.0
  %v6685 = vmax.f32 %v6621, 0.0
  %v6686 = vmax.f32 %v6622, 0.0
  %v6687 = vmax.f32 %v6623, 0.0
  %v6688 = vmax.f32 %v6624, 0.0
  %v6689 = vmax.f32 %v6625, 0.0
  %v6690 = vmax.f32 %v6626, 0.0
  %v6691 = vmax.f32 %v6627, 0.0
  %v6692 = vmax.f32 %v6628, 0.0
  %v6693 = vmax.f32 %v6629, 0.0
  %v6694 = vmax.f32 %v6630, 0.0
  %v6695 = vmax.f32 %v6631, 0.0
  %v6696 = vpack.c.bf16 %v6648, %v6632
  %v6697 = vpack.c.bf16 %v6649, %v6633
  %v6698 = vpack.c.bf16 %v6650, %v6634
  %v6699 = vpack.c.bf16 %v6651, %v6635
  %v6700 = vpack.c.bf16 %v6652, %v6636
  %v6701 = vpack.c.bf16 %v6653, %v6637
  %v6702 = vpack.c.bf16 %v6654, %v6638
  %v6703 = vpack.c.bf16 %v6655, %v6639
  %v6704 = vpack.c.bf16 %v6656, %v6640
  %v6705 = vpack.c.bf16 %v6657, %v6641
  %v6706 = vpack.c.bf16 %v6658, %v6642
  %v6707 = vpack.c.bf16 %v6659, %v6643
  %v6708 = vpack.c.bf16 %v6660, %v6644
  %v6709 = vpack.c.bf16 %v6661, %v6645
  %v6710 = vpack.c.bf16 %v6662, %v6646
  %v6711 = vpack.c.bf16 %v6663, %v6647
  %v6712 = vpack.c.bf16 %v6680, %v6664
  %v6713 = vpack.c.bf16 %v6681, %v6665
  %v6714 = vpack.c.bf16 %v6682, %v6666
  %v6715 = vpack.c.bf16 %v6683, %v6667
  %v6716 = vpack.c.bf16 %v6684, %v6668
  %v6717 = vpack.c.bf16 %v6685, %v6669
  %v6718 = vpack.c.bf16 %v6686, %v6670
  %v6719 = vpack.c.bf16 %v6687, %v6671
  %v6720 = vpack.c.bf16 %v6688, %v6672
  %v6721 = vpack.c.bf16 %v6689, %v6673
  %v6722 = vpack.c.bf16 %v6690, %v6674
  %v6723 = vpack.c.bf16 %v6691, %v6675
  %v6724 = vpack.c.bf16 %v6692, %v6676
  %v6725 = vpack.c.bf16 %v6693, %v6677
  %v6726 = vpack.c.bf16 %v6694, %v6678
  %v6727 = vpack.c.bf16 %v6695, %v6679
  %v6728 = vld [vmem:[%s20] sm:$0xf]
  %v6729 = vld [vmem:[%s20 + $0x4] sm:$0xf]
  %v6730 = vld [vmem:[%s20 + $0x8] sm:$0xf]
  %v6731 = vld [vmem:[%s20 + $0xc] sm:$0xf]
  %v6732 = vld [vmem:[%s20 + $0x10] sm:$0xf]
  %v6733 = vld [vmem:[%s20 + $0x14] sm:$0xf]
  %v6734 = vld [vmem:[%s20 + $0x18] sm:$0xf]
  %v6735 = vld [vmem:[%s20 + $0x1c] sm:$0xf]
  %v6736 = vld [vmem:[%s20 + $0x20] sm:$0xf]
  %v6737 = vld [vmem:[%s20 + $0x24] sm:$0xf]
  %v6738 = vld [vmem:[%s20 + $0x28] sm:$0xf]
  %v6739 = vld [vmem:[%s20 + $0x2c] sm:$0xf]
  %v6740 = vld [vmem:[%s20 + $0x30] sm:$0xf]
  %v6741 = vld [vmem:[%s20 + $0x34] sm:$0xf]
  %v6742 = vld [vmem:[%s20 + $0x38] sm:$0xf]
  %v6743 = vld [vmem:[%s20 + $0x3c] sm:$0xf]
  %v6744 = vld [vmem:[%s20 + $0x40] sm:$0xf]
  %v6745 = vld [vmem:[%s20 + $0x44] sm:$0xf]
  %v6746 = vld [vmem:[%s20 + $0x48] sm:$0xf]
  %v6747 = vld [vmem:[%s20 + $0x4c] sm:$0xf]
  %v6748 = vld [vmem:[%s20 + $0x50] sm:$0xf]
  %v6749 = vld [vmem:[%s20 + $0x54] sm:$0xf]
  %v6750 = vld [vmem:[%s20 + $0x58] sm:$0xf]
  %v6751 = vld [vmem:[%s20 + $0x5c] sm:$0xf]
  %v6752 = vld [vmem:[%s20 + $0x60] sm:$0xf]
  %v6753 = vld [vmem:[%s20 + $0x64] sm:$0xf]
  %v6754 = vld [vmem:[%s20 + $0x68] sm:$0xf]
  %v6755 = vld [vmem:[%s20 + $0x6c] sm:$0xf]
  %v6756 = vld [vmem:[%s20 + $0x70] sm:$0xf]
  %v6757 = vld [vmem:[%s20 + $0x74] sm:$0xf]
  %v6758 = vld [vmem:[%s20 + $0x78] sm:$0xf]
  %v6759 = vld [vmem:[%s20 + $0x7c] sm:$0xf]
  %v6760 = vld [vmem:[%s20 + $0x80] sm:$0xf]
  %v6761 = vld [vmem:[%s20 + $0x84] sm:$0xf]
  %v6762 = vld [vmem:[%s20 + $0x88] sm:$0xf]
  %v6763 = vld [vmem:[%s20 + $0x8c] sm:$0xf]
  %v6764 = vld [vmem:[%s20 + $0x90] sm:$0xf]
  %v6765 = vld [vmem:[%s20 + $0x94] sm:$0xf]
  %v6766 = vld [vmem:[%s20 + $0x98] sm:$0xf]
  %v6767 = vld [vmem:[%s20 + $0x9c] sm:$0xf]
  %v6768 = vld [vmem:[%s20 + $0xa0] sm:$0xf]
  %v6769 = vld [vmem:[%s20 + $0xa4] sm:$0xf]
  %v6770 = vld [vmem:[%s20 + $0xa8] sm:$0xf]
  %v6771 = vld [vmem:[%s20 + $0xac] sm:$0xf]
  %v6772 = vld [vmem:[%s20 + $0xb0] sm:$0xf]
  %v6773 = vld [vmem:[%s20 + $0xb4] sm:$0xf]
  %v6774 = vld [vmem:[%s20 + $0xb8] sm:$0xf]
  %v6775 = vld [vmem:[%s20 + $0xbc] sm:$0xf]
  %v6776 = vld [vmem:[%s20 + $0xc0] sm:$0xf]
  %v6777 = vld [vmem:[%s20 + $0xc4] sm:$0xf]
  %v6778 = vld [vmem:[%s20 + $0xc8] sm:$0xf]
  %v6779 = vld [vmem:[%s20 + $0xcc] sm:$0xf]
  %v6780 = vld [vmem:[%s20 + $0xd0] sm:$0xf]
  %v6781 = vld [vmem:[%s20 + $0xd4] sm:$0xf]
  %v6782 = vld [vmem:[%s20 + $0xd8] sm:$0xf]
  %v6783 = vld [vmem:[%s20 + $0xdc] sm:$0xf]
  %v6784 = vld [vmem:[%s20 + $0xe0] sm:$0xf]
  %v6785 = vld [vmem:[%s20 + $0xe4] sm:$0xf]
  %v6786 = vld [vmem:[%s20 + $0xe8] sm:$0xf]
  %v6787 = vld [vmem:[%s20 + $0xec] sm:$0xf]
  %v6788 = vld [vmem:[%s20 + $0xf0] sm:$0xf]
  %v6789 = vld [vmem:[%s20 + $0xf4] sm:$0xf]
  %v6790 = vld [vmem:[%s20 + $0xf8] sm:$0xf]
  %v6791 = vld [vmem:[%s20 + $0xfc] sm:$0xf]
  %v6792 = vld [vmem:[%s20 + $0x100] sm:$0xf]
  %v6793 = vld [vmem:[%s20 + $0x104] sm:$0xf]
  %v6794 = vld [vmem:[%s20 + $0x108] sm:$0xf]
  %v6795 = vld [vmem:[%s20 + $0x10c] sm:$0xf]
  %v6796 = vld [vmem:[%s20 + $0x110] sm:$0xf]
  %v6797 = vld [vmem:[%s20 + $0x114] sm:$0xf]
  %v6798 = vld [vmem:[%s20 + $0x118] sm:$0xf]
  %v6799 = vld [vmem:[%s20 + $0x11c] sm:$0xf]
  %v6800 = vld [vmem:[%s20 + $0x120] sm:$0xf]
  %v6801 = vld [vmem:[%s20 + $0x124] sm:$0xf]
  %v6802 = vld [vmem:[%s20 + $0x128] sm:$0xf]
  %v6803 = vld [vmem:[%s20 + $0x12c] sm:$0xf]
  %v6804 = vld [vmem:[%s20 + $0x130] sm:$0xf]
  %v6805 = vld [vmem:[%s20 + $0x134] sm:$0xf]
  %v6806 = vld [vmem:[%s20 + $0x138] sm:$0xf]
  %v6807 = vld [vmem:[%s20 + $0x13c] sm:$0xf]
  %v6808 = vld [vmem:[%s20 + $0x140] sm:$0xf]
  %v6809 = vld [vmem:[%s20 + $0x144] sm:$0xf]
  %v6810 = vld [vmem:[%s20 + $0x148] sm:$0xf]
  %v6811 = vld [vmem:[%s20 + $0x14c] sm:$0xf]
  %v6812 = vld [vmem:[%s20 + $0x150] sm:$0xf]
  %v6813 = vld [vmem:[%s20 + $0x154] sm:$0xf]
  %v6814 = vld [vmem:[%s20 + $0x158] sm:$0xf]
  %v6815 = vld [vmem:[%s20 + $0x15c] sm:$0xf]
  %v6816 = vld [vmem:[%s20 + $0x160] sm:$0xf]
  %v6817 = vld [vmem:[%s20 + $0x164] sm:$0xf]
  %v6818 = vld [vmem:[%s20 + $0x168] sm:$0xf]
  %v6819 = vld [vmem:[%s20 + $0x16c] sm:$0xf]
  %v6820 = vld [vmem:[%s20 + $0x170] sm:$0xf]
  %v6821 = vld [vmem:[%s20 + $0x174] sm:$0xf]
  %v6822 = vld [vmem:[%s20 + $0x178] sm:$0xf]
  %v6823 = vld [vmem:[%s20 + $0x17c] sm:$0xf]
  %v6824 = vld [vmem:[%s20 + $0x180] sm:$0xf]
  %v6825 = vld [vmem:[%s20 + $0x184] sm:$0xf]
  %v6826 = vld [vmem:[%s20 + $0x188] sm:$0xf]
  %v6827 = vld [vmem:[%s20 + $0x18c] sm:$0xf]
  %v6828 = vld [vmem:[%s20 + $0x190] sm:$0xf]
  %v6829 = vld [vmem:[%s20 + $0x194] sm:$0xf]
  %v6830 = vld [vmem:[%s20 + $0x198] sm:$0xf]
  %v6831 = vld [vmem:[%s20 + $0x19c] sm:$0xf]
  %v6832 = vld [vmem:[%s20 + $0x1a0] sm:$0xf]
  %v6833 = vld [vmem:[%s20 + $0x1a4] sm:$0xf]
  %v6834 = vld [vmem:[%s20 + $0x1a8] sm:$0xf]
  %v6835 = vld [vmem:[%s20 + $0x1ac] sm:$0xf]
  %v6836 = vld [vmem:[%s20 + $0x1b0] sm:$0xf]
  %v6837 = vld [vmem:[%s20 + $0x1b4] sm:$0xf]
  %v6838 = vld [vmem:[%s20 + $0x1b8] sm:$0xf]
  %v6839 = vld [vmem:[%s20 + $0x1bc] sm:$0xf]
  %v6840 = vld [vmem:[%s20 + $0x1c0] sm:$0xf]
  %v6841 = vld [vmem:[%s20 + $0x1c4] sm:$0xf]
  %v6842 = vld [vmem:[%s20 + $0x1c8] sm:$0xf]
  %v6843 = vld [vmem:[%s20 + $0x1cc] sm:$0xf]
  %v6844 = vld [vmem:[%s20 + $0x1d0] sm:$0xf]
  %v6845 = vld [vmem:[%s20 + $0x1d4] sm:$0xf]
  %v6846 = vld [vmem:[%s20 + $0x1d8] sm:$0xf]
  %v6847 = vld [vmem:[%s20 + $0x1dc] sm:$0xf]
  %v6848 = vld [vmem:[%s20 + $0x1e0] sm:$0xf]
  %v6849 = vld [vmem:[%s20 + $0x1e4] sm:$0xf]
  %v6850 = vld [vmem:[%s20 + $0x1e8] sm:$0xf]
  %v6851 = vld [vmem:[%s20 + $0x1ec] sm:$0xf]
  %v6852 = vld [vmem:[%s20 + $0x1f0] sm:$0xf]
  %v6853 = vld [vmem:[%s20 + $0x1f4] sm:$0xf]
  %v6854 = vld [vmem:[%s20 + $0x1f8] sm:$0xf]
  %v6855 = vld [vmem:[%s20 + $0x1fc] sm:$0xf]
  %v6856 = vld [vmem:[%s20 + $0x200] sm:$0xf]
  %v6857 = vld [vmem:[%s20 + $0x204] sm:$0xf]
  %v6858 = vld [vmem:[%s20 + $0x208] sm:$0xf]
  %v6859 = vld [vmem:[%s20 + $0x20c] sm:$0xf]
  %v6860 = vld [vmem:[%s20 + $0x210] sm:$0xf]
  %v6861 = vld [vmem:[%s20 + $0x214] sm:$0xf]
  %v6862 = vld [vmem:[%s20 + $0x218] sm:$0xf]
  %v6863 = vld [vmem:[%s20 + $0x21c] sm:$0xf]
  %v6864 = vld [vmem:[%s20 + $0x220] sm:$0xf]
  %v6865 = vld [vmem:[%s20 + $0x224] sm:$0xf]
  %v6866 = vld [vmem:[%s20 + $0x228] sm:$0xf]
  %v6867 = vld [vmem:[%s20 + $0x22c] sm:$0xf]
  %v6868 = vld [vmem:[%s20 + $0x230] sm:$0xf]
  %v6869 = vld [vmem:[%s20 + $0x234] sm:$0xf]
  %v6870 = vld [vmem:[%s20 + $0x238] sm:$0xf]
  %v6871 = vld [vmem:[%s20 + $0x23c] sm:$0xf]
  %v6872 = vld [vmem:[%s20 + $0x240] sm:$0xf]
  %v6873 = vld [vmem:[%s20 + $0x244] sm:$0xf]
  %v6874 = vld [vmem:[%s20 + $0x248] sm:$0xf]
  %v6875 = vld [vmem:[%s20 + $0x24c] sm:$0xf]
  %v6876 = vld [vmem:[%s20 + $0x250] sm:$0xf]
  %v6877 = vld [vmem:[%s20 + $0x254] sm:$0xf]
  %v6878 = vld [vmem:[%s20 + $0x258] sm:$0xf]
  %v6879 = vld [vmem:[%s20 + $0x25c] sm:$0xf]
  %v6880 = vld [vmem:[%s20 + $0x260] sm:$0xf]
  %v6881 = vld [vmem:[%s20 + $0x264] sm:$0xf]
  %v6882 = vld [vmem:[%s20 + $0x268] sm:$0xf]
  %v6883 = vld [vmem:[%s20 + $0x26c] sm:$0xf]
  %v6884 = vld [vmem:[%s20 + $0x270] sm:$0xf]
  %v6885 = vld [vmem:[%s20 + $0x274] sm:$0xf]
  %v6886 = vld [vmem:[%s20 + $0x278] sm:$0xf]
  %v6887 = vld [vmem:[%s20 + $0x27c] sm:$0xf]
  %v6888 = vld [vmem:[%s20 + $0x280] sm:$0xf]
  %v6889 = vld [vmem:[%s20 + $0x284] sm:$0xf]
  %v6890 = vld [vmem:[%s20 + $0x288] sm:$0xf]
  %v6891 = vld [vmem:[%s20 + $0x28c] sm:$0xf]
  %v6892 = vld [vmem:[%s20 + $0x290] sm:$0xf]
  %v6893 = vld [vmem:[%s20 + $0x294] sm:$0xf]
  %v6894 = vld [vmem:[%s20 + $0x298] sm:$0xf]
  %v6895 = vld [vmem:[%s20 + $0x29c] sm:$0xf]
  %v6896 = vld [vmem:[%s20 + $0x2a0] sm:$0xf]
  %v6897 = vld [vmem:[%s20 + $0x2a4] sm:$0xf]
  %v6898 = vld [vmem:[%s20 + $0x2a8] sm:$0xf]
  %v6899 = vld [vmem:[%s20 + $0x2ac] sm:$0xf]
  %v6900 = vld [vmem:[%s20 + $0x2b0] sm:$0xf]
  %v6901 = vld [vmem:[%s20 + $0x2b4] sm:$0xf]
  %v6902 = vld [vmem:[%s20 + $0x2b8] sm:$0xf]
  %v6903 = vld [vmem:[%s20 + $0x2bc] sm:$0xf]
  %v6904 = vld [vmem:[%s20 + $0x2c0] sm:$0xf]
  %v6905 = vld [vmem:[%s20 + $0x2c4] sm:$0xf]
  %v6906 = vld [vmem:[%s20 + $0x2c8] sm:$0xf]
  %v6907 = vld [vmem:[%s20 + $0x2cc] sm:$0xf]
  %v6908 = vld [vmem:[%s20 + $0x2d0] sm:$0xf]
  %v6909 = vld [vmem:[%s20 + $0x2d4] sm:$0xf]
  %v6910 = vld [vmem:[%s20 + $0x2d8] sm:$0xf]
  %v6911 = vld [vmem:[%s20 + $0x2dc] sm:$0xf]
  %v6912 = vld [vmem:[%s20 + $0x2e0] sm:$0xf]
  %v6913 = vld [vmem:[%s20 + $0x2e4] sm:$0xf]
  %v6914 = vld [vmem:[%s20 + $0x2e8] sm:$0xf]
  %v6915 = vld [vmem:[%s20 + $0x2ec] sm:$0xf]
  %v6916 = vld [vmem:[%s20 + $0x2f0] sm:$0xf]
  %v6917 = vld [vmem:[%s20 + $0x2f4] sm:$0xf]
  %v6918 = vld [vmem:[%s20 + $0x2f8] sm:$0xf]
  %v6919 = vld [vmem:[%s20 + $0x2fc] sm:$0xf]
  %v6920 = vld [vmem:[%s20 + $0x300] sm:$0xf]
  %v6921 = vld [vmem:[%s20 + $0x304] sm:$0xf]
  %v6922 = vld [vmem:[%s20 + $0x308] sm:$0xf]
  %v6923 = vld [vmem:[%s20 + $0x30c] sm:$0xf]
  %v6924 = vld [vmem:[%s20 + $0x310] sm:$0xf]
  %v6925 = vld [vmem:[%s20 + $0x314] sm:$0xf]
  %v6926 = vld [vmem:[%s20 + $0x318] sm:$0xf]
  %v6927 = vld [vmem:[%s20 + $0x31c] sm:$0xf]
  %v6928 = vld [vmem:[%s20 + $0x320] sm:$0xf]
  %v6929 = vld [vmem:[%s20 + $0x324] sm:$0xf]
  %v6930 = vld [vmem:[%s20 + $0x328] sm:$0xf]
  %v6931 = vld [vmem:[%s20 + $0x32c] sm:$0xf]
  %v6932 = vld [vmem:[%s20 + $0x330] sm:$0xf]
  %v6933 = vld [vmem:[%s20 + $0x334] sm:$0xf]
  %v6934 = vld [vmem:[%s20 + $0x338] sm:$0xf]
  %v6935 = vld [vmem:[%s20 + $0x33c] sm:$0xf]
  %v6936 = vld [vmem:[%s20 + $0x340] sm:$0xf]
  %v6937 = vld [vmem:[%s20 + $0x344] sm:$0xf]
  %v6938 = vld [vmem:[%s20 + $0x348] sm:$0xf]
  %v6939 = vld [vmem:[%s20 + $0x34c] sm:$0xf]
  %v6940 = vld [vmem:[%s20 + $0x350] sm:$0xf]
  %v6941 = vld [vmem:[%s20 + $0x354] sm:$0xf]
  %v6942 = vld [vmem:[%s20 + $0x358] sm:$0xf]
  %v6943 = vld [vmem:[%s20 + $0x35c] sm:$0xf]
  %v6944 = vld [vmem:[%s20 + $0x360] sm:$0xf]
  %v6945 = vld [vmem:[%s20 + $0x364] sm:$0xf]
  %v6946 = vld [vmem:[%s20 + $0x368] sm:$0xf]
  %v6947 = vld [vmem:[%s20 + $0x36c] sm:$0xf]
  %v6948 = vld [vmem:[%s20 + $0x370] sm:$0xf]
  %v6949 = vld [vmem:[%s20 + $0x374] sm:$0xf]
  %v6950 = vld [vmem:[%s20 + $0x378] sm:$0xf]
  %v6951 = vld [vmem:[%s20 + $0x37c] sm:$0xf]
  %v6952 = vld [vmem:[%s20 + $0x380] sm:$0xf]
  %v6953 = vld [vmem:[%s20 + $0x384] sm:$0xf]
  %v6954 = vld [vmem:[%s20 + $0x388] sm:$0xf]
  %v6955 = vld [vmem:[%s20 + $0x38c] sm:$0xf]
  %v6956 = vld [vmem:[%s20 + $0x390] sm:$0xf]
  %v6957 = vld [vmem:[%s20 + $0x394] sm:$0xf]
  %v6958 = vld [vmem:[%s20 + $0x398] sm:$0xf]
  %v6959 = vld [vmem:[%s20 + $0x39c] sm:$0xf]
  %v6960 = vld [vmem:[%s20 + $0x3a0] sm:$0xf]
  %v6961 = vld [vmem:[%s20 + $0x3a4] sm:$0xf]
  %v6962 = vld [vmem:[%s20 + $0x3a8] sm:$0xf]
  %v6963 = vld [vmem:[%s20 + $0x3ac] sm:$0xf]
  %v6964 = vld [vmem:[%s20 + $0x3b0] sm:$0xf]
  %v6965 = vld [vmem:[%s20 + $0x3b4] sm:$0xf]
  %v6966 = vld [vmem:[%s20 + $0x3b8] sm:$0xf]
  %v6967 = vld [vmem:[%s20 + $0x3bc] sm:$0xf]
  %v6968 = vld [vmem:[%s20 + $0x3c0] sm:$0xf]
  %v6969 = vld [vmem:[%s20 + $0x3c4] sm:$0xf]
  %v6970 = vld [vmem:[%s20 + $0x3c8] sm:$0xf]
  %v6971 = vld [vmem:[%s20 + $0x3cc] sm:$0xf]
  %v6972 = vld [vmem:[%s20 + $0x3d0] sm:$0xf]
  %v6973 = vld [vmem:[%s20 + $0x3d4] sm:$0xf]
  %v6974 = vld [vmem:[%s20 + $0x3d8] sm:$0xf]
  %v6975 = vld [vmem:[%s20 + $0x3dc] sm:$0xf]
  %v6976 = vld [vmem:[%s20 + $0x3e0] sm:$0xf]
  %v6977 = vld [vmem:[%s20 + $0x3e4] sm:$0xf]
  %v6978 = vld [vmem:[%s20 + $0x3e8] sm:$0xf]
  %v6979 = vld [vmem:[%s20 + $0x3ec] sm:$0xf]
  %v6980 = vld [vmem:[%s20 + $0x3f0] sm:$0xf]
  %v6981 = vld [vmem:[%s20 + $0x3f4] sm:$0xf]
  %v6982 = vld [vmem:[%s20 + $0x3f8] sm:$0xf]
  %v6983 = vld [vmem:[%s20 + $0x3fc] sm:$0xf]
  %v6984 = vld [vmem:[%s21] sm:$0x1]
  %v6986 = vlaneseq
  %v6987 = vshrl.u32 %v6986, 7
  %v6988 = vsub.s32 0, %v6987
  %v6989 = vrot.slane %v6984, %v6988
  %v7247 = vunpack.c.l.b16 %v6728
  %v7248 = vunpack.c.l.b16 %v6729
  %v7249 = vunpack.c.l.b16 %v6730
  %v7250 = vunpack.c.l.b16 %v6731
  %v7251 = vunpack.c.l.b16 %v6732
  %v7252 = vunpack.c.l.b16 %v6733
  %v7253 = vunpack.c.l.b16 %v6734
  %v7254 = vunpack.c.l.b16 %v6735
  %v7255 = vunpack.c.l.b16 %v6736
  %v7256 = vunpack.c.l.b16 %v6737
  %v7257 = vunpack.c.l.b16 %v6738
  %v7258 = vunpack.c.l.b16 %v6739
  %v7259 = vunpack.c.l.b16 %v6740
  %v7260 = vunpack.c.l.b16 %v6741
  %v7261 = vunpack.c.l.b16 %v6742
  %v7262 = vunpack.c.l.b16 %v6743
  %v7263 = vunpack.c.l.b16 %v6744
  %v7264 = vunpack.c.l.b16 %v6745
  %v7265 = vunpack.c.l.b16 %v6746
  %v7266 = vunpack.c.l.b16 %v6747
  %v7267 = vunpack.c.l.b16 %v6748
  %v7268 = vunpack.c.l.b16 %v6749
  %v7269 = vunpack.c.l.b16 %v6750
  %v7270 = vunpack.c.l.b16 %v6751
  %v7271 = vunpack.c.l.b16 %v6752
  %v7272 = vunpack.c.l.b16 %v6753
  %v7273 = vunpack.c.l.b16 %v6754
  %v7274 = vunpack.c.l.b16 %v6755
  %v7275 = vunpack.c.l.b16 %v6756
  %v7276 = vunpack.c.l.b16 %v6757
  %v7277 = vunpack.c.l.b16 %v6758
  %v7278 = vunpack.c.l.b16 %v6759
  %v7279 = vunpack.c.l.b16 %v6760
  %v7280 = vunpack.c.l.b16 %v6761
  %v7281 = vunpack.c.l.b16 %v6762
  %v7282 = vunpack.c.l.b16 %v6763
  %v7283 = vunpack.c.l.b16 %v6764
  %v7284 = vunpack.c.l.b16 %v6765
  %v7285 = vunpack.c.l.b16 %v6766
  %v7286 = vunpack.c.l.b16 %v6767
  %v7287 = vunpack.c.l.b16 %v6768
  %v7288 = vunpack.c.l.b16 %v6769
  %v7289 = vunpack.c.l.b16 %v6770
  %v7290 = vunpack.c.l.b16 %v6771
  %v7291 = vunpack.c.l.b16 %v6772
  %v7292 = vunpack.c.l.b16 %v6773
  %v7293 = vunpack.c.l.b16 %v6774
  %v7294 = vunpack.c.l.b16 %v6775
  %v7295 = vunpack.c.l.b16 %v6776
  %v7296 = vunpack.c.l.b16 %v6777
  %v7297 = vunpack.c.l.b16 %v6778
  %v7298 = vunpack.c.l.b16 %v6779
  %v7299 = vunpack.c.l.b16 %v6780
  %v7300 = vunpack.c.l.b16 %v6781
  %v7301 = vunpack.c.l.b16 %v6782
  %v7302 = vunpack.c.l.b16 %v6783
  %v7303 = vunpack.c.l.b16 %v6784
  %v7304 = vunpack.c.l.b16 %v6785
  %v7305 = vunpack.c.l.b16 %v6786
  %v7306 = vunpack.c.l.b16 %v6787
  %v7307 = vunpack.c.l.b16 %v6788
  %v7308 = vunpack.c.l.b16 %v6789
  %v7309 = vunpack.c.l.b16 %v6790
  %v7310 = vunpack.c.l.b16 %v6791
  %v7311 = vunpack.c.l.b16 %v6792
  %v7312 = vunpack.c.l.b16 %v6793
  %v7313 = vunpack.c.l.b16 %v6794
  %v7314 = vunpack.c.l.b16 %v6795
  %v7315 = vunpack.c.l.b16 %v6796
  %v7316 = vunpack.c.l.b16 %v6797
  %v7317 = vunpack.c.l.b16 %v6798
  %v7318 = vunpack.c.l.b16 %v6799
  %v7319 = vunpack.c.l.b16 %v6800
  %v7320 = vunpack.c.l.b16 %v6801
  %v7321 = vunpack.c.l.b16 %v6802
  %v7322 = vunpack.c.l.b16 %v6803
  %v7323 = vunpack.c.l.b16 %v6804
  %v7324 = vunpack.c.l.b16 %v6805
  %v7325 = vunpack.c.l.b16 %v6806
  %v7326 = vunpack.c.l.b16 %v6807
  %v7327 = vunpack.c.l.b16 %v6808
  %v7328 = vunpack.c.l.b16 %v6809
  %v7329 = vunpack.c.l.b16 %v6810
  %v7330 = vunpack.c.l.b16 %v6811
  %v7331 = vunpack.c.l.b16 %v6812
  %v7332 = vunpack.c.l.b16 %v6813
  %v7333 = vunpack.c.l.b16 %v6814
  %v7334 = vunpack.c.l.b16 %v6815
  %v7335 = vunpack.c.l.b16 %v6816
  %v7336 = vunpack.c.l.b16 %v6817
  %v7337 = vunpack.c.l.b16 %v6818
  %v7338 = vunpack.c.l.b16 %v6819
  %v7339 = vunpack.c.l.b16 %v6820
  %v7340 = vunpack.c.l.b16 %v6821
  %v7341 = vunpack.c.l.b16 %v6822
  %v7342 = vunpack.c.l.b16 %v6823
  %v7343 = vunpack.c.l.b16 %v6824
  %v7344 = vunpack.c.l.b16 %v6825
  %v7345 = vunpack.c.l.b16 %v6826
  %v7346 = vunpack.c.l.b16 %v6827
  %v7347 = vunpack.c.l.b16 %v6828
  %v7348 = vunpack.c.l.b16 %v6829
  %v7349 = vunpack.c.l.b16 %v6830
  %v7350 = vunpack.c.l.b16 %v6831
  %v7351 = vunpack.c.l.b16 %v6832
  %v7352 = vunpack.c.l.b16 %v6833
  %v7353 = vunpack.c.l.b16 %v6834
  %v7354 = vunpack.c.l.b16 %v6835
  %v7355 = vunpack.c.l.b16 %v6836
  %v7356 = vunpack.c.l.b16 %v6837
  %v7357 = vunpack.c.l.b16 %v6838
  %v7358 = vunpack.c.l.b16 %v6839
  %v7359 = vunpack.c.l.b16 %v6840
  %v7360 = vunpack.c.l.b16 %v6841
  %v7361 = vunpack.c.l.b16 %v6842
  %v7362 = vunpack.c.l.b16 %v6843
  %v7363 = vunpack.c.l.b16 %v6844
  %v7364 = vunpack.c.l.b16 %v6845
  %v7365 = vunpack.c.l.b16 %v6846
  %v7366 = vunpack.c.l.b16 %v6847
  %v7367 = vunpack.c.l.b16 %v6848
  %v7368 = vunpack.c.l.b16 %v6849
  %v7369 = vunpack.c.l.b16 %v6850
  %v7370 = vunpack.c.l.b16 %v6851
  %v7371 = vunpack.c.l.b16 %v6852
  %v7372 = vunpack.c.l.b16 %v6853
  %v7373 = vunpack.c.l.b16 %v6854
  %v7374 = vunpack.c.l.b16 %v6855
  %v7375 = vunpack.c.l.b16 %v6856
  %v7376 = vunpack.c.l.b16 %v6857
  %v7377 = vunpack.c.l.b16 %v6858
  %v7378 = vunpack.c.l.b16 %v6859
  %v7379 = vunpack.c.l.b16 %v6860
  %v7380 = vunpack.c.l.b16 %v6861
  %v7381 = vunpack.c.l.b16 %v6862
  %v7382 = vunpack.c.l.b16 %v6863
  %v7383 = vunpack.c.l.b16 %v6864
  %v7384 = vunpack.c.l.b16 %v6865
  %v7385 = vunpack.c.l.b16 %v6866
  %v7386 = vunpack.c.l.b16 %v6867
  %v7387 = vunpack.c.l.b16 %v6868
  %v7388 = vunpack.c.l.b16 %v6869
  %v7389 = vunpack.c.l.b16 %v6870
  %v7390 = vunpack.c.l.b16 %v6871
  %v7391 = vunpack.c.l.b16 %v6872
  %v7392 = vunpack.c.l.b16 %v6873
  %v7393 = vunpack.c.l.b16 %v6874
  %v7394 = vunpack.c.l.b16 %v6875
  %v7395 = vunpack.c.l.b16 %v6876
  %v7396 = vunpack.c.l.b16 %v6877
  %v7397 = vunpack.c.l.b16 %v6878
  %v7398 = vunpack.c.l.b16 %v6879
  %v7399 = vunpack.c.l.b16 %v6880
  %v7400 = vunpack.c.l.b16 %v6881
  %v7401 = vunpack.c.l.b16 %v6882
  %v7402 = vunpack.c.l.b16 %v6883
  %v7403 = vunpack.c.l.b16 %v6884
  %v7404 = vunpack.c.l.b16 %v6885
  %v7405 = vunpack.c.l.b16 %v6886
  %v7406 = vunpack.c.l.b16 %v6887
  %v7407 = vunpack.c.l.b16 %v6888
  %v7408 = vunpack.c.l.b16 %v6889
  %v7409 = vunpack.c.l.b16 %v6890
  %v7410 = vunpack.c.l.b16 %v6891
  %v7411 = vunpack.c.l.b16 %v6892
  %v7412 = vunpack.c.l.b16 %v6893
  %v7413 = vunpack.c.l.b16 %v6894
  %v7414 = vunpack.c.l.b16 %v6895
  %v7415 = vunpack.c.l.b16 %v6896
  %v7416 = vunpack.c.l.b16 %v6897
  %v7417 = vunpack.c.l.b16 %v6898
  %v7418 = vunpack.c.l.b16 %v6899
  %v7419 = vunpack.c.l.b16 %v6900
  %v7420 = vunpack.c.l.b16 %v6901
  %v7421 = vunpack.c.l.b16 %v6902
  %v7422 = vunpack.c.l.b16 %v6903
  %v7423 = vunpack.c.l.b16 %v6904
  %v7424 = vunpack.c.l.b16 %v6905
  %v7425 = vunpack.c.l.b16 %v6906
  %v7426 = vunpack.c.l.b16 %v6907
  %v7427 = vunpack.c.l.b16 %v6908
  %v7428 = vunpack.c.l.b16 %v6909
  %v7429 = vunpack.c.l.b16 %v6910
  %v7430 = vunpack.c.l.b16 %v6911
  %v7431 = vunpack.c.l.b16 %v6912
  %v7432 = vunpack.c.l.b16 %v6913
  %v7433 = vunpack.c.l.b16 %v6914
  %v7434 = vunpack.c.l.b16 %v6915
  %v7435 = vunpack.c.l.b16 %v6916
  %v7436 = vunpack.c.l.b16 %v6917
  %v7437 = vunpack.c.l.b16 %v6918
  %v7438 = vunpack.c.l.b16 %v6919
  %v7439 = vunpack.c.l.b16 %v6920
  %v7440 = vunpack.c.l.b16 %v6921
  %v7441 = vunpack.c.l.b16 %v6922
  %v7442 = vunpack.c.l.b16 %v6923
  %v7443 = vunpack.c.l.b16 %v6924
  %v7444 = vunpack.c.l.b16 %v6925
  %v7445 = vunpack.c.l.b16 %v6926
  %v7446 = vunpack.c.l.b16 %v6927
  %v7447 = vunpack.c.l.b16 %v6928
  %v7448 = vunpack.c.l.b16 %v6929
  %v7449 = vunpack.c.l.b16 %v6930
  %v7450 = vunpack.c.l.b16 %v6931
  %v7451 = vunpack.c.l.b16 %v6932
  %v7452 = vunpack.c.l.b16 %v6933
  %v7453 = vunpack.c.l.b16 %v6934
  %v7454 = vunpack.c.l.b16 %v6935
  %v7455 = vunpack.c.l.b16 %v6936
  %v7456 = vunpack.c.l.b16 %v6937
  %v7457 = vunpack.c.l.b16 %v6938
  %v7458 = vunpack.c.l.b16 %v6939
  %v7459 = vunpack.c.l.b16 %v6940
  %v7460 = vunpack.c.l.b16 %v6941
  %v7461 = vunpack.c.l.b16 %v6942
  %v7462 = vunpack.c.l.b16 %v6943
  %v7463 = vunpack.c.l.b16 %v6944
  %v7464 = vunpack.c.l.b16 %v6945
  %v7465 = vunpack.c.l.b16 %v6946
  %v7466 = vunpack.c.l.b16 %v6947
  %v7467 = vunpack.c.l.b16 %v6948
  %v7468 = vunpack.c.l.b16 %v6949
  %v7469 = vunpack.c.l.b16 %v6950
  %v7470 = vunpack.c.l.b16 %v6951
  %v7471 = vunpack.c.l.b16 %v6952
  %v7472 = vunpack.c.l.b16 %v6953
  %v7473 = vunpack.c.l.b16 %v6954
  %v7474 = vunpack.c.l.b16 %v6955
  %v7475 = vunpack.c.l.b16 %v6956
  %v7476 = vunpack.c.l.b16 %v6957
  %v7477 = vunpack.c.l.b16 %v6958
  %v7478 = vunpack.c.l.b16 %v6959
  %v7479 = vunpack.c.l.b16 %v6960
  %v7480 = vunpack.c.l.b16 %v6961
  %v7481 = vunpack.c.l.b16 %v6962
  %v7482 = vunpack.c.l.b16 %v6963
  %v7483 = vunpack.c.l.b16 %v6964
  %v7484 = vunpack.c.l.b16 %v6965
  %v7485 = vunpack.c.l.b16 %v6966
  %v7486 = vunpack.c.l.b16 %v6967
  %v7487 = vunpack.c.l.b16 %v6968
  %v7488 = vunpack.c.l.b16 %v6969
  %v7489 = vunpack.c.l.b16 %v6970
  %v7490 = vunpack.c.l.b16 %v6971
  %v7491 = vunpack.c.l.b16 %v6972
  %v7492 = vunpack.c.l.b16 %v6973
  %v7493 = vunpack.c.l.b16 %v6974
  %v7494 = vunpack.c.l.b16 %v6975
  %v7495 = vunpack.c.l.b16 %v6976
  %v7496 = vunpack.c.l.b16 %v6977
  %v7497 = vunpack.c.l.b16 %v6978
  %v7498 = vunpack.c.l.b16 %v6979
  %v7499 = vunpack.c.l.b16 %v6980
  %v7500 = vunpack.c.l.b16 %v6981
  %v7501 = vunpack.c.l.b16 %v6982
  %v7502 = vunpack.c.l.b16 %v6983
  %v7503 = vpack.c.b16 %v7248, %v7247
  %v7504 = vpack.c.b16 %v7250, %v7249
  %v7505 = vpack.c.b16 %v7252, %v7251
  %v7506 = vpack.c.b16 %v7254, %v7253
  %v7507 = vpack.c.b16 %v7256, %v7255
  %v7508 = vpack.c.b16 %v7258, %v7257
  %v7509 = vpack.c.b16 %v7260, %v7259
  %v7510 = vpack.c.b16 %v7262, %v7261
  %v7511 = vpack.c.b16 %v7264, %v7263
  %v7512 = vpack.c.b16 %v7266, %v7265
  %v7513 = vpack.c.b16 %v7268, %v7267
  %v7514 = vpack.c.b16 %v7270, %v7269
  %v7515 = vpack.c.b16 %v7272, %v7271
  %v7516 = vpack.c.b16 %v7274, %v7273
  %v7517 = vpack.c.b16 %v7276, %v7275
  %v7518 = vpack.c.b16 %v7278, %v7277
  %v7519 = vpack.c.b16 %v7280, %v7279
  %v7520 = vpack.c.b16 %v7282, %v7281
  %v7521 = vpack.c.b16 %v7284, %v7283
  %v7522 = vpack.c.b16 %v7286, %v7285
  %v7523 = vpack.c.b16 %v7288, %v7287
  %v7524 = vpack.c.b16 %v7290, %v7289
  %v7525 = vpack.c.b16 %v7292, %v7291
  %v7526 = vpack.c.b16 %v7294, %v7293
  %v7527 = vpack.c.b16 %v7296, %v7295
  %v7528 = vpack.c.b16 %v7298, %v7297
  %v7529 = vpack.c.b16 %v7300, %v7299
  %v7530 = vpack.c.b16 %v7302, %v7301
  %v7531 = vpack.c.b16 %v7304, %v7303
  %v7532 = vpack.c.b16 %v7306, %v7305
  %v7533 = vpack.c.b16 %v7308, %v7307
  %v7534 = vpack.c.b16 %v7310, %v7309
  %v7535 = vpack.c.b16 %v7312, %v7311
  %v7536 = vpack.c.b16 %v7314, %v7313
  %v7537 = vpack.c.b16 %v7316, %v7315
  %v7538 = vpack.c.b16 %v7318, %v7317
  %v7539 = vpack.c.b16 %v7320, %v7319
  %v7540 = vpack.c.b16 %v7322, %v7321
  %v7541 = vpack.c.b16 %v7324, %v7323
  %v7542 = vpack.c.b16 %v7326, %v7325
  %v7543 = vpack.c.b16 %v7328, %v7327
  %v7544 = vpack.c.b16 %v7330, %v7329
  %v7545 = vpack.c.b16 %v7332, %v7331
  %v7546 = vpack.c.b16 %v7334, %v7333
  %v7547 = vpack.c.b16 %v7336, %v7335
  %v7548 = vpack.c.b16 %v7338, %v7337
  %v7549 = vpack.c.b16 %v7340, %v7339
  %v7550 = vpack.c.b16 %v7342, %v7341
  %v7551 = vpack.c.b16 %v7344, %v7343
  %v7552 = vpack.c.b16 %v7346, %v7345
  %v7553 = vpack.c.b16 %v7348, %v7347
  %v7554 = vpack.c.b16 %v7350, %v7349
  %v7555 = vpack.c.b16 %v7352, %v7351
  %v7556 = vpack.c.b16 %v7354, %v7353
  %v7557 = vpack.c.b16 %v7356, %v7355
  %v7558 = vpack.c.b16 %v7358, %v7357
  %v7559 = vpack.c.b16 %v7360, %v7359
  %v7560 = vpack.c.b16 %v7362, %v7361
  %v7561 = vpack.c.b16 %v7364, %v7363
  %v7562 = vpack.c.b16 %v7366, %v7365
  %v7563 = vpack.c.b16 %v7368, %v7367
  %v7564 = vpack.c.b16 %v7370, %v7369
  %v7565 = vpack.c.b16 %v7372, %v7371
  %v7566 = vpack.c.b16 %v7374, %v7373
  %v7567 = vpack.c.b16 %v7376, %v7375
  %v7568 = vpack.c.b16 %v7378, %v7377
  %v7569 = vpack.c.b16 %v7380, %v7379
  %v7570 = vpack.c.b16 %v7382, %v7381
  %v7571 = vpack.c.b16 %v7384, %v7383
  %v7572 = vpack.c.b16 %v7386, %v7385
  %v7573 = vpack.c.b16 %v7388, %v7387
  %v7574 = vpack.c.b16 %v7390, %v7389
  %v7575 = vpack.c.b16 %v7392, %v7391
  %v7576 = vpack.c.b16 %v7394, %v7393
  %v7577 = vpack.c.b16 %v7396, %v7395
  %v7578 = vpack.c.b16 %v7398, %v7397
  %v7579 = vpack.c.b16 %v7400, %v7399
  %v7580 = vpack.c.b16 %v7402, %v7401
  %v7581 = vpack.c.b16 %v7404, %v7403
  %v7582 = vpack.c.b16 %v7406, %v7405
  %v7583 = vpack.c.b16 %v7408, %v7407
  %v7584 = vpack.c.b16 %v7410, %v7409
  %v7585 = vpack.c.b16 %v7412, %v7411
  %v7586 = vpack.c.b16 %v7414, %v7413
  %v7587 = vpack.c.b16 %v7416, %v7415
  %v7588 = vpack.c.b16 %v7418, %v7417
  %v7589 = vpack.c.b16 %v7420, %v7419
  %v7590 = vpack.c.b16 %v7422, %v7421
  %v7591 = vpack.c.b16 %v7424, %v7423
  %v7592 = vpack.c.b16 %v7426, %v7425
  %v7593 = vpack.c.b16 %v7428, %v7427
  %v7594 = vpack.c.b16 %v7430, %v7429
  %v7595 = vpack.c.b16 %v7432, %v7431
  %v7596 = vpack.c.b16 %v7434, %v7433
  %v7597 = vpack.c.b16 %v7436, %v7435
  %v7598 = vpack.c.b16 %v7438, %v7437
  %v7599 = vpack.c.b16 %v7440, %v7439
  %v7600 = vpack.c.b16 %v7442, %v7441
  %v7601 = vpack.c.b16 %v7444, %v7443
  %v7602 = vpack.c.b16 %v7446, %v7445
  %v7603 = vpack.c.b16 %v7448, %v7447
  %v7604 = vpack.c.b16 %v7450, %v7449
  %v7605 = vpack.c.b16 %v7452, %v7451
  %v7606 = vpack.c.b16 %v7454, %v7453
  %v7607 = vpack.c.b16 %v7456, %v7455
  %v7608 = vpack.c.b16 %v7458, %v7457
  %v7609 = vpack.c.b16 %v7460, %v7459
  %v7610 = vpack.c.b16 %v7462, %v7461
  %v7611 = vpack.c.b16 %v7464, %v7463
  %v7612 = vpack.c.b16 %v7466, %v7465
  %v7613 = vpack.c.b16 %v7468, %v7467
  %v7614 = vpack.c.b16 %v7470, %v7469
  %v7615 = vpack.c.b16 %v7472, %v7471
  %v7616 = vpack.c.b16 %v7474, %v7473
  %v7617 = vpack.c.b16 %v7476, %v7475
  %v7618 = vpack.c.b16 %v7478, %v7477
  %v7619 = vpack.c.b16 %v7480, %v7479
  %v7620 = vpack.c.b16 %v7482, %v7481
  %v7621 = vpack.c.b16 %v7484, %v7483
  %v7622 = vpack.c.b16 %v7486, %v7485
  %v7623 = vpack.c.b16 %v7488, %v7487
  %v7624 = vpack.c.b16 %v7490, %v7489
  %v7625 = vpack.c.b16 %v7492, %v7491
  %v7626 = vpack.c.b16 %v7494, %v7493
  %v7627 = vpack.c.b16 %v7496, %v7495
  %v7628 = vpack.c.b16 %v7498, %v7497
  %v7629 = vpack.c.b16 %v7500, %v7499
  %v7630 = vpack.c.b16 %v7502, %v7501
  %7759 = vmatprep.subr.bf16.mxu0 0
  %7760 = vmatpush1.bf16.msra.mxu0 %v7510
  %7761 = vmatprep.subr.bf16.mxu0 0
  %7762 = vmatpush1.bf16.msra.mxu0 %v7509
  %7763 = vmatprep.subr.bf16.mxu0 0
  %7764 = vmatpush1.bf16.msra.mxu0 %v7508
  %7765 = vmatprep.subr.bf16.mxu0 0
  %7766 = vmatpush1.bf16.msra.mxu0 %v7507
  %7767 = vmatprep.subr.bf16.mxu0 0
  %7768 = vmatpush1.bf16.msra.mxu0 %v7506
  %7769 = vmatprep.subr.bf16.mxu0 0
  %7770 = vmatpush1.bf16.msra.mxu0 %v7505
  %7771 = vmatprep.subr.bf16.mxu0 0
  %7772 = vmatpush1.bf16.msra.mxu0 %v7504
  %7773 = vmatprep.subr.bf16.mxu0 0
  %7774 = vmatpush1.bf16.msra.mxu0 %v7503
  %7775 = vmatprep.subr.bf16.mxu0 0
  %7776 = vmatpush2.bf16.msra.mxu0 %v7518
  %7777 = vmatprep.subr.bf16.mxu0 0
  %7778 = vmatpush2.bf16.msra.mxu0 %v7517
  %7779 = vmatprep.subr.bf16.mxu0 0
  %7780 = vmatpush2.bf16.msra.mxu0 %v7516
  %7781 = vmatprep.subr.bf16.mxu0 0
  %7782 = vmatpush2.bf16.msra.mxu0 %v7515
  %7783 = vmatprep.subr.bf16.mxu0 0
  %7784 = vmatpush2.bf16.msra.mxu0 %v7514
  %7785 = vmatprep.subr.bf16.mxu0 0
  %7786 = vmatpush2.bf16.msra.mxu0 %v7513
  %7787 = vmatprep.subr.bf16.mxu0 0
  %7788 = vmatpush2.bf16.msra.mxu0 %v7512
  %7789 = vmatprep.subr.bf16.mxu0 0
  %7790 = vmatpush2.bf16.msra.mxu0 %v7511
  %7791 = vmatprep.mubr.bf16.mxu0 %v6697
  %7792 = vmatmul.mubr.bf16.gmra.mxu0 %v6696
  %v7793 = vpop.f32.mrf.mxu0
  %v7794 = vadd.f32 %v6989, %v7793
  %v7795 = vpop.f32.mrf.mxu0
  %v7796 = vpop.f32.mrf.mxu0
  %v7797 = vadd.f32 %v6989, %v7796
  %v7798 = vpop.f32.mrf.mxu0
  %7799 = vmatprep.mubr.bf16.mxu0 %v6713
  %7800 = vmatmul.mubr.bf16.gmra.mxu0 %v6712
  %v7801 = vpop.f32.mrf.mxu0
  %v7802 = vadd.f32 %v6989, %v7801
  %v7803 = vpop.f32.mrf.mxu0
  %v7804 = vpop.f32.mrf.mxu0
  %v7805 = vadd.f32 %v6989, %v7804
  %v7806 = vpop.f32.mrf.mxu0
  %7807 = vdwg.mxu0
  %7808 = vmatprep.subr.bf16.mxu0 0
  %7809 = vmatpush1.bf16.msra.mxu0 %v7526
  %7810 = vmatprep.subr.bf16.mxu0 0
  %7811 = vmatpush1.bf16.msra.mxu0 %v7525
  %7812 = vmatprep.subr.bf16.mxu0 0
  %7813 = vmatpush1.bf16.msra.mxu0 %v7524
  %7814 = vmatprep.subr.bf16.mxu0 0
  %7815 = vmatpush1.bf16.msra.mxu0 %v7523
  %7816 = vmatprep.subr.bf16.mxu0 0
  %7817 = vmatpush1.bf16.msra.mxu0 %v7522
  %7818 = vmatprep.subr.bf16.mxu0 0
  %7819 = vmatpush1.bf16.msra.mxu0 %v7521
  %7820 = vmatprep.subr.bf16.mxu0 0
  %7821 = vmatpush1.bf16.msra.mxu0 %v7520
  %7822 = vmatprep.subr.bf16.mxu0 0
  %7823 = vmatpush1.bf16.msra.mxu0 %v7519
  %7824 = vmatprep.subr.bf16.mxu0 0
  %7825 = vmatpush2.bf16.msra.mxu0 %v7534
  %7826 = vmatprep.subr.bf16.mxu0 0
  %7827 = vmatpush2.bf16.msra.mxu0 %v7533
  %7828 = vmatprep.subr.bf16.mxu0 0
  %7829 = vmatpush2.bf16.msra.mxu0 %v7532
  %7830 = vmatprep.subr.bf16.mxu0 0
  %7831 = vmatpush2.bf16.msra.mxu0 %v7531
  %7832 = vmatprep.subr.bf16.mxu0 0
  %7833 = vmatpush2.bf16.msra.mxu0 %v7530
  %7834 = vmatprep.subr.bf16.mxu0 0
  %7835 = vmatpush2.bf16.msra.mxu0 %v7529
  %7836 = vmatprep.subr.bf16.mxu0 0
  %7837 = vmatpush2.bf16.msra.mxu0 %v7528
  %7838 = vmatprep.subr.bf16.mxu0 0
  %7839 = vmatpush2.bf16.msra.mxu0 %v7527
  %7840 = vmatprep.mubr.bf16.mxu0 %v6699
  %7841 = vmatmul.mubr.bf16.gmra.mxu0 %v6698
  %v7842 = vpop.f32.mrf.mxu0
  %v7843 = vadd.f32 %v7794, %v7842
  %v7844 = vpop.f32.mrf.mxu0
  %v7845 = vpop.f32.mrf.mxu0
  %v7846 = vadd.f32 %v7797, %v7845
  %v7847 = vpop.f32.mrf.mxu0
  %7848 = vmatprep.mubr.bf16.mxu0 %v6715
  %7849 = vmatmul.mubr.bf16.gmra.mxu0 %v6714
  %v7850 = vpop.f32.mrf.mxu0
  %v7851 = vadd.f32 %v7802, %v7850
  %v7852 = vpop.f32.mrf.mxu0
  %v7853 = vpop.f32.mrf.mxu0
  %v7854 = vadd.f32 %v7805, %v7853
  %v7855 = vpop.f32.mrf.mxu0
  %7856 = vdwg.mxu0
  %7857 = vmatprep.subr.bf16.mxu0 0
  %7858 = vmatpush1.bf16.msra.mxu0 %v7542
  %7859 = vmatprep.subr.bf16.mxu0 0
  %7860 = vmatpush1.bf16.msra.mxu0 %v7541
  %7861 = vmatprep.subr.bf16.mxu0 0
  %7862 = vmatpush1.bf16.msra.mxu0 %v7540
  %7863 = vmatprep.subr.bf16.mxu0 0
  %7864 = vmatpush1.bf16.msra.mxu0 %v7539
  %7865 = vmatprep.subr.bf16.mxu0 0
  %7866 = vmatpush1.bf16.msra.mxu0 %v7538
  %7867 = vmatprep.subr.bf16.mxu0 0
  %7868 = vmatpush1.bf16.msra.mxu0 %v7537
  %7869 = vmatprep.subr.bf16.mxu0 0
  %7870 = vmatpush1.bf16.msra.mxu0 %v7536
  %7871 = vmatprep.subr.bf16.mxu0 0
  %7872 = vmatpush1.bf16.msra.mxu0 %v7535
  %7873 = vmatprep.subr.bf16.mxu0 0
  %7874 = vmatpush2.bf16.msra.mxu0 %v7550
  %7875 = vmatprep.subr.bf16.mxu0 0
  %7876 = vmatpush2.bf16.msra.mxu0 %v7549
  %7877 = vmatprep.subr.bf16.mxu0 0
  %7878 = vmatpush2.bf16.msra.mxu0 %v7548
  %7879 = vmatprep.subr.bf16.mxu0 0
  %7880 = vmatpush2.bf16.msra.mxu0 %v7547
  %7881 = vmatprep.subr.bf16.mxu0 0
  %7882 = vmatpush2.bf16.msra.mxu0 %v7546
  %7883 = vmatprep.subr.bf16.mxu0 0
  %7884 = vmatpush2.bf16.msra.mxu0 %v7545
  %7885 = vmatprep.subr.bf16.mxu0 0
  %7886 = vmatpush2.bf16.msra.mxu0 %v7544
  %7887 = vmatprep.subr.bf16.mxu0 0
  %7888 = vmatpush2.bf16.msra.mxu0 %v7543
  %7889 = vmatprep.mubr.bf16.mxu0 %v6701
  %7890 = vmatmul.mubr.bf16.gmra.mxu0 %v6700
  %v7891 = vpop.f32.mrf.mxu0
  %v7892 = vadd.f32 %v7843, %v7891
  %v7893 = vpop.f32.mrf.mxu0
  %v7894 = vpop.f32.mrf.mxu0
  %v7895 = vadd.f32 %v7846, %v7894
  %v7896 = vpop.f32.mrf.mxu0
  %7897 = vmatprep.mubr.bf16.mxu0 %v6717
  %7898 = vmatmul.mubr.bf16.gmra.mxu0 %v6716
  %v7899 = vpop.f32.mrf.mxu0
  %v7900 = vadd.f32 %v7851, %v7899
  %v7901 = vpop.f32.mrf.mxu0
  %v7902 = vpop.f32.mrf.mxu0
  %v7903 = vadd.f32 %v7854, %v7902
  %v7904 = vpop.f32.mrf.mxu0
  %7905 = vdwg.mxu0
  %7906 = vmatprep.subr.bf16.mxu0 0
  %7907 = vmatpush1.bf16.msra.mxu0 %v7558
  %7908 = vmatprep.subr.bf16.mxu0 0
  %7909 = vmatpush1.bf16.msra.mxu0 %v7557
  %7910 = vmatprep.subr.bf16.mxu0 0
  %7911 = vmatpush1.bf16.msra.mxu0 %v7556
  %7912 = vmatprep.subr.bf16.mxu0 0
  %7913 = vmatpush1.bf16.msra.mxu0 %v7555
  %7914 = vmatprep.subr.bf16.mxu0 0
  %7915 = vmatpush1.bf16.msra.mxu0 %v7554
  %7916 = vmatprep.subr.bf16.mxu0 0
  %7917 = vmatpush1.bf16.msra.mxu0 %v7553
  %7918 = vmatprep.subr.bf16.mxu0 0
  %7919 = vmatpush1.bf16.msra.mxu0 %v7552
  %7920 = vmatprep.subr.bf16.mxu0 0
  %7921 = vmatpush1.bf16.msra.mxu0 %v7551
  %7922 = vmatprep.subr.bf16.mxu0 0
  %7923 = vmatpush2.bf16.msra.mxu0 %v7566
  %7924 = vmatprep.subr.bf16.mxu0 0
  %7925 = vmatpush2.bf16.msra.mxu0 %v7565
  %7926 = vmatprep.subr.bf16.mxu0 0
  %7927 = vmatpush2.bf16.msra.mxu0 %v7564
  %7928 = vmatprep.subr.bf16.mxu0 0
  %7929 = vmatpush2.bf16.msra.mxu0 %v7563
  %7930 = vmatprep.subr.bf16.mxu0 0
  %7931 = vmatpush2.bf16.msra.mxu0 %v7562
  %7932 = vmatprep.subr.bf16.mxu0 0
  %7933 = vmatpush2.bf16.msra.mxu0 %v7561
  %7934 = vmatprep.subr.bf16.mxu0 0
  %7935 = vmatpush2.bf16.msra.mxu0 %v7560
  %7936 = vmatprep.subr.bf16.mxu0 0
  %7937 = vmatpush2.bf16.msra.mxu0 %v7559
  %7938 = vmatprep.mubr.bf16.mxu0 %v6703
  %7939 = vmatmul.mubr.bf16.gmra.mxu0 %v6702
  %v7940 = vpop.f32.mrf.mxu0
  %v7941 = vadd.f32 %v7892, %v7940
  %v7942 = vpop.f32.mrf.mxu0
  %v7943 = vpop.f32.mrf.mxu0
  %v7944 = vadd.f32 %v7895, %v7943
  %v7945 = vpop.f32.mrf.mxu0
  %7946 = vmatprep.mubr.bf16.mxu0 %v6719
  %7947 = vmatmul.mubr.bf16.gmra.mxu0 %v6718
  %v7948 = vpop.f32.mrf.mxu0
  %v7949 = vadd.f32 %v7900, %v7948
  %v7950 = vpop.f32.mrf.mxu0
  %v7951 = vpop.f32.mrf.mxu0
  %v7952 = vadd.f32 %v7903, %v7951
  %v7953 = vpop.f32.mrf.mxu0
  %7954 = vdwg.mxu0
  %7955 = vmatprep.subr.bf16.mxu0 0
  %7956 = vmatpush1.bf16.msra.mxu0 %v7574
  %7957 = vmatprep.subr.bf16.mxu0 0
  %7958 = vmatpush1.bf16.msra.mxu0 %v7573
  %7959 = vmatprep.subr.bf16.mxu0 0
  %7960 = vmatpush1.bf16.msra.mxu0 %v7572
  %7961 = vmatprep.subr.bf16.mxu0 0
  %7962 = vmatpush1.bf16.msra.mxu0 %v7571
  %7963 = vmatprep.subr.bf16.mxu0 0
  %7964 = vmatpush1.bf16.msra.mxu0 %v7570
  %7965 = vmatprep.subr.bf16.mxu0 0
  %7966 = vmatpush1.bf16.msra.mxu0 %v7569
  %7967 = vmatprep.subr.bf16.mxu0 0
  %7968 = vmatpush1.bf16.msra.mxu0 %v7568
  %7969 = vmatprep.subr.bf16.mxu0 0
  %7970 = vmatpush1.bf16.msra.mxu0 %v7567
  %7971 = vmatprep.subr.bf16.mxu0 0
  %7972 = vmatpush2.bf16.msra.mxu0 %v7582
  %7973 = vmatprep.subr.bf16.mxu0 0
  %7974 = vmatpush2.bf16.msra.mxu0 %v7581
  %7975 = vmatprep.subr.bf16.mxu0 0
  %7976 = vmatpush2.bf16.msra.mxu0 %v7580
  %7977 = vmatprep.subr.bf16.mxu0 0
  %7978 = vmatpush2.bf16.msra.mxu0 %v7579
  %7979 = vmatprep.subr.bf16.mxu0 0
  %7980 = vmatpush2.bf16.msra.mxu0 %v7578
  %7981 = vmatprep.subr.bf16.mxu0 0
  %7982 = vmatpush2.bf16.msra.mxu0 %v7577
  %7983 = vmatprep.subr.bf16.mxu0 0
  %7984 = vmatpush2.bf16.msra.mxu0 %v7576
  %7985 = vmatprep.subr.bf16.mxu0 0
  %7986 = vmatpush2.bf16.msra.mxu0 %v7575
  %7987 = vmatprep.mubr.bf16.mxu0 %v6705
  %7988 = vmatmul.mubr.bf16.gmra.mxu0 %v6704
  %v7989 = vpop.f32.mrf.mxu0
  %v7990 = vadd.f32 %v7941, %v7989
  %v7991 = vpop.f32.mrf.mxu0
  %v7992 = vpop.f32.mrf.mxu0
  %v7993 = vadd.f32 %v7944, %v7992
  %v7994 = vpop.f32.mrf.mxu0
  %7995 = vmatprep.mubr.bf16.mxu0 %v6721
  %7996 = vmatmul.mubr.bf16.gmra.mxu0 %v6720
  %v7997 = vpop.f32.mrf.mxu0
  %v7998 = vadd.f32 %v7949, %v7997
  %v7999 = vpop.f32.mrf.mxu0
  %v8000 = vpop.f32.mrf.mxu0
  %v8001 = vadd.f32 %v7952, %v8000
  %v8002 = vpop.f32.mrf.mxu0
  %8003 = vdwg.mxu0
  %8004 = vmatprep.subr.bf16.mxu0 0
  %8005 = vmatpush1.bf16.msra.mxu0 %v7590
  %8006 = vmatprep.subr.bf16.mxu0 0
  %8007 = vmatpush1.bf16.msra.mxu0 %v7589
  %8008 = vmatprep.subr.bf16.mxu0 0
  %8009 = vmatpush1.bf16.msra.mxu0 %v7588
  %8010 = vmatprep.subr.bf16.mxu0 0
  %8011 = vmatpush1.bf16.msra.mxu0 %v7587
  %8012 = vmatprep.subr.bf16.mxu0 0
  %8013 = vmatpush1.bf16.msra.mxu0 %v7586
  %8014 = vmatprep.subr.bf16.mxu0 0
  %8015 = vmatpush1.bf16.msra.mxu0 %v7585
  %8016 = vmatprep.subr.bf16.mxu0 0
  %8017 = vmatpush1.bf16.msra.mxu0 %v7584
  %8018 = vmatprep.subr.bf16.mxu0 0
  %8019 = vmatpush1.bf16.msra.mxu0 %v7583
  %8020 = vmatprep.subr.bf16.mxu0 0
  %8021 = vmatpush2.bf16.msra.mxu0 %v7598
  %8022 = vmatprep.subr.bf16.mxu0 0
  %8023 = vmatpush2.bf16.msra.mxu0 %v7597
  %8024 = vmatprep.subr.bf16.mxu0 0
  %8025 = vmatpush2.bf16.msra.mxu0 %v7596
  %8026 = vmatprep.subr.bf16.mxu0 0
  %8027 = vmatpush2.bf16.msra.mxu0 %v7595
  %8028 = vmatprep.subr.bf16.mxu0 0
  %8029 = vmatpush2.bf16.msra.mxu0 %v7594
  %8030 = vmatprep.subr.bf16.mxu0 0
  %8031 = vmatpush2.bf16.msra.mxu0 %v7593
  %8032 = vmatprep.subr.bf16.mxu0 0
  %8033 = vmatpush2.bf16.msra.mxu0 %v7592
  %8034 = vmatprep.subr.bf16.mxu0 0
  %8035 = vmatpush2.bf16.msra.mxu0 %v7591
  %8036 = vmatprep.mubr.bf16.mxu0 %v6707
  %8037 = vmatmul.mubr.bf16.gmra.mxu0 %v6706
  %v8038 = vpop.f32.mrf.mxu0
  %v8039 = vadd.f32 %v7990, %v8038
  %v8040 = vpop.f32.mrf.mxu0
  %v8041 = vpop.f32.mrf.mxu0
  %v8042 = vadd.f32 %v7993, %v8041
  %v8043 = vpop.f32.mrf.mxu0
  %8044 = vmatprep.mubr.bf16.mxu0 %v6723
  %8045 = vmatmul.mubr.bf16.gmra.mxu0 %v6722
  %v8046 = vpop.f32.mrf.mxu0
  %v8047 = vadd.f32 %v7998, %v8046
  %v8048 = vpop.f32.mrf.mxu0
  %v8049 = vpop.f32.mrf.mxu0
  %v8050 = vadd.f32 %v8001, %v8049
  %v8051 = vpop.f32.mrf.mxu0
  %8052 = vdwg.mxu0
  %8053 = vmatprep.subr.bf16.mxu0 0
  %8054 = vmatpush1.bf16.msra.mxu0 %v7606
  %8055 = vmatprep.subr.bf16.mxu0 0
  %8056 = vmatpush1.bf16.msra.mxu0 %v7605
  %8057 = vmatprep.subr.bf16.mxu0 0
  %8058 = vmatpush1.bf16.msra.mxu0 %v7604
  %8059 = vmatprep.subr.bf16.mxu0 0
  %8060 = vmatpush1.bf16.msra.mxu0 %v7603
  %8061 = vmatprep.subr.bf16.mxu0 0
  %8062 = vmatpush1.bf16.msra.mxu0 %v7602
  %8063 = vmatprep.subr.bf16.mxu0 0
  %8064 = vmatpush1.bf16.msra.mxu0 %v7601
  %8065 = vmatprep.subr.bf16.mxu0 0
  %8066 = vmatpush1.bf16.msra.mxu0 %v7600
  %8067 = vmatprep.subr.bf16.mxu0 0
  %8068 = vmatpush1.bf16.msra.mxu0 %v7599
  %8069 = vmatprep.subr.bf16.mxu0 0
  %8070 = vmatpush2.bf16.msra.mxu0 %v7614
  %8071 = vmatprep.subr.bf16.mxu0 0
  %8072 = vmatpush2.bf16.msra.mxu0 %v7613
  %8073 = vmatprep.subr.bf16.mxu0 0
  %8074 = vmatpush2.bf16.msra.mxu0 %v7612
  %8075 = vmatprep.subr.bf16.mxu0 0
  %8076 = vmatpush2.bf16.msra.mxu0 %v7611
  %8077 = vmatprep.subr.bf16.mxu0 0
  %8078 = vmatpush2.bf16.msra.mxu0 %v7610
  %8079 = vmatprep.subr.bf16.mxu0 0
  %8080 = vmatpush2.bf16.msra.mxu0 %v7609
  %8081 = vmatprep.subr.bf16.mxu0 0
  %8082 = vmatpush2.bf16.msra.mxu0 %v7608
  %8083 = vmatprep.subr.bf16.mxu0 0
  %8084 = vmatpush2.bf16.msra.mxu0 %v7607
  %8085 = vmatprep.mubr.bf16.mxu0 %v6709
  %8086 = vmatmul.mubr.bf16.gmra.mxu0 %v6708
  %v8087 = vpop.f32.mrf.mxu0
  %v8088 = vadd.f32 %v8039, %v8087
  %v8089 = vpop.f32.mrf.mxu0
  %v8090 = vpop.f32.mrf.mxu0
  %v8091 = vadd.f32 %v8042, %v8090
  %v8092 = vpop.f32.mrf.mxu0
  %8093 = vmatprep.mubr.bf16.mxu0 %v6725
  %8094 = vmatmul.mubr.bf16.gmra.mxu0 %v6724
  %v8095 = vpop.f32.mrf.mxu0
  %v8096 = vadd.f32 %v8047, %v8095
  %v8097 = vpop.f32.mrf.mxu0
  %v8098 = vpop.f32.mrf.mxu0
  %v8099 = vadd.f32 %v8050, %v8098
  %v8100 = vpop.f32.mrf.mxu0
  %8101 = vdwg.mxu0
  %8102 = vmatprep.subr.bf16.mxu0 0
  %8103 = vmatpush1.bf16.msra.mxu0 %v7622
  %8104 = vmatprep.subr.bf16.mxu0 0
  %8105 = vmatpush1.bf16.msra.mxu0 %v7621
  %8106 = vmatprep.subr.bf16.mxu0 0
  %8107 = vmatpush1.bf16.msra.mxu0 %v7620
  %8108 = vmatprep.subr.bf16.mxu0 0
  %8109 = vmatpush1.bf16.msra.mxu0 %v7619
  %8110 = vmatprep.subr.bf16.mxu0 0
  %8111 = vmatpush1.bf16.msra.mxu0 %v7618
  %8112 = vmatprep.subr.bf16.mxu0 0
  %8113 = vmatpush1.bf16.msra.mxu0 %v7617
  %8114 = vmatprep.subr.bf16.mxu0 0
  %8115 = vmatpush1.bf16.msra.mxu0 %v7616
  %8116 = vmatprep.subr.bf16.mxu0 0
  %8117 = vmatpush1.bf16.msra.mxu0 %v7615
  %8118 = vmatprep.subr.bf16.mxu0 0
  %8119 = vmatpush2.bf16.msra.mxu0 %v7630
  %8120 = vmatprep.subr.bf16.mxu0 0
  %8121 = vmatpush2.bf16.msra.mxu0 %v7629
  %8122 = vmatprep.subr.bf16.mxu0 0
  %8123 = vmatpush2.bf16.msra.mxu0 %v7628
  %8124 = vmatprep.subr.bf16.mxu0 0
  %8125 = vmatpush2.bf16.msra.mxu0 %v7627
  %8126 = vmatprep.subr.bf16.mxu0 0
  %8127 = vmatpush2.bf16.msra.mxu0 %v7626
  %8128 = vmatprep.subr.bf16.mxu0 0
  %8129 = vmatpush2.bf16.msra.mxu0 %v7625
  %8130 = vmatprep.subr.bf16.mxu0 0
  %8131 = vmatpush2.bf16.msra.mxu0 %v7624
  %8132 = vmatprep.subr.bf16.mxu0 0
  %8133 = vmatpush2.bf16.msra.mxu0 %v7623
  %8134 = vmatprep.mubr.bf16.mxu0 %v6711
  %8135 = vmatmul.mubr.bf16.gmra.mxu0 %v6710
  %v8136 = vpop.f32.mrf.mxu0
  %v8137 = vadd.f32 %v8088, %v8136
  %v8138 = vpop.f32.mrf.mxu0
  %v8139 = vpop.f32.mrf.mxu0
  %v8140 = vadd.f32 %v8091, %v8139
  %v8141 = vpop.f32.mrf.mxu0
  %8142 = vmatprep.mubr.bf16.mxu0 %v6727
  %8143 = vmatmul.mubr.bf16.gmra.mxu0 %v6726
  %v8144 = vpop.f32.mrf.mxu0
  %v8145 = vadd.f32 %v8096, %v8144
  %v8146 = vpop.f32.mrf.mxu0
  %v8147 = vpop.f32.mrf.mxu0
  %v8148 = vadd.f32 %v8099, %v8147
  %v8149 = vpop.f32.mrf.mxu0
  %8150 = vdwg.mxu0
  %v8151 = vmax.f32 %v8137, 0.0
  %v8152 = vmax.f32 %v8140, 0.0
  %v8153 = vmax.f32 %v8145, 0.0
  %v8154 = vmax.f32 %v8148, 0.0
  %v8155 = vpack.c.bf16 %v8152, %v8151
  %v8156 = vpack.c.bf16 %v8154, %v8153
  %v8157 = vld [vmem:[%s22] sm:$0xff]
  %v8158 = vld [vmem:[%s22 + $0x8] sm:$0xff]
  %v8159 = vld [vmem:[%s22 + $0x10] sm:$0xff]
  %v8160 = vld [vmem:[%s22 + $0x18] sm:$0xff]
  %v8161 = vld [vmem:[%s22 + $0x20] sm:$0xff]
  %v8162 = vld [vmem:[%s22 + $0x28] sm:$0xff]
  %v8163 = vld [vmem:[%s22 + $0x30] sm:$0xff]
  %v8164 = vld [vmem:[%s22 + $0x38] sm:$0xff]
  %v8165 = vld [vmem:[%s22 + $0x40] sm:$0xff]
  %v8166 = vld [vmem:[%s22 + $0x48] sm:$0xff]
  %v8167 = vld [vmem:[%s22 + $0x50] sm:$0xff]
  %v8168 = vld [vmem:[%s22 + $0x58] sm:$0xff]
  %v8169 = vld [vmem:[%s22 + $0x60] sm:$0xff]
  %v8170 = vld [vmem:[%s22 + $0x68] sm:$0xff]
  %v8171 = vld [vmem:[%s22 + $0x70] sm:$0xff]
  %v8172 = vld [vmem:[%s22 + $0x78] sm:$0xff]
  %v8173 = vld [vmem:[%s22 + $0x80] sm:$0xff]
  %v8174 = vld [vmem:[%s22 + $0x88] sm:$0xff]
  %v8175 = vld [vmem:[%s22 + $0x90] sm:$0xff]
  %v8176 = vld [vmem:[%s22 + $0x98] sm:$0xff]
  %v8177 = vld [vmem:[%s22 + $0xa0] sm:$0xff]
  %v8178 = vld [vmem:[%s22 + $0xa8] sm:$0xff]
  %v8179 = vld [vmem:[%s22 + $0xb0] sm:$0xff]
  %v8180 = vld [vmem:[%s22 + $0xb8] sm:$0xff]
  %v8181 = vld [vmem:[%s22 + $0xc0] sm:$0xff]
  %v8182 = vld [vmem:[%s22 + $0xc8] sm:$0xff]
  %v8183 = vld [vmem:[%s22 + $0xd0] sm:$0xff]
  %v8184 = vld [vmem:[%s22 + $0xd8] sm:$0xff]
  %v8185 = vld [vmem:[%s22 + $0xe0] sm:$0xff]
  %v8186 = vld [vmem:[%s22 + $0xe8] sm:$0xff]
  %v8187 = vld [vmem:[%s22 + $0xf0] sm:$0xff]
  %v8188 = vld [vmem:[%s22 + $0xf8] sm:$0xff]
  %v8189 = vld [vmem:[%s22 + $0x100] sm:$0xff]
  %v8190 = vld [vmem:[%s22 + $0x108] sm:$0xff]
  %v8191 = vld [vmem:[%s22 + $0x110] sm:$0xff]
  %v8192 = vld [vmem:[%s22 + $0x118] sm:$0xff]
  %v8193 = vld [vmem:[%s22 + $0x120] sm:$0xff]
  %v8194 = vld [vmem:[%s22 + $0x128] sm:$0xff]
  %v8195 = vld [vmem:[%s22 + $0x130] sm:$0xff]
  %v8196 = vld [vmem:[%s22 + $0x138] sm:$0xff]
  %v8197 = vld [vmem:[%s22 + $0x140] sm:$0xff]
  %v8198 = vld [vmem:[%s22 + $0x148] sm:$0xff]
  %v8199 = vld [vmem:[%s22 + $0x150] sm:$0xff]
  %v8200 = vld [vmem:[%s22 + $0x158] sm:$0xff]
  %v8201 = vld [vmem:[%s22 + $0x160] sm:$0xff]
  %v8202 = vld [vmem:[%s22 + $0x168] sm:$0xff]
  %v8203 = vld [vmem:[%s22 + $0x170] sm:$0xff]
  %v8204 = vld [vmem:[%s22 + $0x178] sm:$0xff]
  %v8205 = vld [vmem:[%s22 + $0x180] sm:$0xff]
  %v8206 = vld [vmem:[%s22 + $0x188] sm:$0xff]
  %v8207 = vld [vmem:[%s22 + $0x190] sm:$0xff]
  %v8208 = vld [vmem:[%s22 + $0x198] sm:$0xff]
  %v8209 = vld [vmem:[%s22 + $0x1a0] sm:$0xff]
  %v8210 = vld [vmem:[%s22 + $0x1a8] sm:$0xff]
  %v8211 = vld [vmem:[%s22 + $0x1b0] sm:$0xff]
  %v8212 = vld [vmem:[%s22 + $0x1b8] sm:$0xff]
  %v8213 = vld [vmem:[%s22 + $0x1c0] sm:$0xff]
  %v8214 = vld [vmem:[%s22 + $0x1c8] sm:$0xff]
  %v8215 = vld [vmem:[%s22 + $0x1d0] sm:$0xff]
  %v8216 = vld [vmem:[%s22 + $0x1d8] sm:$0xff]
  %v8217 = vld [vmem:[%s22 + $0x1e0] sm:$0xff]
  %v8218 = vld [vmem:[%s22 + $0x1e8] sm:$0xff]
  %v8219 = vld [vmem:[%s22 + $0x1f0] sm:$0xff]
  %v8220 = vld [vmem:[%s22 + $0x1f8] sm:$0xff]
  %v8221 = vld [vmem:[%s23] sm:$0xff]
  %v8222 = vld [vmem:[%s23 + $0x8] sm:$0xff]
  %v8225 = vlaneseq
  %v8226 = vshrl.u32 %v8225, 7
  %v8227 = vsub.s32 0, %v8226
  %v8228 = vrot.slane %v8221, %v8227
  %v8229 = vlaneseq
  %v8230 = vshrl.u32 %v8229, 7
  %v8231 = vsub.s32 1, %v8230
  %v8232 = vrot.slane %v8221, %v8231
  %v8233 = vlaneseq
  %v8234 = vshrl.u32 %v8233, 7
  %v8235 = vsub.s32 2, %v8234
  %v8236 = vrot.slane %v8221, %v8235
  %v8237 = vlaneseq
  %v8238 = vshrl.u32 %v8237, 7
  %v8239 = vsub.s32 3, %v8238
  %v8240 = vrot.slane %v8221, %v8239
  %v8241 = vlaneseq
  %v8242 = vshrl.u32 %v8241, 7
  %v8243 = vsub.s32 4, %v8242
  %v8244 = vrot.slane %v8221, %v8243
  %v8245 = vlaneseq
  %v8246 = vshrl.u32 %v8245, 7
  %v8247 = vsub.s32 5, %v8246
  %v8248 = vrot.slane %v8221, %v8247
  %v8249 = vlaneseq
  %v8250 = vshrl.u32 %v8249, 7
  %v8251 = vsub.s32 6, %v8250
  %v8252 = vrot.slane %v8221, %v8251
  %v8253 = vlaneseq
  %v8254 = vshrl.u32 %v8253, 7
  %v8255 = vsub.s32 7, %v8254
  %v8256 = vrot.slane %v8221, %v8255
  %v8257 = vlaneseq
  %v8258 = vshrl.u32 %v8257, 7
  %v8259 = vsub.s32 0, %v8258
  %v8260 = vrot.slane %v8222, %v8259
  %v8261 = vlaneseq
  %v8262 = vshrl.u32 %v8261, 7
  %v8263 = vsub.s32 1, %v8262
  %v8264 = vrot.slane %v8222, %v8263
  %v8265 = vlaneseq
  %v8266 = vshrl.u32 %v8265, 7
  %v8267 = vsub.s32 2, %v8266
  %v8268 = vrot.slane %v8222, %v8267
  %v8269 = vlaneseq
  %v8270 = vshrl.u32 %v8269, 7
  %v8271 = vsub.s32 3, %v8270
  %v8272 = vrot.slane %v8222, %v8271
  %v8273 = vlaneseq
  %v8274 = vshrl.u32 %v8273, 7
  %v8275 = vsub.s32 4, %v8274
  %v8276 = vrot.slane %v8222, %v8275
  %v8277 = vlaneseq
  %v8278 = vshrl.u32 %v8277, 7
  %v8279 = vsub.s32 5, %v8278
  %v8280 = vrot.slane %v8222, %v8279
  %v8281 = vlaneseq
  %v8282 = vshrl.u32 %v8281, 7
  %v8283 = vsub.s32 6, %v8282
  %v8284 = vrot.slane %v8222, %v8283
  %v8285 = vlaneseq
  %v8286 = vshrl.u32 %v8285, 7
  %v8287 = vsub.s32 7, %v8286
  %v8288 = vrot.slane %v8222, %v8287
  %v8369 = vunpack.c.l.b16 %v8157
  %v8370 = vunpack.c.h.b16 %v8157
  %v8371 = vunpack.c.l.b16 %v8158
  %v8372 = vunpack.c.h.b16 %v8158
  %v8373 = vunpack.c.l.b16 %v8159
  %v8374 = vunpack.c.h.b16 %v8159
  %v8375 = vunpack.c.l.b16 %v8160
  %v8376 = vunpack.c.h.b16 %v8160
  %v8377 = vunpack.c.l.b16 %v8161
  %v8378 = vunpack.c.h.b16 %v8161
  %v8379 = vunpack.c.l.b16 %v8162
  %v8380 = vunpack.c.h.b16 %v8162
  %v8381 = vunpack.c.l.b16 %v8163
  %v8382 = vunpack.c.h.b16 %v8163
  %v8383 = vunpack.c.l.b16 %v8164
  %v8384 = vunpack.c.h.b16 %v8164
  %v8385 = vunpack.c.l.b16 %v8165
  %v8386 = vunpack.c.h.b16 %v8165
  %v8387 = vunpack.c.l.b16 %v8166
  %v8388 = vunpack.c.h.b16 %v8166
  %v8389 = vunpack.c.l.b16 %v8167
  %v8390 = vunpack.c.h.b16 %v8167
  %v8391 = vunpack.c.l.b16 %v8168
  %v8392 = vunpack.c.h.b16 %v8168
  %v8393 = vunpack.c.l.b16 %v8169
  %v8394 = vunpack.c.h.b16 %v8169
  %v8395 = vunpack.c.l.b16 %v8170
  %v8396 = vunpack.c.h.b16 %v8170
  %v8397 = vunpack.c.l.b16 %v8171
  %v8398 = vunpack.c.h.b16 %v8171
  %v8399 = vunpack.c.l.b16 %v8172
  %v8400 = vunpack.c.h.b16 %v8172
  %v8401 = vunpack.c.l.b16 %v8173
  %v8402 = vunpack.c.h.b16 %v8173
  %v8403 = vunpack.c.l.b16 %v8174
  %v8404 = vunpack.c.h.b16 %v8174
  %v8405 = vunpack.c.l.b16 %v8175
  %v8406 = vunpack.c.h.b16 %v8175
  %v8407 = vunpack.c.l.b16 %v8176
  %v8408 = vunpack.c.h.b16 %v8176
  %v8409 = vunpack.c.l.b16 %v8177
  %v8410 = vunpack.c.h.b16 %v8177
  %v8411 = vunpack.c.l.b16 %v8178
  %v8412 = vunpack.c.h.b16 %v8178
  %v8413 = vunpack.c.l.b16 %v8179
  %v8414 = vunpack.c.h.b16 %v8179
  %v8415 = vunpack.c.l.b16 %v8180
  %v8416 = vunpack.c.h.b16 %v8180
  %v8417 = vunpack.c.l.b16 %v8181
  %v8418 = vunpack.c.h.b16 %v8181
  %v8419 = vunpack.c.l.b16 %v8182
  %v8420 = vunpack.c.h.b16 %v8182
  %v8421 = vunpack.c.l.b16 %v8183
  %v8422 = vunpack.c.h.b16 %v8183
  %v8423 = vunpack.c.l.b16 %v8184
  %v8424 = vunpack.c.h.b16 %v8184
  %v8425 = vunpack.c.l.b16 %v8185
  %v8426 = vunpack.c.h.b16 %v8185
  %v8427 = vunpack.c.l.b16 %v8186
  %v8428 = vunpack.c.h.b16 %v8186
  %v8429 = vunpack.c.l.b16 %v8187
  %v8430 = vunpack.c.h.b16 %v8187
  %v8431 = vunpack.c.l.b16 %v8188
  %v8432 = vunpack.c.h.b16 %v8188
  %v8433 = vunpack.c.l.b16 %v8189
  %v8434 = vunpack.c.h.b16 %v8189
  %v8435 = vunpack.c.l.b16 %v8190
  %v8436 = vunpack.c.h.b16 %v8190
  %v8437 = vunpack.c.l.b16 %v8191
  %v8438 = vunpack.c.h.b16 %v8191
  %v8439 = vunpack.c.l.b16 %v8192
  %v8440 = vunpack.c.h.b16 %v8192
  %v8441 = vunpack.c.l.b16 %v8193
  %v8442 = vunpack.c.h.b16 %v8193
  %v8443 = vunpack.c.l.b16 %v8194
  %v8444 = vunpack.c.h.b16 %v8194
  %v8445 = vunpack.c.l.b16 %v8195
  %v8446 = vunpack.c.h.b16 %v8195
  %v8447 = vunpack.c.l.b16 %v8196
  %v8448 = vunpack.c.h.b16 %v8196
  %v8449 = vunpack.c.l.b16 %v8197
  %v8450 = vunpack.c.h.b16 %v8197
  %v8451 = vunpack.c.l.b16 %v8198
  %v8452 = vunpack.c.h.b16 %v8198
  %v8453 = vunpack.c.l.b16 %v8199
  %v8454 = vunpack.c.h.b16 %v8199
  %v8455 = vunpack.c.l.b16 %v8200
  %v8456 = vunpack.c.h.b16 %v8200
  %v8457 = vunpack.c.l.b16 %v8201
  %v8458 = vunpack.c.h.b16 %v8201
  %v8459 = vunpack.c.l.b16 %v8202
  %v8460 = vunpack.c.h.b16 %v8202
  %v8461 = vunpack.c.l.b16 %v8203
  %v8462 = vunpack.c.h.b16 %v8203
  %v8463 = vunpack.c.l.b16 %v8204
  %v8464 = vunpack.c.h.b16 %v8204
  %v8465 = vunpack.c.l.b16 %v8205
  %v8466 = vunpack.c.h.b16 %v8205
  %v8467 = vunpack.c.l.b16 %v8206
  %v8468 = vunpack.c.h.b16 %v8206
  %v8469 = vunpack.c.l.b16 %v8207
  %v8470 = vunpack.c.h.b16 %v8207
  %v8471 = vunpack.c.l.b16 %v8208
  %v8472 = vunpack.c.h.b16 %v8208
  %v8473 = vunpack.c.l.b16 %v8209
  %v8474 = vunpack.c.h.b16 %v8209
  %v8475 = vunpack.c.l.b16 %v8210
  %v8476 = vunpack.c.h.b16 %v8210
  %v8477 = vunpack.c.l.b16 %v8211
  %v8478 = vunpack.c.h.b16 %v8211
  %v8479 = vunpack.c.l.b16 %v8212
  %v8480 = vunpack.c.h.b16 %v8212
  %v8481 = vunpack.c.l.b16 %v8213
  %v8482 = vunpack.c.h.b16 %v8213
  %v8483 = vunpack.c.l.b16 %v8214
  %v8484 = vunpack.c.h.b16 %v8214
  %v8485 = vunpack.c.l.b16 %v8215
  %v8486 = vunpack.c.h.b16 %v8215
  %v8487 = vunpack.c.l.b16 %v8216
  %v8488 = vunpack.c.h.b16 %v8216
  %v8489 = vunpack.c.l.b16 %v8217
  %v8490 = vunpack.c.h.b16 %v8217
  %v8491 = vunpack.c.l.b16 %v8218
  %v8492 = vunpack.c.h.b16 %v8218
  %v8493 = vunpack.c.l.b16 %v8219
  %v8494 = vunpack.c.h.b16 %v8219
  %v8495 = vunpack.c.l.b16 %v8220
  %v8496 = vunpack.c.h.b16 %v8220
  %v8497 = vpack.c.b16 %v8385, %v8369
  %v8498 = vpack.c.b16 %v8386, %v8370
  %v8499 = vpack.c.b16 %v8387, %v8371
  %v8500 = vpack.c.b16 %v8388, %v8372
  %v8501 = vpack.c.b16 %v8389, %v8373
  %v8502 = vpack.c.b16 %v8390, %v8374
  %v8503 = vpack.c.b16 %v8391, %v8375
  %v8504 = vpack.c.b16 %v8392, %v8376
  %v8505 = vpack.c.b16 %v8393, %v8377
  %v8506 = vpack.c.b16 %v8394, %v8378
  %v8507 = vpack.c.b16 %v8395, %v8379
  %v8508 = vpack.c.b16 %v8396, %v8380
  %v8509 = vpack.c.b16 %v8397, %v8381
  %v8510 = vpack.c.b16 %v8398, %v8382
  %v8511 = vpack.c.b16 %v8399, %v8383
  %v8512 = vpack.c.b16 %v8400, %v8384
  %v8513 = vpack.c.b16 %v8417, %v8401
  %v8514 = vpack.c.b16 %v8418, %v8402
  %v8515 = vpack.c.b16 %v8419, %v8403
  %v8516 = vpack.c.b16 %v8420, %v8404
  %v8517 = vpack.c.b16 %v8421, %v8405
  %v8518 = vpack.c.b16 %v8422, %v8406
  %v8519 = vpack.c.b16 %v8423, %v8407
  %v8520 = vpack.c.b16 %v8424, %v8408
  %v8521 = vpack.c.b16 %v8425, %v8409
  %v8522 = vpack.c.b16 %v8426, %v8410
  %v8523 = vpack.c.b16 %v8427, %v8411
  %v8524 = vpack.c.b16 %v8428, %v8412
  %v8525 = vpack.c.b16 %v8429, %v8413
  %v8526 = vpack.c.b16 %v8430, %v8414
  %v8527 = vpack.c.b16 %v8431, %v8415
  %v8528 = vpack.c.b16 %v8432, %v8416
  %v8529 = vpack.c.b16 %v8449, %v8433
  %v8530 = vpack.c.b16 %v8450, %v8434
  %v8531 = vpack.c.b16 %v8451, %v8435
  %v8532 = vpack.c.b16 %v8452, %v8436
  %v8533 = vpack.c.b16 %v8453, %v8437
  %v8534 = vpack.c.b16 %v8454, %v8438
  %v8535 = vpack.c.b16 %v8455, %v8439
  %v8536 = vpack.c.b16 %v8456, %v8440
  %v8537 = vpack.c.b16 %v8457, %v8441
  %v8538 = vpack.c.b16 %v8458, %v8442
  %v8539 = vpack.c.b16 %v8459, %v8443
  %v8540 = vpack.c.b16 %v8460, %v8444
  %v8541 = vpack.c.b16 %v8461, %v8445
  %v8542 = vpack.c.b16 %v8462, %v8446
  %v8543 = vpack.c.b16 %v8463, %v8447
  %v8544 = vpack.c.b16 %v8464, %v8448
  %v8545 = vpack.c.b16 %v8481, %v8465
  %v8546 = vpack.c.b16 %v8482, %v8466
  %v8547 = vpack.c.b16 %v8483, %v8467
  %v8548 = vpack.c.b16 %v8484, %v8468
  %v8549 = vpack.c.b16 %v8485, %v8469
  %v8550 = vpack.c.b16 %v8486, %v8470
  %v8551 = vpack.c.b16 %v8487, %v8471
  %v8552 = vpack.c.b16 %v8488, %v8472
  %v8553 = vpack.c.b16 %v8489, %v8473
  %v8554 = vpack.c.b16 %v8490, %v8474
  %v8555 = vpack.c.b16 %v8491, %v8475
  %v8556 = vpack.c.b16 %v8492, %v8476
  %v8557 = vpack.c.b16 %v8493, %v8477
  %v8558 = vpack.c.b16 %v8494, %v8478
  %v8559 = vpack.c.b16 %v8495, %v8479
  %v8560 = vpack.c.b16 %v8496, %v8480
  %v8626 = vsel %vm5463, %v8155, 0
  %v8629 = vsel %vm5463, %v8156, 0
  %8631 = vmatprep.subr.bf16.mxu0 0
  %8632 = vmatpush1.bf16.msra.mxu0 0
  %8633 = vmatprep.subr.bf16.mxu0 0
  %8634 = vmatpush1.bf16.msra.mxu0 0
  %8635 = vmatprep.subr.bf16.mxu0 0
  %8636 = vmatpush1.bf16.msra.mxu0 0
  %8637 = vmatprep.subr.bf16.mxu0 0
  %8638 = vmatpush1.bf16.msra.mxu0 0
  %8639 = vmatprep.subr.bf16.mxu0 %v8546
  %8640 = vmatpush1.bf16.msra.mxu0 %v8545
  %8641 = vmatprep.subr.bf16.mxu0 %v8530
  %8642 = vmatpush1.bf16.msra.mxu0 %v8529
  %8643 = vmatprep.subr.bf16.mxu0 %v8514
  %8644 = vmatpush1.bf16.msra.mxu0 %v8513
  %8645 = vmatprep.subr.bf16.mxu0 %v8498
  %8646 = vmatpush1.bf16.msra.mxu0 %v8497
  %8647 = vmatprep.subr.bf16.mxu0 0
  %8648 = vmatpush2.bf16.msra.mxu0 0
  %8649 = vmatprep.subr.bf16.mxu0 0
  %8650 = vmatpush2.bf16.msra.mxu0 0
  %8651 = vmatprep.subr.bf16.mxu0 0
  %8652 = vmatpush2.bf16.msra.mxu0 0
  %8653 = vmatprep.subr.bf16.mxu0 0
  %8654 = vmatpush2.bf16.msra.mxu0 0
  %8655 = vmatprep.subr.bf16.mxu0 0
  %8656 = vmatpush2.bf16.msra.mxu0 0
  %8657 = vmatprep.subr.bf16.mxu0 0
  %8658 = vmatpush2.bf16.msra.mxu0 0
  %8659 = vmatprep.subr.bf16.mxu0 0
  %8660 = vmatpush2.bf16.msra.mxu0 0
  %8661 = vmatprep.subr.bf16.mxu0 0
  %8662 = vmatpush2.bf16.msra.mxu0 0
  %8663 = vmatprep.mubr.bf16.mxu0 0
  %8664 = vmatmul.mubr.bf16.gmra.mxu0 %v8626
  %v8665 = vpop.f32.mrf.mxu0
  %v8666 = vadd.f32 %v8228, %v8665
  %v8667 = vpop.f32.mrf.mxu0
  %v8668 = vadd.f32 %v8232, %v8667
  %v8669 = vpop.f32.mrf.mxu0
  %v8670 = vadd.f32 %v8228, %v8669
  %v8671 = vpop.f32.mrf.mxu0
  %v8672 = vadd.f32 %v8232, %v8671
  %8673 = vmatprep.mubr.bf16.mxu0 0
  %8674 = vmatmul.mubr.bf16.gmra.mxu0 %v8629
  %v8675 = vpop.f32.mrf.mxu0
  %v8676 = vadd.f32 %v8228, %v8675
  %v8677 = vpop.f32.mrf.mxu0
  %v8678 = vadd.f32 %v8232, %v8677
  %v8679 = vpop.f32.mrf.mxu0
  %v8680 = vadd.f32 %v8228, %v8679
  %v8681 = vpop.f32.mrf.mxu0
  %v8682 = vadd.f32 %v8232, %v8681
  %8683 = vdwg.mxu0
  %8684 = vmatprep.subr.bf16.mxu0 0
  %8685 = vmatpush1.bf16.msra.mxu0 0
  %8686 = vmatprep.subr.bf16.mxu0 0
  %8687 = vmatpush1.bf16.msra.mxu0 0
  %8688 = vmatprep.subr.bf16.mxu0 0
  %8689 = vmatpush1.bf16.msra.mxu0 0
  %8690 = vmatprep.subr.bf16.mxu0 0
  %8691 = vmatpush1.bf16.msra.mxu0 0
  %8692 = vmatprep.subr.bf16.mxu0 %v8548
  %8693 = vmatpush1.bf16.msra.mxu0 %v8547
  %8694 = vmatprep.subr.bf16.mxu0 %v8532
  %8695 = vmatpush1.bf16.msra.mxu0 %v8531
  %8696 = vmatprep.subr.bf16.mxu0 %v8516
  %8697 = vmatpush1.bf16.msra.mxu0 %v8515
  %8698 = vmatprep.subr.bf16.mxu0 %v8500
  %8699 = vmatpush1.bf16.msra.mxu0 %v8499
  %8700 = vmatprep.subr.bf16.mxu0 0
  %8701 = vmatpush2.bf16.msra.mxu0 0
  %8702 = vmatprep.subr.bf16.mxu0 0
  %8703 = vmatpush2.bf16.msra.mxu0 0
  %8704 = vmatprep.subr.bf16.mxu0 0
  %8705 = vmatpush2.bf16.msra.mxu0 0
  %8706 = vmatprep.subr.bf16.mxu0 0
  %8707 = vmatpush2.bf16.msra.mxu0 0
  %8708 = vmatprep.subr.bf16.mxu0 0
  %8709 = vmatpush2.bf16.msra.mxu0 0
  %8710 = vmatprep.subr.bf16.mxu0 0
  %8711 = vmatpush2.bf16.msra.mxu0 0
  %8712 = vmatprep.subr.bf16.mxu0 0
  %8713 = vmatpush2.bf16.msra.mxu0 0
  %8714 = vmatprep.subr.bf16.mxu0 0
  %8715 = vmatpush2.bf16.msra.mxu0 0
  %8716 = vmatprep.mubr.bf16.mxu0 0
  %8717 = vmatmul.mubr.bf16.gmra.mxu0 %v8626
  %v8718 = vpop.f32.mrf.mxu0
  %v8719 = vadd.f32 %v8236, %v8718
  %v8720 = vpop.f32.mrf.mxu0
  %v8721 = vadd.f32 %v8240, %v8720
  %v8722 = vpop.f32.mrf.mxu0
  %v8723 = vadd.f32 %v8236, %v8722
  %v8724 = vpop.f32.mrf.mxu0
  %v8725 = vadd.f32 %v8240, %v8724
  %8726 = vmatprep.mubr.bf16.mxu0 0
  %8727 = vmatmul.mubr.bf16.gmra.mxu0 %v8629
  %v8728 = vpop.f32.mrf.mxu0
  %v8729 = vadd.f32 %v8236, %v8728
  %v8730 = vpop.f32.mrf.mxu0
  %v8731 = vadd.f32 %v8240, %v8730
  %v8732 = vpop.f32.mrf.mxu0
  %v8733 = vadd.f32 %v8236, %v8732
  %v8734 = vpop.f32.mrf.mxu0
  %v8735 = vadd.f32 %v8240, %v8734
  %8736 = vdwg.mxu0
  %8737 = vmatprep.subr.bf16.mxu0 0
  %8738 = vmatpush1.bf16.msra.mxu0 0
  %8739 = vmatprep.subr.bf16.mxu0 0
  %8740 = vmatpush1.bf16.msra.mxu0 0
  %8741 = vmatprep.subr.bf16.mxu0 0
  %8742 = vmatpush1.bf16.msra.mxu0 0
  %8743 = vmatprep.subr.bf16.mxu0 0
  %8744 = vmatpush1.bf16.msra.mxu0 0
  %8745 = vmatprep.subr.bf16.mxu0 %v8550
  %8746 = vmatpush1.bf16.msra.mxu0 %v8549
  %8747 = vmatprep.subr.bf16.mxu0 %v8534
  %8748 = vmatpush1.bf16.msra.mxu0 %v8533
  %8749 = vmatprep.subr.bf16.mxu0 %v8518
  %8750 = vmatpush1.bf16.msra.mxu0 %v8517
  %8751 = vmatprep.subr.bf16.mxu0 %v8502
  %8752 = vmatpush1.bf16.msra.mxu0 %v8501
  %8753 = vmatprep.subr.bf16.mxu0 0
  %8754 = vmatpush2.bf16.msra.mxu0 0
  %8755 = vmatprep.subr.bf16.mxu0 0
  %8756 = vmatpush2.bf16.msra.mxu0 0
  %8757 = vmatprep.subr.bf16.mxu0 0
  %8758 = vmatpush2.bf16.msra.mxu0 0
  %8759 = vmatprep.subr.bf16.mxu0 0
  %8760 = vmatpush2.bf16.msra.mxu0 0
  %8761 = vmatprep.subr.bf16.mxu0 0
  %8762 = vmatpush2.bf16.msra.mxu0 0
  %8763 = vmatprep.subr.bf16.mxu0 0
  %8764 = vmatpush2.bf16.msra.mxu0 0
  %8765 = vmatprep.subr.bf16.mxu0 0
  %8766 = vmatpush2.bf16.msra.mxu0 0
  %8767 = vmatprep.subr.bf16.mxu0 0
  %8768 = vmatpush2.bf16.msra.mxu0 0
  %8769 = vmatprep.mubr.bf16.mxu0 0
  %8770 = vmatmul.mubr.bf16.gmra.mxu0 %v8626
  %v8771 = vpop.f32.mrf.mxu0
  %v8772 = vadd.f32 %v8244, %v8771
  %v8773 = vpop.f32.mrf.mxu0
  %v8774 = vadd.f32 %v8248, %v8773
  %v8775 = vpop.f32.mrf.mxu0
  %v8776 = vadd.f32 %v8244, %v8775
  %v8777 = vpop.f32.mrf.mxu0
  %v8778 = vadd.f32 %v8248, %v8777
  %8779 = vmatprep.mubr.bf16.mxu0 0
  %8780 = vmatmul.mubr.bf16.gmra.mxu0 %v8629
  %v8781 = vpop.f32.mrf.mxu0
  %v8782 = vadd.f32 %v8244, %v8781
  %v8783 = vpop.f32.mrf.mxu0
  %v8784 = vadd.f32 %v8248, %v8783
  %v8785 = vpop.f32.mrf.mxu0
  %v8786 = vadd.f32 %v8244, %v8785
  %v8787 = vpop.f32.mrf.mxu0
  %v8788 = vadd.f32 %v8248, %v8787
  %8789 = vdwg.mxu0
  %8790 = vmatprep.subr.bf16.mxu0 0
  %8791 = vmatpush1.bf16.msra.mxu0 0
  %8792 = vmatprep.subr.bf16.mxu0 0
  %8793 = vmatpush1.bf16.msra.mxu0 0
  %8794 = vmatprep.subr.bf16.mxu0 0
  %8795 = vmatpush1.bf16.msra.mxu0 0
  %8796 = vmatprep.subr.bf16.mxu0 0
  %8797 = vmatpush1.bf16.msra.mxu0 0
  %8798 = vmatprep.subr.bf16.mxu0 %v8552
  %8799 = vmatpush1.bf16.msra.mxu0 %v8551
  %8800 = vmatprep.subr.bf16.mxu0 %v8536
  %8801 = vmatpush1.bf16.msra.mxu0 %v8535
  %8802 = vmatprep.subr.bf16.mxu0 %v8520
  %8803 = vmatpush1.bf16.msra.mxu0 %v8519
  %8804 = vmatprep.subr.bf16.mxu0 %v8504
  %8805 = vmatpush1.bf16.msra.mxu0 %v8503
  %8806 = vmatprep.subr.bf16.mxu0 0
  %8807 = vmatpush2.bf16.msra.mxu0 0
  %8808 = vmatprep.subr.bf16.mxu0 0
  %8809 = vmatpush2.bf16.msra.mxu0 0
  %8810 = vmatprep.subr.bf16.mxu0 0
  %8811 = vmatpush2.bf16.msra.mxu0 0
  %8812 = vmatprep.subr.bf16.mxu0 0
  %8813 = vmatpush2.bf16.msra.mxu0 0
  %8814 = vmatprep.subr.bf16.mxu0 0
  %8815 = vmatpush2.bf16.msra.mxu0 0
  %8816 = vmatprep.subr.bf16.mxu0 0
  %8817 = vmatpush2.bf16.msra.mxu0 0
  %8818 = vmatprep.subr.bf16.mxu0 0
  %8819 = vmatpush2.bf16.msra.mxu0 0
  %8820 = vmatprep.subr.bf16.mxu0 0
  %8821 = vmatpush2.bf16.msra.mxu0 0
  %8822 = vmatprep.mubr.bf16.mxu0 0
  %8823 = vmatmul.mubr.bf16.gmra.mxu0 %v8626
  %v8824 = vpop.f32.mrf.mxu0
  %v8825 = vadd.f32 %v8252, %v8824
  %v8826 = vpop.f32.mrf.mxu0
  %v8827 = vadd.f32 %v8256, %v8826
  %v8828 = vpop.f32.mrf.mxu0
  %v8829 = vadd.f32 %v8252, %v8828
  %v8830 = vpop.f32.mrf.mxu0
  %v8831 = vadd.f32 %v8256, %v8830
  %8832 = vmatprep.mubr.bf16.mxu0 0
  %8833 = vmatmul.mubr.bf16.gmra.mxu0 %v8629
  %v8834 = vpop.f32.mrf.mxu0
  %v8835 = vadd.f32 %v8252, %v8834
  %v8836 = vpop.f32.mrf.mxu0
  %v8837 = vadd.f32 %v8256, %v8836
  %v8838 = vpop.f32.mrf.mxu0
  %v8839 = vadd.f32 %v8252, %v8838
  %v8840 = vpop.f32.mrf.mxu0
  %v8841 = vadd.f32 %v8256, %v8840
  %8842 = vdwg.mxu0
  %8843 = vmatprep.subr.bf16.mxu0 0
  %8844 = vmatpush1.bf16.msra.mxu0 0
  %8845 = vmatprep.subr.bf16.mxu0 0
  %8846 = vmatpush1.bf16.msra.mxu0 0
  %8847 = vmatprep.subr.bf16.mxu0 0
  %8848 = vmatpush1.bf16.msra.mxu0 0
  %8849 = vmatprep.subr.bf16.mxu0 0
  %8850 = vmatpush1.bf16.msra.mxu0 0
  %8851 = vmatprep.subr.bf16.mxu0 %v8554
  %8852 = vmatpush1.bf16.msra.mxu0 %v8553
  %8853 = vmatprep.subr.bf16.mxu0 %v8538
  %8854 = vmatpush1.bf16.msra.mxu0 %v8537
  %8855 = vmatprep.subr.bf16.mxu0 %v8522
  %8856 = vmatpush1.bf16.msra.mxu0 %v8521
  %8857 = vmatprep.subr.bf16.mxu0 %v8506
  %8858 = vmatpush1.bf16.msra.mxu0 %v8505
  %8859 = vmatprep.subr.bf16.mxu0 0
  %8860 = vmatpush2.bf16.msra.mxu0 0
  %8861 = vmatprep.subr.bf16.mxu0 0
  %8862 = vmatpush2.bf16.msra.mxu0 0
  %8863 = vmatprep.subr.bf16.mxu0 0
  %8864 = vmatpush2.bf16.msra.mxu0 0
  %8865 = vmatprep.subr.bf16.mxu0 0
  %8866 = vmatpush2.bf16.msra.mxu0 0
  %8867 = vmatprep.subr.bf16.mxu0 0
  %8868 = vmatpush2.bf16.msra.mxu0 0
  %8869 = vmatprep.subr.bf16.mxu0 0
  %8870 = vmatpush2.bf16.msra.mxu0 0
  %8871 = vmatprep.subr.bf16.mxu0 0
  %8872 = vmatpush2.bf16.msra.mxu0 0
  %8873 = vmatprep.subr.bf16.mxu0 0
  %8874 = vmatpush2.bf16.msra.mxu0 0
  %8875 = vmatprep.mubr.bf16.mxu0 0
  %8876 = vmatmul.mubr.bf16.gmra.mxu0 %v8626
  %v8877 = vpop.f32.mrf.mxu0
  %v8878 = vadd.f32 %v8260, %v8877
  %v8879 = vpop.f32.mrf.mxu0
  %v8880 = vadd.f32 %v8264, %v8879
  %v8881 = vpop.f32.mrf.mxu0
  %v8882 = vadd.f32 %v8260, %v8881
  %v8883 = vpop.f32.mrf.mxu0
  %v8884 = vadd.f32 %v8264, %v8883
  %8885 = vmatprep.mubr.bf16.mxu0 0
  %8886 = vmatmul.mubr.bf16.gmra.mxu0 %v8629
  %v8887 = vpop.f32.mrf.mxu0
  %v8888 = vadd.f32 %v8260, %v8887
  %v8889 = vpop.f32.mrf.mxu0
  %v8890 = vadd.f32 %v8264, %v8889
  %v8891 = vpop.f32.mrf.mxu0
  %v8892 = vadd.f32 %v8260, %v8891
  %v8893 = vpop.f32.mrf.mxu0
  %v8894 = vadd.f32 %v8264, %v8893
  %8895 = vdwg.mxu0
  %8896 = vmatprep.subr.bf16.mxu0 0
  %8897 = vmatpush1.bf16.msra.mxu0 0
  %8898 = vmatprep.subr.bf16.mxu0 0
  %8899 = vmatpush1.bf16.msra.mxu0 0
  %8900 = vmatprep.subr.bf16.mxu0 0
  %8901 = vmatpush1.bf16.msra.mxu0 0
  %8902 = vmatprep.subr.bf16.mxu0 0
  %8903 = vmatpush1.bf16.msra.mxu0 0
  %8904 = vmatprep.subr.bf16.mxu0 %v8556
  %8905 = vmatpush1.bf16.msra.mxu0 %v8555
  %8906 = vmatprep.subr.bf16.mxu0 %v8540
  %8907 = vmatpush1.bf16.msra.mxu0 %v8539
  %8908 = vmatprep.subr.bf16.mxu0 %v8524
  %8909 = vmatpush1.bf16.msra.mxu0 %v8523
  %8910 = vmatprep.subr.bf16.mxu0 %v8508
  %8911 = vmatpush1.bf16.msra.mxu0 %v8507
  %8912 = vmatprep.subr.bf16.mxu0 0
  %8913 = vmatpush2.bf16.msra.mxu0 0
  %8914 = vmatprep.subr.bf16.mxu0 0
  %8915 = vmatpush2.bf16.msra.mxu0 0
  %8916 = vmatprep.subr.bf16.mxu0 0
  %8917 = vmatpush2.bf16.msra.mxu0 0
  %8918 = vmatprep.subr.bf16.mxu0 0
  %8919 = vmatpush2.bf16.msra.mxu0 0
  %8920 = vmatprep.subr.bf16.mxu0 0
  %8921 = vmatpush2.bf16.msra.mxu0 0
  %8922 = vmatprep.subr.bf16.mxu0 0
  %8923 = vmatpush2.bf16.msra.mxu0 0
  %8924 = vmatprep.subr.bf16.mxu0 0
  %8925 = vmatpush2.bf16.msra.mxu0 0
  %8926 = vmatprep.subr.bf16.mxu0 0
  %8927 = vmatpush2.bf16.msra.mxu0 0
  %8928 = vmatprep.mubr.bf16.mxu0 0
  %8929 = vmatmul.mubr.bf16.gmra.mxu0 %v8626
  %v8930 = vpop.f32.mrf.mxu0
  %v8931 = vadd.f32 %v8268, %v8930
  %v8932 = vpop.f32.mrf.mxu0
  %v8933 = vadd.f32 %v8272, %v8932
  %v8934 = vpop.f32.mrf.mxu0
  %v8935 = vadd.f32 %v8268, %v8934
  %v8936 = vpop.f32.mrf.mxu0
  %v8937 = vadd.f32 %v8272, %v8936
  %8938 = vmatprep.mubr.bf16.mxu0 0
  %8939 = vmatmul.mubr.bf16.gmra.mxu0 %v8629
  %v8940 = vpop.f32.mrf.mxu0
  %v8941 = vadd.f32 %v8268, %v8940
  %v8942 = vpop.f32.mrf.mxu0
  %v8943 = vadd.f32 %v8272, %v8942
  %v8944 = vpop.f32.mrf.mxu0
  %v8945 = vadd.f32 %v8268, %v8944
  %v8946 = vpop.f32.mrf.mxu0
  %v8947 = vadd.f32 %v8272, %v8946
  %8948 = vdwg.mxu0
  %8949 = vmatprep.subr.bf16.mxu0 0
  %8950 = vmatpush1.bf16.msra.mxu0 0
  %8951 = vmatprep.subr.bf16.mxu0 0
  %8952 = vmatpush1.bf16.msra.mxu0 0
  %8953 = vmatprep.subr.bf16.mxu0 0
  %8954 = vmatpush1.bf16.msra.mxu0 0
  %8955 = vmatprep.subr.bf16.mxu0 0
  %8956 = vmatpush1.bf16.msra.mxu0 0
  %8957 = vmatprep.subr.bf16.mxu0 %v8558
  %8958 = vmatpush1.bf16.msra.mxu0 %v8557
  %8959 = vmatprep.subr.bf16.mxu0 %v8542
  %8960 = vmatpush1.bf16.msra.mxu0 %v8541
  %8961 = vmatprep.subr.bf16.mxu0 %v8526
  %8962 = vmatpush1.bf16.msra.mxu0 %v8525
  %8963 = vmatprep.subr.bf16.mxu0 %v8510
  %8964 = vmatpush1.bf16.msra.mxu0 %v8509
  %8965 = vmatprep.subr.bf16.mxu0 0
  %8966 = vmatpush2.bf16.msra.mxu0 0
  %8967 = vmatprep.subr.bf16.mxu0 0
  %8968 = vmatpush2.bf16.msra.mxu0 0
  %8969 = vmatprep.subr.bf16.mxu0 0
  %8970 = vmatpush2.bf16.msra.mxu0 0
  %8971 = vmatprep.subr.bf16.mxu0 0
  %8972 = vmatpush2.bf16.msra.mxu0 0
  %8973 = vmatprep.subr.bf16.mxu0 0
  %8974 = vmatpush2.bf16.msra.mxu0 0
  %8975 = vmatprep.subr.bf16.mxu0 0
  %8976 = vmatpush2.bf16.msra.mxu0 0
  %8977 = vmatprep.subr.bf16.mxu0 0
  %8978 = vmatpush2.bf16.msra.mxu0 0
  %8979 = vmatprep.subr.bf16.mxu0 0
  %8980 = vmatpush2.bf16.msra.mxu0 0
  %8981 = vmatprep.mubr.bf16.mxu0 0
  %8982 = vmatmul.mubr.bf16.gmra.mxu0 %v8626
  %v8983 = vpop.f32.mrf.mxu0
  %v8984 = vadd.f32 %v8276, %v8983
  %v8985 = vpop.f32.mrf.mxu0
  %v8986 = vadd.f32 %v8280, %v8985
  %v8987 = vpop.f32.mrf.mxu0
  %v8988 = vadd.f32 %v8276, %v8987
  %v8989 = vpop.f32.mrf.mxu0
  %v8990 = vadd.f32 %v8280, %v8989
  %8991 = vmatprep.mubr.bf16.mxu0 0
  %8992 = vmatmul.mubr.bf16.gmra.mxu0 %v8629
  %v8993 = vpop.f32.mrf.mxu0
  %v8994 = vadd.f32 %v8276, %v8993
  %v8995 = vpop.f32.mrf.mxu0
  %v8996 = vadd.f32 %v8280, %v8995
  %v8997 = vpop.f32.mrf.mxu0
  %v8998 = vadd.f32 %v8276, %v8997
  %v8999 = vpop.f32.mrf.mxu0
  %v9000 = vadd.f32 %v8280, %v8999
  %9001 = vdwg.mxu0
  %9002 = vmatprep.subr.bf16.mxu0 0
  %9003 = vmatpush1.bf16.msra.mxu0 0
  %9004 = vmatprep.subr.bf16.mxu0 0
  %9005 = vmatpush1.bf16.msra.mxu0 0
  %9006 = vmatprep.subr.bf16.mxu0 0
  %9007 = vmatpush1.bf16.msra.mxu0 0
  %9008 = vmatprep.subr.bf16.mxu0 0
  %9009 = vmatpush1.bf16.msra.mxu0 0
  %9010 = vmatprep.subr.bf16.mxu0 %v8560
  %9011 = vmatpush1.bf16.msra.mxu0 %v8559
  %9012 = vmatprep.subr.bf16.mxu0 %v8544
  %9013 = vmatpush1.bf16.msra.mxu0 %v8543
  %9014 = vmatprep.subr.bf16.mxu0 %v8528
  %9015 = vmatpush1.bf16.msra.mxu0 %v8527
  %9016 = vmatprep.subr.bf16.mxu0 %v8512
  %9017 = vmatpush1.bf16.msra.mxu0 %v8511
  %9018 = vmatprep.subr.bf16.mxu0 0
  %9019 = vmatpush2.bf16.msra.mxu0 0
  %9020 = vmatprep.subr.bf16.mxu0 0
  %9021 = vmatpush2.bf16.msra.mxu0 0
  %9022 = vmatprep.subr.bf16.mxu0 0
  %9023 = vmatpush2.bf16.msra.mxu0 0
  %9024 = vmatprep.subr.bf16.mxu0 0
  %9025 = vmatpush2.bf16.msra.mxu0 0
  %9026 = vmatprep.subr.bf16.mxu0 0
  %9027 = vmatpush2.bf16.msra.mxu0 0
  %9028 = vmatprep.subr.bf16.mxu0 0
  %9029 = vmatpush2.bf16.msra.mxu0 0
  %9030 = vmatprep.subr.bf16.mxu0 0
  %9031 = vmatpush2.bf16.msra.mxu0 0
  %9032 = vmatprep.subr.bf16.mxu0 0
  %9033 = vmatpush2.bf16.msra.mxu0 0
  %9034 = vmatprep.mubr.bf16.mxu0 0
  %9035 = vmatmul.mubr.bf16.gmra.mxu0 %v8626
  %v9036 = vpop.f32.mrf.mxu0
  %v9037 = vadd.f32 %v8284, %v9036
  %v9038 = vpop.f32.mrf.mxu0
  %v9039 = vadd.f32 %v8288, %v9038
  %v9040 = vpop.f32.mrf.mxu0
  %v9041 = vadd.f32 %v8284, %v9040
  %v9042 = vpop.f32.mrf.mxu0
  %v9043 = vadd.f32 %v8288, %v9042
  %9044 = vmatprep.mubr.bf16.mxu0 0
  %9045 = vmatmul.mubr.bf16.gmra.mxu0 %v8629
  %v9046 = vpop.f32.mrf.mxu0
  %v9047 = vadd.f32 %v8284, %v9046
  %v9048 = vpop.f32.mrf.mxu0
  %v9049 = vadd.f32 %v8288, %v9048
  %v9050 = vpop.f32.mrf.mxu0
  %v9051 = vadd.f32 %v8284, %v9050
  %v9052 = vpop.f32.mrf.mxu0
  %v9053 = vadd.f32 %v8288, %v9052
  %9054 = vdwg.mxu0
  %v9055 = vmax.f32 %v8666, 0.0
  %v9056 = vmax.f32 %v8668, 0.0
  %v9057 = vmax.f32 %v8719, 0.0
  %v9058 = vmax.f32 %v8721, 0.0
  %v9059 = vmax.f32 %v8772, 0.0
  %v9060 = vmax.f32 %v8774, 0.0
  %v9061 = vmax.f32 %v8825, 0.0
  %v9062 = vmax.f32 %v8827, 0.0
  %v9063 = vmax.f32 %v8878, 0.0
  %v9064 = vmax.f32 %v8880, 0.0
  %v9065 = vmax.f32 %v8931, 0.0
  %v9066 = vmax.f32 %v8933, 0.0
  %v9067 = vmax.f32 %v8984, 0.0
  %v9068 = vmax.f32 %v8986, 0.0
  %v9069 = vmax.f32 %v9037, 0.0
  %v9070 = vmax.f32 %v9039, 0.0
  %v9071 = vmax.f32 %v8670, 0.0
  %v9072 = vmax.f32 %v8672, 0.0
  %v9073 = vmax.f32 %v8723, 0.0
  %v9074 = vmax.f32 %v8725, 0.0
  %v9075 = vmax.f32 %v8776, 0.0
  %v9076 = vmax.f32 %v8778, 0.0
  %v9077 = vmax.f32 %v8829, 0.0
  %v9078 = vmax.f32 %v8831, 0.0
  %v9079 = vmax.f32 %v8882, 0.0
  %v9080 = vmax.f32 %v8884, 0.0
  %v9081 = vmax.f32 %v8935, 0.0
  %v9082 = vmax.f32 %v8937, 0.0
  %v9083 = vmax.f32 %v8988, 0.0
  %v9084 = vmax.f32 %v8990, 0.0
  %v9085 = vmax.f32 %v9041, 0.0
  %v9086 = vmax.f32 %v9043, 0.0
  %v9087 = vmax.f32 %v8676, 0.0
  %v9088 = vmax.f32 %v8678, 0.0
  %v9089 = vmax.f32 %v8729, 0.0
  %v9090 = vmax.f32 %v8731, 0.0
  %v9091 = vmax.f32 %v8782, 0.0
  %v9092 = vmax.f32 %v8784, 0.0
  %v9093 = vmax.f32 %v8835, 0.0
  %v9094 = vmax.f32 %v8837, 0.0
  %v9095 = vmax.f32 %v8888, 0.0
  %v9096 = vmax.f32 %v8890, 0.0
  %v9097 = vmax.f32 %v8941, 0.0
  %v9098 = vmax.f32 %v8943, 0.0
  %v9099 = vmax.f32 %v8994, 0.0
  %v9100 = vmax.f32 %v8996, 0.0
  %v9101 = vmax.f32 %v9047, 0.0
  %v9102 = vmax.f32 %v9049, 0.0
  %v9103 = vmax.f32 %v8680, 0.0
  %v9104 = vmax.f32 %v8682, 0.0
  %v9105 = vmax.f32 %v8733, 0.0
  %v9106 = vmax.f32 %v8735, 0.0
  %v9107 = vmax.f32 %v8786, 0.0
  %v9108 = vmax.f32 %v8788, 0.0
  %v9109 = vmax.f32 %v8839, 0.0
  %v9110 = vmax.f32 %v8841, 0.0
  %v9111 = vmax.f32 %v8892, 0.0
  %v9112 = vmax.f32 %v8894, 0.0
  %v9113 = vmax.f32 %v8945, 0.0
  %v9114 = vmax.f32 %v8947, 0.0
  %v9115 = vmax.f32 %v8998, 0.0
  %v9116 = vmax.f32 %v9000, 0.0
  %v9117 = vmax.f32 %v9051, 0.0
  %v9118 = vmax.f32 %v9053, 0.0
  %v9119 = vpack.c.bf16 %v9071, %v9055
  %v9120 = vpack.c.bf16 %v9072, %v9056
  %v9121 = vpack.c.bf16 %v9073, %v9057
  %v9122 = vpack.c.bf16 %v9074, %v9058
  %v9123 = vpack.c.bf16 %v9075, %v9059
  %v9124 = vpack.c.bf16 %v9076, %v9060
  %v9125 = vpack.c.bf16 %v9077, %v9061
  %v9126 = vpack.c.bf16 %v9078, %v9062
  %v9127 = vpack.c.bf16 %v9079, %v9063
  %v9128 = vpack.c.bf16 %v9080, %v9064
  %v9129 = vpack.c.bf16 %v9081, %v9065
  %v9130 = vpack.c.bf16 %v9082, %v9066
  %v9131 = vpack.c.bf16 %v9083, %v9067
  %v9132 = vpack.c.bf16 %v9084, %v9068
  %v9133 = vpack.c.bf16 %v9085, %v9069
  %v9134 = vpack.c.bf16 %v9086, %v9070
  %v9135 = vpack.c.bf16 %v9103, %v9087
  %v9136 = vpack.c.bf16 %v9104, %v9088
  %v9137 = vpack.c.bf16 %v9105, %v9089
  %v9138 = vpack.c.bf16 %v9106, %v9090
  %v9139 = vpack.c.bf16 %v9107, %v9091
  %v9140 = vpack.c.bf16 %v9108, %v9092
  %v9141 = vpack.c.bf16 %v9109, %v9093
  %v9142 = vpack.c.bf16 %v9110, %v9094
  %v9143 = vpack.c.bf16 %v9111, %v9095
  %v9144 = vpack.c.bf16 %v9112, %v9096
  %v9145 = vpack.c.bf16 %v9113, %v9097
  %v9146 = vpack.c.bf16 %v9114, %v9098
  %v9147 = vpack.c.bf16 %v9115, %v9099
  %v9148 = vpack.c.bf16 %v9116, %v9100
  %v9149 = vpack.c.bf16 %v9117, %v9101
  %v9150 = vpack.c.bf16 %v9118, %v9102
  %v9151 = vld [vmem:[%s24] sm:$0xf]
  %v9152 = vld [vmem:[%s24 + $0x4] sm:$0xf]
  %v9153 = vld [vmem:[%s24 + $0x8] sm:$0xf]
  %v9154 = vld [vmem:[%s24 + $0xc] sm:$0xf]
  %v9155 = vld [vmem:[%s24 + $0x10] sm:$0xf]
  %v9156 = vld [vmem:[%s24 + $0x14] sm:$0xf]
  %v9157 = vld [vmem:[%s24 + $0x18] sm:$0xf]
  %v9158 = vld [vmem:[%s24 + $0x1c] sm:$0xf]
  %v9159 = vld [vmem:[%s24 + $0x20] sm:$0xf]
  %v9160 = vld [vmem:[%s24 + $0x24] sm:$0xf]
  %v9161 = vld [vmem:[%s24 + $0x28] sm:$0xf]
  %v9162 = vld [vmem:[%s24 + $0x2c] sm:$0xf]
  %v9163 = vld [vmem:[%s24 + $0x30] sm:$0xf]
  %v9164 = vld [vmem:[%s24 + $0x34] sm:$0xf]
  %v9165 = vld [vmem:[%s24 + $0x38] sm:$0xf]
  %v9166 = vld [vmem:[%s24 + $0x3c] sm:$0xf]
  %v9167 = vld [vmem:[%s24 + $0x40] sm:$0xf]
  %v9168 = vld [vmem:[%s24 + $0x44] sm:$0xf]
  %v9169 = vld [vmem:[%s24 + $0x48] sm:$0xf]
  %v9170 = vld [vmem:[%s24 + $0x4c] sm:$0xf]
  %v9171 = vld [vmem:[%s24 + $0x50] sm:$0xf]
  %v9172 = vld [vmem:[%s24 + $0x54] sm:$0xf]
  %v9173 = vld [vmem:[%s24 + $0x58] sm:$0xf]
  %v9174 = vld [vmem:[%s24 + $0x5c] sm:$0xf]
  %v9175 = vld [vmem:[%s24 + $0x60] sm:$0xf]
  %v9176 = vld [vmem:[%s24 + $0x64] sm:$0xf]
  %v9177 = vld [vmem:[%s24 + $0x68] sm:$0xf]
  %v9178 = vld [vmem:[%s24 + $0x6c] sm:$0xf]
  %v9179 = vld [vmem:[%s24 + $0x70] sm:$0xf]
  %v9180 = vld [vmem:[%s24 + $0x74] sm:$0xf]
  %v9181 = vld [vmem:[%s24 + $0x78] sm:$0xf]
  %v9182 = vld [vmem:[%s24 + $0x7c] sm:$0xf]
  %v9183 = vld [vmem:[%s24 + $0x80] sm:$0xf]
  %v9184 = vld [vmem:[%s24 + $0x84] sm:$0xf]
  %v9185 = vld [vmem:[%s24 + $0x88] sm:$0xf]
  %v9186 = vld [vmem:[%s24 + $0x8c] sm:$0xf]
  %v9187 = vld [vmem:[%s24 + $0x90] sm:$0xf]
  %v9188 = vld [vmem:[%s24 + $0x94] sm:$0xf]
  %v9189 = vld [vmem:[%s24 + $0x98] sm:$0xf]
  %v9190 = vld [vmem:[%s24 + $0x9c] sm:$0xf]
  %v9191 = vld [vmem:[%s24 + $0xa0] sm:$0xf]
  %v9192 = vld [vmem:[%s24 + $0xa4] sm:$0xf]
  %v9193 = vld [vmem:[%s24 + $0xa8] sm:$0xf]
  %v9194 = vld [vmem:[%s24 + $0xac] sm:$0xf]
  %v9195 = vld [vmem:[%s24 + $0xb0] sm:$0xf]
  %v9196 = vld [vmem:[%s24 + $0xb4] sm:$0xf]
  %v9197 = vld [vmem:[%s24 + $0xb8] sm:$0xf]
  %v9198 = vld [vmem:[%s24 + $0xbc] sm:$0xf]
  %v9199 = vld [vmem:[%s24 + $0xc0] sm:$0xf]
  %v9200 = vld [vmem:[%s24 + $0xc4] sm:$0xf]
  %v9201 = vld [vmem:[%s24 + $0xc8] sm:$0xf]
  %v9202 = vld [vmem:[%s24 + $0xcc] sm:$0xf]
  %v9203 = vld [vmem:[%s24 + $0xd0] sm:$0xf]
  %v9204 = vld [vmem:[%s24 + $0xd4] sm:$0xf]
  %v9205 = vld [vmem:[%s24 + $0xd8] sm:$0xf]
  %v9206 = vld [vmem:[%s24 + $0xdc] sm:$0xf]
  %v9207 = vld [vmem:[%s24 + $0xe0] sm:$0xf]
  %v9208 = vld [vmem:[%s24 + $0xe4] sm:$0xf]
  %v9209 = vld [vmem:[%s24 + $0xe8] sm:$0xf]
  %v9210 = vld [vmem:[%s24 + $0xec] sm:$0xf]
  %v9211 = vld [vmem:[%s24 + $0xf0] sm:$0xf]
  %v9212 = vld [vmem:[%s24 + $0xf4] sm:$0xf]
  %v9213 = vld [vmem:[%s24 + $0xf8] sm:$0xf]
  %v9214 = vld [vmem:[%s24 + $0xfc] sm:$0xf]
  %v9215 = vld [vmem:[%s24 + $0x100] sm:$0xf]
  %v9216 = vld [vmem:[%s24 + $0x104] sm:$0xf]
  %v9217 = vld [vmem:[%s24 + $0x108] sm:$0xf]
  %v9218 = vld [vmem:[%s24 + $0x10c] sm:$0xf]
  %v9219 = vld [vmem:[%s24 + $0x110] sm:$0xf]
  %v9220 = vld [vmem:[%s24 + $0x114] sm:$0xf]
  %v9221 = vld [vmem:[%s24 + $0x118] sm:$0xf]
  %v9222 = vld [vmem:[%s24 + $0x11c] sm:$0xf]
  %v9223 = vld [vmem:[%s24 + $0x120] sm:$0xf]
  %v9224 = vld [vmem:[%s24 + $0x124] sm:$0xf]
  %v9225 = vld [vmem:[%s24 + $0x128] sm:$0xf]
  %v9226 = vld [vmem:[%s24 + $0x12c] sm:$0xf]
  %v9227 = vld [vmem:[%s24 + $0x130] sm:$0xf]
  %v9228 = vld [vmem:[%s24 + $0x134] sm:$0xf]
  %v9229 = vld [vmem:[%s24 + $0x138] sm:$0xf]
  %v9230 = vld [vmem:[%s24 + $0x13c] sm:$0xf]
  %v9231 = vld [vmem:[%s24 + $0x140] sm:$0xf]
  %v9232 = vld [vmem:[%s24 + $0x144] sm:$0xf]
  %v9233 = vld [vmem:[%s24 + $0x148] sm:$0xf]
  %v9234 = vld [vmem:[%s24 + $0x14c] sm:$0xf]
  %v9235 = vld [vmem:[%s24 + $0x150] sm:$0xf]
  %v9236 = vld [vmem:[%s24 + $0x154] sm:$0xf]
  %v9237 = vld [vmem:[%s24 + $0x158] sm:$0xf]
  %v9238 = vld [vmem:[%s24 + $0x15c] sm:$0xf]
  %v9239 = vld [vmem:[%s24 + $0x160] sm:$0xf]
  %v9240 = vld [vmem:[%s24 + $0x164] sm:$0xf]
  %v9241 = vld [vmem:[%s24 + $0x168] sm:$0xf]
  %v9242 = vld [vmem:[%s24 + $0x16c] sm:$0xf]
  %v9243 = vld [vmem:[%s24 + $0x170] sm:$0xf]
  %v9244 = vld [vmem:[%s24 + $0x174] sm:$0xf]
  %v9245 = vld [vmem:[%s24 + $0x178] sm:$0xf]
  %v9246 = vld [vmem:[%s24 + $0x17c] sm:$0xf]
  %v9247 = vld [vmem:[%s24 + $0x180] sm:$0xf]
  %v9248 = vld [vmem:[%s24 + $0x184] sm:$0xf]
  %v9249 = vld [vmem:[%s24 + $0x188] sm:$0xf]
  %v9250 = vld [vmem:[%s24 + $0x18c] sm:$0xf]
  %v9251 = vld [vmem:[%s24 + $0x190] sm:$0xf]
  %v9252 = vld [vmem:[%s24 + $0x194] sm:$0xf]
  %v9253 = vld [vmem:[%s24 + $0x198] sm:$0xf]
  %v9254 = vld [vmem:[%s24 + $0x19c] sm:$0xf]
  %v9255 = vld [vmem:[%s24 + $0x1a0] sm:$0xf]
  %v9256 = vld [vmem:[%s24 + $0x1a4] sm:$0xf]
  %v9257 = vld [vmem:[%s24 + $0x1a8] sm:$0xf]
  %v9258 = vld [vmem:[%s24 + $0x1ac] sm:$0xf]
  %v9259 = vld [vmem:[%s24 + $0x1b0] sm:$0xf]
  %v9260 = vld [vmem:[%s24 + $0x1b4] sm:$0xf]
  %v9261 = vld [vmem:[%s24 + $0x1b8] sm:$0xf]
  %v9262 = vld [vmem:[%s24 + $0x1bc] sm:$0xf]
  %v9263 = vld [vmem:[%s24 + $0x1c0] sm:$0xf]
  %v9264 = vld [vmem:[%s24 + $0x1c4] sm:$0xf]
  %v9265 = vld [vmem:[%s24 + $0x1c8] sm:$0xf]
  %v9266 = vld [vmem:[%s24 + $0x1cc] sm:$0xf]
  %v9267 = vld [vmem:[%s24 + $0x1d0] sm:$0xf]
  %v9268 = vld [vmem:[%s24 + $0x1d4] sm:$0xf]
  %v9269 = vld [vmem:[%s24 + $0x1d8] sm:$0xf]
  %v9270 = vld [vmem:[%s24 + $0x1dc] sm:$0xf]
  %v9271 = vld [vmem:[%s24 + $0x1e0] sm:$0xf]
  %v9272 = vld [vmem:[%s24 + $0x1e4] sm:$0xf]
  %v9273 = vld [vmem:[%s24 + $0x1e8] sm:$0xf]
  %v9274 = vld [vmem:[%s24 + $0x1ec] sm:$0xf]
  %v9275 = vld [vmem:[%s24 + $0x1f0] sm:$0xf]
  %v9276 = vld [vmem:[%s24 + $0x1f4] sm:$0xf]
  %v9277 = vld [vmem:[%s24 + $0x1f8] sm:$0xf]
  %v9278 = vld [vmem:[%s24 + $0x1fc] sm:$0xf]
  %v9279 = vld [vmem:[%s24 + $0x200] sm:$0xf]
  %v9280 = vld [vmem:[%s24 + $0x204] sm:$0xf]
  %v9281 = vld [vmem:[%s24 + $0x208] sm:$0xf]
  %v9282 = vld [vmem:[%s24 + $0x20c] sm:$0xf]
  %v9283 = vld [vmem:[%s24 + $0x210] sm:$0xf]
  %v9284 = vld [vmem:[%s24 + $0x214] sm:$0xf]
  %v9285 = vld [vmem:[%s24 + $0x218] sm:$0xf]
  %v9286 = vld [vmem:[%s24 + $0x21c] sm:$0xf]
  %v9287 = vld [vmem:[%s24 + $0x220] sm:$0xf]
  %v9288 = vld [vmem:[%s24 + $0x224] sm:$0xf]
  %v9289 = vld [vmem:[%s24 + $0x228] sm:$0xf]
  %v9290 = vld [vmem:[%s24 + $0x22c] sm:$0xf]
  %v9291 = vld [vmem:[%s24 + $0x230] sm:$0xf]
  %v9292 = vld [vmem:[%s24 + $0x234] sm:$0xf]
  %v9293 = vld [vmem:[%s24 + $0x238] sm:$0xf]
  %v9294 = vld [vmem:[%s24 + $0x23c] sm:$0xf]
  %v9295 = vld [vmem:[%s24 + $0x240] sm:$0xf]
  %v9296 = vld [vmem:[%s24 + $0x244] sm:$0xf]
  %v9297 = vld [vmem:[%s24 + $0x248] sm:$0xf]
  %v9298 = vld [vmem:[%s24 + $0x24c] sm:$0xf]
  %v9299 = vld [vmem:[%s24 + $0x250] sm:$0xf]
  %v9300 = vld [vmem:[%s24 + $0x254] sm:$0xf]
  %v9301 = vld [vmem:[%s24 + $0x258] sm:$0xf]
  %v9302 = vld [vmem:[%s24 + $0x25c] sm:$0xf]
  %v9303 = vld [vmem:[%s24 + $0x260] sm:$0xf]
  %v9304 = vld [vmem:[%s24 + $0x264] sm:$0xf]
  %v9305 = vld [vmem:[%s24 + $0x268] sm:$0xf]
  %v9306 = vld [vmem:[%s24 + $0x26c] sm:$0xf]
  %v9307 = vld [vmem:[%s24 + $0x270] sm:$0xf]
  %v9308 = vld [vmem:[%s24 + $0x274] sm:$0xf]
  %v9309 = vld [vmem:[%s24 + $0x278] sm:$0xf]
  %v9310 = vld [vmem:[%s24 + $0x27c] sm:$0xf]
  %v9311 = vld [vmem:[%s24 + $0x280] sm:$0xf]
  %v9312 = vld [vmem:[%s24 + $0x284] sm:$0xf]
  %v9313 = vld [vmem:[%s24 + $0x288] sm:$0xf]
  %v9314 = vld [vmem:[%s24 + $0x28c] sm:$0xf]
  %v9315 = vld [vmem:[%s24 + $0x290] sm:$0xf]
  %v9316 = vld [vmem:[%s24 + $0x294] sm:$0xf]
  %v9317 = vld [vmem:[%s24 + $0x298] sm:$0xf]
  %v9318 = vld [vmem:[%s24 + $0x29c] sm:$0xf]
  %v9319 = vld [vmem:[%s24 + $0x2a0] sm:$0xf]
  %v9320 = vld [vmem:[%s24 + $0x2a4] sm:$0xf]
  %v9321 = vld [vmem:[%s24 + $0x2a8] sm:$0xf]
  %v9322 = vld [vmem:[%s24 + $0x2ac] sm:$0xf]
  %v9323 = vld [vmem:[%s24 + $0x2b0] sm:$0xf]
  %v9324 = vld [vmem:[%s24 + $0x2b4] sm:$0xf]
  %v9325 = vld [vmem:[%s24 + $0x2b8] sm:$0xf]
  %v9326 = vld [vmem:[%s24 + $0x2bc] sm:$0xf]
  %v9327 = vld [vmem:[%s24 + $0x2c0] sm:$0xf]
  %v9328 = vld [vmem:[%s24 + $0x2c4] sm:$0xf]
  %v9329 = vld [vmem:[%s24 + $0x2c8] sm:$0xf]
  %v9330 = vld [vmem:[%s24 + $0x2cc] sm:$0xf]
  %v9331 = vld [vmem:[%s24 + $0x2d0] sm:$0xf]
  %v9332 = vld [vmem:[%s24 + $0x2d4] sm:$0xf]
  %v9333 = vld [vmem:[%s24 + $0x2d8] sm:$0xf]
  %v9334 = vld [vmem:[%s24 + $0x2dc] sm:$0xf]
  %v9335 = vld [vmem:[%s24 + $0x2e0] sm:$0xf]
  %v9336 = vld [vmem:[%s24 + $0x2e4] sm:$0xf]
  %v9337 = vld [vmem:[%s24 + $0x2e8] sm:$0xf]
  %v9338 = vld [vmem:[%s24 + $0x2ec] sm:$0xf]
  %v9339 = vld [vmem:[%s24 + $0x2f0] sm:$0xf]
  %v9340 = vld [vmem:[%s24 + $0x2f4] sm:$0xf]
  %v9341 = vld [vmem:[%s24 + $0x2f8] sm:$0xf]
  %v9342 = vld [vmem:[%s24 + $0x2fc] sm:$0xf]
  %v9343 = vld [vmem:[%s24 + $0x300] sm:$0xf]
  %v9344 = vld [vmem:[%s24 + $0x304] sm:$0xf]
  %v9345 = vld [vmem:[%s24 + $0x308] sm:$0xf]
  %v9346 = vld [vmem:[%s24 + $0x30c] sm:$0xf]
  %v9347 = vld [vmem:[%s24 + $0x310] sm:$0xf]
  %v9348 = vld [vmem:[%s24 + $0x314] sm:$0xf]
  %v9349 = vld [vmem:[%s24 + $0x318] sm:$0xf]
  %v9350 = vld [vmem:[%s24 + $0x31c] sm:$0xf]
  %v9351 = vld [vmem:[%s24 + $0x320] sm:$0xf]
  %v9352 = vld [vmem:[%s24 + $0x324] sm:$0xf]
  %v9353 = vld [vmem:[%s24 + $0x328] sm:$0xf]
  %v9354 = vld [vmem:[%s24 + $0x32c] sm:$0xf]
  %v9355 = vld [vmem:[%s24 + $0x330] sm:$0xf]
  %v9356 = vld [vmem:[%s24 + $0x334] sm:$0xf]
  %v9357 = vld [vmem:[%s24 + $0x338] sm:$0xf]
  %v9358 = vld [vmem:[%s24 + $0x33c] sm:$0xf]
  %v9359 = vld [vmem:[%s24 + $0x340] sm:$0xf]
  %v9360 = vld [vmem:[%s24 + $0x344] sm:$0xf]
  %v9361 = vld [vmem:[%s24 + $0x348] sm:$0xf]
  %v9362 = vld [vmem:[%s24 + $0x34c] sm:$0xf]
  %v9363 = vld [vmem:[%s24 + $0x350] sm:$0xf]
  %v9364 = vld [vmem:[%s24 + $0x354] sm:$0xf]
  %v9365 = vld [vmem:[%s24 + $0x358] sm:$0xf]
  %v9366 = vld [vmem:[%s24 + $0x35c] sm:$0xf]
  %v9367 = vld [vmem:[%s24 + $0x360] sm:$0xf]
  %v9368 = vld [vmem:[%s24 + $0x364] sm:$0xf]
  %v9369 = vld [vmem:[%s24 + $0x368] sm:$0xf]
  %v9370 = vld [vmem:[%s24 + $0x36c] sm:$0xf]
  %v9371 = vld [vmem:[%s24 + $0x370] sm:$0xf]
  %v9372 = vld [vmem:[%s24 + $0x374] sm:$0xf]
  %v9373 = vld [vmem:[%s24 + $0x378] sm:$0xf]
  %v9374 = vld [vmem:[%s24 + $0x37c] sm:$0xf]
  %v9375 = vld [vmem:[%s24 + $0x380] sm:$0xf]
  %v9376 = vld [vmem:[%s24 + $0x384] sm:$0xf]
  %v9377 = vld [vmem:[%s24 + $0x388] sm:$0xf]
  %v9378 = vld [vmem:[%s24 + $0x38c] sm:$0xf]
  %v9379 = vld [vmem:[%s24 + $0x390] sm:$0xf]
  %v9380 = vld [vmem:[%s24 + $0x394] sm:$0xf]
  %v9381 = vld [vmem:[%s24 + $0x398] sm:$0xf]
  %v9382 = vld [vmem:[%s24 + $0x39c] sm:$0xf]
  %v9383 = vld [vmem:[%s24 + $0x3a0] sm:$0xf]
  %v9384 = vld [vmem:[%s24 + $0x3a4] sm:$0xf]
  %v9385 = vld [vmem:[%s24 + $0x3a8] sm:$0xf]
  %v9386 = vld [vmem:[%s24 + $0x3ac] sm:$0xf]
  %v9387 = vld [vmem:[%s24 + $0x3b0] sm:$0xf]
  %v9388 = vld [vmem:[%s24 + $0x3b4] sm:$0xf]
  %v9389 = vld [vmem:[%s24 + $0x3b8] sm:$0xf]
  %v9390 = vld [vmem:[%s24 + $0x3bc] sm:$0xf]
  %v9391 = vld [vmem:[%s24 + $0x3c0] sm:$0xf]
  %v9392 = vld [vmem:[%s24 + $0x3c4] sm:$0xf]
  %v9393 = vld [vmem:[%s24 + $0x3c8] sm:$0xf]
  %v9394 = vld [vmem:[%s24 + $0x3cc] sm:$0xf]
  %v9395 = vld [vmem:[%s24 + $0x3d0] sm:$0xf]
  %v9396 = vld [vmem:[%s24 + $0x3d4] sm:$0xf]
  %v9397 = vld [vmem:[%s24 + $0x3d8] sm:$0xf]
  %v9398 = vld [vmem:[%s24 + $0x3dc] sm:$0xf]
  %v9399 = vld [vmem:[%s24 + $0x3e0] sm:$0xf]
  %v9400 = vld [vmem:[%s24 + $0x3e4] sm:$0xf]
  %v9401 = vld [vmem:[%s24 + $0x3e8] sm:$0xf]
  %v9402 = vld [vmem:[%s24 + $0x3ec] sm:$0xf]
  %v9403 = vld [vmem:[%s24 + $0x3f0] sm:$0xf]
  %v9404 = vld [vmem:[%s24 + $0x3f4] sm:$0xf]
  %v9405 = vld [vmem:[%s24 + $0x3f8] sm:$0xf]
  %v9406 = vld [vmem:[%s24 + $0x3fc] sm:$0xf]
  %v9407 = vld [vmem:[%s25] sm:$0x1]
  %v9409 = vlaneseq
  %v9410 = vshrl.u32 %v9409, 7
  %v9411 = vsub.s32 0, %v9410
  %v9412 = vrot.slane %v9407, %v9411
  %v9670 = vunpack.c.l.b16 %v9151
  %v9671 = vunpack.c.l.b16 %v9152
  %v9672 = vunpack.c.l.b16 %v9153
  %v9673 = vunpack.c.l.b16 %v9154
  %v9674 = vunpack.c.l.b16 %v9155
  %v9675 = vunpack.c.l.b16 %v9156
  %v9676 = vunpack.c.l.b16 %v9157
  %v9677 = vunpack.c.l.b16 %v9158
  %v9678 = vunpack.c.l.b16 %v9159
  %v9679 = vunpack.c.l.b16 %v9160
  %v9680 = vunpack.c.l.b16 %v9161
  %v9681 = vunpack.c.l.b16 %v9162
  %v9682 = vunpack.c.l.b16 %v9163
  %v9683 = vunpack.c.l.b16 %v9164
  %v9684 = vunpack.c.l.b16 %v9165
  %v9685 = vunpack.c.l.b16 %v9166
  %v9686 = vunpack.c.l.b16 %v9167
  %v9687 = vunpack.c.l.b16 %v9168
  %v9688 = vunpack.c.l.b16 %v9169
  %v9689 = vunpack.c.l.b16 %v9170
  %v9690 = vunpack.c.l.b16 %v9171
  %v9691 = vunpack.c.l.b16 %v9172
  %v9692 = vunpack.c.l.b16 %v9173
  %v9693 = vunpack.c.l.b16 %v9174
  %v9694 = vunpack.c.l.b16 %v9175
  %v9695 = vunpack.c.l.b16 %v9176
  %v9696 = vunpack.c.l.b16 %v9177
  %v9697 = vunpack.c.l.b16 %v9178
  %v9698 = vunpack.c.l.b16 %v9179
  %v9699 = vunpack.c.l.b16 %v9180
  %v9700 = vunpack.c.l.b16 %v9181
  %v9701 = vunpack.c.l.b16 %v9182
  %v9702 = vunpack.c.l.b16 %v9183
  %v9703 = vunpack.c.l.b16 %v9184
  %v9704 = vunpack.c.l.b16 %v9185
  %v9705 = vunpack.c.l.b16 %v9186
  %v9706 = vunpack.c.l.b16 %v9187
  %v9707 = vunpack.c.l.b16 %v9188
  %v9708 = vunpack.c.l.b16 %v9189
  %v9709 = vunpack.c.l.b16 %v9190
  %v9710 = vunpack.c.l.b16 %v9191
  %v9711 = vunpack.c.l.b16 %v9192
  %v9712 = vunpack.c.l.b16 %v9193
  %v9713 = vunpack.c.l.b16 %v9194
  %v9714 = vunpack.c.l.b16 %v9195
  %v9715 = vunpack.c.l.b16 %v9196
  %v9716 = vunpack.c.l.b16 %v9197
  %v9717 = vunpack.c.l.b16 %v9198
  %v9718 = vunpack.c.l.b16 %v9199
  %v9719 = vunpack.c.l.b16 %v9200
  %v9720 = vunpack.c.l.b16 %v9201
  %v9721 = vunpack.c.l.b16 %v9202
  %v9722 = vunpack.c.l.b16 %v9203
  %v9723 = vunpack.c.l.b16 %v9204
  %v9724 = vunpack.c.l.b16 %v9205
  %v9725 = vunpack.c.l.b16 %v9206
  %v9726 = vunpack.c.l.b16 %v9207
  %v9727 = vunpack.c.l.b16 %v9208
  %v9728 = vunpack.c.l.b16 %v9209
  %v9729 = vunpack.c.l.b16 %v9210
  %v9730 = vunpack.c.l.b16 %v9211
  %v9731 = vunpack.c.l.b16 %v9212
  %v9732 = vunpack.c.l.b16 %v9213
  %v9733 = vunpack.c.l.b16 %v9214
  %v9734 = vunpack.c.l.b16 %v9215
  %v9735 = vunpack.c.l.b16 %v9216
  %v9736 = vunpack.c.l.b16 %v9217
  %v9737 = vunpack.c.l.b16 %v9218
  %v9738 = vunpack.c.l.b16 %v9219
  %v9739 = vunpack.c.l.b16 %v9220
  %v9740 = vunpack.c.l.b16 %v9221
  %v9741 = vunpack.c.l.b16 %v9222
  %v9742 = vunpack.c.l.b16 %v9223
  %v9743 = vunpack.c.l.b16 %v9224
  %v9744 = vunpack.c.l.b16 %v9225
  %v9745 = vunpack.c.l.b16 %v9226
  %v9746 = vunpack.c.l.b16 %v9227
  %v9747 = vunpack.c.l.b16 %v9228
  %v9748 = vunpack.c.l.b16 %v9229
  %v9749 = vunpack.c.l.b16 %v9230
  %v9750 = vunpack.c.l.b16 %v9231
  %v9751 = vunpack.c.l.b16 %v9232
  %v9752 = vunpack.c.l.b16 %v9233
  %v9753 = vunpack.c.l.b16 %v9234
  %v9754 = vunpack.c.l.b16 %v9235
  %v9755 = vunpack.c.l.b16 %v9236
  %v9756 = vunpack.c.l.b16 %v9237
  %v9757 = vunpack.c.l.b16 %v9238
  %v9758 = vunpack.c.l.b16 %v9239
  %v9759 = vunpack.c.l.b16 %v9240
  %v9760 = vunpack.c.l.b16 %v9241
  %v9761 = vunpack.c.l.b16 %v9242
  %v9762 = vunpack.c.l.b16 %v9243
  %v9763 = vunpack.c.l.b16 %v9244
  %v9764 = vunpack.c.l.b16 %v9245
  %v9765 = vunpack.c.l.b16 %v9246
  %v9766 = vunpack.c.l.b16 %v9247
  %v9767 = vunpack.c.l.b16 %v9248
  %v9768 = vunpack.c.l.b16 %v9249
  %v9769 = vunpack.c.l.b16 %v9250
  %v9770 = vunpack.c.l.b16 %v9251
  %v9771 = vunpack.c.l.b16 %v9252
  %v9772 = vunpack.c.l.b16 %v9253
  %v9773 = vunpack.c.l.b16 %v9254
  %v9774 = vunpack.c.l.b16 %v9255
  %v9775 = vunpack.c.l.b16 %v9256
  %v9776 = vunpack.c.l.b16 %v9257
  %v9777 = vunpack.c.l.b16 %v9258
  %v9778 = vunpack.c.l.b16 %v9259
  %v9779 = vunpack.c.l.b16 %v9260
  %v9780 = vunpack.c.l.b16 %v9261
  %v9781 = vunpack.c.l.b16 %v9262
  %v9782 = vunpack.c.l.b16 %v9263
  %v9783 = vunpack.c.l.b16 %v9264
  %v9784 = vunpack.c.l.b16 %v9265
  %v9785 = vunpack.c.l.b16 %v9266
  %v9786 = vunpack.c.l.b16 %v9267
  %v9787 = vunpack.c.l.b16 %v9268
  %v9788 = vunpack.c.l.b16 %v9269
  %v9789 = vunpack.c.l.b16 %v9270
  %v9790 = vunpack.c.l.b16 %v9271
  %v9791 = vunpack.c.l.b16 %v9272
  %v9792 = vunpack.c.l.b16 %v9273
  %v9793 = vunpack.c.l.b16 %v9274
  %v9794 = vunpack.c.l.b16 %v9275
  %v9795 = vunpack.c.l.b16 %v9276
  %v9796 = vunpack.c.l.b16 %v9277
  %v9797 = vunpack.c.l.b16 %v9278
  %v9798 = vunpack.c.l.b16 %v9279
  %v9799 = vunpack.c.l.b16 %v9280
  %v9800 = vunpack.c.l.b16 %v9281
  %v9801 = vunpack.c.l.b16 %v9282
  %v9802 = vunpack.c.l.b16 %v9283
  %v9803 = vunpack.c.l.b16 %v9284
  %v9804 = vunpack.c.l.b16 %v9285
  %v9805 = vunpack.c.l.b16 %v9286
  %v9806 = vunpack.c.l.b16 %v9287
  %v9807 = vunpack.c.l.b16 %v9288
  %v9808 = vunpack.c.l.b16 %v9289
  %v9809 = vunpack.c.l.b16 %v9290
  %v9810 = vunpack.c.l.b16 %v9291
  %v9811 = vunpack.c.l.b16 %v9292
  %v9812 = vunpack.c.l.b16 %v9293
  %v9813 = vunpack.c.l.b16 %v9294
  %v9814 = vunpack.c.l.b16 %v9295
  %v9815 = vunpack.c.l.b16 %v9296
  %v9816 = vunpack.c.l.b16 %v9297
  %v9817 = vunpack.c.l.b16 %v9298
  %v9818 = vunpack.c.l.b16 %v9299
  %v9819 = vunpack.c.l.b16 %v9300
  %v9820 = vunpack.c.l.b16 %v9301
  %v9821 = vunpack.c.l.b16 %v9302
  %v9822 = vunpack.c.l.b16 %v9303
  %v9823 = vunpack.c.l.b16 %v9304
  %v9824 = vunpack.c.l.b16 %v9305
  %v9825 = vunpack.c.l.b16 %v9306
  %v9826 = vunpack.c.l.b16 %v9307
  %v9827 = vunpack.c.l.b16 %v9308
  %v9828 = vunpack.c.l.b16 %v9309
  %v9829 = vunpack.c.l.b16 %v9310
  %v9830 = vunpack.c.l.b16 %v9311
  %v9831 = vunpack.c.l.b16 %v9312
  %v9832 = vunpack.c.l.b16 %v9313
  %v9833 = vunpack.c.l.b16 %v9314
  %v9834 = vunpack.c.l.b16 %v9315
  %v9835 = vunpack.c.l.b16 %v9316
  %v9836 = vunpack.c.l.b16 %v9317
  %v9837 = vunpack.c.l.b16 %v9318
  %v9838 = vunpack.c.l.b16 %v9319
  %v9839 = vunpack.c.l.b16 %v9320
  %v9840 = vunpack.c.l.b16 %v9321
  %v9841 = vunpack.c.l.b16 %v9322
  %v9842 = vunpack.c.l.b16 %v9323
  %v9843 = vunpack.c.l.b16 %v9324
  %v9844 = vunpack.c.l.b16 %v9325
  %v9845 = vunpack.c.l.b16 %v9326
  %v9846 = vunpack.c.l.b16 %v9327
  %v9847 = vunpack.c.l.b16 %v9328
  %v9848 = vunpack.c.l.b16 %v9329
  %v9849 = vunpack.c.l.b16 %v9330
  %v9850 = vunpack.c.l.b16 %v9331
  %v9851 = vunpack.c.l.b16 %v9332
  %v9852 = vunpack.c.l.b16 %v9333
  %v9853 = vunpack.c.l.b16 %v9334
  %v9854 = vunpack.c.l.b16 %v9335
  %v9855 = vunpack.c.l.b16 %v9336
  %v9856 = vunpack.c.l.b16 %v9337
  %v9857 = vunpack.c.l.b16 %v9338
  %v9858 = vunpack.c.l.b16 %v9339
  %v9859 = vunpack.c.l.b16 %v9340
  %v9860 = vunpack.c.l.b16 %v9341
  %v9861 = vunpack.c.l.b16 %v9342
  %v9862 = vunpack.c.l.b16 %v9343
  %v9863 = vunpack.c.l.b16 %v9344
  %v9864 = vunpack.c.l.b16 %v9345
  %v9865 = vunpack.c.l.b16 %v9346
  %v9866 = vunpack.c.l.b16 %v9347
  %v9867 = vunpack.c.l.b16 %v9348
  %v9868 = vunpack.c.l.b16 %v9349
  %v9869 = vunpack.c.l.b16 %v9350
  %v9870 = vunpack.c.l.b16 %v9351
  %v9871 = vunpack.c.l.b16 %v9352
  %v9872 = vunpack.c.l.b16 %v9353
  %v9873 = vunpack.c.l.b16 %v9354
  %v9874 = vunpack.c.l.b16 %v9355
  %v9875 = vunpack.c.l.b16 %v9356
  %v9876 = vunpack.c.l.b16 %v9357
  %v9877 = vunpack.c.l.b16 %v9358
  %v9878 = vunpack.c.l.b16 %v9359
  %v9879 = vunpack.c.l.b16 %v9360
  %v9880 = vunpack.c.l.b16 %v9361
  %v9881 = vunpack.c.l.b16 %v9362
  %v9882 = vunpack.c.l.b16 %v9363
  %v9883 = vunpack.c.l.b16 %v9364
  %v9884 = vunpack.c.l.b16 %v9365
  %v9885 = vunpack.c.l.b16 %v9366
  %v9886 = vunpack.c.l.b16 %v9367
  %v9887 = vunpack.c.l.b16 %v9368
  %v9888 = vunpack.c.l.b16 %v9369
  %v9889 = vunpack.c.l.b16 %v9370
  %v9890 = vunpack.c.l.b16 %v9371
  %v9891 = vunpack.c.l.b16 %v9372
  %v9892 = vunpack.c.l.b16 %v9373
  %v9893 = vunpack.c.l.b16 %v9374
  %v9894 = vunpack.c.l.b16 %v9375
  %v9895 = vunpack.c.l.b16 %v9376
  %v9896 = vunpack.c.l.b16 %v9377
  %v9897 = vunpack.c.l.b16 %v9378
  %v9898 = vunpack.c.l.b16 %v9379
  %v9899 = vunpack.c.l.b16 %v9380
  %v9900 = vunpack.c.l.b16 %v9381
  %v9901 = vunpack.c.l.b16 %v9382
  %v9902 = vunpack.c.l.b16 %v9383
  %v9903 = vunpack.c.l.b16 %v9384
  %v9904 = vunpack.c.l.b16 %v9385
  %v9905 = vunpack.c.l.b16 %v9386
  %v9906 = vunpack.c.l.b16 %v9387
  %v9907 = vunpack.c.l.b16 %v9388
  %v9908 = vunpack.c.l.b16 %v9389
  %v9909 = vunpack.c.l.b16 %v9390
  %v9910 = vunpack.c.l.b16 %v9391
  %v9911 = vunpack.c.l.b16 %v9392
  %v9912 = vunpack.c.l.b16 %v9393
  %v9913 = vunpack.c.l.b16 %v9394
  %v9914 = vunpack.c.l.b16 %v9395
  %v9915 = vunpack.c.l.b16 %v9396
  %v9916 = vunpack.c.l.b16 %v9397
  %v9917 = vunpack.c.l.b16 %v9398
  %v9918 = vunpack.c.l.b16 %v9399
  %v9919 = vunpack.c.l.b16 %v9400
  %v9920 = vunpack.c.l.b16 %v9401
  %v9921 = vunpack.c.l.b16 %v9402
  %v9922 = vunpack.c.l.b16 %v9403
  %v9923 = vunpack.c.l.b16 %v9404
  %v9924 = vunpack.c.l.b16 %v9405
  %v9925 = vunpack.c.l.b16 %v9406
  %v9926 = vpack.c.b16 %v9671, %v9670
  %v9927 = vpack.c.b16 %v9673, %v9672
  %v9928 = vpack.c.b16 %v9675, %v9674
  %v9929 = vpack.c.b16 %v9677, %v9676
  %v9930 = vpack.c.b16 %v9679, %v9678
  %v9931 = vpack.c.b16 %v9681, %v9680
  %v9932 = vpack.c.b16 %v9683, %v9682
  %v9933 = vpack.c.b16 %v9685, %v9684
  %v9934 = vpack.c.b16 %v9687, %v9686
  %v9935 = vpack.c.b16 %v9689, %v9688
  %v9936 = vpack.c.b16 %v9691, %v9690
  %v9937 = vpack.c.b16 %v9693, %v9692
  %v9938 = vpack.c.b16 %v9695, %v9694
  %v9939 = vpack.c.b16 %v9697, %v9696
  %v9940 = vpack.c.b16 %v9699, %v9698
  %v9941 = vpack.c.b16 %v9701, %v9700
  %v9942 = vpack.c.b16 %v9703, %v9702
  %v9943 = vpack.c.b16 %v9705, %v9704
  %v9944 = vpack.c.b16 %v9707, %v9706
  %v9945 = vpack.c.b16 %v9709, %v9708
  %v9946 = vpack.c.b16 %v9711, %v9710
  %v9947 = vpack.c.b16 %v9713, %v9712
  %v9948 = vpack.c.b16 %v9715, %v9714
  %v9949 = vpack.c.b16 %v9717, %v9716
  %v9950 = vpack.c.b16 %v9719, %v9718
  %v9951 = vpack.c.b16 %v9721, %v9720
  %v9952 = vpack.c.b16 %v9723, %v9722
  %v9953 = vpack.c.b16 %v9725, %v9724
  %v9954 = vpack.c.b16 %v9727, %v9726
  %v9955 = vpack.c.b16 %v9729, %v9728
  %v9956 = vpack.c.b16 %v9731, %v9730
  %v9957 = vpack.c.b16 %v9733, %v9732
  %v9958 = vpack.c.b16 %v9735, %v9734
  %v9959 = vpack.c.b16 %v9737, %v9736
  %v9960 = vpack.c.b16 %v9739, %v9738
  %v9961 = vpack.c.b16 %v9741, %v9740
  %v9962 = vpack.c.b16 %v9743, %v9742
  %v9963 = vpack.c.b16 %v9745, %v9744
  %v9964 = vpack.c.b16 %v9747, %v9746
  %v9965 = vpack.c.b16 %v9749, %v9748
  %v9966 = vpack.c.b16 %v9751, %v9750
  %v9967 = vpack.c.b16 %v9753, %v9752
  %v9968 = vpack.c.b16 %v9755, %v9754
  %v9969 = vpack.c.b16 %v9757, %v9756
  %v9970 = vpack.c.b16 %v9759, %v9758
  %v9971 = vpack.c.b16 %v9761, %v9760
  %v9972 = vpack.c.b16 %v9763, %v9762
  %v9973 = vpack.c.b16 %v9765, %v9764
  %v9974 = vpack.c.b16 %v9767, %v9766
  %v9975 = vpack.c.b16 %v9769, %v9768
  %v9976 = vpack.c.b16 %v9771, %v9770
  %v9977 = vpack.c.b16 %v9773, %v9772
  %v9978 = vpack.c.b16 %v9775, %v9774
  %v9979 = vpack.c.b16 %v9777, %v9776
  %v9980 = vpack.c.b16 %v9779, %v9778
  %v9981 = vpack.c.b16 %v9781, %v9780
  %v9982 = vpack.c.b16 %v9783, %v9782
  %v9983 = vpack.c.b16 %v9785, %v9784
  %v9984 = vpack.c.b16 %v9787, %v9786
  %v9985 = vpack.c.b16 %v9789, %v9788
  %v9986 = vpack.c.b16 %v9791, %v9790
  %v9987 = vpack.c.b16 %v9793, %v9792
  %v9988 = vpack.c.b16 %v9795, %v9794
  %v9989 = vpack.c.b16 %v9797, %v9796
  %v9990 = vpack.c.b16 %v9799, %v9798
  %v9991 = vpack.c.b16 %v9801, %v9800
  %v9992 = vpack.c.b16 %v9803, %v9802
  %v9993 = vpack.c.b16 %v9805, %v9804
  %v9994 = vpack.c.b16 %v9807, %v9806
  %v9995 = vpack.c.b16 %v9809, %v9808
  %v9996 = vpack.c.b16 %v9811, %v9810
  %v9997 = vpack.c.b16 %v9813, %v9812
  %v9998 = vpack.c.b16 %v9815, %v9814
  %v9999 = vpack.c.b16 %v9817, %v9816
  %v10000 = vpack.c.b16 %v9819, %v9818
  %v10001 = vpack.c.b16 %v9821, %v9820
  %v10002 = vpack.c.b16 %v9823, %v9822
  %v10003 = vpack.c.b16 %v9825, %v9824
  %v10004 = vpack.c.b16 %v9827, %v9826
  %v10005 = vpack.c.b16 %v9829, %v9828
  %v10006 = vpack.c.b16 %v9831, %v9830
  %v10007 = vpack.c.b16 %v9833, %v9832
  %v10008 = vpack.c.b16 %v9835, %v9834
  %v10009 = vpack.c.b16 %v9837, %v9836
  %v10010 = vpack.c.b16 %v9839, %v9838
  %v10011 = vpack.c.b16 %v9841, %v9840
  %v10012 = vpack.c.b16 %v9843, %v9842
  %v10013 = vpack.c.b16 %v9845, %v9844
  %v10014 = vpack.c.b16 %v9847, %v9846
  %v10015 = vpack.c.b16 %v9849, %v9848
  %v10016 = vpack.c.b16 %v9851, %v9850
  %v10017 = vpack.c.b16 %v9853, %v9852
  %v10018 = vpack.c.b16 %v9855, %v9854
  %v10019 = vpack.c.b16 %v9857, %v9856
  %v10020 = vpack.c.b16 %v9859, %v9858
  %v10021 = vpack.c.b16 %v9861, %v9860
  %v10022 = vpack.c.b16 %v9863, %v9862
  %v10023 = vpack.c.b16 %v9865, %v9864
  %v10024 = vpack.c.b16 %v9867, %v9866
  %v10025 = vpack.c.b16 %v9869, %v9868
  %v10026 = vpack.c.b16 %v9871, %v9870
  %v10027 = vpack.c.b16 %v9873, %v9872
  %v10028 = vpack.c.b16 %v9875, %v9874
  %v10029 = vpack.c.b16 %v9877, %v9876
  %v10030 = vpack.c.b16 %v9879, %v9878
  %v10031 = vpack.c.b16 %v9881, %v9880
  %v10032 = vpack.c.b16 %v9883, %v9882
  %v10033 = vpack.c.b16 %v9885, %v9884
  %v10034 = vpack.c.b16 %v9887, %v9886
  %v10035 = vpack.c.b16 %v9889, %v9888
  %v10036 = vpack.c.b16 %v9891, %v9890
  %v10037 = vpack.c.b16 %v9893, %v9892
  %v10038 = vpack.c.b16 %v9895, %v9894
  %v10039 = vpack.c.b16 %v9897, %v9896
  %v10040 = vpack.c.b16 %v9899, %v9898
  %v10041 = vpack.c.b16 %v9901, %v9900
  %v10042 = vpack.c.b16 %v9903, %v9902
  %v10043 = vpack.c.b16 %v9905, %v9904
  %v10044 = vpack.c.b16 %v9907, %v9906
  %v10045 = vpack.c.b16 %v9909, %v9908
  %v10046 = vpack.c.b16 %v9911, %v9910
  %v10047 = vpack.c.b16 %v9913, %v9912
  %v10048 = vpack.c.b16 %v9915, %v9914
  %v10049 = vpack.c.b16 %v9917, %v9916
  %v10050 = vpack.c.b16 %v9919, %v9918
  %v10051 = vpack.c.b16 %v9921, %v9920
  %v10052 = vpack.c.b16 %v9923, %v9922
  %v10053 = vpack.c.b16 %v9925, %v9924
  %10182 = vmatprep.subr.bf16.mxu0 0
  %10183 = vmatpush1.bf16.msra.mxu0 %v9933
  %10184 = vmatprep.subr.bf16.mxu0 0
  %10185 = vmatpush1.bf16.msra.mxu0 %v9932
  %10186 = vmatprep.subr.bf16.mxu0 0
  %10187 = vmatpush1.bf16.msra.mxu0 %v9931
  %10188 = vmatprep.subr.bf16.mxu0 0
  %10189 = vmatpush1.bf16.msra.mxu0 %v9930
  %10190 = vmatprep.subr.bf16.mxu0 0
  %10191 = vmatpush1.bf16.msra.mxu0 %v9929
  %10192 = vmatprep.subr.bf16.mxu0 0
  %10193 = vmatpush1.bf16.msra.mxu0 %v9928
  %10194 = vmatprep.subr.bf16.mxu0 0
  %10195 = vmatpush1.bf16.msra.mxu0 %v9927
  %10196 = vmatprep.subr.bf16.mxu0 0
  %10197 = vmatpush1.bf16.msra.mxu0 %v9926
  %10198 = vmatprep.subr.bf16.mxu0 0
  %10199 = vmatpush2.bf16.msra.mxu0 %v9941
  %10200 = vmatprep.subr.bf16.mxu0 0
  %10201 = vmatpush2.bf16.msra.mxu0 %v9940
  %10202 = vmatprep.subr.bf16.mxu0 0
  %10203 = vmatpush2.bf16.msra.mxu0 %v9939
  %10204 = vmatprep.subr.bf16.mxu0 0
  %10205 = vmatpush2.bf16.msra.mxu0 %v9938
  %10206 = vmatprep.subr.bf16.mxu0 0
  %10207 = vmatpush2.bf16.msra.mxu0 %v9937
  %10208 = vmatprep.subr.bf16.mxu0 0
  %10209 = vmatpush2.bf16.msra.mxu0 %v9936
  %10210 = vmatprep.subr.bf16.mxu0 0
  %10211 = vmatpush2.bf16.msra.mxu0 %v9935
  %10212 = vmatprep.subr.bf16.mxu0 0
  %10213 = vmatpush2.bf16.msra.mxu0 %v9934
  %10214 = vmatprep.mubr.bf16.mxu0 %v9120
  %10215 = vmatmul.mubr.bf16.gmra.mxu0 %v9119
  %v10216 = vpop.f32.mrf.mxu0
  %v10217 = vadd.f32 %v9412, %v10216
  %v10218 = vpop.f32.mrf.mxu0
  %v10219 = vpop.f32.mrf.mxu0
  %v10220 = vadd.f32 %v9412, %v10219
  %v10221 = vpop.f32.mrf.mxu0
  %10222 = vmatprep.mubr.bf16.mxu0 %v9136
  %10223 = vmatmul.mubr.bf16.gmra.mxu0 %v9135
  %v10224 = vpop.f32.mrf.mxu0
  %v10225 = vadd.f32 %v9412, %v10224
  %v10226 = vpop.f32.mrf.mxu0
  %v10227 = vpop.f32.mrf.mxu0
  %v10228 = vadd.f32 %v9412, %v10227
  %v10229 = vpop.f32.mrf.mxu0
  %10230 = vdwg.mxu0
  %10231 = vmatprep.subr.bf16.mxu0 0
  %10232 = vmatpush1.bf16.msra.mxu0 %v9949
  %10233 = vmatprep.subr.bf16.mxu0 0
  %10234 = vmatpush1.bf16.msra.mxu0 %v9948
  %10235 = vmatprep.subr.bf16.mxu0 0
  %10236 = vmatpush1.bf16.msra.mxu0 %v9947
  %10237 = vmatprep.subr.bf16.mxu0 0
  %10238 = vmatpush1.bf16.msra.mxu0 %v9946
  %10239 = vmatprep.subr.bf16.mxu0 0
  %10240 = vmatpush1.bf16.msra.mxu0 %v9945
  %10241 = vmatprep.subr.bf16.mxu0 0
  %10242 = vmatpush1.bf16.msra.mxu0 %v9944
  %10243 = vmatprep.subr.bf16.mxu0 0
  %10244 = vmatpush1.bf16.msra.mxu0 %v9943
  %10245 = vmatprep.subr.bf16.mxu0 0
  %10246 = vmatpush1.bf16.msra.mxu0 %v9942
  %10247 = vmatprep.subr.bf16.mxu0 0
  %10248 = vmatpush2.bf16.msra.mxu0 %v9957
  %10249 = vmatprep.subr.bf16.mxu0 0
  %10250 = vmatpush2.bf16.msra.mxu0 %v9956
  %10251 = vmatprep.subr.bf16.mxu0 0
  %10252 = vmatpush2.bf16.msra.mxu0 %v9955
  %10253 = vmatprep.subr.bf16.mxu0 0
  %10254 = vmatpush2.bf16.msra.mxu0 %v9954
  %10255 = vmatprep.subr.bf16.mxu0 0
  %10256 = vmatpush2.bf16.msra.mxu0 %v9953
  %10257 = vmatprep.subr.bf16.mxu0 0
  %10258 = vmatpush2.bf16.msra.mxu0 %v9952
  %10259 = vmatprep.subr.bf16.mxu0 0
  %10260 = vmatpush2.bf16.msra.mxu0 %v9951
  %10261 = vmatprep.subr.bf16.mxu0 0
  %10262 = vmatpush2.bf16.msra.mxu0 %v9950
  %10263 = vmatprep.mubr.bf16.mxu0 %v9122
  %10264 = vmatmul.mubr.bf16.gmra.mxu0 %v9121
  %v10265 = vpop.f32.mrf.mxu0
  %v10266 = vadd.f32 %v10217, %v10265
  %v10267 = vpop.f32.mrf.mxu0
  %v10268 = vpop.f32.mrf.mxu0
  %v10269 = vadd.f32 %v10220, %v10268
  %v10270 = vpop.f32.mrf.mxu0
  %10271 = vmatprep.mubr.bf16.mxu0 %v9138
  %10272 = vmatmul.mubr.bf16.gmra.mxu0 %v9137
  %v10273 = vpop.f32.mrf.mxu0
  %v10274 = vadd.f32 %v10225, %v10273
  %v10275 = vpop.f32.mrf.mxu0
  %v10276 = vpop.f32.mrf.mxu0
  %v10277 = vadd.f32 %v10228, %v10276
  %v10278 = vpop.f32.mrf.mxu0
  %10279 = vdwg.mxu0
  %10280 = vmatprep.subr.bf16.mxu0 0
  %10281 = vmatpush1.bf16.msra.mxu0 %v9965
  %10282 = vmatprep.subr.bf16.mxu0 0
  %10283 = vmatpush1.bf16.msra.mxu0 %v9964
  %10284 = vmatprep.subr.bf16.mxu0 0
  %10285 = vmatpush1.bf16.msra.mxu0 %v9963
  %10286 = vmatprep.subr.bf16.mxu0 0
  %10287 = vmatpush1.bf16.msra.mxu0 %v9962
  %10288 = vmatprep.subr.bf16.mxu0 0
  %10289 = vmatpush1.bf16.msra.mxu0 %v9961
  %10290 = vmatprep.subr.bf16.mxu0 0
  %10291 = vmatpush1.bf16.msra.mxu0 %v9960
  %10292 = vmatprep.subr.bf16.mxu0 0
  %10293 = vmatpush1.bf16.msra.mxu0 %v9959
  %10294 = vmatprep.subr.bf16.mxu0 0
  %10295 = vmatpush1.bf16.msra.mxu0 %v9958
  %10296 = vmatprep.subr.bf16.mxu0 0
  %10297 = vmatpush2.bf16.msra.mxu0 %v9973
  %10298 = vmatprep.subr.bf16.mxu0 0
  %10299 = vmatpush2.bf16.msra.mxu0 %v9972
  %10300 = vmatprep.subr.bf16.mxu0 0
  %10301 = vmatpush2.bf16.msra.mxu0 %v9971
  %10302 = vmatprep.subr.bf16.mxu0 0
  %10303 = vmatpush2.bf16.msra.mxu0 %v9970
  %10304 = vmatprep.subr.bf16.mxu0 0
  %10305 = vmatpush2.bf16.msra.mxu0 %v9969
  %10306 = vmatprep.subr.bf16.mxu0 0
  %10307 = vmatpush2.bf16.msra.mxu0 %v9968
  %10308 = vmatprep.subr.bf16.mxu0 0
  %10309 = vmatpush2.bf16.msra.mxu0 %v9967
  %10310 = vmatprep.subr.bf16.mxu0 0
  %10311 = vmatpush2.bf16.msra.mxu0 %v9966
  %10312 = vmatprep.mubr.bf16.mxu0 %v9124
  %10313 = vmatmul.mubr.bf16.gmra.mxu0 %v9123
  %v10314 = vpop.f32.mrf.mxu0
  %v10315 = vadd.f32 %v10266, %v10314
  %v10316 = vpop.f32.mrf.mxu0
  %v10317 = vpop.f32.mrf.mxu0
  %v10318 = vadd.f32 %v10269, %v10317
  %v10319 = vpop.f32.mrf.mxu0
  %10320 = vmatprep.mubr.bf16.mxu0 %v9140
  %10321 = vmatmul.mubr.bf16.gmra.mxu0 %v9139
  %v10322 = vpop.f32.mrf.mxu0
  %v10323 = vadd.f32 %v10274, %v10322
  %v10324 = vpop.f32.mrf.mxu0
  %v10325 = vpop.f32.mrf.mxu0
  %v10326 = vadd.f32 %v10277, %v10325
  %v10327 = vpop.f32.mrf.mxu0
  %10328 = vdwg.mxu0
  %10329 = vmatprep.subr.bf16.mxu0 0
  %10330 = vmatpush1.bf16.msra.mxu0 %v9981
  %10331 = vmatprep.subr.bf16.mxu0 0
  %10332 = vmatpush1.bf16.msra.mxu0 %v9980
  %10333 = vmatprep.subr.bf16.mxu0 0
  %10334 = vmatpush1.bf16.msra.mxu0 %v9979
  %10335 = vmatprep.subr.bf16.mxu0 0
  %10336 = vmatpush1.bf16.msra.mxu0 %v9978
  %10337 = vmatprep.subr.bf16.mxu0 0
  %10338 = vmatpush1.bf16.msra.mxu0 %v9977
  %10339 = vmatprep.subr.bf16.mxu0 0
  %10340 = vmatpush1.bf16.msra.mxu0 %v9976
  %10341 = vmatprep.subr.bf16.mxu0 0
  %10342 = vmatpush1.bf16.msra.mxu0 %v9975
  %10343 = vmatprep.subr.bf16.mxu0 0
  %10344 = vmatpush1.bf16.msra.mxu0 %v9974
  %10345 = vmatprep.subr.bf16.mxu0 0
  %10346 = vmatpush2.bf16.msra.mxu0 %v9989
  %10347 = vmatprep.subr.bf16.mxu0 0
  %10348 = vmatpush2.bf16.msra.mxu0 %v9988
  %10349 = vmatprep.subr.bf16.mxu0 0
  %10350 = vmatpush2.bf16.msra.mxu0 %v9987
  %10351 = vmatprep.subr.bf16.mxu0 0
  %10352 = vmatpush2.bf16.msra.mxu0 %v9986
  %10353 = vmatprep.subr.bf16.mxu0 0
  %10354 = vmatpush2.bf16.msra.mxu0 %v9985
  %10355 = vmatprep.subr.bf16.mxu0 0
  %10356 = vmatpush2.bf16.msra.mxu0 %v9984
  %10357 = vmatprep.subr.bf16.mxu0 0
  %10358 = vmatpush2.bf16.msra.mxu0 %v9983
  %10359 = vmatprep.subr.bf16.mxu0 0
  %10360 = vmatpush2.bf16.msra.mxu0 %v9982
  %10361 = vmatprep.mubr.bf16.mxu0 %v9126
  %10362 = vmatmul.mubr.bf16.gmra.mxu0 %v9125
  %v10363 = vpop.f32.mrf.mxu0
  %v10364 = vadd.f32 %v10315, %v10363
  %v10365 = vpop.f32.mrf.mxu0
  %v10366 = vpop.f32.mrf.mxu0
  %v10367 = vadd.f32 %v10318, %v10366
  %v10368 = vpop.f32.mrf.mxu0
  %10369 = vmatprep.mubr.bf16.mxu0 %v9142
  %10370 = vmatmul.mubr.bf16.gmra.mxu0 %v9141
  %v10371 = vpop.f32.mrf.mxu0
  %v10372 = vadd.f32 %v10323, %v10371
  %v10373 = vpop.f32.mrf.mxu0
  %v10374 = vpop.f32.mrf.mxu0
  %v10375 = vadd.f32 %v10326, %v10374
  %v10376 = vpop.f32.mrf.mxu0
  %10377 = vdwg.mxu0
  %10378 = vmatprep.subr.bf16.mxu0 0
  %10379 = vmatpush1.bf16.msra.mxu0 %v9997
  %10380 = vmatprep.subr.bf16.mxu0 0
  %10381 = vmatpush1.bf16.msra.mxu0 %v9996
  %10382 = vmatprep.subr.bf16.mxu0 0
  %10383 = vmatpush1.bf16.msra.mxu0 %v9995
  %10384 = vmatprep.subr.bf16.mxu0 0
  %10385 = vmatpush1.bf16.msra.mxu0 %v9994
  %10386 = vmatprep.subr.bf16.mxu0 0
  %10387 = vmatpush1.bf16.msra.mxu0 %v9993
  %10388 = vmatprep.subr.bf16.mxu0 0
  %10389 = vmatpush1.bf16.msra.mxu0 %v9992
  %10390 = vmatprep.subr.bf16.mxu0 0
  %10391 = vmatpush1.bf16.msra.mxu0 %v9991
  %10392 = vmatprep.subr.bf16.mxu0 0
  %10393 = vmatpush1.bf16.msra.mxu0 %v9990
  %10394 = vmatprep.subr.bf16.mxu0 0
  %10395 = vmatpush2.bf16.msra.mxu0 %v10005
  %10396 = vmatprep.subr.bf16.mxu0 0
  %10397 = vmatpush2.bf16.msra.mxu0 %v10004
  %10398 = vmatprep.subr.bf16.mxu0 0
  %10399 = vmatpush2.bf16.msra.mxu0 %v10003
  %10400 = vmatprep.subr.bf16.mxu0 0
  %10401 = vmatpush2.bf16.msra.mxu0 %v10002
  %10402 = vmatprep.subr.bf16.mxu0 0
  %10403 = vmatpush2.bf16.msra.mxu0 %v10001
  %10404 = vmatprep.subr.bf16.mxu0 0
  %10405 = vmatpush2.bf16.msra.mxu0 %v10000
  %10406 = vmatprep.subr.bf16.mxu0 0
  %10407 = vmatpush2.bf16.msra.mxu0 %v9999
  %10408 = vmatprep.subr.bf16.mxu0 0
  %10409 = vmatpush2.bf16.msra.mxu0 %v9998
  %10410 = vmatprep.mubr.bf16.mxu0 %v9128
  %10411 = vmatmul.mubr.bf16.gmra.mxu0 %v9127
  %v10412 = vpop.f32.mrf.mxu0
  %v10413 = vadd.f32 %v10364, %v10412
  %v10414 = vpop.f32.mrf.mxu0
  %v10415 = vpop.f32.mrf.mxu0
  %v10416 = vadd.f32 %v10367, %v10415
  %v10417 = vpop.f32.mrf.mxu0
  %10418 = vmatprep.mubr.bf16.mxu0 %v9144
  %10419 = vmatmul.mubr.bf16.gmra.mxu0 %v9143
  %v10420 = vpop.f32.mrf.mxu0
  %v10421 = vadd.f32 %v10372, %v10420
  %v10422 = vpop.f32.mrf.mxu0
  %v10423 = vpop.f32.mrf.mxu0
  %v10424 = vadd.f32 %v10375, %v10423
  %v10425 = vpop.f32.mrf.mxu0
  %10426 = vdwg.mxu0
  %10427 = vmatprep.subr.bf16.mxu0 0
  %10428 = vmatpush1.bf16.msra.mxu0 %v10013
  %10429 = vmatprep.subr.bf16.mxu0 0
  %10430 = vmatpush1.bf16.msra.mxu0 %v10012
  %10431 = vmatprep.subr.bf16.mxu0 0
  %10432 = vmatpush1.bf16.msra.mxu0 %v10011
  %10433 = vmatprep.subr.bf16.mxu0 0
  %10434 = vmatpush1.bf16.msra.mxu0 %v10010
  %10435 = vmatprep.subr.bf16.mxu0 0
  %10436 = vmatpush1.bf16.msra.mxu0 %v10009
  %10437 = vmatprep.subr.bf16.mxu0 0
  %10438 = vmatpush1.bf16.msra.mxu0 %v10008
  %10439 = vmatprep.subr.bf16.mxu0 0
  %10440 = vmatpush1.bf16.msra.mxu0 %v10007
  %10441 = vmatprep.subr.bf16.mxu0 0
  %10442 = vmatpush1.bf16.msra.mxu0 %v10006
  %10443 = vmatprep.subr.bf16.mxu0 0
  %10444 = vmatpush2.bf16.msra.mxu0 %v10021
  %10445 = vmatprep.subr.bf16.mxu0 0
  %10446 = vmatpush2.bf16.msra.mxu0 %v10020
  %10447 = vmatprep.subr.bf16.mxu0 0
  %10448 = vmatpush2.bf16.msra.mxu0 %v10019
  %10449 = vmatprep.subr.bf16.mxu0 0
  %10450 = vmatpush2.bf16.msra.mxu0 %v10018
  %10451 = vmatprep.subr.bf16.mxu0 0
  %10452 = vmatpush2.bf16.msra.mxu0 %v10017
  %10453 = vmatprep.subr.bf16.mxu0 0
  %10454 = vmatpush2.bf16.msra.mxu0 %v10016
  %10455 = vmatprep.subr.bf16.mxu0 0
  %10456 = vmatpush2.bf16.msra.mxu0 %v10015
  %10457 = vmatprep.subr.bf16.mxu0 0
  %10458 = vmatpush2.bf16.msra.mxu0 %v10014
  %10459 = vmatprep.mubr.bf16.mxu0 %v9130
  %10460 = vmatmul.mubr.bf16.gmra.mxu0 %v9129
  %v10461 = vpop.f32.mrf.mxu0
  %v10462 = vadd.f32 %v10413, %v10461
  %v10463 = vpop.f32.mrf.mxu0
  %v10464 = vpop.f32.mrf.mxu0
  %v10465 = vadd.f32 %v10416, %v10464
  %v10466 = vpop.f32.mrf.mxu0
  %10467 = vmatprep.mubr.bf16.mxu0 %v9146
  %10468 = vmatmul.mubr.bf16.gmra.mxu0 %v9145
  %v10469 = vpop.f32.mrf.mxu0
  %v10470 = vadd.f32 %v10421, %v10469
  %v10471 = vpop.f32.mrf.mxu0
  %v10472 = vpop.f32.mrf.mxu0
  %v10473 = vadd.f32 %v10424, %v10472
  %v10474 = vpop.f32.mrf.mxu0
  %10475 = vdwg.mxu0
  %10476 = vmatprep.subr.bf16.mxu0 0
  %10477 = vmatpush1.bf16.msra.mxu0 %v10029
  %10478 = vmatprep.subr.bf16.mxu0 0
  %10479 = vmatpush1.bf16.msra.mxu0 %v10028
  %10480 = vmatprep.subr.bf16.mxu0 0
  %10481 = vmatpush1.bf16.msra.mxu0 %v10027
  %10482 = vmatprep.subr.bf16.mxu0 0
  %10483 = vmatpush1.bf16.msra.mxu0 %v10026
  %10484 = vmatprep.subr.bf16.mxu0 0
  %10485 = vmatpush1.bf16.msra.mxu0 %v10025
  %10486 = vmatprep.subr.bf16.mxu0 0
  %10487 = vmatpush1.bf16.msra.mxu0 %v10024
  %10488 = vmatprep.subr.bf16.mxu0 0
  %10489 = vmatpush1.bf16.msra.mxu0 %v10023
  %10490 = vmatprep.subr.bf16.mxu0 0
  %10491 = vmatpush1.bf16.msra.mxu0 %v10022
  %10492 = vmatprep.subr.bf16.mxu0 0
  %10493 = vmatpush2.bf16.msra.mxu0 %v10037
  %10494 = vmatprep.subr.bf16.mxu0 0
  %10495 = vmatpush2.bf16.msra.mxu0 %v10036
  %10496 = vmatprep.subr.bf16.mxu0 0
  %10497 = vmatpush2.bf16.msra.mxu0 %v10035
  %10498 = vmatprep.subr.bf16.mxu0 0
  %10499 = vmatpush2.bf16.msra.mxu0 %v10034
  %10500 = vmatprep.subr.bf16.mxu0 0
  %10501 = vmatpush2.bf16.msra.mxu0 %v10033
  %10502 = vmatprep.subr.bf16.mxu0 0
  %10503 = vmatpush2.bf16.msra.mxu0 %v10032
  %10504 = vmatprep.subr.bf16.mxu0 0
  %10505 = vmatpush2.bf16.msra.mxu0 %v10031
  %10506 = vmatprep.subr.bf16.mxu0 0
  %10507 = vmatpush2.bf16.msra.mxu0 %v10030
  %10508 = vmatprep.mubr.bf16.mxu0 %v9132
  %10509 = vmatmul.mubr.bf16.gmra.mxu0 %v9131
  %v10510 = vpop.f32.mrf.mxu0
  %v10511 = vadd.f32 %v10462, %v10510
  %v10512 = vpop.f32.mrf.mxu0
  %v10513 = vpop.f32.mrf.mxu0
  %v10514 = vadd.f32 %v10465, %v10513
  %v10515 = vpop.f32.mrf.mxu0
  %10516 = vmatprep.mubr.bf16.mxu0 %v9148
  %10517 = vmatmul.mubr.bf16.gmra.mxu0 %v9147
  %v10518 = vpop.f32.mrf.mxu0
  %v10519 = vadd.f32 %v10470, %v10518
  %v10520 = vpop.f32.mrf.mxu0
  %v10521 = vpop.f32.mrf.mxu0
  %v10522 = vadd.f32 %v10473, %v10521
  %v10523 = vpop.f32.mrf.mxu0
  %10524 = vdwg.mxu0
  %10525 = vmatprep.subr.bf16.mxu0 0
  %10526 = vmatpush1.bf16.msra.mxu0 %v10045
  %10527 = vmatprep.subr.bf16.mxu0 0
  %10528 = vmatpush1.bf16.msra.mxu0 %v10044
  %10529 = vmatprep.subr.bf16.mxu0 0
  %10530 = vmatpush1.bf16.msra.mxu0 %v10043
  %10531 = vmatprep.subr.bf16.mxu0 0
  %10532 = vmatpush1.bf16.msra.mxu0 %v10042
  %10533 = vmatprep.subr.bf16.mxu0 0
  %10534 = vmatpush1.bf16.msra.mxu0 %v10041
  %10535 = vmatprep.subr.bf16.mxu0 0
  %10536 = vmatpush1.bf16.msra.mxu0 %v10040
  %10537 = vmatprep.subr.bf16.mxu0 0
  %10538 = vmatpush1.bf16.msra.mxu0 %v10039
  %10539 = vmatprep.subr.bf16.mxu0 0
  %10540 = vmatpush1.bf16.msra.mxu0 %v10038
  %10541 = vmatprep.subr.bf16.mxu0 0
  %10542 = vmatpush2.bf16.msra.mxu0 %v10053
  %10543 = vmatprep.subr.bf16.mxu0 0
  %10544 = vmatpush2.bf16.msra.mxu0 %v10052
  %10545 = vmatprep.subr.bf16.mxu0 0
  %10546 = vmatpush2.bf16.msra.mxu0 %v10051
  %10547 = vmatprep.subr.bf16.mxu0 0
  %10548 = vmatpush2.bf16.msra.mxu0 %v10050
  %10549 = vmatprep.subr.bf16.mxu0 0
  %10550 = vmatpush2.bf16.msra.mxu0 %v10049
  %10551 = vmatprep.subr.bf16.mxu0 0
  %10552 = vmatpush2.bf16.msra.mxu0 %v10048
  %10553 = vmatprep.subr.bf16.mxu0 0
  %10554 = vmatpush2.bf16.msra.mxu0 %v10047
  %10555 = vmatprep.subr.bf16.mxu0 0
  %10556 = vmatpush2.bf16.msra.mxu0 %v10046
  %10557 = vmatprep.mubr.bf16.mxu0 %v9134
  %10558 = vmatmul.mubr.bf16.gmra.mxu0 %v9133
  %v10559 = vpop.f32.mrf.mxu0
  %v10560 = vadd.f32 %v10511, %v10559
  %v10561 = vpop.f32.mrf.mxu0
  %v10562 = vpop.f32.mrf.mxu0
  %v10563 = vadd.f32 %v10514, %v10562
  %v10564 = vpop.f32.mrf.mxu0
  %10565 = vmatprep.mubr.bf16.mxu0 %v9150
  %10566 = vmatmul.mubr.bf16.gmra.mxu0 %v9149
  %v10567 = vpop.f32.mrf.mxu0
  %v10568 = vadd.f32 %v10519, %v10567
  %v10569 = vpop.f32.mrf.mxu0
  %v10570 = vpop.f32.mrf.mxu0
  %v10571 = vadd.f32 %v10522, %v10570
  %v10572 = vpop.f32.mrf.mxu0
  %10573 = vdwg.mxu0
  %v10574 = vmax.f32 %v10560, 0.0
  %v10575 = vmax.f32 %v10563, 0.0
  %v10576 = vmax.f32 %v10568, 0.0
  %v10577 = vmax.f32 %v10571, 0.0
  %v10578 = vsub.f32 %v8151, %v92
  %v10579 = vsub.f32 %v8152, %v93
  %v10580 = vsub.f32 %v8153, %v94
  %v10581 = vsub.f32 %v8154, %v95
  %v10582 = vmul.f32 %v10578, %v10578
  %v10583 = vmul.f32 %v10579, %v10579
  %v10584 = vmul.f32 %v10580, %v10580
  %v10585 = vmul.f32 %v10581, %v10581
  %v10586 = vsel %vm5463, %v10582, 0.0
  %10587 = vadd.xlane.f32.xlu0 %v10586
  %v10588 = vpop.xlane.xlu0 %10587
  %v10589 = vsel %vm5463, %v10583, 0.0
  %10590 = vadd.xlane.f32.xlu0 %v10589
  %v10591 = vpop.xlane.xlu0 %10590
  %v10592 = vsel %vm5463, %v10584, 0.0
  %10593 = vadd.xlane.f32.xlu0 %v10592
  %v10594 = vpop.xlane.xlu0 %10593
  %v10595 = vsel %vm5463, %v10585, 0.0
  %10596 = vadd.xlane.f32.xlu0 %v10595
  %v10597 = vpop.xlane.xlu0 %10596
  %v10598 = vrcp.pop 64.0
  %v10599 = vmul.f32 %v10588, %v10598
  %v10600 = vmul.f32 %v10591, %v10598
  %v10601 = vmul.f32 %v10594, %v10598
  %v10602 = vmul.f32 %v10597, %v10598
  %v10607 = vlaneseq
  %v10608 = vshrl.u32 %v10607, 7
  %v10609 = vsub.s32 %v5014, %v10608
  %v10610 = vrot.slane %v10599, %v10609
  %v10611 = vlaneseq
  %v10612 = vshrl.u32 %v10611, 7
  %v10613 = vsub.s32 %v5014, %v10612
  %v10614 = vrot.slane %v10600, %v10613
  %v10615 = vlaneseq
  %v10616 = vshrl.u32 %v10615, 7
  %v10617 = vsub.s32 %v5014, %v10616
  %v10618 = vrot.slane %v10601, %v10617
  %v10619 = vlaneseq
  %v10620 = vshrl.u32 %v10619, 7
  %v10621 = vsub.s32 %v5014, %v10620
  %v10622 = vrot.slane %v10602, %v10621
  %v10623 = vsel %vm5031, %v10614, %v10610
  %v10624 = vsel %vm5033, %v10618, %v10623
  %v10625 = vsel %vm5035, %v10622, %v10624
  %v10627 = vsel %vm5038, %v10625, 0.0
  %10628 = vadd.xlane.f32.xlu0 %v10627
  %v10629 = vpop.xlane.xlu0 %10628
  %v10630 = vmul.f32 %v10629, %v2030
  %v10631 = vsub.f32 %v10574, %v88
  %v10632 = vsub.f32 %v10575, %v89
  %v10633 = vsub.f32 %v10576, %v90
  %v10634 = vsub.f32 %v10577, %v91
  %v10635 = vmul.f32 %v10631, %v10631
  %v10636 = vmul.f32 %v10632, %v10632
  %v10637 = vmul.f32 %v10633, %v10633
  %v10638 = vmul.f32 %v10634, %v10634
  %v10639 = vsel %vm5463, %v10635, 0.0
  %10640 = vadd.xlane.f32.xlu0 %v10639
  %v10641 = vpop.xlane.xlu0 %10640
  %v10642 = vsel %vm5463, %v10636, 0.0
  %10643 = vadd.xlane.f32.xlu0 %v10642
  %v10644 = vpop.xlane.xlu0 %10643
  %v10645 = vsel %vm5463, %v10637, 0.0
  %10646 = vadd.xlane.f32.xlu0 %v10645
  %v10647 = vpop.xlane.xlu0 %10646
  %v10648 = vsel %vm5463, %v10638, 0.0
  %10649 = vadd.xlane.f32.xlu0 %v10648
  %v10650 = vpop.xlane.xlu0 %10649
  %v10651 = vmul.f32 %v10641, %v10598
  %v10652 = vmul.f32 %v10644, %v10598
  %v10653 = vmul.f32 %v10647, %v10598
  %v10654 = vmul.f32 %v10650, %v10598
  %v10659 = vlaneseq
  %v10660 = vshrl.u32 %v10659, 7
  %v10661 = vsub.s32 %v5014, %v10660
  %v10662 = vrot.slane %v10651, %v10661
  %v10663 = vlaneseq
  %v10664 = vshrl.u32 %v10663, 7
  %v10665 = vsub.s32 %v5014, %v10664
  %v10666 = vrot.slane %v10652, %v10665
  %v10667 = vlaneseq
  %v10668 = vshrl.u32 %v10667, 7
  %v10669 = vsub.s32 %v5014, %v10668
  %v10670 = vrot.slane %v10653, %v10669
  %v10671 = vlaneseq
  %v10672 = vshrl.u32 %v10671, 7
  %v10673 = vsub.s32 %v5014, %v10672
  %v10674 = vrot.slane %v10654, %v10673
  %v10675 = vsel %vm5031, %v10666, %v10662
  %v10676 = vsel %vm5033, %v10670, %v10675
  %v10677 = vsel %vm5035, %v10674, %v10676
  %v10679 = vsel %vm5038, %v10677, 0.0
  %10680 = vadd.xlane.f32.xlu0 %v10679
  %v10681 = vpop.xlane.xlu0 %10680
  %v10682 = vmul.f32 %v10681, %v2030
  %vm10683 = vcmask 3072
  %10684 = vst.msk [vmem:[%s26] sm:$0xf] %vm10683, %v5042
  %vm10685 = vcmask 11272
  %10686 = vst.msk [vmem:[%s26] sm:$0xf] %vm10685, %v10630
  %vm10687 = vcmask 19472
  %10688 = vst.msk [vmem:[%s26] sm:$0xf] %vm10687, %v10682
  // Predicated region
  $region106: #{cvae_forward.1} parent=0 // pred_check
    _
  $region107: #{cvae_forward.1} parent=0 // pred_check_branch
    %10690 = sbr.rel (0) target = $region109
  $region108: #{cvae_forward.1} parent=0 // pred_region
    _
  $region109: #{cvae_forward.1} parent=0 // pred_fallthru
    _
  // Predicated region
  $region110: #{cvae_forward.1} parent=0 // pred_check
    _
  $region111: #{cvae_forward.1} parent=0 // pred_check_branch
    %10692 = sbr.rel (0) target = $region113
  $region112: #{cvae_forward.1} parent=0 // pred_region
    _
  $region113: #{cvae_forward.1} parent=0 // pred_fallthru
    _

</llo_original>
